<compile_context>
chip_gen: v6e
topology: v6e:2x2x1
jax: 0.10.0
libtpu: 0.0.40
codegen_flags: <defaults>
</compile_context>

<pallas_src>
import numpy as np

import jax
import jax.numpy as jnp
from jax.experimental import pallas as pl
from jax.experimental.pallas import tpu as pltpu


CIN = 3        # real input channels
CIN_PAD = 8    # stem contraction dim per tap (3 real channels + 5 zero pad)
C1 = 16        # stem output channels
C2 = 32        # residual-block / backbone output channels (backbone.output_dim)
OUT_ROWS = 8   # sublane-aligned rows per image in the logits output block


def _round_up(n, m):
    return (n + m - 1) // m * m


def _geometry(H, W):
    Hp, Wp = H + 2, W + 2          # padded grid of the HxW stage
    Ho, Wo = H // 2, W // 2        # spatial size after the stride-2 stage
    Hq, Wq = Ho + 2, Wo + 2        # padded grid of the Ho x Wo stage
    R1, R3 = Hp * Wp, Hq * Wq
    G1 = _round_up(Wp + 2, 8)      # guard rows >= max |tap row offset| (= Wp + 1)
    G3 = _round_up(Wq + 2, 8)
    SLAB1 = _round_up(G1 + R1 + G1, 8)
    SLAB3 = _round_up(G3 + R3 + G3, 8)
    return dict(Hp=Hp, Wp=Wp, Ho=Ho, Wo=Wo, Hq=Hq, Wq=Wq, R1=R1, R3=R3,
                G1=G1, G3=G3, SLAB1=SLAB1, SLAB3=SLAB3)


# ------------------------------ fused kernel ---------------------------------


def _build_kernel(g, ncls_pad):
    Wp, Wq = g["Wp"], g["Wq"]
    R1, R3 = g["R1"], g["R3"]
    G1, G3 = g["G1"], g["G3"]
    SLAB1, SLAB3 = g["SLAB1"], g["SLAB3"]
    OFFS1 = tuple((i - 1) * Wp + (j - 1) for i in range(3) for j in range(3))
    OFFS3 = tuple((i - 1) * Wq + (j - 1) for i in range(3) for j in range(3))

    def kernel(x_ref, w1_ref, b1_ref, w2_ref, b2_ref, w3_ref, ws_ref, b3_ref,
               wfc_ref, bfc_ref, mask1_ref, sel_ref, pool_ref,
               out_ref, x2s_ref, x3s_ref):
        f32 = jnp.float32

        def conv3x3(load, w_ref, offs, rows, k):
            # 3x3 conv on a flat padded-grid slab: 9 shifted-row-window MXU
            # matmuls accumulated in f32 (BN scale already folded into the weights).
            acc = None
            for t, off in enumerate(offs):
                d = jnp.dot(load(off, rows), w_ref[t * k:(t + 1) * k, :],
                            preferred_element_type=f32)
                acc = d if acc is None else acc + d
            return acc

        # ---- stem: 3x3 s1 conv (CIN_PAD -> C1) + folded BN + ReLU -------------
        y1 = conv3x3(lambda o, n: x_ref[0, G1 + o:G1 + o + n, :],
                     w1_ref, OFFS1, R1, CIN_PAD)
        # zero the padded-grid border so the next conv sees proper zero padding
        y1 = jnp.maximum(y1 + b1_ref[...], 0.0) * mask1_ref[...]

        # ---- block conv A: 3x3 (C1 -> C2) + folded BN + ReLU ------------------
        # computed at stride 1; the stride-2 selection happens below on the MXU.
        x2s_ref[0:G1, :] = jnp.zeros((G1, C1), f32)
        x2s_ref[G1 + R1:SLAB1, :] = jnp.zeros((SLAB1 - G1 - R1, C1), f32)
        x2s_ref[G1:G1 + R1, :] = y1
        y2 = conv3x3(lambda o, n: x2s_ref[G1 + o:G1 + o + n, :],
                     w2_ref, OFFS1, R1, C1)
        y2 = jnp.maximum(y2 + b2_ref[...], 0.0)

        # ---- stride-2 subsample of both paths, re-embedded into the 10x10 ----
        # padded grid (fresh zero border) with one selection-matrix matmul each.
        x3g = jnp.dot(sel_ref[...], y2, preferred_element_type=f32)   # main path
        sc = jnp.dot(jnp.dot(sel_ref[...], y1, preferred_element_type=f32),
                     ws_ref[...], preferred_element_type=f32)         # 1x1 s2 shortcut

        # ---- block conv B: 3x3 s1 (C2 -> C2) + folded BN + shortcut + ReLU ----
        x3s_ref[0:G3, :] = jnp.zeros((G3, C2), f32)
        x3s_ref[G3 + R3:SLAB3, :] = jnp.zeros((SLAB3 - G3 - R3, C2), f32)
        x3s_ref[G3:G3 + R3, :] = x3g
        y3 = conv3x3(lambda o, n: x3s_ref[G3 + o:G3 + o + n, :],
                     w3_ref, OFFS3, R3, C2)
        y3 = jnp.maximum(y3 + sc + b3_ref[...], 0.0)

        # ---- GAP (pooling-row matvec over interior rows) fused with fc --------
        feat = jnp.dot(pool_ref[...], y3, preferred_element_type=f32)      # [1, C2]
        logits = (jnp.dot(feat, wfc_ref[...], preferred_element_type=f32)
                  + bfc_ref[...])                                          # [1, 128]
        out_ref[...] = jnp.broadcast_to(logits, (1, OUT_ROWS, ncls_pad))

    return kernel


# --------------------------- host-side constants ------------------------------


def _build_constants(H, W, g):
    Hp, Wp, Hq, Wq = g["Hp"], g["Wp"], g["Hq"], g["Wq"]
    Ho, Wo = g["Ho"], g["Wo"]
    R1, R3 = g["R1"], g["R3"]

    # 1.0 on interior padded-grid rows of the HxW stage, 0.0 on the zero border.
    yy, xx = np.meshgrid(np.arange(Hp), np.arange(Wp), indexing="ij")
    interior = (yy >= 1) & (yy <= H) & (xx >= 1) & (xx <= W)
    mask1 = interior.reshape(R1, 1).astype(np.float32)

    # Stride-2 selection matrix: picks stride-1 conv2 outputs at the stride-2
    # centers and scatters them into the interior of the 10x10 padded grid.
    sel = np.zeros((R3, R1), np.float32)
    for oy in range(Ho):
        for ox in range(Wo):
            sel[(oy + 1) * Wq + (ox + 1), (2 * oy + 1) * Wp + (2 * ox + 1)] = 1.0

    # Global-average-pool row: 1/(Ho*Wo) at interior rows of the 10x10 grid.
    pool = np.zeros((1, R3), np.float32)
    for qy in range(1, Hq - 1):
        for qx in range(1, Wq - 1):
            pool[0, qy * Wq + qx] = 1.0 / float(Ho * Wo)

    return {"mask1": jnp.asarray(mask1), "sel": jnp.asarray(sel),
            "pool": jnp.asarray(pool)}


# ------------------------------ model forward ---------------------------------


def build_forward(H=16, W=16, num_classes=10):
    assert H % 2 == 0 and W % 2 == 0
    ncls_pad = _round_up(max(num_classes, 128), 128)
    g = _geometry(H, W)
    kernel = _build_kernel(g, ncls_pad)
    consts = _build_constants(H, W, g)
    G1, R1, SLAB1, SLAB3 = g["G1"], g["R1"], g["SLAB1"], g["SLAB3"]

    def forward(x_nchw, p):
        B, cin, h, w = x_nchw.shape
        assert (cin, h, w) == (CIN, H, W)

        # Input staging (the only pre-kernel XLA work): NCHW -> NHWC, pad the
        # 3 channels to CIN_PAD, bake the 1-px zero border + guard rows, and
        # flatten to a per-image guarded padded-grid slab.
        xh = jnp.transpose(x_nchw.astype(jnp.float32), (0, 2, 3, 1))
        xh = jnp.pad(xh, ((0, 0), (1, 1), (1, 1), (0, CIN_PAD - CIN)))
        x_slab = jnp.pad(xh.reshape(B, R1, CIN_PAD),
                         ((0, 0), (G1, SLAB1 - G1 - R1), (0, 0)))

        out = pl.pallas_call(
            kernel,
            out_shape=jax.ShapeDtypeStruct((B, OUT_ROWS, ncls_pad), jnp.float32),
            grid=(B,),
            in_specs=[
                pl.BlockSpec((1, SLAB1, CIN_PAD), lambda b: (b, 0, 0)),
                pl.BlockSpec(p["conv1_w"].shape, lambda b: (0, 0)),
                pl.BlockSpec(p["bn1_b"].shape, lambda b: (0, 0)),
                pl.BlockSpec(p["conv2_w"].shape, lambda b: (0, 0)),
                pl.BlockSpec(p["bn2_b"].shape, lambda b: (0, 0)),
                pl.BlockSpec(p["conv3_w"].shape, lambda b: (0, 0)),
                pl.BlockSpec(p["convs_w"].shape, lambda b: (0, 0)),
                pl.BlockSpec(p["bn3s_b"].shape, lambda b: (0, 0)),
                pl.BlockSpec(p["fc_w"].shape, lambda b: (0, 0)),
                pl.BlockSpec(p["fc_b"].shape, lambda b: (0, 0)),
                pl.BlockSpec(consts["mask1"].shape, lambda b: (0, 0)),
                pl.BlockSpec(consts["sel"].shape, lambda b: (0, 0)),
                pl.BlockSpec(consts["pool"].shape, lambda b: (0, 0)),
            ],
            out_specs=pl.BlockSpec((1, OUT_ROWS, ncls_pad), lambda b: (b, 0, 0)),
            scratch_shapes=[
                pltpu.VMEM((SLAB1, C1), jnp.float32),   # conv2 input padded grid
                pltpu.VMEM((SLAB3, C2), jnp.float32),   # conv3 input padded grid
            ],
            compiler_params=pltpu.CompilerParams(
                dimension_semantics=("parallel",)),
        )(x_slab, p["conv1_w"], p["bn1_b"], p["conv2_w"], p["bn2_b"],
          p["conv3_w"], p["convs_w"], p["bn3s_b"], p["fc_w"], p["fc_b"],
          consts["mask1"], consts["sel"], consts["pool"])
        return out[:, 0, :num_classes]

    return forward


# -------------------------------- parameters ----------------------------------


def init_params(key, num_classes=10):
    """Raw parameters in PyTorch conventions (OIHW conv weights, [out,in] fc)."""
    ks = jax.random.split(key, 14)

    def w(k, shape, scale=0.1):
        return scale * jax.random.normal(k, shape, jnp.float32)

    return {
        "conv1_w": w(ks[0], (C1, CIN, 3, 3)),
        "bn1_s": 1.0 + 0.05 * jax.random.normal(ks[1], (C1,), jnp.float32),
        "bn1_b": 0.05 * jax.random.normal(ks[2], (C1,), jnp.float32),
        "conv2_w": w(ks[3], (C2, C1, 3, 3)),
        "bn2_s": 1.0 + 0.05 * jax.random.normal(ks[4], (C2,), jnp.float32),
        "bn2_b": 0.05 * jax.random.normal(ks[5], (C2,), jnp.float32),
        "conv3_w": w(ks[6], (C2, C2, 3, 3)),
        "bn3_s": 1.0 + 0.05 * jax.random.normal(ks[7], (C2,), jnp.float32),
        "bn3_b": 0.05 * jax.random.normal(ks[8], (C2,), jnp.float32),
        "convs_w": w(ks[9], (C2, C1, 1, 1)),
        "bns_s": 1.0 + 0.05 * jax.random.normal(ks[10], (C2,), jnp.float32),
        "bns_b": 0.05 * jax.random.normal(ks[11], (C2,), jnp.float32),
        "fc_w": w(ks[12], (num_classes, C2)),
        "fc_b": 0.05 * jax.random.normal(ks[13], (num_classes,), jnp.float32),
    }


def prepare_params(raw, *, ncls_pad=128):
    """One-time weight preprocessing (kept out of the per-forward hot path):
    conv weights -> [taps*K, N] f32 slabs (tap-major / channel-minor, BN scale
    folded in), BN biases -> [1, N] rows (conv3 + shortcut biases pre-summed),
    fc -> transposed + lane-padded to 128."""

    def conv_w(w_oihw, bn_scale, pad_in=None):
        o, i, kh, kw = w_oihw.shape
        w = jnp.transpose(w_oihw, (2, 3, 1, 0)) * bn_scale[None, None, None, :]
        if pad_in is not None and pad_in > i:
            w = jnp.pad(w, ((0, 0), (0, 0), (0, pad_in - i), (0, 0)))
            i = pad_in
        return w.reshape(kh * kw * i, o).astype(jnp.float32)

    def row(v):
        return v.reshape(1, -1).astype(jnp.float32)

    ncls, d = raw["fc_w"].shape
    fc_w = jnp.zeros((d, ncls_pad), jnp.float32).at[:, :ncls].set(raw["fc_w"].T)
    fc_b = jnp.zeros((1, ncls_pad), jnp.float32).at[0, :ncls].set(raw["fc_b"])

    return {
        "conv1_w": conv_w(raw["conv1_w"], raw["bn1_s"], pad_in=CIN_PAD),
        "bn1_b": row(raw["bn1_b"]),
        "conv2_w": conv_w(raw["conv2_w"], raw["bn2_s"]),
        "bn2_b": row(raw["bn2_b"]),
        "conv3_w": conv_w(raw["conv3_w"], raw["bn3_s"]),
        "convs_w": conv_w(raw["convs_w"], raw["bns_s"]),
        "bn3s_b": row(raw["bn3_b"] + raw["bns_b"]),   # pre-summed epilogue bias
        "fc_w": fc_w,
        "fc_b": fc_b,
    }


# ------------------------------ pure-JAX reference -----------------------------


def reference_forward(x_nchw, raw, num_classes):
    x = jnp.transpose(x_nchw.astype(jnp.float32), (0, 2, 3, 1))
    dn = ("NHWC", "HWIO", "NHWC")
    hp = jax.lax.Precision.HIGHEST

    def conv(v, w_oihw, stride, pad):
        w = jnp.transpose(w_oihw, (2, 3, 1, 0))
        return jax.lax.conv_general_dilated(
            v, w, (stride, stride), ((pad, pad), (pad, pad)),
            dimension_numbers=dn, precision=hp)

    y1 = jax.nn.relu(conv(x, raw["conv1_w"], 1, 1) * raw["bn1_s"] + raw["bn1_b"])
    y2 = jax.nn.relu(conv(y1, raw["conv2_w"], 2, 1) * raw["bn2_s"] + raw["bn2_b"])
    main = conv(y2, raw["conv3_w"], 1, 1) * raw["bn3_s"] + raw["bn3_b"]
    sc = conv(y1, raw["convs_w"], 2, 0) * raw["bns_s"] + raw["bns_b"]
    z = jax.nn.relu(main + sc)
    feat = jnp.mean(z, axis=(1, 2))
    return feat @ raw["fc_w"].T + raw["fc_b"]


if __name__ == "__main__":
    key = jax.random.PRNGKey(0)
    k_in, k_param = jax.random.split(key)

    # NCHW input, matching the PyTorch module's expected layout
    x = jax.random.normal(k_in, (2, CIN, 16, 16), jnp.float32)
    raw = init_params(k_param, num_classes=10)
    params = prepare_params(raw)

    fwd = jax.jit(build_forward(H=16, W=16, num_classes=10))
    out = fwd(x, params)
    jax.block_until_ready(out)

    assert out.shape == (2, 10)
    assert out.dtype == jnp.float32
    assert bool(jnp.all(jnp.isfinite(out)))

    ref = reference_forward(x, raw, 10)
    max_diff = float(jnp.max(jnp.abs(out - ref)))
    assert bool(jnp.allclose(out, ref, atol=5e-2, rtol=5e-2)), (
        f"kernel/reference mismatch, max abs diff = {max_diff}")

    print("KERNEL_OK")
</pallas_src>

<mosaic_0001>
module attributes {stable_mosaic.version = 11 : i64} {
  func.func @kernel(%arg0: i32, %arg1: memref<1x376x8xf32, #tpu.memory_space<vmem>>, %arg2: memref<72x16xf32, #tpu.memory_space<vmem>>, %arg3: memref<1x16xf32, #tpu.memory_space<vmem>>, %arg4: memref<144x32xf32, #tpu.memory_space<vmem>>, %arg5: memref<1x32xf32, #tpu.memory_space<vmem>>, %arg6: memref<288x32xf32, #tpu.memory_space<vmem>>, %arg7: memref<16x32xf32, #tpu.memory_space<vmem>>, %arg8: memref<1x32xf32, #tpu.memory_space<vmem>>, %arg9: memref<32x128xf32, #tpu.memory_space<vmem>>, %arg10: memref<1x128xf32, #tpu.memory_space<vmem>>, %arg11: memref<324x1xf32, #tpu.memory_space<vmem>>, %arg12: memref<100x324xf32, #tpu.memory_space<vmem>>, %arg13: memref<1x100xf32, #tpu.memory_space<vmem>>, %arg14: memref<1x8x128xf32, #tpu.memory_space<vmem>>, %arg15: memref<376x16xf32, #tpu.memory_space<vmem>>, %arg16: memref<136x32xf32, #tpu.memory_space<vmem>>) attributes {dimension_semantics = [#tpu.dimension_semantics<parallel>], iteration_bounds = array<i64: 2>, scalar_prefetch = 0 : i64, scratch_operands = 2 : i64, tpu.core_type = #tpu.core_type<tc>, window_params = [{transform_indices = @transform_0, window_bounds = array<i64: 1, 376, 8>}, {pipeline_mode = #tpu.pipeline_mode<synchronous>, transform_indices = @transform_1, window_bounds = array<i64: 72, 16>}, {pipeline_mode = #tpu.pipeline_mode<synchronous>, transform_indices = @transform_2, window_bounds = array<i64: 1, 16>}, {pipeline_mode = #tpu.pipeline_mode<synchronous>, transform_indices = @transform_3, window_bounds = array<i64: 144, 32>}, {pipeline_mode = #tpu.pipeline_mode<synchronous>, transform_indices = @transform_4, window_bounds = array<i64: 1, 32>}, {pipeline_mode = #tpu.pipeline_mode<synchronous>, transform_indices = @transform_5, window_bounds = array<i64: 288, 32>}, {pipeline_mode = #tpu.pipeline_mode<synchronous>, transform_indices = @transform_6, window_bounds = array<i64: 16, 32>}, {pipeline_mode = #tpu.pipeline_mode<synchronous>, transform_indices = @transform_7, window_bounds = array<i64: 1, 32>}, {pipeline_mode = #tpu.pipeline_mode<synchronous>, transform_indices = @transform_8, window_bounds = array<i64: 32, 128>}, {pipeline_mode = #tpu.pipeline_mode<synchronous>, transform_indices = @transform_9, window_bounds = array<i64: 1, 128>}, {pipeline_mode = #tpu.pipeline_mode<synchronous>, transform_indices = @transform_10, window_bounds = array<i64: 324, 1>}, {pipeline_mode = #tpu.pipeline_mode<synchronous>, transform_indices = @transform_11, window_bounds = array<i64: 100, 324>}, {pipeline_mode = #tpu.pipeline_mode<synchronous>, transform_indices = @transform_12, window_bounds = array<i64: 1, 100>}, {transform_indices = @transform_13, window_bounds = array<i64: 1, 8, 128>}]} {
    %c0 = arith.constant 0 : index
    %c5 = arith.constant 5 : index
    %c0_0 = arith.constant 0 : index
    %0 = vector.load %arg1[%c0, %c5, %c0_0] : memref<1x376x8xf32, #tpu.memory_space<vmem>>, vector<1x324x8xf32>
    %1 = vector.shape_cast %0 : vector<1x324x8xf32> to vector<324x8xf32>
    %c0_1 = arith.constant 0 : index
    %c0_2 = arith.constant 0 : index
    %2 = vector.load %arg2[%c0_1, %c0_2] : memref<72x16xf32, #tpu.memory_space<vmem>>, vector<8x16xf32>
    %cst = arith.constant dense<0.000000e+00> : vector<324x16xf32>
    %3 = tpu.matmul %1, %2, %cst {dimension_numbers = #tpu.dot_dimension_numbers<[1], [0], [0], [1], [0, 0, 1, 1], [], []>} : vector<324x8xf32>, vector<8x16xf32>, vector<324x16xf32> -> vector<324x16xf32>
    %c0_3 = arith.constant 0 : index
    %c6 = arith.constant 6 : index
    %c0_4 = arith.constant 0 : index
    %4 = vector.load %arg1[%c0_3, %c6, %c0_4] : memref<1x376x8xf32, #tpu.memory_space<vmem>>, vector<1x324x8xf32>
    %5 = vector.shape_cast %4 : vector<1x324x8xf32> to vector<324x8xf32>
    %c8 = arith.constant 8 : index
    %c0_5 = arith.constant 0 : index
    %6 = vector.load %arg2[%c8, %c0_5] : memref<72x16xf32, #tpu.memory_space<vmem>>, vector<8x16xf32>
    %cst_6 = arith.constant dense<0.000000e+00> : vector<324x16xf32>
    %7 = tpu.matmul %5, %6, %cst_6 {dimension_numbers = #tpu.dot_dimension_numbers<[1], [0], [0], [1], [0, 0, 1, 1], [], []>} : vector<324x8xf32>, vector<8x16xf32>, vector<324x16xf32> -> vector<324x16xf32>
    %8 = arith.addf %3, %7 : vector<324x16xf32>
    %c0_7 = arith.constant 0 : index
    %c7 = arith.constant 7 : index
    %c0_8 = arith.constant 0 : index
    %9 = vector.load %arg1[%c0_7, %c7, %c0_8] : memref<1x376x8xf32, #tpu.memory_space<vmem>>, vector<1x324x8xf32>
    %10 = vector.shape_cast %9 : vector<1x324x8xf32> to vector<324x8xf32>
    %c16 = arith.constant 16 : index
    %c0_9 = arith.constant 0 : index
    %11 = vector.load %arg2[%c16, %c0_9] : memref<72x16xf32, #tpu.memory_space<vmem>>, vector<8x16xf32>
    %cst_10 = arith.constant dense<0.000000e+00> : vector<324x16xf32>
    %12 = tpu.matmul %10, %11, %cst_10 {dimension_numbers = #tpu.dot_dimension_numbers<[1], [0], [0], [1], [0, 0, 1, 1], [], []>} : vector<324x8xf32>, vector<8x16xf32>, vector<324x16xf32> -> vector<324x16xf32>
    %13 = arith.addf %8, %12 : vector<324x16xf32>
    %c0_11 = arith.constant 0 : index
    %c23 = arith.constant 23 : index
    %c0_12 = arith.constant 0 : index
    %14 = vector.load %arg1[%c0_11, %c23, %c0_12] : memref<1x376x8xf32, #tpu.memory_space<vmem>>, vector<1x324x8xf32>
    %15 = vector.shape_cast %14 : vector<1x324x8xf32> to vector<324x8xf32>
    %c24 = arith.constant 24 : index
    %c0_13 = arith.constant 0 : index
    %16 = vector.load %arg2[%c24, %c0_13] : memref<72x16xf32, #tpu.memory_space<vmem>>, vector<8x16xf32>
    %cst_14 = arith.constant dense<0.000000e+00> : vector<324x16xf32>
    %17 = tpu.matmul %15, %16, %cst_14 {dimension_numbers = #tpu.dot_dimension_numbers<[1], [0], [0], [1], [0, 0, 1, 1], [], []>} : vector<324x8xf32>, vector<8x16xf32>, vector<324x16xf32> -> vector<324x16xf32>
    %18 = arith.addf %13, %17 : vector<324x16xf32>
    %c0_15 = arith.constant 0 : index
    %c24_16 = arith.constant 24 : index
    %c0_17 = arith.constant 0 : index
    %19 = vector.load %arg1[%c0_15, %c24_16, %c0_17] : memref<1x376x8xf32, #tpu.memory_space<vmem>>, vector<1x324x8xf32>
    %20 = vector.shape_cast %19 : vector<1x324x8xf32> to vector<324x8xf32>
    %c32 = arith.constant 32 : index
    %c0_18 = arith.constant 0 : index
    %21 = vector.load %arg2[%c32, %c0_18] : memref<72x16xf32, #tpu.memory_space<vmem>>, vector<8x16xf32>
    %cst_19 = arith.constant dense<0.000000e+00> : vector<324x16xf32>
    %22 = tpu.matmul %20, %21, %cst_19 {dimension_numbers = #tpu.dot_dimension_numbers<[1], [0], [0], [1], [0, 0, 1, 1], [], []>} : vector<324x8xf32>, vector<8x16xf32>, vector<324x16xf32> -> vector<324x16xf32>
    %23 = arith.addf %18, %22 : vector<324x16xf32>
    %c0_20 = arith.constant 0 : index
    %c25 = arith.constant 25 : index
    %c0_21 = arith.constant 0 : index
    %24 = vector.load %arg1[%c0_20, %c25, %c0_21] : memref<1x376x8xf32, #tpu.memory_space<vmem>>, vector<1x324x8xf32>
    %25 = vector.shape_cast %24 : vector<1x324x8xf32> to vector<324x8xf32>
    %c40 = arith.constant 40 : index
    %c0_22 = arith.constant 0 : index
    %26 = vector.load %arg2[%c40, %c0_22] : memref<72x16xf32, #tpu.memory_space<vmem>>, vector<8x16xf32>
    %cst_23 = arith.constant dense<0.000000e+00> : vector<324x16xf32>
    %27 = tpu.matmul %25, %26, %cst_23 {dimension_numbers = #tpu.dot_dimension_numbers<[1], [0], [0], [1], [0, 0, 1, 1], [], []>} : vector<324x8xf32>, vector<8x16xf32>, vector<324x16xf32> -> vector<324x16xf32>
    %28 = arith.addf %23, %27 : vector<324x16xf32>
    %c0_24 = arith.constant 0 : index
    %c41 = arith.constant 41 : index
    %c0_25 = arith.constant 0 : index
    %29 = vector.load %arg1[%c0_24, %c41, %c0_25] : memref<1x376x8xf32, #tpu.memory_space<vmem>>, vector<1x324x8xf32>
    %30 = vector.shape_cast %29 : vector<1x324x8xf32> to vector<324x8xf32>
    %c48 = arith.constant 48 : index
    %c0_26 = arith.constant 0 : index
    %31 = vector.load %arg2[%c48, %c0_26] : memref<72x16xf32, #tpu.memory_space<vmem>>, vector<8x16xf32>
    %cst_27 = arith.constant dense<0.000000e+00> : vector<324x16xf32>
    %32 = tpu.matmul %30, %31, %cst_27 {dimension_numbers = #tpu.dot_dimension_numbers<[1], [0], [0], [1], [0, 0, 1, 1], [], []>} : vector<324x8xf32>, vector<8x16xf32>, vector<324x16xf32> -> vector<324x16xf32>
    %33 = arith.addf %28, %32 : vector<324x16xf32>
    %c0_28 = arith.constant 0 : index
    %c42 = arith.constant 42 : index
    %c0_29 = arith.constant 0 : index
    %34 = vector.load %arg1[%c0_28, %c42, %c0_29] : memref<1x376x8xf32, #tpu.memory_space<vmem>>, vector<1x324x8xf32>
    %35 = vector.shape_cast %34 : vector<1x324x8xf32> to vector<324x8xf32>
    %c56 = arith.constant 56 : index
    %c0_30 = arith.constant 0 : index
    %36 = vector.load %arg2[%c56, %c0_30] : memref<72x16xf32, #tpu.memory_space<vmem>>, vector<8x16xf32>
    %cst_31 = arith.constant dense<0.000000e+00> : vector<324x16xf32>
    %37 = tpu.matmul %35, %36, %cst_31 {dimension_numbers = #tpu.dot_dimension_numbers<[1], [0], [0], [1], [0, 0, 1, 1], [], []>} : vector<324x8xf32>, vector<8x16xf32>, vector<324x16xf32> -> vector<324x16xf32>
    %38 = arith.addf %33, %37 : vector<324x16xf32>
    %c0_32 = arith.constant 0 : index
    %c43 = arith.constant 43 : index
    %c0_33 = arith.constant 0 : index
    %39 = vector.load %arg1[%c0_32, %c43, %c0_33] : memref<1x376x8xf32, #tpu.memory_space<vmem>>, vector<1x324x8xf32>
    %40 = vector.shape_cast %39 : vector<1x324x8xf32> to vector<324x8xf32>
    %c64 = arith.constant 64 : index
    %c0_34 = arith.constant 0 : index
    %41 = vector.load %arg2[%c64, %c0_34] : memref<72x16xf32, #tpu.memory_space<vmem>>, vector<8x16xf32>
    %cst_35 = arith.constant dense<0.000000e+00> : vector<324x16xf32>
    %42 = tpu.matmul %40, %41, %cst_35 {dimension_numbers = #tpu.dot_dimension_numbers<[1], [0], [0], [1], [0, 0, 1, 1], [], []>} : vector<324x8xf32>, vector<8x16xf32>, vector<324x16xf32> -> vector<324x16xf32>
    %43 = arith.addf %38, %42 : vector<324x16xf32>
    %c0_36 = arith.constant 0 : index
    %c0_37 = arith.constant 0 : index
    %44 = vector.load %arg3[%c0_36, %c0_37] : memref<1x16xf32, #tpu.memory_space<vmem>>, vector<1x16xf32>
    %45 = vector.broadcast %44 : vector<1x16xf32> to vector<324x16xf32>
    %46 = arith.addf %43, %45 : vector<324x16xf32>
    %cst_38 = arith.constant 0.000000e+00 : f32
    %47 = vector.broadcast %cst_38 : f32 to vector<324x16xf32>
    %48 = arith.maximumf %46, %47 : vector<324x16xf32>
    %c0_39 = arith.constant 0 : index
    %c0_40 = arith.constant 0 : index
    %49 = vector.load %arg11[%c0_39, %c0_40] : memref<324x1xf32, #tpu.memory_space<vmem>>, vector<324x1xf32>
    %50 = vector.broadcast %49 : vector<324x1xf32> to vector<324x16xf32>
    %51 = arith.mulf %48, %50 : vector<324x16xf32>
    %cst_41 = arith.constant 0.000000e+00 : f32
    %52 = vector.broadcast %cst_41 : f32 to vector<24x16xf32>
    %c0_42 = arith.constant 0 : index
    %c0_43 = arith.constant 0 : index
    %53 = vector.load %arg15[%c0_42, %c0_43] : memref<376x16xf32, #tpu.memory_space<vmem>>, vector<24x16xf32>
    tpu.vector_store %arg15[%c0_42, %c0_43], %52 {strides = array<i32>} : memref<376x16xf32, #tpu.memory_space<vmem>>, vector<24x16xf32>,
    %cst_44 = arith.constant 0.000000e+00 : f32
    %54 = vector.broadcast %cst_44 : f32 to vector<28x16xf32>
    %c348 = arith.constant 348 : index
    %c0_45 = arith.constant 0 : index
    %55 = vector.load %arg15[%c348, %c0_45] : memref<376x16xf32, #tpu.memory_space<vmem>>, vector<28x16xf32>
    tpu.vector_store %arg15[%c348, %c0_45], %54 {strides = array<i32>} : memref<376x16xf32, #tpu.memory_space<vmem>>, vector<28x16xf32>,
    %c24_46 = arith.constant 24 : index
    %c0_47 = arith.constant 0 : index
    %56 = vector.load %arg15[%c24_46, %c0_47] : memref<376x16xf32, #tpu.memory_space<vmem>>, vector<324x16xf32>
    tpu.vector_store %arg15[%c24_46, %c0_47], %51 {strides = array<i32>} : memref<376x16xf32, #tpu.memory_space<vmem>>, vector<324x16xf32>,
    %c5_48 = arith.constant 5 : index
    %c0_49 = arith.constant 0 : index
    %57 = vector.load %arg15[%c5_48, %c0_49] : memref<376x16xf32, #tpu.memory_space<vmem>>, vector<324x16xf32>
    %c0_50 = arith.constant 0 : index
    %c0_51 = arith.constant 0 : index
    %58 = vector.load %arg4[%c0_50, %c0_51] : memref<144x32xf32, #tpu.memory_space<vmem>>, vector<16x32xf32>
    %cst_52 = arith.constant dense<0.000000e+00> : vector<324x32xf32>
    %59 = tpu.matmul %57, %58, %cst_52 {dimension_numbers = #tpu.dot_dimension_numbers<[1], [0], [0], [1], [0, 0, 1, 1], [], []>} : vector<324x16xf32>, vector<16x32xf32>, vector<324x32xf32> -> vector<324x32xf32>
    %c6_53 = arith.constant 6 : index
    %c0_54 = arith.constant 0 : index
    %60 = vector.load %arg15[%c6_53, %c0_54] : memref<376x16xf32, #tpu.memory_space<vmem>>, vector<324x16xf32>
    %c16_55 = arith.constant 16 : index
    %c0_56 = arith.constant 0 : index
    %61 = vector.load %arg4[%c16_55, %c0_56] : memref<144x32xf32, #tpu.memory_space<vmem>>, vector<16x32xf32>
    %cst_57 = arith.constant dense<0.000000e+00> : vector<324x32xf32>
    %62 = tpu.matmul %60, %61, %cst_57 {dimension_numbers = #tpu.dot_dimension_numbers<[1], [0], [0], [1], [0, 0, 1, 1], [], []>} : vector<324x16xf32>, vector<16x32xf32>, vector<324x32xf32> -> vector<324x32xf32>
    %63 = arith.addf %59, %62 : vector<324x32xf32>
    %c7_58 = arith.constant 7 : index
    %c0_59 = arith.constant 0 : index
    %64 = vector.load %arg15[%c7_58, %c0_59] : memref<376x16xf32, #tpu.memory_space<vmem>>, vector<324x16xf32>
    %c32_60 = arith.constant 32 : index
    %c0_61 = arith.constant 0 : index
    %65 = vector.load %arg4[%c32_60, %c0_61] : memref<144x32xf32, #tpu.memory_space<vmem>>, vector<16x32xf32>
    %cst_62 = arith.constant dense<0.000000e+00> : vector<324x32xf32>
    %66 = tpu.matmul %64, %65, %cst_62 {dimension_numbers = #tpu.dot_dimension_numbers<[1], [0], [0], [1], [0, 0, 1, 1], [], []>} : vector<324x16xf32>, vector<16x32xf32>, vector<324x32xf32> -> vector<324x32xf32>
    %67 = arith.addf %63, %66 : vector<324x32xf32>
    %c23_63 = arith.constant 23 : index
    %c0_64 = arith.constant 0 : index
    %68 = vector.load %arg15[%c23_63, %c0_64] : memref<376x16xf32, #tpu.memory_space<vmem>>, vector<324x16xf32>
    %c48_65 = arith.constant 48 : index
    %c0_66 = arith.constant 0 : index
    %69 = vector.load %arg4[%c48_65, %c0_66] : memref<144x32xf32, #tpu.memory_space<vmem>>, vector<16x32xf32>
    %cst_67 = arith.constant dense<0.000000e+00> : vector<324x32xf32>
    %70 = tpu.matmul %68, %69, %cst_67 {dimension_numbers = #tpu.dot_dimension_numbers<[1], [0], [0], [1], [0, 0, 1, 1], [], []>} : vector<324x16xf32>, vector<16x32xf32>, vector<324x32xf32> -> vector<324x32xf32>
    %71 = arith.addf %67, %70 : vector<324x32xf32>
    %c24_68 = arith.constant 24 : index
    %c0_69 = arith.constant 0 : index
    %72 = vector.load %arg15[%c24_68, %c0_69] : memref<376x16xf32, #tpu.memory_space<vmem>>, vector<324x16xf32>
    %c64_70 = arith.constant 64 : index
    %c0_71 = arith.constant 0 : index
    %73 = vector.load %arg4[%c64_70, %c0_71] : memref<144x32xf32, #tpu.memory_space<vmem>>, vector<16x32xf32>
    %cst_72 = arith.constant dense<0.000000e+00> : vector<324x32xf32>
    %74 = tpu.matmul %72, %73, %cst_72 {dimension_numbers = #tpu.dot_dimension_numbers<[1], [0], [0], [1], [0, 0, 1, 1], [], []>} : vector<324x16xf32>, vector<16x32xf32>, vector<324x32xf32> -> vector<324x32xf32>
    %75 = arith.addf %71, %74 : vector<324x32xf32>
    %c25_73 = arith.constant 25 : index
    %c0_74 = arith.constant 0 : index
    %76 = vector.load %arg15[%c25_73, %c0_74] : memref<376x16xf32, #tpu.memory_space<vmem>>, vector<324x16xf32>
    %c80 = arith.constant 80 : index
    %c0_75 = arith.constant 0 : index
    %77 = vector.load %arg4[%c80, %c0_75] : memref<144x32xf32, #tpu.memory_space<vmem>>, vector<16x32xf32>
    %cst_76 = arith.constant dense<0.000000e+00> : vector<324x32xf32>
    %78 = tpu.matmul %76, %77, %cst_76 {dimension_numbers = #tpu.dot_dimension_numbers<[1], [0], [0], [1], [0, 0, 1, 1], [], []>} : vector<324x16xf32>, vector<16x32xf32>, vector<324x32xf32> -> vector<324x32xf32>
    %79 = arith.addf %75, %78 : vector<324x32xf32>
    %c41_77 = arith.constant 41 : index
    %c0_78 = arith.constant 0 : index
    %80 = vector.load %arg15[%c41_77, %c0_78] : memref<376x16xf32, #tpu.memory_space<vmem>>, vector<324x16xf32>
    %c96 = arith.constant 96 : index
    %c0_79 = arith.constant 0 : index
    %81 = vector.load %arg4[%c96, %c0_79] : memref<144x32xf32, #tpu.memory_space<vmem>>, vector<16x32xf32>
    %cst_80 = arith.constant dense<0.000000e+00> : vector<324x32xf32>
    %82 = tpu.matmul %80, %81, %cst_80 {dimension_numbers = #tpu.dot_dimension_numbers<[1], [0], [0], [1], [0, 0, 1, 1], [], []>} : vector<324x16xf32>, vector<16x32xf32>, vector<324x32xf32> -> vector<324x32xf32>
    %83 = arith.addf %79, %82 : vector<324x32xf32>
    %c42_81 = arith.constant 42 : index
    %c0_82 = arith.constant 0 : index
    %84 = vector.load %arg15[%c42_81, %c0_82] : memref<376x16xf32, #tpu.memory_space<vmem>>, vector<324x16xf32>
    %c112 = arith.constant 112 : index
    %c0_83 = arith.constant 0 : index
    %85 = vector.load %arg4[%c112, %c0_83] : memref<144x32xf32, #tpu.memory_space<vmem>>, vector<16x32xf32>
    %cst_84 = arith.constant dense<0.000000e+00> : vector<324x32xf32>
    %86 = tpu.matmul %84, %85, %cst_84 {dimension_numbers = #tpu.dot_dimension_numbers<[1], [0], [0], [1], [0, 0, 1, 1], [], []>} : vector<324x16xf32>, vector<16x32xf32>, vector<324x32xf32> -> vector<324x32xf32>
    %87 = arith.addf %83, %86 : vector<324x32xf32>
    %c43_85 = arith.constant 43 : index
    %c0_86 = arith.constant 0 : index
    %88 = vector.load %arg15[%c43_85, %c0_86] : memref<376x16xf32, #tpu.memory_space<vmem>>, vector<324x16xf32>
    %c128 = arith.constant 128 : index
    %c0_87 = arith.constant 0 : index
    %89 = vector.load %arg4[%c128, %c0_87] : memref<144x32xf32, #tpu.memory_space<vmem>>, vector<16x32xf32>
    %cst_88 = arith.constant dense<0.000000e+00> : vector<324x32xf32>
    %90 = tpu.matmul %88, %89, %cst_88 {dimension_numbers = #tpu.dot_dimension_numbers<[1], [0], [0], [1], [0, 0, 1, 1], [], []>} : vector<324x16xf32>, vector<16x32xf32>, vector<324x32xf32> -> vector<324x32xf32>
    %91 = arith.addf %87, %90 : vector<324x32xf32>
    %c0_89 = arith.constant 0 : index
    %c0_90 = arith.constant 0 : index
    %92 = vector.load %arg5[%c0_89, %c0_90] : memref<1x32xf32, #tpu.memory_space<vmem>>, vector<1x32xf32>
    %93 = vector.broadcast %92 : vector<1x32xf32> to vector<324x32xf32>
    %94 = arith.addf %91, %93 : vector<324x32xf32>
    %cst_91 = arith.constant 0.000000e+00 : f32
    %95 = vector.broadcast %cst_91 : f32 to vector<324x32xf32>
    %96 = arith.maximumf %94, %95 : vector<324x32xf32>
    %c0_92 = arith.constant 0 : index
    %c0_93 = arith.constant 0 : index
    %97 = vector.load %arg12[%c0_92, %c0_93] : memref<100x324xf32, #tpu.memory_space<vmem>>, vector<100x324xf32>
    %cst_94 = arith.constant dense<0.000000e+00> : vector<100x32xf32>
    %98 = tpu.matmul %97, %96, %cst_94 {dimension_numbers = #tpu.dot_dimension_numbers<[1], [0], [0], [1], [0, 0, 1, 1], [], []>} : vector<100x324xf32>, vector<324x32xf32>, vector<100x32xf32> -> vector<100x32xf32>
    %c0_95 = arith.constant 0 : index
    %c0_96 = arith.constant 0 : index
    %99 = vector.load %arg12[%c0_95, %c0_96] : memref<100x324xf32, #tpu.memory_space<vmem>>, vector<100x324xf32>
    %cst_97 = arith.constant dense<0.000000e+00> : vector<100x16xf32>
    %100 = tpu.matmul %99, %51, %cst_97 {dimension_numbers = #tpu.dot_dimension_numbers<[1], [0], [0], [1], [0, 0, 1, 1], [], []>} : vector<100x324xf32>, vector<324x16xf32>, vector<100x16xf32> -> vector<100x16xf32>
    %c0_98 = arith.constant 0 : index
    %c0_99 = arith.constant 0 : index
    %101 = vector.load %arg7[%c0_98, %c0_99] : memref<16x32xf32, #tpu.memory_space<vmem>>, vector<16x32xf32>
    %cst_100 = arith.constant dense<0.000000e+00> : vector<100x32xf32>
    %102 = tpu.matmul %100, %101, %cst_100 {dimension_numbers = #tpu.dot_dimension_numbers<[1], [0], [0], [1], [0, 0, 1, 1], [], []>} : vector<100x16xf32>, vector<16x32xf32>, vector<100x32xf32> -> vector<100x32xf32>
    %cst_101 = arith.constant 0.000000e+00 : f32
    %103 = vector.broadcast %cst_101 : f32 to vector<16x32xf32>
    %c0_102 = arith.constant 0 : index
    %c0_103 = arith.constant 0 : index
    %104 = vector.load %arg16[%c0_102, %c0_103] : memref<136x32xf32, #tpu.memory_space<vmem>>, vector<16x32xf32>
    tpu.vector_store %arg16[%c0_102, %c0_103], %103 {strides = array<i32>} : memref<136x32xf32, #tpu.memory_space<vmem>>, vector<16x32xf32>,
    %cst_104 = arith.constant 0.000000e+00 : f32
    %105 = vector.broadcast %cst_104 : f32 to vector<20x32xf32>
    %c116 = arith.constant 116 : index
    %c0_105 = arith.constant 0 : index
    %106 = vector.load %arg16[%c116, %c0_105] : memref<136x32xf32, #tpu.memory_space<vmem>>, vector<20x32xf32>
    tpu.vector_store %arg16[%c116, %c0_105], %105 {strides = array<i32>} : memref<136x32xf32, #tpu.memory_space<vmem>>, vector<20x32xf32>,
    %c16_106 = arith.constant 16 : index
    %c0_107 = arith.constant 0 : index
    %107 = vector.load %arg16[%c16_106, %c0_107] : memref<136x32xf32, #tpu.memory_space<vmem>>, vector<100x32xf32>
    tpu.vector_store %arg16[%c16_106, %c0_107], %98 {strides = array<i32>} : memref<136x32xf32, #tpu.memory_space<vmem>>, vector<100x32xf32>,
    %c5_108 = arith.constant 5 : index
    %c0_109 = arith.constant 0 : index
    %108 = vector.load %arg16[%c5_108, %c0_109] : memref<136x32xf32, #tpu.memory_space<vmem>>, vector<100x32xf32>
    %c0_110 = arith.constant 0 : index
    %c0_111 = arith.constant 0 : index
    %109 = vector.load %arg6[%c0_110, %c0_111] : memref<288x32xf32, #tpu.memory_space<vmem>>, vector<32x32xf32>
    %cst_112 = arith.constant dense<0.000000e+00> : vector<100x32xf32>
    %110 = tpu.matmul %108, %109, %cst_112 {dimension_numbers = #tpu.dot_dimension_numbers<[1], [0], [0], [1], [0, 0, 1, 1], [], []>} : vector<100x32xf32>, vector<32x32xf32>, vector<100x32xf32> -> vector<100x32xf32>
    %c6_113 = arith.constant 6 : index
    %c0_114 = arith.constant 0 : index
    %111 = vector.load %arg16[%c6_113, %c0_114] : memref<136x32xf32, #tpu.memory_space<vmem>>, vector<100x32xf32>
    %c32_115 = arith.constant 32 : index
    %c0_116 = arith.constant 0 : index
    %112 = vector.load %arg6[%c32_115, %c0_116] : memref<288x32xf32, #tpu.memory_space<vmem>>, vector<32x32xf32>
    %cst_117 = arith.constant dense<0.000000e+00> : vector<100x32xf32>
    %113 = tpu.matmul %111, %112, %cst_117 {dimension_numbers = #tpu.dot_dimension_numbers<[1], [0], [0], [1], [0, 0, 1, 1], [], []>} : vector<100x32xf32>, vector<32x32xf32>, vector<100x32xf32> -> vector<100x32xf32>
    %114 = arith.addf %110, %113 : vector<100x32xf32>
    %c7_118 = arith.constant 7 : index
    %c0_119 = arith.constant 0 : index
    %115 = vector.load %arg16[%c7_118, %c0_119] : memref<136x32xf32, #tpu.memory_space<vmem>>, vector<100x32xf32>
    %c64_120 = arith.constant 64 : index
    %c0_121 = arith.constant 0 : index
    %116 = vector.load %arg6[%c64_120, %c0_121] : memref<288x32xf32, #tpu.memory_space<vmem>>, vector<32x32xf32>
    %cst_122 = arith.constant dense<0.000000e+00> : vector<100x32xf32>
    %117 = tpu.matmul %115, %116, %cst_122 {dimension_numbers = #tpu.dot_dimension_numbers<[1], [0], [0], [1], [0, 0, 1, 1], [], []>} : vector<100x32xf32>, vector<32x32xf32>, vector<100x32xf32> -> vector<100x32xf32>
    %118 = arith.addf %114, %117 : vector<100x32xf32>
    %c15 = arith.constant 15 : index
    %c0_123 = arith.constant 0 : index
    %119 = vector.load %arg16[%c15, %c0_123] : memref<136x32xf32, #tpu.memory_space<vmem>>, vector<100x32xf32>
    %c96_124 = arith.constant 96 : index
    %c0_125 = arith.constant 0 : index
    %120 = vector.load %arg6[%c96_124, %c0_125] : memref<288x32xf32, #tpu.memory_space<vmem>>, vector<32x32xf32>
    %cst_126 = arith.constant dense<0.000000e+00> : vector<100x32xf32>
    %121 = tpu.matmul %119, %120, %cst_126 {dimension_numbers = #tpu.dot_dimension_numbers<[1], [0], [0], [1], [0, 0, 1, 1], [], []>} : vector<100x32xf32>, vector<32x32xf32>, vector<100x32xf32> -> vector<100x32xf32>
    %122 = arith.addf %118, %121 : vector<100x32xf32>
    %c16_127 = arith.constant 16 : index
    %c0_128 = arith.constant 0 : index
    %123 = vector.load %arg16[%c16_127, %c0_128] : memref<136x32xf32, #tpu.memory_space<vmem>>, vector<100x32xf32>
    %c128_129 = arith.constant 128 : index
    %c0_130 = arith.constant 0 : index
    %124 = vector.load %arg6[%c128_129, %c0_130] : memref<288x32xf32, #tpu.memory_space<vmem>>, vector<32x32xf32>
    %cst_131 = arith.constant dense<0.000000e+00> : vector<100x32xf32>
    %125 = tpu.matmul %123, %124, %cst_131 {dimension_numbers = #tpu.dot_dimension_numbers<[1], [0], [0], [1], [0, 0, 1, 1], [], []>} : vector<100x32xf32>, vector<32x32xf32>, vector<100x32xf32> -> vector<100x32xf32>
    %126 = arith.addf %122, %125 : vector<100x32xf32>
    %c17 = arith.constant 17 : index
    %c0_132 = arith.constant 0 : index
    %127 = vector.load %arg16[%c17, %c0_132] : memref<136x32xf32, #tpu.memory_space<vmem>>, vector<100x32xf32>
    %c160 = arith.constant 160 : index
    %c0_133 = arith.constant 0 : index
    %128 = vector.load %arg6[%c160, %c0_133] : memref<288x32xf32, #tpu.memory_space<vmem>>, vector<32x32xf32>
    %cst_134 = arith.constant dense<0.000000e+00> : vector<100x32xf32>
    %129 = tpu.matmul %127, %128, %cst_134 {dimension_numbers = #tpu.dot_dimension_numbers<[1], [0], [0], [1], [0, 0, 1, 1], [], []>} : vector<100x32xf32>, vector<32x32xf32>, vector<100x32xf32> -> vector<100x32xf32>
    %130 = arith.addf %126, %129 : vector<100x32xf32>
    %c25_135 = arith.constant 25 : index
    %c0_136 = arith.constant 0 : index
    %131 = vector.load %arg16[%c25_135, %c0_136] : memref<136x32xf32, #tpu.memory_space<vmem>>, vector<100x32xf32>
    %c192 = arith.constant 192 : index
    %c0_137 = arith.constant 0 : index
    %132 = vector.load %arg6[%c192, %c0_137] : memref<288x32xf32, #tpu.memory_space<vmem>>, vector<32x32xf32>
    %cst_138 = arith.constant dense<0.000000e+00> : vector<100x32xf32>
    %133 = tpu.matmul %131, %132, %cst_138 {dimension_numbers = #tpu.dot_dimension_numbers<[1], [0], [0], [1], [0, 0, 1, 1], [], []>} : vector<100x32xf32>, vector<32x32xf32>, vector<100x32xf32> -> vector<100x32xf32>
    %134 = arith.addf %130, %133 : vector<100x32xf32>
    %c26 = arith.constant 26 : index
    %c0_139 = arith.constant 0 : index
    %135 = vector.load %arg16[%c26, %c0_139] : memref<136x32xf32, #tpu.memory_space<vmem>>, vector<100x32xf32>
    %c224 = arith.constant 224 : index
    %c0_140 = arith.constant 0 : index
    %136 = vector.load %arg6[%c224, %c0_140] : memref<288x32xf32, #tpu.memory_space<vmem>>, vector<32x32xf32>
    %cst_141 = arith.constant dense<0.000000e+00> : vector<100x32xf32>
    %137 = tpu.matmul %135, %136, %cst_141 {dimension_numbers = #tpu.dot_dimension_numbers<[1], [0], [0], [1], [0, 0, 1, 1], [], []>} : vector<100x32xf32>, vector<32x32xf32>, vector<100x32xf32> -> vector<100x32xf32>
    %138 = arith.addf %134, %137 : vector<100x32xf32>
    %c27 = arith.constant 27 : index
    %c0_142 = arith.constant 0 : index
    %139 = vector.load %arg16[%c27, %c0_142] : memref<136x32xf32, #tpu.memory_space<vmem>>, vector<100x32xf32>
    %c256 = arith.constant 256 : index
    %c0_143 = arith.constant 0 : index
    %140 = vector.load %arg6[%c256, %c0_143] : memref<288x32xf32, #tpu.memory_space<vmem>>, vector<32x32xf32>
    %cst_144 = arith.constant dense<0.000000e+00> : vector<100x32xf32>
    %141 = tpu.matmul %139, %140, %cst_144 {dimension_numbers = #tpu.dot_dimension_numbers<[1], [0], [0], [1], [0, 0, 1, 1], [], []>} : vector<100x32xf32>, vector<32x32xf32>, vector<100x32xf32> -> vector<100x32xf32>
    %142 = arith.addf %138, %141 : vector<100x32xf32>
    %143 = arith.addf %142, %102 : vector<100x32xf32>
    %c0_145 = arith.constant 0 : index
    %c0_146 = arith.constant 0 : index
    %144 = vector.load %arg8[%c0_145, %c0_146] : memref<1x32xf32, #tpu.memory_space<vmem>>, vector<1x32xf32>
    %145 = vector.broadcast %144 : vector<1x32xf32> to vector<100x32xf32>
    %146 = arith.addf %143, %145 : vector<100x32xf32>
    %cst_147 = arith.constant 0.000000e+00 : f32
    %147 = vector.broadcast %cst_147 : f32 to vector<100x32xf32>
    %148 = arith.maximumf %146, %147 : vector<100x32xf32>
    %c0_148 = arith.constant 0 : index
    %c0_149 = arith.constant 0 : index
    %149 = vector.load %arg13[%c0_148, %c0_149] : memref<1x100xf32, #tpu.memory_space<vmem>>, vector<1x100xf32>
    %cst_150 = arith.constant dense<0.000000e+00> : vector<1x32xf32>
    %150 = tpu.matmul %149, %148, %cst_150 {dimension_numbers = #tpu.dot_dimension_numbers<[1], [0], [0], [1], [0, 0, 1, 1], [], []>} : vector<1x100xf32>, vector<100x32xf32>, vector<1x32xf32> -> vector<1x32xf32>
    %c0_151 = arith.constant 0 : index
    %c0_152 = arith.constant 0 : index
    %151 = vector.load %arg9[%c0_151, %c0_152] : memref<32x128xf32, #tpu.memory_space<vmem>>, vector<32x128xf32>
    %cst_153 = arith.constant dense<0.000000e+00> : vector<1x128xf32>
    %152 = tpu.matmul %150, %151, %cst_153 {dimension_numbers = #tpu.dot_dimension_numbers<[1], [0], [0], [1], [0, 0, 1, 1], [], []>} : vector<1x32xf32>, vector<32x128xf32>, vector<1x128xf32> -> vector<1x128xf32>
    %c0_154 = arith.constant 0 : index
    %c0_155 = arith.constant 0 : index
    %153 = vector.load %arg10[%c0_154, %c0_155] : memref<1x128xf32, #tpu.memory_space<vmem>>, vector<1x128xf32>
    %154 = arith.addf %152, %153 : vector<1x128xf32>
    %155 = vector.shape_cast %154 : vector<1x128xf32> to vector<1x1x128xf32>
    %156 = vector.broadcast %155 : vector<1x1x128xf32> to vector<1x8x128xf32>
    %c0_156 = arith.constant 0 : index
    %c0_157 = arith.constant 0 : index
    %c0_158 = arith.constant 0 : index
    %157 = vector.load %arg14[%c0_156, %c0_157, %c0_158] : memref<1x8x128xf32, #tpu.memory_space<vmem>>, vector<1x8x128xf32>
    tpu.vector_store %arg14[%c0_156, %c0_157, %c0_158], %156 {strides = array<i32>} : memref<1x8x128xf32, #tpu.memory_space<vmem>>, vector<1x8x128xf32>,
    return
  }
  func.func @transform_0(%arg0: i32) -> (i32, i32, i32) {
    %c0_i32 = arith.constant 0 : i32
    %c0_i32_0 = arith.constant 0 : i32
    %c0_i32_1 = arith.constant 0 : i32
    return %arg0, %c0_i32, %c0_i32_0 : i32, i32, i32
  }
  func.func @transform_1(%arg0: i32) -> (i32, i32) {
    %c0_i32 = arith.constant 0 : i32
    %c0_i32_0 = arith.constant 0 : i32
    %c0_i32_1 = arith.constant 0 : i32
    return %c0_i32, %c0_i32_0 : i32, i32
  }
  func.func @transform_2(%arg0: i32) -> (i32, i32) {
    %c0_i32 = arith.constant 0 : i32
    %c0_i32_0 = arith.constant 0 : i32
    %c0_i32_1 = arith.constant 0 : i32
    return %c0_i32, %c0_i32_0 : i32, i32
  }
  func.func @transform_3(%arg0: i32) -> (i32, i32) {
    %c0_i32 = arith.constant 0 : i32
    %c0_i32_0 = arith.constant 0 : i32
    %c0_i32_1 = arith.constant 0 : i32
    return %c0_i32, %c0_i32_0 : i32, i32
  }
  func.func @transform_4(%arg0: i32) -> (i32, i32) {
    %c0_i32 = arith.constant 0 : i32
    %c0_i32_0 = arith.constant 0 : i32
    %c0_i32_1 = arith.constant 0 : i32
    return %c0_i32, %c0_i32_0 : i32, i32
  }
  func.func @transform_5(%arg0: i32) -> (i32, i32) {
    %c0_i32 = arith.constant 0 : i32
    %c0_i32_0 = arith.constant 0 : i32
    %c0_i32_1 = arith.constant 0 : i32
    return %c0_i32, %c0_i32_0 : i32, i32
  }
  func.func @transform_6(%arg0: i32) -> (i32, i32) {
    %c0_i32 = arith.constant 0 : i32
    %c0_i32_0 = arith.constant 0 : i32
    %c0_i32_1 = arith.constant 0 : i32
    return %c0_i32, %c0_i32_0 : i32, i32
  }
  func.func @transform_7(%arg0: i32) -> (i32, i32) {
    %c0_i32 = arith.constant 0 : i32
    %c0_i32_0 = arith.constant 0 : i32
    %c0_i32_1 = arith.constant 0 : i32
    return %c0_i32, %c0_i32_0 : i32, i32
  }
  func.func @transform_8(%arg0: i32) -> (i32, i32) {
    %c0_i32 = arith.constant 0 : i32
    %c0_i32_0 = arith.constant 0 : i32
    %c0_i32_1 = arith.constant 0 : i32
    return %c0_i32, %c0_i32_0 : i32, i32
  }
  func.func @transform_9(%arg0: i32) -> (i32, i32) {
    %c0_i32 = arith.constant 0 : i32
    %c0_i32_0 = arith.constant 0 : i32
    %c0_i32_1 = arith.constant 0 : i32
    return %c0_i32, %c0_i32_0 : i32, i32
  }
  func.func @transform_10(%arg0: i32) -> (i32, i32) {
    %c0_i32 = arith.constant 0 : i32
    %c0_i32_0 = arith.constant 0 : i32
    %c0_i32_1 = arith.constant 0 : i32
    return %c0_i32, %c0_i32_0 : i32, i32
  }
  func.func @transform_11(%arg0: i32) -> (i32, i32) {
    %c0_i32 = arith.constant 0 : i32
    %c0_i32_0 = arith.constant 0 : i32
    %c0_i32_1 = arith.constant 0 : i32
    return %c0_i32, %c0_i32_0 : i32, i32
  }
  func.func @transform_12(%arg0: i32) -> (i32, i32) {
    %c0_i32 = arith.constant 0 : i32
    %c0_i32_0 = arith.constant 0 : i32
    %c0_i32_1 = arith.constant 0 : i32
    return %c0_i32, %c0_i32_0 : i32, i32
  }
  func.func @transform_13(%arg0: i32) -> (i32, i32, i32) {
    %c0_i32 = arith.constant 0 : i32
    %c0_i32_0 = arith.constant 0 : i32
    %c0_i32_1 = arith.constant 0 : i32
    return %arg0, %c0_i32, %c0_i32_0 : i32, i32, i32
  }
}

</mosaic_0001>

<llo_original>
// kernel: forward.1
$region0: #{forward.1}
  #allocation0 [shape = 'u32[]', space=smem, size = 0x4, offset = 0x4, fixed_abs, tag = 'smem constant byte address 0x4 - core index']
  #allocation1 [shape = 'u32[144,128]{1,0:T(1,128)}', space=vmem, size = 0x12000, scoped, tag = 'internal scratch']
  #allocation2 [shape = 'f32[376,16]{1,0:T(8,128)}', space=vmem, size = 0x2f000, scoped, tag = 'scratch operand']
  #allocation3 [shape = 'f32[136,32]{1,0:T(8,128)}', space=vmem, size = 0x11000, scoped, tag = 'scratch operand']
  %s0 = inlined_call_operand.vmem [shape: f32[2,376,8], index: 0, kind: input, shape index: {}]
  %s1 = inlined_call_operand.vmem [shape: f32[72,16], index: 1, kind: input, shape index: {}]
  %s2 = inlined_call_operand.vmem [shape: f32[1,16], index: 2, kind: input, shape index: {}]
  %s3 = inlined_call_operand.vmem [shape: f32[144,32], index: 3, kind: input, shape index: {}]
  %s4 = inlined_call_operand.vmem [shape: f32[1,32], index: 4, kind: input, shape index: {}]
  %s5 = inlined_call_operand.vmem [shape: f32[288,32], index: 5, kind: input, shape index: {}]
  %s6 = inlined_call_operand.vmem [shape: f32[16,32], index: 6, kind: input, shape index: {}]
  %s7 = inlined_call_operand.vmem [shape: f32[1,32], index: 7, kind: input, shape index: {}]
  %s8 = inlined_call_operand.vmem [shape: f32[32,128], index: 8, kind: input, shape index: {}]
  %s9 = inlined_call_operand.vmem [shape: f32[1,128], index: 9, kind: input, shape index: {}]
  %s10 = inlined_call_operand.vmem [shape: f32[324,1], index: 10, kind: input, shape index: {}]
  %s11 = inlined_call_operand.vmem [shape: f32[100,324], index: 11, kind: input, shape index: {}]
  %s12 = inlined_call_operand.vmem [shape: f32[1,100], index: 12, kind: input, shape index: {}]
  %s13 = inlined_call_operand.vmem [shape: f32[2,8,128], index: 13, kind: output, shape index: {}]
  %s14 = sld [smem:[#allocation0]]
  $region85: #{forward.1} parent=0
    _
  %s16 = ssub.s32 1, %s14
  %s17 = scalar_select 0, %s16, %s14
  loop: start=0, step=1, limit=4
  $region2: #{forward.1} parent=0 // loop_pre_header
    _
  $region3: #{forward.1} parent=0 // loop_header
    %s19 = sphi 0, %s23
    %p20 = scmp.ge.s32.totalorder %s19, 4
    %s29 = sphi 0, %s31
    %s32 = sphi 0, %s29
    %s33 = sphi 0, %s32
    %s49 = sphi 0, %s33
    %s53 = sphi 0, %s53
    %s55 = sphi 0, %s53
    %s56 = sphi 0, %s55
    %s70 = sphi 0, %s56
    %s74 = sphi 0, %s74
    %s76 = sphi 0, %s74
    %s77 = sphi 0, %s76
    %s91 = sphi 0, %s77
    %s95 = sphi 0, %s95
    %s97 = sphi 0, %s95
    %s98 = sphi 0, %s97
    %s112 = sphi 0, %s98
    %s116 = sphi 0, %s116
    %s118 = sphi 0, %s116
    %s119 = sphi 0, %s118
    %s133 = sphi 0, %s119
    %s137 = sphi 0, %s137
    %s139 = sphi 0, %s137
    %s140 = sphi 0, %s139
    %s154 = sphi 0, %s140
    %s158 = sphi 0, %s158
    %s160 = sphi 0, %s158
    %s161 = sphi 0, %s160
    %s175 = sphi 0, %s161
    %s179 = sphi 0, %s179
    %s181 = sphi 0, %s179
    %s182 = sphi 0, %s181
    %s196 = sphi 0, %s182
    %s200 = sphi 0, %s200
    %s202 = sphi 0, %s200
    %s203 = sphi 0, %s202
    %s217 = sphi 0, %s203
    %s221 = sphi 0, %s221
    %s223 = sphi 0, %s221
    %s224 = sphi 0, %s223
    %s238 = sphi 0, %s224
    %s242 = sphi 0, %s242
    %s244 = sphi 0, %s242
    %s245 = sphi 0, %s244
    %s259 = sphi 0, %s245
    %s263 = sphi 0, %s263
    %s265 = sphi 0, %s263
    %s266 = sphi 0, %s265
    %s280 = sphi 0, %s266
    %s284 = sphi 0, %s284
    %s286 = sphi 0, %s284
    %s287 = sphi 0, %s286
    %s301 = sphi 0, %s287
    %s307 = sphi 0, %s309
    %s310 = sphi 0, %s307
    %s311 = sphi 0, %s310
    %s327 = sphi 0, %s311
  $region4: #{forward.1} parent=0 // loop_header_branch
    %22 = sbr.rel (%p20) target = $region8
  $region5: #{forward.1} parent=0 // loop_body
    %s24 = ssub.s32 %s19, 1
    %s25 = ssub.s32 %s19, 2
    %s26 = sadd.s32 %s19, 1
    %s27 = ssub.s32 %s19, %s26
    %p28 = scmp.eq.s32.totalorder %s27, 0
    %s30 = sadd.s32 %s29, 1
    %s31 = scalar_select %p28, %s29, %s30
    %p34 = pneg %p28
    %p35 = scmp.eq.s32.totalorder %s19, 1
    %p36 = por %p34, %p35
    %p37 = scmp.ne.s32.totalorder %s29, %s32
    %p38 = scmp.eq.s32.totalorder %s19, 0
    %p39 = por %p37, %p38
    %p40 = scmp.ne.s32.totalorder %s29, %s32
    %p41 = scmp.eq.s32.totalorder %s24, 1
    %p42 = por %p40, %p41
    %p43 = scmp.ne.s32.totalorder %s32, %s33
    %p44 = scmp.eq.s32.totalorder %s24, 0
    %p45 = por %p43, %p44
    %p46 = scmp.ne.s32.totalorder %s32, %s33
    %p47 = scmp.eq.s32.totalorder %s25, 1
    %p48 = por %p46, %p47
    %p50 = scmp.ne.s32.totalorder %s33, %s49
    %p51 = scmp.eq.s32.totalorder %s25, 0
    %p52 = por %p50, %p51
    %s54 = sadd.s32 %s53, 1
    %p57 = scmp.eq.s32.totalorder %s19, 1
    %p58 = scmp.ne.s32.totalorder %s53, %s55
    %p59 = scmp.eq.s32.totalorder %s19, 0
    %p60 = por %p58, %p59
    %p61 = scmp.ne.s32.totalorder %s53, %s55
    %p62 = scmp.eq.s32.totalorder %s24, 1
    %p63 = por %p61, %p62
    %p64 = scmp.ne.s32.totalorder %s55, %s56
    %p65 = scmp.eq.s32.totalorder %s24, 0
    %p66 = por %p64, %p65
    %p67 = scmp.ne.s32.totalorder %s55, %s56
    %p68 = scmp.eq.s32.totalorder %s25, 1
    %p69 = por %p67, %p68
    %p71 = scmp.ne.s32.totalorder %s56, %s70
    %p72 = scmp.eq.s32.totalorder %s25, 0
    %p73 = por %p71, %p72
    %s75 = sadd.s32 %s74, 1
    %p78 = scmp.eq.s32.totalorder %s19, 1
    %p79 = scmp.ne.s32.totalorder %s74, %s76
    %p80 = scmp.eq.s32.totalorder %s19, 0
    %p81 = por %p79, %p80
    %p82 = scmp.ne.s32.totalorder %s74, %s76
    %p83 = scmp.eq.s32.totalorder %s24, 1
    %p84 = por %p82, %p83
    %p85 = scmp.ne.s32.totalorder %s76, %s77
    %p86 = scmp.eq.s32.totalorder %s24, 0
    %p87 = por %p85, %p86
    %p88 = scmp.ne.s32.totalorder %s76, %s77
    %p89 = scmp.eq.s32.totalorder %s25, 1
    %p90 = por %p88, %p89
    %p92 = scmp.ne.s32.totalorder %s77, %s91
    %p93 = scmp.eq.s32.totalorder %s25, 0
    %p94 = por %p92, %p93
    %s96 = sadd.s32 %s95, 1
    %p99 = scmp.eq.s32.totalorder %s19, 1
    %p100 = scmp.ne.s32.totalorder %s95, %s97
    %p101 = scmp.eq.s32.totalorder %s19, 0
    %p102 = por %p100, %p101
    %p103 = scmp.ne.s32.totalorder %s95, %s97
    %p104 = scmp.eq.s32.totalorder %s24, 1
    %p105 = por %p103, %p104
    %p106 = scmp.ne.s32.totalorder %s97, %s98
    %p107 = scmp.eq.s32.totalorder %s24, 0
    %p108 = por %p106, %p107
    %p109 = scmp.ne.s32.totalorder %s97, %s98
    %p110 = scmp.eq.s32.totalorder %s25, 1
    %p111 = por %p109, %p110
    %p113 = scmp.ne.s32.totalorder %s98, %s112
    %p114 = scmp.eq.s32.totalorder %s25, 0
    %p115 = por %p113, %p114
    %s117 = sadd.s32 %s116, 1
    %p120 = scmp.eq.s32.totalorder %s19, 1
    %p121 = scmp.ne.s32.totalorder %s116, %s118
    %p122 = scmp.eq.s32.totalorder %s19, 0
    %p123 = por %p121, %p122
    %p124 = scmp.ne.s32.totalorder %s116, %s118
    %p125 = scmp.eq.s32.totalorder %s24, 1
    %p126 = por %p124, %p125
    %p127 = scmp.ne.s32.totalorder %s118, %s119
    %p128 = scmp.eq.s32.totalorder %s24, 0
    %p129 = por %p127, %p128
    %p130 = scmp.ne.s32.totalorder %s118, %s119
    %p131 = scmp.eq.s32.totalorder %s25, 1
    %p132 = por %p130, %p131
    %p134 = scmp.ne.s32.totalorder %s119, %s133
    %p135 = scmp.eq.s32.totalorder %s25, 0
    %p136 = por %p134, %p135
    %s138 = sadd.s32 %s137, 1
    %p141 = scmp.eq.s32.totalorder %s19, 1
    %p142 = scmp.ne.s32.totalorder %s137, %s139
    %p143 = scmp.eq.s32.totalorder %s19, 0
    %p144 = por %p142, %p143
    %p145 = scmp.ne.s32.totalorder %s137, %s139
    %p146 = scmp.eq.s32.totalorder %s24, 1
    %p147 = por %p145, %p146
    %p148 = scmp.ne.s32.totalorder %s139, %s140
    %p149 = scmp.eq.s32.totalorder %s24, 0
    %p150 = por %p148, %p149
    %p151 = scmp.ne.s32.totalorder %s139, %s140
    %p152 = scmp.eq.s32.totalorder %s25, 1
    %p153 = por %p151, %p152
    %p155 = scmp.ne.s32.totalorder %s140, %s154
    %p156 = scmp.eq.s32.totalorder %s25, 0
    %p157 = por %p155, %p156
    %s159 = sadd.s32 %s158, 1
    %p162 = scmp.eq.s32.totalorder %s19, 1
    %p163 = scmp.ne.s32.totalorder %s158, %s160
    %p164 = scmp.eq.s32.totalorder %s19, 0
    %p165 = por %p163, %p164
    %p166 = scmp.ne.s32.totalorder %s158, %s160
    %p167 = scmp.eq.s32.totalorder %s24, 1
    %p168 = por %p166, %p167
    %p169 = scmp.ne.s32.totalorder %s160, %s161
    %p170 = scmp.eq.s32.totalorder %s24, 0
    %p171 = por %p169, %p170
    %p172 = scmp.ne.s32.totalorder %s160, %s161
    %p173 = scmp.eq.s32.totalorder %s25, 1
    %p174 = por %p172, %p173
    %p176 = scmp.ne.s32.totalorder %s161, %s175
    %p177 = scmp.eq.s32.totalorder %s25, 0
    %p178 = por %p176, %p177
    %s180 = sadd.s32 %s179, 1
    %p183 = scmp.eq.s32.totalorder %s19, 1
    %p184 = scmp.ne.s32.totalorder %s179, %s181
    %p185 = scmp.eq.s32.totalorder %s19, 0
    %p186 = por %p184, %p185
    %p187 = scmp.ne.s32.totalorder %s179, %s181
    %p188 = scmp.eq.s32.totalorder %s24, 1
    %p189 = por %p187, %p188
    %p190 = scmp.ne.s32.totalorder %s181, %s182
    %p191 = scmp.eq.s32.totalorder %s24, 0
    %p192 = por %p190, %p191
    %p193 = scmp.ne.s32.totalorder %s181, %s182
    %p194 = scmp.eq.s32.totalorder %s25, 1
    %p195 = por %p193, %p194
    %p197 = scmp.ne.s32.totalorder %s182, %s196
    %p198 = scmp.eq.s32.totalorder %s25, 0
    %p199 = por %p197, %p198
    %s201 = sadd.s32 %s200, 1
    %p204 = scmp.eq.s32.totalorder %s19, 1
    %p205 = scmp.ne.s32.totalorder %s200, %s202
    %p206 = scmp.eq.s32.totalorder %s19, 0
    %p207 = por %p205, %p206
    %p208 = scmp.ne.s32.totalorder %s200, %s202
    %p209 = scmp.eq.s32.totalorder %s24, 1
    %p210 = por %p208, %p209
    %p211 = scmp.ne.s32.totalorder %s202, %s203
    %p212 = scmp.eq.s32.totalorder %s24, 0
    %p213 = por %p211, %p212
    %p214 = scmp.ne.s32.totalorder %s202, %s203
    %p215 = scmp.eq.s32.totalorder %s25, 1
    %p216 = por %p214, %p215
    %p218 = scmp.ne.s32.totalorder %s203, %s217
    %p219 = scmp.eq.s32.totalorder %s25, 0
    %p220 = por %p218, %p219
    %s222 = sadd.s32 %s221, 1
    %p225 = scmp.eq.s32.totalorder %s19, 1
    %p226 = scmp.ne.s32.totalorder %s221, %s223
    %p227 = scmp.eq.s32.totalorder %s19, 0
    %p228 = por %p226, %p227
    %p229 = scmp.ne.s32.totalorder %s221, %s223
    %p230 = scmp.eq.s32.totalorder %s24, 1
    %p231 = por %p229, %p230
    %p232 = scmp.ne.s32.totalorder %s223, %s224
    %p233 = scmp.eq.s32.totalorder %s24, 0
    %p234 = por %p232, %p233
    %p235 = scmp.ne.s32.totalorder %s223, %s224
    %p236 = scmp.eq.s32.totalorder %s25, 1
    %p237 = por %p235, %p236
    %p239 = scmp.ne.s32.totalorder %s224, %s238
    %p240 = scmp.eq.s32.totalorder %s25, 0
    %p241 = por %p239, %p240
    %s243 = sadd.s32 %s242, 1
    %p246 = scmp.eq.s32.totalorder %s19, 1
    %p247 = scmp.ne.s32.totalorder %s242, %s244
    %p248 = scmp.eq.s32.totalorder %s19, 0
    %p249 = por %p247, %p248
    %p250 = scmp.ne.s32.totalorder %s242, %s244
    %p251 = scmp.eq.s32.totalorder %s24, 1
    %p252 = por %p250, %p251
    %p253 = scmp.ne.s32.totalorder %s244, %s245
    %p254 = scmp.eq.s32.totalorder %s24, 0
    %p255 = por %p253, %p254
    %p256 = scmp.ne.s32.totalorder %s244, %s245
    %p257 = scmp.eq.s32.totalorder %s25, 1
    %p258 = por %p256, %p257
    %p260 = scmp.ne.s32.totalorder %s245, %s259
    %p261 = scmp.eq.s32.totalorder %s25, 0
    %p262 = por %p260, %p261
    %s264 = sadd.s32 %s263, 1
    %p267 = scmp.eq.s32.totalorder %s19, 1
    %p268 = scmp.ne.s32.totalorder %s263, %s265
    %p269 = scmp.eq.s32.totalorder %s19, 0
    %p270 = por %p268, %p269
    %p271 = scmp.ne.s32.totalorder %s263, %s265
    %p272 = scmp.eq.s32.totalorder %s24, 1
    %p273 = por %p271, %p272
    %p274 = scmp.ne.s32.totalorder %s265, %s266
    %p275 = scmp.eq.s32.totalorder %s24, 0
    %p276 = por %p274, %p275
    %p277 = scmp.ne.s32.totalorder %s265, %s266
    %p278 = scmp.eq.s32.totalorder %s25, 1
    %p279 = por %p277, %p278
    %p281 = scmp.ne.s32.totalorder %s266, %s280
    %p282 = scmp.eq.s32.totalorder %s25, 0
    %p283 = por %p281, %p282
    %s285 = sadd.s32 %s284, 1
    %p288 = scmp.eq.s32.totalorder %s19, 1
    %p289 = scmp.ne.s32.totalorder %s284, %s286
    %p290 = scmp.eq.s32.totalorder %s19, 0
    %p291 = por %p289, %p290
    %p292 = scmp.ne.s32.totalorder %s284, %s286
    %p293 = scmp.eq.s32.totalorder %s24, 1
    %p294 = por %p292, %p293
    %p295 = scmp.ne.s32.totalorder %s286, %s287
    %p296 = scmp.eq.s32.totalorder %s24, 0
    %p297 = por %p295, %p296
    %p298 = scmp.ne.s32.totalorder %s286, %s287
    %p299 = scmp.eq.s32.totalorder %s25, 1
    %p300 = por %p298, %p299
    %p302 = scmp.ne.s32.totalorder %s287, %s301
    %p303 = scmp.eq.s32.totalorder %s25, 0
    %p304 = por %p302, %p303
    %s305 = ssub.s32 %s19, %s26
    %p306 = scmp.eq.s32.totalorder %s305, 0
    %s308 = sadd.s32 %s307, 1
    %s309 = scalar_select %p306, %s307, %s308
    %p312 = pneg %p306
    %p313 = scmp.eq.s32.totalorder %s19, 1
    %p314 = por %p312, %p313
    %p315 = scmp.ne.s32.totalorder %s307, %s310
    %p316 = scmp.eq.s32.totalorder %s19, 0
    %p317 = por %p315, %p316
    %p318 = scmp.ne.s32.totalorder %s307, %s310
    %p319 = scmp.eq.s32.totalorder %s24, 1
    %p320 = por %p318, %p319
    %p321 = scmp.ne.s32.totalorder %s310, %s311
    %p322 = scmp.eq.s32.totalorder %s24, 0
    %p323 = por %p321, %p322
    %p324 = scmp.ne.s32.totalorder %s310, %s311
    %p325 = scmp.eq.s32.totalorder %s25, 1
    %p326 = por %p324, %p325
    %p328 = scmp.ne.s32.totalorder %s311, %s327
    %p329 = scmp.eq.s32.totalorder %s25, 0
    %p330 = por %p328, %p329
    %p331 = scmp.le.s32.totalorder 1, %s19
    %p332 = scmp.lt.s32.totalorder %s19, 3
    %p333 = pnand %p331, %p332
    %p334 = pneg %p333
    // Predicated region
    $region9: #{forward.1} parent=5 // pred_check
      _
    $region10: #{forward.1} parent=5 // pred_check_branch
      %336 = sbr.rel (%p333) target = $region12
    $region11: #{forward.1} parent=5 // pred_region
      %s337 = ssub.s32 %s19, 1
      // Predicated region
      $region13: #{forward.1} parent=11 // pred_check
        %p338 = pneg %p66
      $region14: #{forward.1} parent=11 // pred_check_branch
        %340 = sbr.rel (%p338) target = $region16
      $region15: #{forward.1} parent=11 // pred_region
        _
      $region16: #{forward.1} parent=11 // pred_fallthru
        _
      // Predicated region
      $region17: #{forward.1} parent=11 // pred_check
        %p341 = pneg %p87
      $region18: #{forward.1} parent=11 // pred_check_branch
        %343 = sbr.rel (%p341) target = $region20
      $region19: #{forward.1} parent=11 // pred_region
        _
      $region20: #{forward.1} parent=11 // pred_fallthru
        _
      // Predicated region
      $region21: #{forward.1} parent=11 // pred_check
        %p344 = pneg %p108
      $region22: #{forward.1} parent=11 // pred_check_branch
        %346 = sbr.rel (%p344) target = $region24
      $region23: #{forward.1} parent=11 // pred_region
        _
      $region24: #{forward.1} parent=11 // pred_fallthru
        _
      // Predicated region
      $region25: #{forward.1} parent=11 // pred_check
        %p347 = pneg %p129
      $region26: #{forward.1} parent=11 // pred_check_branch
        %349 = sbr.rel (%p347) target = $region28
      $region27: #{forward.1} parent=11 // pred_region
        _
      $region28: #{forward.1} parent=11 // pred_fallthru
        _
      // Predicated region
      $region29: #{forward.1} parent=11 // pred_check
        %p350 = pneg %p150
      $region30: #{forward.1} parent=11 // pred_check_branch
        %352 = sbr.rel (%p350) target = $region32
      $region31: #{forward.1} parent=11 // pred_region
        _
      $region32: #{forward.1} parent=11 // pred_fallthru
        _
      // Predicated region
      $region33: #{forward.1} parent=11 // pred_check
        %p353 = pneg %p171
      $region34: #{forward.1} parent=11 // pred_check_branch
        %355 = sbr.rel (%p353) target = $region36
      $region35: #{forward.1} parent=11 // pred_region
        _
      $region36: #{forward.1} parent=11 // pred_fallthru
        _
      // Predicated region
      $region37: #{forward.1} parent=11 // pred_check
        %p356 = pneg %p192
      $region38: #{forward.1} parent=11 // pred_check_branch
        %358 = sbr.rel (%p356) target = $region40
      $region39: #{forward.1} parent=11 // pred_region
        _
      $region40: #{forward.1} parent=11 // pred_fallthru
        _
      // Predicated region
      $region41: #{forward.1} parent=11 // pred_check
        %p359 = pneg %p213
      $region42: #{forward.1} parent=11 // pred_check_branch
        %361 = sbr.rel (%p359) target = $region44
      $region43: #{forward.1} parent=11 // pred_region
        _
      $region44: #{forward.1} parent=11 // pred_fallthru
        _
      // Predicated region
      $region45: #{forward.1} parent=11 // pred_check
        %p362 = pneg %p234
      $region46: #{forward.1} parent=11 // pred_check_branch
        %364 = sbr.rel (%p362) target = $region48
      $region47: #{forward.1} parent=11 // pred_region
        _
      $region48: #{forward.1} parent=11 // pred_fallthru
        _
      // Predicated region
      $region49: #{forward.1} parent=11 // pred_check
        %p365 = pneg %p255
      $region50: #{forward.1} parent=11 // pred_check_branch
        %367 = sbr.rel (%p365) target = $region52
      $region51: #{forward.1} parent=11 // pred_region
        _
      $region52: #{forward.1} parent=11 // pred_fallthru
        _
      // Predicated region
      $region53: #{forward.1} parent=11 // pred_check
        %p368 = pneg %p276
      $region54: #{forward.1} parent=11 // pred_check_branch
        %370 = sbr.rel (%p368) target = $region56
      $region55: #{forward.1} parent=11 // pred_region
        _
      $region56: #{forward.1} parent=11 // pred_fallthru
        _
      // Predicated region
      $region57: #{forward.1} parent=11 // pred_check
        %p371 = pneg %p297
      $region58: #{forward.1} parent=11 // pred_check_branch
        %373 = sbr.rel (%p371) target = $region60
      $region59: #{forward.1} parent=11 // pred_region
        _
      $region60: #{forward.1} parent=11 // pred_fallthru
        _
    $region12: #{forward.1} parent=5 // pred_fallthru
      _
    %p374 = scmp.lt.s32.totalorder %s19, 2
    // Predicated region
    $region61: #{forward.1} parent=5 // pred_check
      %p375 = pneg %p374
    $region62: #{forward.1} parent=5 // pred_check_branch
      %377 = sbr.rel (%p375) target = $region64
    $region63: #{forward.1} parent=5 // pred_region
      // Predicated region
      $region65: #{forward.1} parent=63 // pred_check
        %p378 = pneg %p39
      $region66: #{forward.1} parent=63 // pred_check_branch
        %380 = sbr.rel (%p378) target = $region68
      $region67: #{forward.1} parent=63 // pred_region
        %p381 = scmp.lt.s32.totalorder %s19, 1
        %s382 = scalar_select %p381, %s19, 1
        %s383 = smul.addr %s382, 47
        %s384 = smul.addr %s383, 8
        %s385 = scalar_lea.vmem %s0, %s384
      $region68: #{forward.1} parent=63 // pred_fallthru
        _
    $region64: #{forward.1} parent=5 // pred_fallthru
      _
    %p386 = scmp.le.s32.totalorder 1, %s19
    %p387 = scmp.lt.s32.totalorder %s19, 3
    %p388 = pnand %p386, %p387
    %p389 = pneg %p388
    // Predicated region
    $region69: #{forward.1} parent=5 // pred_check
      _
    $region70: #{forward.1} parent=5 // pred_check_branch
      %391 = sbr.rel (%p388) target = $region72
    $region71: #{forward.1} parent=5 // pred_region
      %s392 = ssub.s32 %s19, 1
      %p393 = scmp.lt.s32.totalorder %s24, 1
      %s394 = scalar_select %p393, %s24, 1
      %s395 = smul.addr %s394, 47
      %s396 = smul.addr %s395, 8
      %s397 = scalar_lea.vmem %s0, %s396
      %p398 = pneg %p45
      %p399 = pneg %p42
      %p400 = pneg %p66
      %p401 = pneg %p63
      %p402 = pneg %p87
      %p403 = pneg %p84
      %p404 = pneg %p108
      %p405 = pneg %p105
      %p406 = pneg %p129
      %p407 = pneg %p126
      %p408 = pneg %p150
      %p409 = pneg %p147
      %p410 = pneg %p171
      %p411 = pneg %p168
      %p412 = pneg %p192
      %p413 = pneg %p189
      %p414 = pneg %p213
      %p415 = pneg %p210
      %p416 = pneg %p234
      %p417 = pneg %p231
      %p418 = pneg %p255
      %p419 = pneg %p252
      %p420 = pneg %p276
      %p421 = pneg %p273
      %p422 = pneg %p297
      %p423 = pneg %p294
      %p424 = pneg %p323
      %p425 = pneg %p320
      %p426 = scmp.lt.s32.totalorder %s24, 1
      %s427 = scalar_select %p426, %s24, 1
      %s428 = smul.addr %s427, 8
      %s429 = scalar_lea.vmem %s13, %s428
      %p430 = scmp.lt.s32.totalorder %s24, 1
      %s431 = scalar_select %p430, %s24, 1
      %s432 = smul.addr %s431, 47
      %s433 = smul.addr %s432, 8
      %s434 = scalar_lea.vmem %s0, %s433
      %p435 = scmp.lt.s32.totalorder %s24, 1
      %s436 = scalar_select %p435, %s24, 1
      %s437 = smul.addr %s436, 8
      %s438 = scalar_lea.vmem %s13, %s437
      %v439 = vld [vmem:[%s434 + $0x5] sm:$0xff]
      %v440 = vld [vmem:[%s434 + $0xd] sm:$0xff]
      %v441 = vld [vmem:[%s434 + $0x15] sm:$0xff]
      %v442 = vld [vmem:[%s434 + $0x1d] sm:$0xff]
      %v443 = vld [vmem:[%s434 + $0x25] sm:$0xff]
      %v444 = vld [vmem:[%s434 + $0x2d] sm:$0xff]
      %v445 = vld [vmem:[%s434 + $0x35] sm:$0xff]
      %v446 = vld [vmem:[%s434 + $0x3d] sm:$0xff]
      %v447 = vld [vmem:[%s434 + $0x45] sm:$0xff]
      %v448 = vld [vmem:[%s434 + $0x4d] sm:$0xff]
      %v449 = vld [vmem:[%s434 + $0x55] sm:$0xff]
      %v450 = vld [vmem:[%s434 + $0x5d] sm:$0xff]
      %v451 = vld [vmem:[%s434 + $0x65] sm:$0xff]
      %v452 = vld [vmem:[%s434 + $0x6d] sm:$0xff]
      %v453 = vld [vmem:[%s434 + $0x75] sm:$0xff]
      %v454 = vld [vmem:[%s434 + $0x7d] sm:$0xff]
      %v455 = vld [vmem:[%s434 + $0x85] sm:$0xff]
      %v456 = vld [vmem:[%s434 + $0x8d] sm:$0xff]
      %v457 = vld [vmem:[%s434 + $0x95] sm:$0xff]
      %v458 = vld [vmem:[%s434 + $0x9d] sm:$0xff]
      %v459 = vld [vmem:[%s434 + $0xa5] sm:$0xff]
      %v460 = vld [vmem:[%s434 + $0xad] sm:$0xff]
      %v461 = vld [vmem:[%s434 + $0xb5] sm:$0xff]
      %v462 = vld [vmem:[%s434 + $0xbd] sm:$0xff]
      %v463 = vld [vmem:[%s434 + $0xc5] sm:$0xff]
      %v464 = vld [vmem:[%s434 + $0xcd] sm:$0xff]
      %v465 = vld [vmem:[%s434 + $0xd5] sm:$0xff]
      %v466 = vld [vmem:[%s434 + $0xdd] sm:$0xff]
      %v467 = vld [vmem:[%s434 + $0xe5] sm:$0xff]
      %v468 = vld [vmem:[%s434 + $0xed] sm:$0xff]
      %v469 = vld [vmem:[%s434 + $0xf5] sm:$0xff]
      %v470 = vld [vmem:[%s434 + $0xfd] sm:$0xff]
      %v471 = vld [vmem:[%s434 + $0x105] sm:$0xff]
      %v472 = vld [vmem:[%s434 + $0x10d] sm:$0xff]
      %v473 = vld [vmem:[%s434 + $0x115] sm:$0xff]
      %v474 = vld [vmem:[%s434 + $0x11d] sm:$0xff]
      %v475 = vld [vmem:[%s434 + $0x125] sm:$0xff]
      %v476 = vld [vmem:[%s434 + $0x12d] sm:$0xff]
      %v477 = vld [vmem:[%s434 + $0x135] sm:$0xff]
      %v478 = vld [vmem:[%s434 + $0x13d] sm:$0xff]
      %v479 = vld [vmem:[%s434 + $0x145] sm:$0xf]
      %v480 = vld [vmem:[%s1] sm:$0xff]
      %v481 = vld [vmem:[%s434 + $0x6] sm:$0xff]
      %v482 = vld [vmem:[%s434 + $0xe] sm:$0xff]
      %v483 = vld [vmem:[%s434 + $0x16] sm:$0xff]
      %v484 = vld [vmem:[%s434 + $0x1e] sm:$0xff]
      %v485 = vld [vmem:[%s434 + $0x26] sm:$0xff]
      %v486 = vld [vmem:[%s434 + $0x2e] sm:$0xff]
      %v487 = vld [vmem:[%s434 + $0x36] sm:$0xff]
      %v488 = vld [vmem:[%s434 + $0x3e] sm:$0xff]
      %v489 = vld [vmem:[%s434 + $0x46] sm:$0xff]
      %v490 = vld [vmem:[%s434 + $0x4e] sm:$0xff]
      %v491 = vld [vmem:[%s434 + $0x56] sm:$0xff]
      %v492 = vld [vmem:[%s434 + $0x5e] sm:$0xff]
      %v493 = vld [vmem:[%s434 + $0x66] sm:$0xff]
      %v494 = vld [vmem:[%s434 + $0x6e] sm:$0xff]
      %v495 = vld [vmem:[%s434 + $0x76] sm:$0xff]
      %v496 = vld [vmem:[%s434 + $0x7e] sm:$0xff]
      %v497 = vld [vmem:[%s434 + $0x86] sm:$0xff]
      %v498 = vld [vmem:[%s434 + $0x8e] sm:$0xff]
      %v499 = vld [vmem:[%s434 + $0x96] sm:$0xff]
      %v500 = vld [vmem:[%s434 + $0x9e] sm:$0xff]
      %v501 = vld [vmem:[%s434 + $0xa6] sm:$0xff]
      %v502 = vld [vmem:[%s434 + $0xae] sm:$0xff]
      %v503 = vld [vmem:[%s434 + $0xb6] sm:$0xff]
      %v504 = vld [vmem:[%s434 + $0xbe] sm:$0xff]
      %v505 = vld [vmem:[%s434 + $0xc6] sm:$0xff]
      %v506 = vld [vmem:[%s434 + $0xce] sm:$0xff]
      %v507 = vld [vmem:[%s434 + $0xd6] sm:$0xff]
      %v508 = vld [vmem:[%s434 + $0xde] sm:$0xff]
      %v509 = vld [vmem:[%s434 + $0xe6] sm:$0xff]
      %v510 = vld [vmem:[%s434 + $0xee] sm:$0xff]
      %v511 = vld [vmem:[%s434 + $0xf6] sm:$0xff]
      %v512 = vld [vmem:[%s434 + $0xfe] sm:$0xff]
      %v513 = vld [vmem:[%s434 + $0x106] sm:$0xff]
      %v514 = vld [vmem:[%s434 + $0x10e] sm:$0xff]
      %v515 = vld [vmem:[%s434 + $0x116] sm:$0xff]
      %v516 = vld [vmem:[%s434 + $0x11e] sm:$0xff]
      %v517 = vld [vmem:[%s434 + $0x126] sm:$0xff]
      %v518 = vld [vmem:[%s434 + $0x12e] sm:$0xff]
      %v519 = vld [vmem:[%s434 + $0x136] sm:$0xff]
      %v520 = vld [vmem:[%s434 + $0x13e] sm:$0xff]
      %v521 = vld [vmem:[%s434 + $0x146] sm:$0xf]
      %v522 = vld [vmem:[%s1 + $0x8] sm:$0xff]
      %vm523 = vcmask 64512
      %v525 = vsel %vm523, %v481, 0
      %v528 = vsel %vm523, %v482, 0
      %v531 = vsel %vm523, %v483, 0
      %v534 = vsel %vm523, %v484, 0
      %v537 = vsel %vm523, %v485, 0
      %v540 = vsel %vm523, %v486, 0
      %v543 = vsel %vm523, %v487, 0
      %v546 = vsel %vm523, %v488, 0
      %v549 = vsel %vm523, %v489, 0
      %v552 = vsel %vm523, %v490, 0
      %v555 = vsel %vm523, %v491, 0
      %v558 = vsel %vm523, %v492, 0
      %v561 = vsel %vm523, %v493, 0
      %v564 = vsel %vm523, %v494, 0
      %v567 = vsel %vm523, %v495, 0
      %v570 = vsel %vm523, %v496, 0
      %v573 = vsel %vm523, %v497, 0
      %v576 = vsel %vm523, %v498, 0
      %v579 = vsel %vm523, %v499, 0
      %v582 = vsel %vm523, %v500, 0
      %v585 = vsel %vm523, %v501, 0
      %v588 = vsel %vm523, %v502, 0
      %v591 = vsel %vm523, %v503, 0
      %v594 = vsel %vm523, %v504, 0
      %v597 = vsel %vm523, %v505, 0
      %v600 = vsel %vm523, %v506, 0
      %v603 = vsel %vm523, %v507, 0
      %v606 = vsel %vm523, %v508, 0
      %v609 = vsel %vm523, %v509, 0
      %v612 = vsel %vm523, %v510, 0
      %v615 = vsel %vm523, %v511, 0
      %v618 = vsel %vm523, %v512, 0
      %v621 = vsel %vm523, %v513, 0
      %v624 = vsel %vm523, %v514, 0
      %v627 = vsel %vm523, %v515, 0
      %v630 = vsel %vm523, %v516, 0
      %v633 = vsel %vm523, %v517, 0
      %v636 = vsel %vm523, %v518, 0
      %v639 = vsel %vm523, %v519, 0
      %v642 = vsel %vm523, %v520, 0
      %v645 = vsel %vm523, %v521, 0
      %647 = vmatprep.subr.mxu0 0.0
      %648 = vmatpush1.msra.mxu0 0.0
      %649 = vmatprep.subr.mxu0 0.0
      %650 = vmatpush1.msra.mxu0 0.0
      %651 = vmatprep.subr.mxu0 0.0
      %652 = vmatpush1.msra.mxu0 0.0
      %653 = vmatprep.subr.mxu0 0.0
      %654 = vmatpush1.msra.mxu0 0.0
      %655 = vmatprep.subr.mxu0 0.0
      %656 = vmatpush1.msra.mxu0 0.0
      %657 = vmatprep.subr.mxu0 0.0
      %658 = vmatpush1.msra.mxu0 0.0
      %659 = vmatprep.subr.mxu0 0.0
      %660 = vmatpush1.msra.mxu0 0.0
      %661 = vmatprep.subr.mxu0 0.0
      %662 = vmatpush1.msra.mxu0 0.0
      %663 = vmatprep.subr.mxu0 0.0
      %664 = vmatpush1.msra.mxu0 0.0
      %665 = vmatprep.subr.mxu0 0.0
      %666 = vmatpush1.msra.mxu0 0.0
      %667 = vmatprep.subr.mxu0 0.0
      %668 = vmatpush1.msra.mxu0 0.0
      %669 = vmatprep.subr.mxu0 0.0
      %670 = vmatpush1.msra.mxu0 0.0
      %671 = vmatprep.subr.mxu0 0.0
      %672 = vmatpush1.msra.mxu0 0.0
      %673 = vmatprep.subr.mxu0 0.0
      %674 = vmatpush1.msra.mxu0 0.0
      %675 = vmatprep.subr.mxu0 0.0
      %676 = vmatpush1.msra.mxu0 0.0
      %677 = vmatprep.subr.mxu0 0.0
      %678 = vmatpush1.msra.mxu0 %v522
      %679 = vmatprep.subr.mxu0 0.0
      %680 = vmatpush2.msra.mxu0 0.0
      %681 = vmatprep.subr.mxu0 0.0
      %682 = vmatpush2.msra.mxu0 0.0
      %683 = vmatprep.subr.mxu0 0.0
      %684 = vmatpush2.msra.mxu0 0.0
      %685 = vmatprep.subr.mxu0 0.0
      %686 = vmatpush2.msra.mxu0 0.0
      %687 = vmatprep.subr.mxu0 0.0
      %688 = vmatpush2.msra.mxu0 0.0
      %689 = vmatprep.subr.mxu0 0.0
      %690 = vmatpush2.msra.mxu0 0.0
      %691 = vmatprep.subr.mxu0 0.0
      %692 = vmatpush2.msra.mxu0 0.0
      %693 = vmatprep.subr.mxu0 0.0
      %694 = vmatpush2.msra.mxu0 0.0
      %695 = vmatprep.subr.mxu0 0.0
      %696 = vmatpush2.msra.mxu0 0.0
      %697 = vmatprep.subr.mxu0 0.0
      %698 = vmatpush2.msra.mxu0 0.0
      %699 = vmatprep.subr.mxu0 0.0
      %700 = vmatpush2.msra.mxu0 0.0
      %701 = vmatprep.subr.mxu0 0.0
      %702 = vmatpush2.msra.mxu0 0.0
      %703 = vmatprep.subr.mxu0 0.0
      %704 = vmatpush2.msra.mxu0 0.0
      %705 = vmatprep.subr.mxu0 0.0
      %706 = vmatpush2.msra.mxu0 0.0
      %707 = vmatprep.subr.mxu0 0.0
      %708 = vmatpush2.msra.mxu0 0.0
      %709 = vmatprep.subr.mxu0 0.0
      %710 = vmatpush2.msra.mxu0 0.0
      %711 = vmatprep.mubr.f32.mxu0 0.0
      %712 = vmatmul.mubr.f32.gmra.mxu0 %v525
      %v713 = vpop.f32.mrf.mxu0
      %v714 = vadd.f32 0.0, %v713
      %v715 = vpop.f32.mrf.mxu0
      %716 = vmatprep.mubr.f32.mxu0 0.0
      %717 = vmatmul.mubr.f32.gmra.mxu0 %v528
      %v718 = vpop.f32.mrf.mxu0
      %v719 = vadd.f32 0.0, %v718
      %v720 = vpop.f32.mrf.mxu0
      %721 = vmatprep.mubr.f32.mxu0 0.0
      %722 = vmatmul.mubr.f32.gmra.mxu0 %v531
      %v723 = vpop.f32.mrf.mxu0
      %v724 = vadd.f32 0.0, %v723
      %v725 = vpop.f32.mrf.mxu0
      %726 = vmatprep.mubr.f32.mxu0 0.0
      %727 = vmatmul.mubr.f32.gmra.mxu0 %v534
      %v728 = vpop.f32.mrf.mxu0
      %v729 = vadd.f32 0.0, %v728
      %v730 = vpop.f32.mrf.mxu0
      %731 = vmatprep.mubr.f32.mxu0 0.0
      %732 = vmatmul.mubr.f32.gmra.mxu0 %v537
      %v733 = vpop.f32.mrf.mxu0
      %v734 = vadd.f32 0.0, %v733
      %v735 = vpop.f32.mrf.mxu0
      %736 = vmatprep.mubr.f32.mxu0 0.0
      %737 = vmatmul.mubr.f32.gmra.mxu0 %v540
      %v738 = vpop.f32.mrf.mxu0
      %v739 = vadd.f32 0.0, %v738
      %v740 = vpop.f32.mrf.mxu0
      %741 = vmatprep.mubr.f32.mxu0 0.0
      %742 = vmatmul.mubr.f32.gmra.mxu0 %v543
      %v743 = vpop.f32.mrf.mxu0
      %v744 = vadd.f32 0.0, %v743
      %v745 = vpop.f32.mrf.mxu0
      %746 = vmatprep.mubr.f32.mxu0 0.0
      %747 = vmatmul.mubr.f32.gmra.mxu0 %v546
      %v748 = vpop.f32.mrf.mxu0
      %v749 = vadd.f32 0.0, %v748
      %v750 = vpop.f32.mrf.mxu0
      %751 = vmatprep.mubr.f32.mxu0 0.0
      %752 = vmatmul.mubr.f32.gmra.mxu0 %v549
      %v753 = vpop.f32.mrf.mxu0
      %v754 = vadd.f32 0.0, %v753
      %v755 = vpop.f32.mrf.mxu0
      %756 = vmatprep.mubr.f32.mxu0 0.0
      %757 = vmatmul.mubr.f32.gmra.mxu0 %v552
      %v758 = vpop.f32.mrf.mxu0
      %v759 = vadd.f32 0.0, %v758
      %v760 = vpop.f32.mrf.mxu0
      %761 = vmatprep.mubr.f32.mxu0 0.0
      %762 = vmatmul.mubr.f32.gmra.mxu0 %v555
      %v763 = vpop.f32.mrf.mxu0
      %v764 = vadd.f32 0.0, %v763
      %v765 = vpop.f32.mrf.mxu0
      %766 = vmatprep.mubr.f32.mxu0 0.0
      %767 = vmatmul.mubr.f32.gmra.mxu0 %v558
      %v768 = vpop.f32.mrf.mxu0
      %v769 = vadd.f32 0.0, %v768
      %v770 = vpop.f32.mrf.mxu0
      %771 = vmatprep.mubr.f32.mxu0 0.0
      %772 = vmatmul.mubr.f32.gmra.mxu0 %v561
      %v773 = vpop.f32.mrf.mxu0
      %v774 = vadd.f32 0.0, %v773
      %v775 = vpop.f32.mrf.mxu0
      %776 = vmatprep.mubr.f32.mxu0 0.0
      %777 = vmatmul.mubr.f32.gmra.mxu0 %v564
      %v778 = vpop.f32.mrf.mxu0
      %v779 = vadd.f32 0.0, %v778
      %v780 = vpop.f32.mrf.mxu0
      %781 = vmatprep.mubr.f32.mxu0 0.0
      %782 = vmatmul.mubr.f32.gmra.mxu0 %v567
      %v783 = vpop.f32.mrf.mxu0
      %v784 = vadd.f32 0.0, %v783
      %v785 = vpop.f32.mrf.mxu0
      %786 = vmatprep.mubr.f32.mxu0 0.0
      %787 = vmatmul.mubr.f32.gmra.mxu0 %v570
      %v788 = vpop.f32.mrf.mxu0
      %v789 = vadd.f32 0.0, %v788
      %v790 = vpop.f32.mrf.mxu0
      %791 = vmatprep.mubr.f32.mxu0 0.0
      %792 = vmatmul.mubr.f32.gmra.mxu0 %v573
      %v793 = vpop.f32.mrf.mxu0
      %v794 = vadd.f32 0.0, %v793
      %v795 = vpop.f32.mrf.mxu0
      %796 = vmatprep.mubr.f32.mxu0 0.0
      %797 = vmatmul.mubr.f32.gmra.mxu0 %v576
      %v798 = vpop.f32.mrf.mxu0
      %v799 = vadd.f32 0.0, %v798
      %v800 = vpop.f32.mrf.mxu0
      %801 = vmatprep.mubr.f32.mxu0 0.0
      %802 = vmatmul.mubr.f32.gmra.mxu0 %v579
      %v803 = vpop.f32.mrf.mxu0
      %v804 = vadd.f32 0.0, %v803
      %v805 = vpop.f32.mrf.mxu0
      %806 = vmatprep.mubr.f32.mxu0 0.0
      %807 = vmatmul.mubr.f32.gmra.mxu0 %v582
      %v808 = vpop.f32.mrf.mxu0
      %v809 = vadd.f32 0.0, %v808
      %v810 = vpop.f32.mrf.mxu0
      %811 = vmatprep.mubr.f32.mxu0 0.0
      %812 = vmatmul.mubr.f32.gmra.mxu0 %v585
      %v813 = vpop.f32.mrf.mxu0
      %v814 = vadd.f32 0.0, %v813
      %v815 = vpop.f32.mrf.mxu0
      %816 = vmatprep.mubr.f32.mxu0 0.0
      %817 = vmatmul.mubr.f32.gmra.mxu0 %v588
      %v818 = vpop.f32.mrf.mxu0
      %v819 = vadd.f32 0.0, %v818
      %v820 = vpop.f32.mrf.mxu0
      %821 = vmatprep.mubr.f32.mxu0 0.0
      %822 = vmatmul.mubr.f32.gmra.mxu0 %v591
      %v823 = vpop.f32.mrf.mxu0
      %v824 = vadd.f32 0.0, %v823
      %v825 = vpop.f32.mrf.mxu0
      %826 = vmatprep.mubr.f32.mxu0 0.0
      %827 = vmatmul.mubr.f32.gmra.mxu0 %v594
      %v828 = vpop.f32.mrf.mxu0
      %v829 = vadd.f32 0.0, %v828
      %v830 = vpop.f32.mrf.mxu0
      %831 = vmatprep.mubr.f32.mxu0 0.0
      %832 = vmatmul.mubr.f32.gmra.mxu0 %v597
      %v833 = vpop.f32.mrf.mxu0
      %v834 = vadd.f32 0.0, %v833
      %v835 = vpop.f32.mrf.mxu0
      %836 = vmatprep.mubr.f32.mxu0 0.0
      %837 = vmatmul.mubr.f32.gmra.mxu0 %v600
      %v838 = vpop.f32.mrf.mxu0
      %v839 = vadd.f32 0.0, %v838
      %v840 = vpop.f32.mrf.mxu0
      %841 = vmatprep.mubr.f32.mxu0 0.0
      %842 = vmatmul.mubr.f32.gmra.mxu0 %v603
      %v843 = vpop.f32.mrf.mxu0
      %v844 = vadd.f32 0.0, %v843
      %v845 = vpop.f32.mrf.mxu0
      %846 = vmatprep.mubr.f32.mxu0 0.0
      %847 = vmatmul.mubr.f32.gmra.mxu0 %v606
      %v848 = vpop.f32.mrf.mxu0
      %v849 = vadd.f32 0.0, %v848
      %v850 = vpop.f32.mrf.mxu0
      %851 = vmatprep.mubr.f32.mxu0 0.0
      %852 = vmatmul.mubr.f32.gmra.mxu0 %v609
      %v853 = vpop.f32.mrf.mxu0
      %v854 = vadd.f32 0.0, %v853
      %v855 = vpop.f32.mrf.mxu0
      %856 = vmatprep.mubr.f32.mxu0 0.0
      %857 = vmatmul.mubr.f32.gmra.mxu0 %v612
      %v858 = vpop.f32.mrf.mxu0
      %v859 = vadd.f32 0.0, %v858
      %v860 = vpop.f32.mrf.mxu0
      %861 = vmatprep.mubr.f32.mxu0 0.0
      %862 = vmatmul.mubr.f32.gmra.mxu0 %v615
      %v863 = vpop.f32.mrf.mxu0
      %v864 = vadd.f32 0.0, %v863
      %v865 = vpop.f32.mrf.mxu0
      %866 = vmatprep.mubr.f32.mxu0 0.0
      %867 = vmatmul.mubr.f32.gmra.mxu0 %v618
      %v868 = vpop.f32.mrf.mxu0
      %v869 = vadd.f32 0.0, %v868
      %v870 = vpop.f32.mrf.mxu0
      %871 = vmatprep.mubr.f32.mxu0 0.0
      %872 = vmatmul.mubr.f32.gmra.mxu0 %v621
      %v873 = vpop.f32.mrf.mxu0
      %v874 = vadd.f32 0.0, %v873
      %v875 = vpop.f32.mrf.mxu0
      %876 = vmatprep.mubr.f32.mxu0 0.0
      %877 = vmatmul.mubr.f32.gmra.mxu0 %v624
      %v878 = vpop.f32.mrf.mxu0
      %v879 = vadd.f32 0.0, %v878
      %v880 = vpop.f32.mrf.mxu0
      %881 = vmatprep.mubr.f32.mxu0 0.0
      %882 = vmatmul.mubr.f32.gmra.mxu0 %v627
      %v883 = vpop.f32.mrf.mxu0
      %v884 = vadd.f32 0.0, %v883
      %v885 = vpop.f32.mrf.mxu0
      %886 = vmatprep.mubr.f32.mxu0 0.0
      %887 = vmatmul.mubr.f32.gmra.mxu0 %v630
      %v888 = vpop.f32.mrf.mxu0
      %v889 = vadd.f32 0.0, %v888
      %v890 = vpop.f32.mrf.mxu0
      %891 = vmatprep.mubr.f32.mxu0 0.0
      %892 = vmatmul.mubr.f32.gmra.mxu0 %v633
      %v893 = vpop.f32.mrf.mxu0
      %v894 = vadd.f32 0.0, %v893
      %v895 = vpop.f32.mrf.mxu0
      %896 = vmatprep.mubr.f32.mxu0 0.0
      %897 = vmatmul.mubr.f32.gmra.mxu0 %v636
      %v898 = vpop.f32.mrf.mxu0
      %v899 = vadd.f32 0.0, %v898
      %v900 = vpop.f32.mrf.mxu0
      %901 = vmatprep.mubr.f32.mxu0 0.0
      %902 = vmatmul.mubr.f32.gmra.mxu0 %v639
      %v903 = vpop.f32.mrf.mxu0
      %v904 = vadd.f32 0.0, %v903
      %v905 = vpop.f32.mrf.mxu0
      %906 = vmatprep.mubr.f32.mxu0 0.0
      %907 = vmatmul.mubr.f32.gmra.mxu0 %v642
      %v908 = vpop.f32.mrf.mxu0
      %v909 = vadd.f32 0.0, %v908
      %v910 = vpop.f32.mrf.mxu0
      %911 = vmatprep.mubr.f32.mxu0 0.0
      %912 = vmatmul.mubr.f32.gmra.mxu0 %v645
      %v913 = vpop.f32.mrf.mxu0
      %v914 = vadd.f32 0.0, %v913
      %v915 = vpop.f32.mrf.mxu0
      %916 = vdwg.mxu0
      %v918 = vsel %vm523, %v439, 0
      %v921 = vsel %vm523, %v440, 0
      %v924 = vsel %vm523, %v441, 0
      %v927 = vsel %vm523, %v442, 0
      %v930 = vsel %vm523, %v443, 0
      %v933 = vsel %vm523, %v444, 0
      %v936 = vsel %vm523, %v445, 0
      %v939 = vsel %vm523, %v446, 0
      %v942 = vsel %vm523, %v447, 0
      %v945 = vsel %vm523, %v448, 0
      %v948 = vsel %vm523, %v449, 0
      %v951 = vsel %vm523, %v450, 0
      %v954 = vsel %vm523, %v451, 0
      %v957 = vsel %vm523, %v452, 0
      %v960 = vsel %vm523, %v453, 0
      %v963 = vsel %vm523, %v454, 0
      %v966 = vsel %vm523, %v455, 0
      %v969 = vsel %vm523, %v456, 0
      %v972 = vsel %vm523, %v457, 0
      %v975 = vsel %vm523, %v458, 0
      %v978 = vsel %vm523, %v459, 0
      %v981 = vsel %vm523, %v460, 0
      %v984 = vsel %vm523, %v461, 0
      %v987 = vsel %vm523, %v462, 0
      %v990 = vsel %vm523, %v463, 0
      %v993 = vsel %vm523, %v464, 0
      %v996 = vsel %vm523, %v465, 0
      %v999 = vsel %vm523, %v466, 0
      %v1002 = vsel %vm523, %v467, 0
      %v1005 = vsel %vm523, %v468, 0
      %v1008 = vsel %vm523, %v469, 0
      %v1011 = vsel %vm523, %v470, 0
      %v1014 = vsel %vm523, %v471, 0
      %v1017 = vsel %vm523, %v472, 0
      %v1020 = vsel %vm523, %v473, 0
      %v1023 = vsel %vm523, %v474, 0
      %v1026 = vsel %vm523, %v475, 0
      %v1029 = vsel %vm523, %v476, 0
      %v1032 = vsel %vm523, %v477, 0
      %v1035 = vsel %vm523, %v478, 0
      %v1038 = vsel %vm523, %v479, 0
      %1040 = vmatprep.subr.mxu0 0.0
      %1041 = vmatpush1.msra.mxu0 0.0
      %1042 = vmatprep.subr.mxu0 0.0
      %1043 = vmatpush1.msra.mxu0 0.0
      %1044 = vmatprep.subr.mxu0 0.0
      %1045 = vmatpush1.msra.mxu0 0.0
      %1046 = vmatprep.subr.mxu0 0.0
      %1047 = vmatpush1.msra.mxu0 0.0
      %1048 = vmatprep.subr.mxu0 0.0
      %1049 = vmatpush1.msra.mxu0 0.0
      %1050 = vmatprep.subr.mxu0 0.0
      %1051 = vmatpush1.msra.mxu0 0.0
      %1052 = vmatprep.subr.mxu0 0.0
      %1053 = vmatpush1.msra.mxu0 0.0
      %1054 = vmatprep.subr.mxu0 0.0
      %1055 = vmatpush1.msra.mxu0 0.0
      %1056 = vmatprep.subr.mxu0 0.0
      %1057 = vmatpush1.msra.mxu0 0.0
      %1058 = vmatprep.subr.mxu0 0.0
      %1059 = vmatpush1.msra.mxu0 0.0
      %1060 = vmatprep.subr.mxu0 0.0
      %1061 = vmatpush1.msra.mxu0 0.0
      %1062 = vmatprep.subr.mxu0 0.0
      %1063 = vmatpush1.msra.mxu0 0.0
      %1064 = vmatprep.subr.mxu0 0.0
      %1065 = vmatpush1.msra.mxu0 0.0
      %1066 = vmatprep.subr.mxu0 0.0
      %1067 = vmatpush1.msra.mxu0 0.0
      %1068 = vmatprep.subr.mxu0 0.0
      %1069 = vmatpush1.msra.mxu0 0.0
      %1070 = vmatprep.subr.mxu0 0.0
      %1071 = vmatpush1.msra.mxu0 %v480
      %1072 = vmatprep.subr.mxu0 0.0
      %1073 = vmatpush2.msra.mxu0 0.0
      %1074 = vmatprep.subr.mxu0 0.0
      %1075 = vmatpush2.msra.mxu0 0.0
      %1076 = vmatprep.subr.mxu0 0.0
      %1077 = vmatpush2.msra.mxu0 0.0
      %1078 = vmatprep.subr.mxu0 0.0
      %1079 = vmatpush2.msra.mxu0 0.0
      %1080 = vmatprep.subr.mxu0 0.0
      %1081 = vmatpush2.msra.mxu0 0.0
      %1082 = vmatprep.subr.mxu0 0.0
      %1083 = vmatpush2.msra.mxu0 0.0
      %1084 = vmatprep.subr.mxu0 0.0
      %1085 = vmatpush2.msra.mxu0 0.0
      %1086 = vmatprep.subr.mxu0 0.0
      %1087 = vmatpush2.msra.mxu0 0.0
      %1088 = vmatprep.subr.mxu0 0.0
      %1089 = vmatpush2.msra.mxu0 0.0
      %1090 = vmatprep.subr.mxu0 0.0
      %1091 = vmatpush2.msra.mxu0 0.0
      %1092 = vmatprep.subr.mxu0 0.0
      %1093 = vmatpush2.msra.mxu0 0.0
      %1094 = vmatprep.subr.mxu0 0.0
      %1095 = vmatpush2.msra.mxu0 0.0
      %1096 = vmatprep.subr.mxu0 0.0
      %1097 = vmatpush2.msra.mxu0 0.0
      %1098 = vmatprep.subr.mxu0 0.0
      %1099 = vmatpush2.msra.mxu0 0.0
      %1100 = vmatprep.subr.mxu0 0.0
      %1101 = vmatpush2.msra.mxu0 0.0
      %1102 = vmatprep.subr.mxu0 0.0
      %1103 = vmatpush2.msra.mxu0 0.0
      %1104 = vmatprep.mubr.f32.mxu0 0.0
      %1105 = vmatmul.mubr.f32.gmra.mxu0 %v918
      %v1106 = vpop.f32.mrf.mxu0
      %v1107 = vadd.f32 %v714, %v1106
      %v1108 = vpop.f32.mrf.mxu0
      %1109 = vmatprep.mubr.f32.mxu0 0.0
      %1110 = vmatmul.mubr.f32.gmra.mxu0 %v921
      %v1111 = vpop.f32.mrf.mxu0
      %v1112 = vadd.f32 %v719, %v1111
      %v1113 = vpop.f32.mrf.mxu0
      %1114 = vmatprep.mubr.f32.mxu0 0.0
      %1115 = vmatmul.mubr.f32.gmra.mxu0 %v924
      %v1116 = vpop.f32.mrf.mxu0
      %v1117 = vadd.f32 %v724, %v1116
      %v1118 = vpop.f32.mrf.mxu0
      %1119 = vmatprep.mubr.f32.mxu0 0.0
      %1120 = vmatmul.mubr.f32.gmra.mxu0 %v927
      %v1121 = vpop.f32.mrf.mxu0
      %v1122 = vadd.f32 %v729, %v1121
      %v1123 = vpop.f32.mrf.mxu0
      %1124 = vmatprep.mubr.f32.mxu0 0.0
      %1125 = vmatmul.mubr.f32.gmra.mxu0 %v930
      %v1126 = vpop.f32.mrf.mxu0
      %v1127 = vadd.f32 %v734, %v1126
      %v1128 = vpop.f32.mrf.mxu0
      %1129 = vmatprep.mubr.f32.mxu0 0.0
      %1130 = vmatmul.mubr.f32.gmra.mxu0 %v933
      %v1131 = vpop.f32.mrf.mxu0
      %v1132 = vadd.f32 %v739, %v1131
      %v1133 = vpop.f32.mrf.mxu0
      %1134 = vmatprep.mubr.f32.mxu0 0.0
      %1135 = vmatmul.mubr.f32.gmra.mxu0 %v936
      %v1136 = vpop.f32.mrf.mxu0
      %v1137 = vadd.f32 %v744, %v1136
      %v1138 = vpop.f32.mrf.mxu0
      %1139 = vmatprep.mubr.f32.mxu0 0.0
      %1140 = vmatmul.mubr.f32.gmra.mxu0 %v939
      %v1141 = vpop.f32.mrf.mxu0
      %v1142 = vadd.f32 %v749, %v1141
      %v1143 = vpop.f32.mrf.mxu0
      %1144 = vmatprep.mubr.f32.mxu0 0.0
      %1145 = vmatmul.mubr.f32.gmra.mxu0 %v942
      %v1146 = vpop.f32.mrf.mxu0
      %v1147 = vadd.f32 %v754, %v1146
      %v1148 = vpop.f32.mrf.mxu0
      %1149 = vmatprep.mubr.f32.mxu0 0.0
      %1150 = vmatmul.mubr.f32.gmra.mxu0 %v945
      %v1151 = vpop.f32.mrf.mxu0
      %v1152 = vadd.f32 %v759, %v1151
      %v1153 = vpop.f32.mrf.mxu0
      %1154 = vmatprep.mubr.f32.mxu0 0.0
      %1155 = vmatmul.mubr.f32.gmra.mxu0 %v948
      %v1156 = vpop.f32.mrf.mxu0
      %v1157 = vadd.f32 %v764, %v1156
      %v1158 = vpop.f32.mrf.mxu0
      %1159 = vmatprep.mubr.f32.mxu0 0.0
      %1160 = vmatmul.mubr.f32.gmra.mxu0 %v951
      %v1161 = vpop.f32.mrf.mxu0
      %v1162 = vadd.f32 %v769, %v1161
      %v1163 = vpop.f32.mrf.mxu0
      %1164 = vmatprep.mubr.f32.mxu0 0.0
      %1165 = vmatmul.mubr.f32.gmra.mxu0 %v954
      %v1166 = vpop.f32.mrf.mxu0
      %v1167 = vadd.f32 %v774, %v1166
      %v1168 = vpop.f32.mrf.mxu0
      %1169 = vmatprep.mubr.f32.mxu0 0.0
      %1170 = vmatmul.mubr.f32.gmra.mxu0 %v957
      %v1171 = vpop.f32.mrf.mxu0
      %v1172 = vadd.f32 %v779, %v1171
      %v1173 = vpop.f32.mrf.mxu0
      %1174 = vmatprep.mubr.f32.mxu0 0.0
      %1175 = vmatmul.mubr.f32.gmra.mxu0 %v960
      %v1176 = vpop.f32.mrf.mxu0
      %v1177 = vadd.f32 %v784, %v1176
      %v1178 = vpop.f32.mrf.mxu0
      %1179 = vmatprep.mubr.f32.mxu0 0.0
      %1180 = vmatmul.mubr.f32.gmra.mxu0 %v963
      %v1181 = vpop.f32.mrf.mxu0
      %v1182 = vadd.f32 %v789, %v1181
      %v1183 = vpop.f32.mrf.mxu0
      %1184 = vmatprep.mubr.f32.mxu0 0.0
      %1185 = vmatmul.mubr.f32.gmra.mxu0 %v966
      %v1186 = vpop.f32.mrf.mxu0
      %v1187 = vadd.f32 %v794, %v1186
      %v1188 = vpop.f32.mrf.mxu0
      %1189 = vmatprep.mubr.f32.mxu0 0.0
      %1190 = vmatmul.mubr.f32.gmra.mxu0 %v969
      %v1191 = vpop.f32.mrf.mxu0
      %v1192 = vadd.f32 %v799, %v1191
      %v1193 = vpop.f32.mrf.mxu0
      %1194 = vmatprep.mubr.f32.mxu0 0.0
      %1195 = vmatmul.mubr.f32.gmra.mxu0 %v972
      %v1196 = vpop.f32.mrf.mxu0
      %v1197 = vadd.f32 %v804, %v1196
      %v1198 = vpop.f32.mrf.mxu0
      %1199 = vmatprep.mubr.f32.mxu0 0.0
      %1200 = vmatmul.mubr.f32.gmra.mxu0 %v975
      %v1201 = vpop.f32.mrf.mxu0
      %v1202 = vadd.f32 %v809, %v1201
      %v1203 = vpop.f32.mrf.mxu0
      %1204 = vmatprep.mubr.f32.mxu0 0.0
      %1205 = vmatmul.mubr.f32.gmra.mxu0 %v978
      %v1206 = vpop.f32.mrf.mxu0
      %v1207 = vadd.f32 %v814, %v1206
      %v1208 = vpop.f32.mrf.mxu0
      %1209 = vmatprep.mubr.f32.mxu0 0.0
      %1210 = vmatmul.mubr.f32.gmra.mxu0 %v981
      %v1211 = vpop.f32.mrf.mxu0
      %v1212 = vadd.f32 %v819, %v1211
      %v1213 = vpop.f32.mrf.mxu0
      %1214 = vmatprep.mubr.f32.mxu0 0.0
      %1215 = vmatmul.mubr.f32.gmra.mxu0 %v984
      %v1216 = vpop.f32.mrf.mxu0
      %v1217 = vadd.f32 %v824, %v1216
      %v1218 = vpop.f32.mrf.mxu0
      %1219 = vmatprep.mubr.f32.mxu0 0.0
      %1220 = vmatmul.mubr.f32.gmra.mxu0 %v987
      %v1221 = vpop.f32.mrf.mxu0
      %v1222 = vadd.f32 %v829, %v1221
      %v1223 = vpop.f32.mrf.mxu0
      %1224 = vmatprep.mubr.f32.mxu0 0.0
      %1225 = vmatmul.mubr.f32.gmra.mxu0 %v990
      %v1226 = vpop.f32.mrf.mxu0
      %v1227 = vadd.f32 %v834, %v1226
      %v1228 = vpop.f32.mrf.mxu0
      %1229 = vmatprep.mubr.f32.mxu0 0.0
      %1230 = vmatmul.mubr.f32.gmra.mxu0 %v993
      %v1231 = vpop.f32.mrf.mxu0
      %v1232 = vadd.f32 %v839, %v1231
      %v1233 = vpop.f32.mrf.mxu0
      %1234 = vmatprep.mubr.f32.mxu0 0.0
      %1235 = vmatmul.mubr.f32.gmra.mxu0 %v996
      %v1236 = vpop.f32.mrf.mxu0
      %v1237 = vadd.f32 %v844, %v1236
      %v1238 = vpop.f32.mrf.mxu0
      %1239 = vmatprep.mubr.f32.mxu0 0.0
      %1240 = vmatmul.mubr.f32.gmra.mxu0 %v999
      %v1241 = vpop.f32.mrf.mxu0
      %v1242 = vadd.f32 %v849, %v1241
      %v1243 = vpop.f32.mrf.mxu0
      %1244 = vmatprep.mubr.f32.mxu0 0.0
      %1245 = vmatmul.mubr.f32.gmra.mxu0 %v1002
      %v1246 = vpop.f32.mrf.mxu0
      %v1247 = vadd.f32 %v854, %v1246
      %v1248 = vpop.f32.mrf.mxu0
      %1249 = vmatprep.mubr.f32.mxu0 0.0
      %1250 = vmatmul.mubr.f32.gmra.mxu0 %v1005
      %v1251 = vpop.f32.mrf.mxu0
      %v1252 = vadd.f32 %v859, %v1251
      %v1253 = vpop.f32.mrf.mxu0
      %1254 = vmatprep.mubr.f32.mxu0 0.0
      %1255 = vmatmul.mubr.f32.gmra.mxu0 %v1008
      %v1256 = vpop.f32.mrf.mxu0
      %v1257 = vadd.f32 %v864, %v1256
      %v1258 = vpop.f32.mrf.mxu0
      %1259 = vmatprep.mubr.f32.mxu0 0.0
      %1260 = vmatmul.mubr.f32.gmra.mxu0 %v1011
      %v1261 = vpop.f32.mrf.mxu0
      %v1262 = vadd.f32 %v869, %v1261
      %v1263 = vpop.f32.mrf.mxu0
      %1264 = vmatprep.mubr.f32.mxu0 0.0
      %1265 = vmatmul.mubr.f32.gmra.mxu0 %v1014
      %v1266 = vpop.f32.mrf.mxu0
      %v1267 = vadd.f32 %v874, %v1266
      %v1268 = vpop.f32.mrf.mxu0
      %1269 = vmatprep.mubr.f32.mxu0 0.0
      %1270 = vmatmul.mubr.f32.gmra.mxu0 %v1017
      %v1271 = vpop.f32.mrf.mxu0
      %v1272 = vadd.f32 %v879, %v1271
      %v1273 = vpop.f32.mrf.mxu0
      %1274 = vmatprep.mubr.f32.mxu0 0.0
      %1275 = vmatmul.mubr.f32.gmra.mxu0 %v1020
      %v1276 = vpop.f32.mrf.mxu0
      %v1277 = vadd.f32 %v884, %v1276
      %v1278 = vpop.f32.mrf.mxu0
      %1279 = vmatprep.mubr.f32.mxu0 0.0
      %1280 = vmatmul.mubr.f32.gmra.mxu0 %v1023
      %v1281 = vpop.f32.mrf.mxu0
      %v1282 = vadd.f32 %v889, %v1281
      %v1283 = vpop.f32.mrf.mxu0
      %1284 = vmatprep.mubr.f32.mxu0 0.0
      %1285 = vmatmul.mubr.f32.gmra.mxu0 %v1026
      %v1286 = vpop.f32.mrf.mxu0
      %v1287 = vadd.f32 %v894, %v1286
      %v1288 = vpop.f32.mrf.mxu0
      %1289 = vmatprep.mubr.f32.mxu0 0.0
      %1290 = vmatmul.mubr.f32.gmra.mxu0 %v1029
      %v1291 = vpop.f32.mrf.mxu0
      %v1292 = vadd.f32 %v899, %v1291
      %v1293 = vpop.f32.mrf.mxu0
      %1294 = vmatprep.mubr.f32.mxu0 0.0
      %1295 = vmatmul.mubr.f32.gmra.mxu0 %v1032
      %v1296 = vpop.f32.mrf.mxu0
      %v1297 = vadd.f32 %v904, %v1296
      %v1298 = vpop.f32.mrf.mxu0
      %1299 = vmatprep.mubr.f32.mxu0 0.0
      %1300 = vmatmul.mubr.f32.gmra.mxu0 %v1035
      %v1301 = vpop.f32.mrf.mxu0
      %v1302 = vadd.f32 %v909, %v1301
      %v1303 = vpop.f32.mrf.mxu0
      %1304 = vmatprep.mubr.f32.mxu0 0.0
      %1305 = vmatmul.mubr.f32.gmra.mxu0 %v1038
      %v1306 = vpop.f32.mrf.mxu0
      %v1307 = vadd.f32 %v914, %v1306
      %v1308 = vpop.f32.mrf.mxu0
      %1309 = vdwg.mxu0
      %v1310 = vld [vmem:[%s434 + $0x7] sm:$0xff]
      %v1311 = vld [vmem:[%s434 + $0xf] sm:$0xff]
      %v1312 = vld [vmem:[%s434 + $0x17] sm:$0xff]
      %v1313 = vld [vmem:[%s434 + $0x1f] sm:$0xff]
      %v1314 = vld [vmem:[%s434 + $0x27] sm:$0xff]
      %v1315 = vld [vmem:[%s434 + $0x2f] sm:$0xff]
      %v1316 = vld [vmem:[%s434 + $0x37] sm:$0xff]
      %v1317 = vld [vmem:[%s434 + $0x3f] sm:$0xff]
      %v1318 = vld [vmem:[%s434 + $0x47] sm:$0xff]
      %v1319 = vld [vmem:[%s434 + $0x4f] sm:$0xff]
      %v1320 = vld [vmem:[%s434 + $0x57] sm:$0xff]
      %v1321 = vld [vmem:[%s434 + $0x5f] sm:$0xff]
      %v1322 = vld [vmem:[%s434 + $0x67] sm:$0xff]
      %v1323 = vld [vmem:[%s434 + $0x6f] sm:$0xff]
      %v1324 = vld [vmem:[%s434 + $0x77] sm:$0xff]
      %v1325 = vld [vmem:[%s434 + $0x7f] sm:$0xff]
      %v1326 = vld [vmem:[%s434 + $0x87] sm:$0xff]
      %v1327 = vld [vmem:[%s434 + $0x8f] sm:$0xff]
      %v1328 = vld [vmem:[%s434 + $0x97] sm:$0xff]
      %v1329 = vld [vmem:[%s434 + $0x9f] sm:$0xff]
      %v1330 = vld [vmem:[%s434 + $0xa7] sm:$0xff]
      %v1331 = vld [vmem:[%s434 + $0xaf] sm:$0xff]
      %v1332 = vld [vmem:[%s434 + $0xb7] sm:$0xff]
      %v1333 = vld [vmem:[%s434 + $0xbf] sm:$0xff]
      %v1334 = vld [vmem:[%s434 + $0xc7] sm:$0xff]
      %v1335 = vld [vmem:[%s434 + $0xcf] sm:$0xff]
      %v1336 = vld [vmem:[%s434 + $0xd7] sm:$0xff]
      %v1337 = vld [vmem:[%s434 + $0xdf] sm:$0xff]
      %v1338 = vld [vmem:[%s434 + $0xe7] sm:$0xff]
      %v1339 = vld [vmem:[%s434 + $0xef] sm:$0xff]
      %v1340 = vld [vmem:[%s434 + $0xf7] sm:$0xff]
      %v1341 = vld [vmem:[%s434 + $0xff] sm:$0xff]
      %v1342 = vld [vmem:[%s434 + $0x107] sm:$0xff]
      %v1343 = vld [vmem:[%s434 + $0x10f] sm:$0xff]
      %v1344 = vld [vmem:[%s434 + $0x117] sm:$0xff]
      %v1345 = vld [vmem:[%s434 + $0x11f] sm:$0xff]
      %v1346 = vld [vmem:[%s434 + $0x127] sm:$0xff]
      %v1347 = vld [vmem:[%s434 + $0x12f] sm:$0xff]
      %v1348 = vld [vmem:[%s434 + $0x137] sm:$0xff]
      %v1349 = vld [vmem:[%s434 + $0x13f] sm:$0xff]
      %v1350 = vld [vmem:[%s434 + $0x147] sm:$0xf]
      %v1351 = vld [vmem:[%s1 + $0x10] sm:$0xff]
      %v1353 = vsel %vm523, %v1310, 0
      %v1356 = vsel %vm523, %v1311, 0
      %v1359 = vsel %vm523, %v1312, 0
      %v1362 = vsel %vm523, %v1313, 0
      %v1365 = vsel %vm523, %v1314, 0
      %v1368 = vsel %vm523, %v1315, 0
      %v1371 = vsel %vm523, %v1316, 0
      %v1374 = vsel %vm523, %v1317, 0
      %v1377 = vsel %vm523, %v1318, 0
      %v1380 = vsel %vm523, %v1319, 0
      %v1383 = vsel %vm523, %v1320, 0
      %v1386 = vsel %vm523, %v1321, 0
      %v1389 = vsel %vm523, %v1322, 0
      %v1392 = vsel %vm523, %v1323, 0
      %v1395 = vsel %vm523, %v1324, 0
      %v1398 = vsel %vm523, %v1325, 0
      %v1401 = vsel %vm523, %v1326, 0
      %v1404 = vsel %vm523, %v1327, 0
      %v1407 = vsel %vm523, %v1328, 0
      %v1410 = vsel %vm523, %v1329, 0
      %v1413 = vsel %vm523, %v1330, 0
      %v1416 = vsel %vm523, %v1331, 0
      %v1419 = vsel %vm523, %v1332, 0
      %v1422 = vsel %vm523, %v1333, 0
      %v1425 = vsel %vm523, %v1334, 0
      %v1428 = vsel %vm523, %v1335, 0
      %v1431 = vsel %vm523, %v1336, 0
      %v1434 = vsel %vm523, %v1337, 0
      %v1437 = vsel %vm523, %v1338, 0
      %v1440 = vsel %vm523, %v1339, 0
      %v1443 = vsel %vm523, %v1340, 0
      %v1446 = vsel %vm523, %v1341, 0
      %v1449 = vsel %vm523, %v1342, 0
      %v1452 = vsel %vm523, %v1343, 0
      %v1455 = vsel %vm523, %v1344, 0
      %v1458 = vsel %vm523, %v1345, 0
      %v1461 = vsel %vm523, %v1346, 0
      %v1464 = vsel %vm523, %v1347, 0
      %v1467 = vsel %vm523, %v1348, 0
      %v1470 = vsel %vm523, %v1349, 0
      %v1473 = vsel %vm523, %v1350, 0
      %1475 = vmatprep.subr.mxu0 0.0
      %1476 = vmatpush1.msra.mxu0 0.0
      %1477 = vmatprep.subr.mxu0 0.0
      %1478 = vmatpush1.msra.mxu0 0.0
      %1479 = vmatprep.subr.mxu0 0.0
      %1480 = vmatpush1.msra.mxu0 0.0
      %1481 = vmatprep.subr.mxu0 0.0
      %1482 = vmatpush1.msra.mxu0 0.0
      %1483 = vmatprep.subr.mxu0 0.0
      %1484 = vmatpush1.msra.mxu0 0.0
      %1485 = vmatprep.subr.mxu0 0.0
      %1486 = vmatpush1.msra.mxu0 0.0
      %1487 = vmatprep.subr.mxu0 0.0
      %1488 = vmatpush1.msra.mxu0 0.0
      %1489 = vmatprep.subr.mxu0 0.0
      %1490 = vmatpush1.msra.mxu0 0.0
      %1491 = vmatprep.subr.mxu0 0.0
      %1492 = vmatpush1.msra.mxu0 0.0
      %1493 = vmatprep.subr.mxu0 0.0
      %1494 = vmatpush1.msra.mxu0 0.0
      %1495 = vmatprep.subr.mxu0 0.0
      %1496 = vmatpush1.msra.mxu0 0.0
      %1497 = vmatprep.subr.mxu0 0.0
      %1498 = vmatpush1.msra.mxu0 0.0
      %1499 = vmatprep.subr.mxu0 0.0
      %1500 = vmatpush1.msra.mxu0 0.0
      %1501 = vmatprep.subr.mxu0 0.0
      %1502 = vmatpush1.msra.mxu0 0.0
      %1503 = vmatprep.subr.mxu0 0.0
      %1504 = vmatpush1.msra.mxu0 0.0
      %1505 = vmatprep.subr.mxu0 0.0
      %1506 = vmatpush1.msra.mxu0 %v1351
      %1507 = vmatprep.subr.mxu0 0.0
      %1508 = vmatpush2.msra.mxu0 0.0
      %1509 = vmatprep.subr.mxu0 0.0
      %1510 = vmatpush2.msra.mxu0 0.0
      %1511 = vmatprep.subr.mxu0 0.0
      %1512 = vmatpush2.msra.mxu0 0.0
      %1513 = vmatprep.subr.mxu0 0.0
      %1514 = vmatpush2.msra.mxu0 0.0
      %1515 = vmatprep.subr.mxu0 0.0
      %1516 = vmatpush2.msra.mxu0 0.0
      %1517 = vmatprep.subr.mxu0 0.0
      %1518 = vmatpush2.msra.mxu0 0.0
      %1519 = vmatprep.subr.mxu0 0.0
      %1520 = vmatpush2.msra.mxu0 0.0
      %1521 = vmatprep.subr.mxu0 0.0
      %1522 = vmatpush2.msra.mxu0 0.0
      %1523 = vmatprep.subr.mxu0 0.0
      %1524 = vmatpush2.msra.mxu0 0.0
      %1525 = vmatprep.subr.mxu0 0.0
      %1526 = vmatpush2.msra.mxu0 0.0
      %1527 = vmatprep.subr.mxu0 0.0
      %1528 = vmatpush2.msra.mxu0 0.0
      %1529 = vmatprep.subr.mxu0 0.0
      %1530 = vmatpush2.msra.mxu0 0.0
      %1531 = vmatprep.subr.mxu0 0.0
      %1532 = vmatpush2.msra.mxu0 0.0
      %1533 = vmatprep.subr.mxu0 0.0
      %1534 = vmatpush2.msra.mxu0 0.0
      %1535 = vmatprep.subr.mxu0 0.0
      %1536 = vmatpush2.msra.mxu0 0.0
      %1537 = vmatprep.subr.mxu0 0.0
      %1538 = vmatpush2.msra.mxu0 0.0
      %1539 = vmatprep.mubr.f32.mxu0 0.0
      %1540 = vmatmul.mubr.f32.gmra.mxu0 %v1353
      %v1541 = vpop.f32.mrf.mxu0
      %v1542 = vadd.f32 0.0, %v1541
      %v1543 = vpop.f32.mrf.mxu0
      %1544 = vmatprep.mubr.f32.mxu0 0.0
      %1545 = vmatmul.mubr.f32.gmra.mxu0 %v1356
      %v1546 = vpop.f32.mrf.mxu0
      %v1547 = vadd.f32 0.0, %v1546
      %v1548 = vpop.f32.mrf.mxu0
      %1549 = vmatprep.mubr.f32.mxu0 0.0
      %1550 = vmatmul.mubr.f32.gmra.mxu0 %v1359
      %v1551 = vpop.f32.mrf.mxu0
      %v1552 = vadd.f32 0.0, %v1551
      %v1553 = vpop.f32.mrf.mxu0
      %1554 = vmatprep.mubr.f32.mxu0 0.0
      %1555 = vmatmul.mubr.f32.gmra.mxu0 %v1362
      %v1556 = vpop.f32.mrf.mxu0
      %v1557 = vadd.f32 0.0, %v1556
      %v1558 = vpop.f32.mrf.mxu0
      %1559 = vmatprep.mubr.f32.mxu0 0.0
      %1560 = vmatmul.mubr.f32.gmra.mxu0 %v1365
      %v1561 = vpop.f32.mrf.mxu0
      %v1562 = vadd.f32 0.0, %v1561
      %v1563 = vpop.f32.mrf.mxu0
      %1564 = vmatprep.mubr.f32.mxu0 0.0
      %1565 = vmatmul.mubr.f32.gmra.mxu0 %v1368
      %v1566 = vpop.f32.mrf.mxu0
      %v1567 = vadd.f32 0.0, %v1566
      %v1568 = vpop.f32.mrf.mxu0
      %1569 = vmatprep.mubr.f32.mxu0 0.0
      %1570 = vmatmul.mubr.f32.gmra.mxu0 %v1371
      %v1571 = vpop.f32.mrf.mxu0
      %v1572 = vadd.f32 0.0, %v1571
      %v1573 = vpop.f32.mrf.mxu0
      %1574 = vmatprep.mubr.f32.mxu0 0.0
      %1575 = vmatmul.mubr.f32.gmra.mxu0 %v1374
      %v1576 = vpop.f32.mrf.mxu0
      %v1577 = vadd.f32 0.0, %v1576
      %v1578 = vpop.f32.mrf.mxu0
      %1579 = vmatprep.mubr.f32.mxu0 0.0
      %1580 = vmatmul.mubr.f32.gmra.mxu0 %v1377
      %v1581 = vpop.f32.mrf.mxu0
      %v1582 = vadd.f32 0.0, %v1581
      %v1583 = vpop.f32.mrf.mxu0
      %1584 = vmatprep.mubr.f32.mxu0 0.0
      %1585 = vmatmul.mubr.f32.gmra.mxu0 %v1380
      %v1586 = vpop.f32.mrf.mxu0
      %v1587 = vadd.f32 0.0, %v1586
      %v1588 = vpop.f32.mrf.mxu0
      %1589 = vmatprep.mubr.f32.mxu0 0.0
      %1590 = vmatmul.mubr.f32.gmra.mxu0 %v1383
      %v1591 = vpop.f32.mrf.mxu0
      %v1592 = vadd.f32 0.0, %v1591
      %v1593 = vpop.f32.mrf.mxu0
      %1594 = vmatprep.mubr.f32.mxu0 0.0
      %1595 = vmatmul.mubr.f32.gmra.mxu0 %v1386
      %v1596 = vpop.f32.mrf.mxu0
      %v1597 = vadd.f32 0.0, %v1596
      %v1598 = vpop.f32.mrf.mxu0
      %1599 = vmatprep.mubr.f32.mxu0 0.0
      %1600 = vmatmul.mubr.f32.gmra.mxu0 %v1389
      %v1601 = vpop.f32.mrf.mxu0
      %v1602 = vadd.f32 0.0, %v1601
      %v1603 = vpop.f32.mrf.mxu0
      %1604 = vmatprep.mubr.f32.mxu0 0.0
      %1605 = vmatmul.mubr.f32.gmra.mxu0 %v1392
      %v1606 = vpop.f32.mrf.mxu0
      %v1607 = vadd.f32 0.0, %v1606
      %v1608 = vpop.f32.mrf.mxu0
      %1609 = vmatprep.mubr.f32.mxu0 0.0
      %1610 = vmatmul.mubr.f32.gmra.mxu0 %v1395
      %v1611 = vpop.f32.mrf.mxu0
      %v1612 = vadd.f32 0.0, %v1611
      %v1613 = vpop.f32.mrf.mxu0
      %1614 = vmatprep.mubr.f32.mxu0 0.0
      %1615 = vmatmul.mubr.f32.gmra.mxu0 %v1398
      %v1616 = vpop.f32.mrf.mxu0
      %v1617 = vadd.f32 0.0, %v1616
      %v1618 = vpop.f32.mrf.mxu0
      %1619 = vmatprep.mubr.f32.mxu0 0.0
      %1620 = vmatmul.mubr.f32.gmra.mxu0 %v1401
      %v1621 = vpop.f32.mrf.mxu0
      %v1622 = vadd.f32 0.0, %v1621
      %v1623 = vpop.f32.mrf.mxu0
      %1624 = vmatprep.mubr.f32.mxu0 0.0
      %1625 = vmatmul.mubr.f32.gmra.mxu0 %v1404
      %v1626 = vpop.f32.mrf.mxu0
      %v1627 = vadd.f32 0.0, %v1626
      %v1628 = vpop.f32.mrf.mxu0
      %1629 = vmatprep.mubr.f32.mxu0 0.0
      %1630 = vmatmul.mubr.f32.gmra.mxu0 %v1407
      %v1631 = vpop.f32.mrf.mxu0
      %v1632 = vadd.f32 0.0, %v1631
      %v1633 = vpop.f32.mrf.mxu0
      %1634 = vmatprep.mubr.f32.mxu0 0.0
      %1635 = vmatmul.mubr.f32.gmra.mxu0 %v1410
      %v1636 = vpop.f32.mrf.mxu0
      %v1637 = vadd.f32 0.0, %v1636
      %v1638 = vpop.f32.mrf.mxu0
      %1639 = vmatprep.mubr.f32.mxu0 0.0
      %1640 = vmatmul.mubr.f32.gmra.mxu0 %v1413
      %v1641 = vpop.f32.mrf.mxu0
      %v1642 = vadd.f32 0.0, %v1641
      %v1643 = vpop.f32.mrf.mxu0
      %1644 = vmatprep.mubr.f32.mxu0 0.0
      %1645 = vmatmul.mubr.f32.gmra.mxu0 %v1416
      %v1646 = vpop.f32.mrf.mxu0
      %v1647 = vadd.f32 0.0, %v1646
      %v1648 = vpop.f32.mrf.mxu0
      %1649 = vmatprep.mubr.f32.mxu0 0.0
      %1650 = vmatmul.mubr.f32.gmra.mxu0 %v1419
      %v1651 = vpop.f32.mrf.mxu0
      %v1652 = vadd.f32 0.0, %v1651
      %v1653 = vpop.f32.mrf.mxu0
      %1654 = vmatprep.mubr.f32.mxu0 0.0
      %1655 = vmatmul.mubr.f32.gmra.mxu0 %v1422
      %v1656 = vpop.f32.mrf.mxu0
      %v1657 = vadd.f32 0.0, %v1656
      %v1658 = vpop.f32.mrf.mxu0
      %1659 = vmatprep.mubr.f32.mxu0 0.0
      %1660 = vmatmul.mubr.f32.gmra.mxu0 %v1425
      %v1661 = vpop.f32.mrf.mxu0
      %v1662 = vadd.f32 0.0, %v1661
      %v1663 = vpop.f32.mrf.mxu0
      %1664 = vmatprep.mubr.f32.mxu0 0.0
      %1665 = vmatmul.mubr.f32.gmra.mxu0 %v1428
      %v1666 = vpop.f32.mrf.mxu0
      %v1667 = vadd.f32 0.0, %v1666
      %v1668 = vpop.f32.mrf.mxu0
      %1669 = vmatprep.mubr.f32.mxu0 0.0
      %1670 = vmatmul.mubr.f32.gmra.mxu0 %v1431
      %v1671 = vpop.f32.mrf.mxu0
      %v1672 = vadd.f32 0.0, %v1671
      %v1673 = vpop.f32.mrf.mxu0
      %1674 = vmatprep.mubr.f32.mxu0 0.0
      %1675 = vmatmul.mubr.f32.gmra.mxu0 %v1434
      %v1676 = vpop.f32.mrf.mxu0
      %v1677 = vadd.f32 0.0, %v1676
      %v1678 = vpop.f32.mrf.mxu0
      %1679 = vmatprep.mubr.f32.mxu0 0.0
      %1680 = vmatmul.mubr.f32.gmra.mxu0 %v1437
      %v1681 = vpop.f32.mrf.mxu0
      %v1682 = vadd.f32 0.0, %v1681
      %v1683 = vpop.f32.mrf.mxu0
      %1684 = vmatprep.mubr.f32.mxu0 0.0
      %1685 = vmatmul.mubr.f32.gmra.mxu0 %v1440
      %v1686 = vpop.f32.mrf.mxu0
      %v1687 = vadd.f32 0.0, %v1686
      %v1688 = vpop.f32.mrf.mxu0
      %1689 = vmatprep.mubr.f32.mxu0 0.0
      %1690 = vmatmul.mubr.f32.gmra.mxu0 %v1443
      %v1691 = vpop.f32.mrf.mxu0
      %v1692 = vadd.f32 0.0, %v1691
      %v1693 = vpop.f32.mrf.mxu0
      %1694 = vmatprep.mubr.f32.mxu0 0.0
      %1695 = vmatmul.mubr.f32.gmra.mxu0 %v1446
      %v1696 = vpop.f32.mrf.mxu0
      %v1697 = vadd.f32 0.0, %v1696
      %v1698 = vpop.f32.mrf.mxu0
      %1699 = vmatprep.mubr.f32.mxu0 0.0
      %1700 = vmatmul.mubr.f32.gmra.mxu0 %v1449
      %v1701 = vpop.f32.mrf.mxu0
      %v1702 = vadd.f32 0.0, %v1701
      %v1703 = vpop.f32.mrf.mxu0
      %1704 = vmatprep.mubr.f32.mxu0 0.0
      %1705 = vmatmul.mubr.f32.gmra.mxu0 %v1452
      %v1706 = vpop.f32.mrf.mxu0
      %v1707 = vadd.f32 0.0, %v1706
      %v1708 = vpop.f32.mrf.mxu0
      %1709 = vmatprep.mubr.f32.mxu0 0.0
      %1710 = vmatmul.mubr.f32.gmra.mxu0 %v1455
      %v1711 = vpop.f32.mrf.mxu0
      %v1712 = vadd.f32 0.0, %v1711
      %v1713 = vpop.f32.mrf.mxu0
      %1714 = vmatprep.mubr.f32.mxu0 0.0
      %1715 = vmatmul.mubr.f32.gmra.mxu0 %v1458
      %v1716 = vpop.f32.mrf.mxu0
      %v1717 = vadd.f32 0.0, %v1716
      %v1718 = vpop.f32.mrf.mxu0
      %1719 = vmatprep.mubr.f32.mxu0 0.0
      %1720 = vmatmul.mubr.f32.gmra.mxu0 %v1461
      %v1721 = vpop.f32.mrf.mxu0
      %v1722 = vadd.f32 0.0, %v1721
      %v1723 = vpop.f32.mrf.mxu0
      %1724 = vmatprep.mubr.f32.mxu0 0.0
      %1725 = vmatmul.mubr.f32.gmra.mxu0 %v1464
      %v1726 = vpop.f32.mrf.mxu0
      %v1727 = vadd.f32 0.0, %v1726
      %v1728 = vpop.f32.mrf.mxu0
      %1729 = vmatprep.mubr.f32.mxu0 0.0
      %1730 = vmatmul.mubr.f32.gmra.mxu0 %v1467
      %v1731 = vpop.f32.mrf.mxu0
      %v1732 = vadd.f32 0.0, %v1731
      %v1733 = vpop.f32.mrf.mxu0
      %1734 = vmatprep.mubr.f32.mxu0 0.0
      %1735 = vmatmul.mubr.f32.gmra.mxu0 %v1470
      %v1736 = vpop.f32.mrf.mxu0
      %v1737 = vadd.f32 0.0, %v1736
      %v1738 = vpop.f32.mrf.mxu0
      %1739 = vmatprep.mubr.f32.mxu0 0.0
      %1740 = vmatmul.mubr.f32.gmra.mxu0 %v1473
      %v1741 = vpop.f32.mrf.mxu0
      %v1742 = vadd.f32 0.0, %v1741
      %v1743 = vpop.f32.mrf.mxu0
      %1744 = vdwg.mxu0
      %v1745 = vadd.f32 %v1107, %v1542
      %v1746 = vadd.f32 %v1112, %v1547
      %v1747 = vadd.f32 %v1117, %v1552
      %v1748 = vadd.f32 %v1122, %v1557
      %v1749 = vadd.f32 %v1127, %v1562
      %v1750 = vadd.f32 %v1132, %v1567
      %v1751 = vadd.f32 %v1137, %v1572
      %v1752 = vadd.f32 %v1142, %v1577
      %v1753 = vadd.f32 %v1147, %v1582
      %v1754 = vadd.f32 %v1152, %v1587
      %v1755 = vadd.f32 %v1157, %v1592
      %v1756 = vadd.f32 %v1162, %v1597
      %v1757 = vadd.f32 %v1167, %v1602
      %v1758 = vadd.f32 %v1172, %v1607
      %v1759 = vadd.f32 %v1177, %v1612
      %v1760 = vadd.f32 %v1182, %v1617
      %v1761 = vadd.f32 %v1187, %v1622
      %v1762 = vadd.f32 %v1192, %v1627
      %v1763 = vadd.f32 %v1197, %v1632
      %v1764 = vadd.f32 %v1202, %v1637
      %v1765 = vadd.f32 %v1207, %v1642
      %v1766 = vadd.f32 %v1212, %v1647
      %v1767 = vadd.f32 %v1217, %v1652
      %v1768 = vadd.f32 %v1222, %v1657
      %v1769 = vadd.f32 %v1227, %v1662
      %v1770 = vadd.f32 %v1232, %v1667
      %v1771 = vadd.f32 %v1237, %v1672
      %v1772 = vadd.f32 %v1242, %v1677
      %v1773 = vadd.f32 %v1247, %v1682
      %v1774 = vadd.f32 %v1252, %v1687
      %v1775 = vadd.f32 %v1257, %v1692
      %v1776 = vadd.f32 %v1262, %v1697
      %v1777 = vadd.f32 %v1267, %v1702
      %v1778 = vadd.f32 %v1272, %v1707
      %v1779 = vadd.f32 %v1277, %v1712
      %v1780 = vadd.f32 %v1282, %v1717
      %v1781 = vadd.f32 %v1287, %v1722
      %v1782 = vadd.f32 %v1292, %v1727
      %v1783 = vadd.f32 %v1297, %v1732
      %v1784 = vadd.f32 %v1302, %v1737
      %v1785 = vadd.f32 %v1307, %v1742
      %v1786 = vld [vmem:[%s434 + $0x17] sm:$0xff]
      %v1787 = vld [vmem:[%s434 + $0x1f] sm:$0xff]
      %v1788 = vld [vmem:[%s434 + $0x27] sm:$0xff]
      %v1789 = vld [vmem:[%s434 + $0x2f] sm:$0xff]
      %v1790 = vld [vmem:[%s434 + $0x37] sm:$0xff]
      %v1791 = vld [vmem:[%s434 + $0x3f] sm:$0xff]
      %v1792 = vld [vmem:[%s434 + $0x47] sm:$0xff]
      %v1793 = vld [vmem:[%s434 + $0x4f] sm:$0xff]
      %v1794 = vld [vmem:[%s434 + $0x57] sm:$0xff]
      %v1795 = vld [vmem:[%s434 + $0x5f] sm:$0xff]
      %v1796 = vld [vmem:[%s434 + $0x67] sm:$0xff]
      %v1797 = vld [vmem:[%s434 + $0x6f] sm:$0xff]
      %v1798 = vld [vmem:[%s434 + $0x77] sm:$0xff]
      %v1799 = vld [vmem:[%s434 + $0x7f] sm:$0xff]
      %v1800 = vld [vmem:[%s434 + $0x87] sm:$0xff]
      %v1801 = vld [vmem:[%s434 + $0x8f] sm:$0xff]
      %v1802 = vld [vmem:[%s434 + $0x97] sm:$0xff]
      %v1803 = vld [vmem:[%s434 + $0x9f] sm:$0xff]
      %v1804 = vld [vmem:[%s434 + $0xa7] sm:$0xff]
      %v1805 = vld [vmem:[%s434 + $0xaf] sm:$0xff]
      %v1806 = vld [vmem:[%s434 + $0xb7] sm:$0xff]
      %v1807 = vld [vmem:[%s434 + $0xbf] sm:$0xff]
      %v1808 = vld [vmem:[%s434 + $0xc7] sm:$0xff]
      %v1809 = vld [vmem:[%s434 + $0xcf] sm:$0xff]
      %v1810 = vld [vmem:[%s434 + $0xd7] sm:$0xff]
      %v1811 = vld [vmem:[%s434 + $0xdf] sm:$0xff]
      %v1812 = vld [vmem:[%s434 + $0xe7] sm:$0xff]
      %v1813 = vld [vmem:[%s434 + $0xef] sm:$0xff]
      %v1814 = vld [vmem:[%s434 + $0xf7] sm:$0xff]
      %v1815 = vld [vmem:[%s434 + $0xff] sm:$0xff]
      %v1816 = vld [vmem:[%s434 + $0x107] sm:$0xff]
      %v1817 = vld [vmem:[%s434 + $0x10f] sm:$0xff]
      %v1818 = vld [vmem:[%s434 + $0x117] sm:$0xff]
      %v1819 = vld [vmem:[%s434 + $0x11f] sm:$0xff]
      %v1820 = vld [vmem:[%s434 + $0x127] sm:$0xff]
      %v1821 = vld [vmem:[%s434 + $0x12f] sm:$0xff]
      %v1822 = vld [vmem:[%s434 + $0x137] sm:$0xff]
      %v1823 = vld [vmem:[%s434 + $0x13f] sm:$0xff]
      %v1824 = vld [vmem:[%s434 + $0x147] sm:$0xff]
      %v1825 = vld [vmem:[%s434 + $0x14f] sm:$0xff]
      %v1826 = vld [vmem:[%s434 + $0x157] sm:$0xf]
      %v1827 = vld [vmem:[%s1 + $0x18] sm:$0xff]
      %v1829 = vsel %vm523, %v1786, 0
      %v1832 = vsel %vm523, %v1787, 0
      %v1835 = vsel %vm523, %v1788, 0
      %v1838 = vsel %vm523, %v1789, 0
      %v1841 = vsel %vm523, %v1790, 0
      %v1844 = vsel %vm523, %v1791, 0
      %v1847 = vsel %vm523, %v1792, 0
      %v1850 = vsel %vm523, %v1793, 0
      %v1853 = vsel %vm523, %v1794, 0
      %v1856 = vsel %vm523, %v1795, 0
      %v1859 = vsel %vm523, %v1796, 0
      %v1862 = vsel %vm523, %v1797, 0
      %v1865 = vsel %vm523, %v1798, 0
      %v1868 = vsel %vm523, %v1799, 0
      %v1871 = vsel %vm523, %v1800, 0
      %v1874 = vsel %vm523, %v1801, 0
      %v1877 = vsel %vm523, %v1802, 0
      %v1880 = vsel %vm523, %v1803, 0
      %v1883 = vsel %vm523, %v1804, 0
      %v1886 = vsel %vm523, %v1805, 0
      %v1889 = vsel %vm523, %v1806, 0
      %v1892 = vsel %vm523, %v1807, 0
      %v1895 = vsel %vm523, %v1808, 0
      %v1898 = vsel %vm523, %v1809, 0
      %v1901 = vsel %vm523, %v1810, 0
      %v1904 = vsel %vm523, %v1811, 0
      %v1907 = vsel %vm523, %v1812, 0
      %v1910 = vsel %vm523, %v1813, 0
      %v1913 = vsel %vm523, %v1814, 0
      %v1916 = vsel %vm523, %v1815, 0
      %v1919 = vsel %vm523, %v1816, 0
      %v1922 = vsel %vm523, %v1817, 0
      %v1925 = vsel %vm523, %v1818, 0
      %v1928 = vsel %vm523, %v1819, 0
      %v1931 = vsel %vm523, %v1820, 0
      %v1934 = vsel %vm523, %v1821, 0
      %v1937 = vsel %vm523, %v1822, 0
      %v1940 = vsel %vm523, %v1823, 0
      %v1943 = vsel %vm523, %v1824, 0
      %v1946 = vsel %vm523, %v1825, 0
      %v1949 = vsel %vm523, %v1826, 0
      %1951 = vmatprep.subr.mxu0 0.0
      %1952 = vmatpush1.msra.mxu0 0.0
      %1953 = vmatprep.subr.mxu0 0.0
      %1954 = vmatpush1.msra.mxu0 0.0
      %1955 = vmatprep.subr.mxu0 0.0
      %1956 = vmatpush1.msra.mxu0 0.0
      %1957 = vmatprep.subr.mxu0 0.0
      %1958 = vmatpush1.msra.mxu0 0.0
      %1959 = vmatprep.subr.mxu0 0.0
      %1960 = vmatpush1.msra.mxu0 0.0
      %1961 = vmatprep.subr.mxu0 0.0
      %1962 = vmatpush1.msra.mxu0 0.0
      %1963 = vmatprep.subr.mxu0 0.0
      %1964 = vmatpush1.msra.mxu0 0.0
      %1965 = vmatprep.subr.mxu0 0.0
      %1966 = vmatpush1.msra.mxu0 0.0
      %1967 = vmatprep.subr.mxu0 0.0
      %1968 = vmatpush1.msra.mxu0 0.0
      %1969 = vmatprep.subr.mxu0 0.0
      %1970 = vmatpush1.msra.mxu0 0.0
      %1971 = vmatprep.subr.mxu0 0.0
      %1972 = vmatpush1.msra.mxu0 0.0
      %1973 = vmatprep.subr.mxu0 0.0
      %1974 = vmatpush1.msra.mxu0 0.0
      %1975 = vmatprep.subr.mxu0 0.0
      %1976 = vmatpush1.msra.mxu0 0.0
      %1977 = vmatprep.subr.mxu0 0.0
      %1978 = vmatpush1.msra.mxu0 0.0
      %1979 = vmatprep.subr.mxu0 0.0
      %1980 = vmatpush1.msra.mxu0 0.0
      %1981 = vmatprep.subr.mxu0 0.0
      %1982 = vmatpush1.msra.mxu0 %v1827
      %1983 = vmatprep.subr.mxu0 0.0
      %1984 = vmatpush2.msra.mxu0 0.0
      %1985 = vmatprep.subr.mxu0 0.0
      %1986 = vmatpush2.msra.mxu0 0.0
      %1987 = vmatprep.subr.mxu0 0.0
      %1988 = vmatpush2.msra.mxu0 0.0
      %1989 = vmatprep.subr.mxu0 0.0
      %1990 = vmatpush2.msra.mxu0 0.0
      %1991 = vmatprep.subr.mxu0 0.0
      %1992 = vmatpush2.msra.mxu0 0.0
      %1993 = vmatprep.subr.mxu0 0.0
      %1994 = vmatpush2.msra.mxu0 0.0
      %1995 = vmatprep.subr.mxu0 0.0
      %1996 = vmatpush2.msra.mxu0 0.0
      %1997 = vmatprep.subr.mxu0 0.0
      %1998 = vmatpush2.msra.mxu0 0.0
      %1999 = vmatprep.subr.mxu0 0.0
      %2000 = vmatpush2.msra.mxu0 0.0
      %2001 = vmatprep.subr.mxu0 0.0
      %2002 = vmatpush2.msra.mxu0 0.0
      %2003 = vmatprep.subr.mxu0 0.0
      %2004 = vmatpush2.msra.mxu0 0.0
      %2005 = vmatprep.subr.mxu0 0.0
      %2006 = vmatpush2.msra.mxu0 0.0
      %2007 = vmatprep.subr.mxu0 0.0
      %2008 = vmatpush2.msra.mxu0 0.0
      %2009 = vmatprep.subr.mxu0 0.0
      %2010 = vmatpush2.msra.mxu0 0.0
      %2011 = vmatprep.subr.mxu0 0.0
      %2012 = vmatpush2.msra.mxu0 0.0
      %2013 = vmatprep.subr.mxu0 0.0
      %2014 = vmatpush2.msra.mxu0 0.0
      %2015 = vmatprep.mubr.f32.mxu0 0.0
      %2016 = vmatmul.mubr.f32.gmra.mxu0 %v1829
      %v2017 = vpop.f32.mrf.mxu0
      %v2018 = vadd.f32 0.0, %v2017
      %v2019 = vpop.f32.mrf.mxu0
      %2020 = vmatprep.mubr.f32.mxu0 0.0
      %2021 = vmatmul.mubr.f32.gmra.mxu0 %v1832
      %v2022 = vpop.f32.mrf.mxu0
      %v2023 = vadd.f32 0.0, %v2022
      %v2024 = vpop.f32.mrf.mxu0
      %2025 = vmatprep.mubr.f32.mxu0 0.0
      %2026 = vmatmul.mubr.f32.gmra.mxu0 %v1835
      %v2027 = vpop.f32.mrf.mxu0
      %v2028 = vadd.f32 0.0, %v2027
      %v2029 = vpop.f32.mrf.mxu0
      %2030 = vmatprep.mubr.f32.mxu0 0.0
      %2031 = vmatmul.mubr.f32.gmra.mxu0 %v1838
      %v2032 = vpop.f32.mrf.mxu0
      %v2033 = vadd.f32 0.0, %v2032
      %v2034 = vpop.f32.mrf.mxu0
      %2035 = vmatprep.mubr.f32.mxu0 0.0
      %2036 = vmatmul.mubr.f32.gmra.mxu0 %v1841
      %v2037 = vpop.f32.mrf.mxu0
      %v2038 = vadd.f32 0.0, %v2037
      %v2039 = vpop.f32.mrf.mxu0
      %2040 = vmatprep.mubr.f32.mxu0 0.0
      %2041 = vmatmul.mubr.f32.gmra.mxu0 %v1844
      %v2042 = vpop.f32.mrf.mxu0
      %v2043 = vadd.f32 0.0, %v2042
      %v2044 = vpop.f32.mrf.mxu0
      %2045 = vmatprep.mubr.f32.mxu0 0.0
      %2046 = vmatmul.mubr.f32.gmra.mxu0 %v1847
      %v2047 = vpop.f32.mrf.mxu0
      %v2048 = vadd.f32 0.0, %v2047
      %v2049 = vpop.f32.mrf.mxu0
      %2050 = vmatprep.mubr.f32.mxu0 0.0
      %2051 = vmatmul.mubr.f32.gmra.mxu0 %v1850
      %v2052 = vpop.f32.mrf.mxu0
      %v2053 = vadd.f32 0.0, %v2052
      %v2054 = vpop.f32.mrf.mxu0
      %2055 = vmatprep.mubr.f32.mxu0 0.0
      %2056 = vmatmul.mubr.f32.gmra.mxu0 %v1853
      %v2057 = vpop.f32.mrf.mxu0
      %v2058 = vadd.f32 0.0, %v2057
      %v2059 = vpop.f32.mrf.mxu0
      %2060 = vmatprep.mubr.f32.mxu0 0.0
      %2061 = vmatmul.mubr.f32.gmra.mxu0 %v1856
      %v2062 = vpop.f32.mrf.mxu0
      %v2063 = vadd.f32 0.0, %v2062
      %v2064 = vpop.f32.mrf.mxu0
      %2065 = vmatprep.mubr.f32.mxu0 0.0
      %2066 = vmatmul.mubr.f32.gmra.mxu0 %v1859
      %v2067 = vpop.f32.mrf.mxu0
      %v2068 = vadd.f32 0.0, %v2067
      %v2069 = vpop.f32.mrf.mxu0
      %2070 = vmatprep.mubr.f32.mxu0 0.0
      %2071 = vmatmul.mubr.f32.gmra.mxu0 %v1862
      %v2072 = vpop.f32.mrf.mxu0
      %v2073 = vadd.f32 0.0, %v2072
      %v2074 = vpop.f32.mrf.mxu0
      %2075 = vmatprep.mubr.f32.mxu0 0.0
      %2076 = vmatmul.mubr.f32.gmra.mxu0 %v1865
      %v2077 = vpop.f32.mrf.mxu0
      %v2078 = vadd.f32 0.0, %v2077
      %v2079 = vpop.f32.mrf.mxu0
      %2080 = vmatprep.mubr.f32.mxu0 0.0
      %2081 = vmatmul.mubr.f32.gmra.mxu0 %v1868
      %v2082 = vpop.f32.mrf.mxu0
      %v2083 = vadd.f32 0.0, %v2082
      %v2084 = vpop.f32.mrf.mxu0
      %2085 = vmatprep.mubr.f32.mxu0 0.0
      %2086 = vmatmul.mubr.f32.gmra.mxu0 %v1871
      %v2087 = vpop.f32.mrf.mxu0
      %v2088 = vadd.f32 0.0, %v2087
      %v2089 = vpop.f32.mrf.mxu0
      %2090 = vmatprep.mubr.f32.mxu0 0.0
      %2091 = vmatmul.mubr.f32.gmra.mxu0 %v1874
      %v2092 = vpop.f32.mrf.mxu0
      %v2093 = vadd.f32 0.0, %v2092
      %v2094 = vpop.f32.mrf.mxu0
      %2095 = vmatprep.mubr.f32.mxu0 0.0
      %2096 = vmatmul.mubr.f32.gmra.mxu0 %v1877
      %v2097 = vpop.f32.mrf.mxu0
      %v2098 = vadd.f32 0.0, %v2097
      %v2099 = vpop.f32.mrf.mxu0
      %2100 = vmatprep.mubr.f32.mxu0 0.0
      %2101 = vmatmul.mubr.f32.gmra.mxu0 %v1880
      %v2102 = vpop.f32.mrf.mxu0
      %v2103 = vadd.f32 0.0, %v2102
      %v2104 = vpop.f32.mrf.mxu0
      %2105 = vmatprep.mubr.f32.mxu0 0.0
      %2106 = vmatmul.mubr.f32.gmra.mxu0 %v1883
      %v2107 = vpop.f32.mrf.mxu0
      %v2108 = vadd.f32 0.0, %v2107
      %v2109 = vpop.f32.mrf.mxu0
      %2110 = vmatprep.mubr.f32.mxu0 0.0
      %2111 = vmatmul.mubr.f32.gmra.mxu0 %v1886
      %v2112 = vpop.f32.mrf.mxu0
      %v2113 = vadd.f32 0.0, %v2112
      %v2114 = vpop.f32.mrf.mxu0
      %2115 = vmatprep.mubr.f32.mxu0 0.0
      %2116 = vmatmul.mubr.f32.gmra.mxu0 %v1889
      %v2117 = vpop.f32.mrf.mxu0
      %v2118 = vadd.f32 0.0, %v2117
      %v2119 = vpop.f32.mrf.mxu0
      %2120 = vmatprep.mubr.f32.mxu0 0.0
      %2121 = vmatmul.mubr.f32.gmra.mxu0 %v1892
      %v2122 = vpop.f32.mrf.mxu0
      %v2123 = vadd.f32 0.0, %v2122
      %v2124 = vpop.f32.mrf.mxu0
      %2125 = vmatprep.mubr.f32.mxu0 0.0
      %2126 = vmatmul.mubr.f32.gmra.mxu0 %v1895
      %v2127 = vpop.f32.mrf.mxu0
      %v2128 = vadd.f32 0.0, %v2127
      %v2129 = vpop.f32.mrf.mxu0
      %2130 = vmatprep.mubr.f32.mxu0 0.0
      %2131 = vmatmul.mubr.f32.gmra.mxu0 %v1898
      %v2132 = vpop.f32.mrf.mxu0
      %v2133 = vadd.f32 0.0, %v2132
      %v2134 = vpop.f32.mrf.mxu0
      %2135 = vmatprep.mubr.f32.mxu0 0.0
      %2136 = vmatmul.mubr.f32.gmra.mxu0 %v1901
      %v2137 = vpop.f32.mrf.mxu0
      %v2138 = vadd.f32 0.0, %v2137
      %v2139 = vpop.f32.mrf.mxu0
      %2140 = vmatprep.mubr.f32.mxu0 0.0
      %2141 = vmatmul.mubr.f32.gmra.mxu0 %v1904
      %v2142 = vpop.f32.mrf.mxu0
      %v2143 = vadd.f32 0.0, %v2142
      %v2144 = vpop.f32.mrf.mxu0
      %2145 = vmatprep.mubr.f32.mxu0 0.0
      %2146 = vmatmul.mubr.f32.gmra.mxu0 %v1907
      %v2147 = vpop.f32.mrf.mxu0
      %v2148 = vadd.f32 0.0, %v2147
      %v2149 = vpop.f32.mrf.mxu0
      %2150 = vmatprep.mubr.f32.mxu0 0.0
      %2151 = vmatmul.mubr.f32.gmra.mxu0 %v1910
      %v2152 = vpop.f32.mrf.mxu0
      %v2153 = vadd.f32 0.0, %v2152
      %v2154 = vpop.f32.mrf.mxu0
      %2155 = vmatprep.mubr.f32.mxu0 0.0
      %2156 = vmatmul.mubr.f32.gmra.mxu0 %v1913
      %v2157 = vpop.f32.mrf.mxu0
      %v2158 = vadd.f32 0.0, %v2157
      %v2159 = vpop.f32.mrf.mxu0
      %2160 = vmatprep.mubr.f32.mxu0 0.0
      %2161 = vmatmul.mubr.f32.gmra.mxu0 %v1916
      %v2162 = vpop.f32.mrf.mxu0
      %v2163 = vadd.f32 0.0, %v2162
      %v2164 = vpop.f32.mrf.mxu0
      %2165 = vmatprep.mubr.f32.mxu0 0.0
      %2166 = vmatmul.mubr.f32.gmra.mxu0 %v1919
      %v2167 = vpop.f32.mrf.mxu0
      %v2168 = vadd.f32 0.0, %v2167
      %v2169 = vpop.f32.mrf.mxu0
      %2170 = vmatprep.mubr.f32.mxu0 0.0
      %2171 = vmatmul.mubr.f32.gmra.mxu0 %v1922
      %v2172 = vpop.f32.mrf.mxu0
      %v2173 = vadd.f32 0.0, %v2172
      %v2174 = vpop.f32.mrf.mxu0
      %2175 = vmatprep.mubr.f32.mxu0 0.0
      %2176 = vmatmul.mubr.f32.gmra.mxu0 %v1925
      %v2177 = vpop.f32.mrf.mxu0
      %v2178 = vadd.f32 0.0, %v2177
      %v2179 = vpop.f32.mrf.mxu0
      %2180 = vmatprep.mubr.f32.mxu0 0.0
      %2181 = vmatmul.mubr.f32.gmra.mxu0 %v1928
      %v2182 = vpop.f32.mrf.mxu0
      %v2183 = vadd.f32 0.0, %v2182
      %v2184 = vpop.f32.mrf.mxu0
      %2185 = vmatprep.mubr.f32.mxu0 0.0
      %2186 = vmatmul.mubr.f32.gmra.mxu0 %v1931
      %v2187 = vpop.f32.mrf.mxu0
      %v2188 = vadd.f32 0.0, %v2187
      %v2189 = vpop.f32.mrf.mxu0
      %2190 = vmatprep.mubr.f32.mxu0 0.0
      %2191 = vmatmul.mubr.f32.gmra.mxu0 %v1934
      %v2192 = vpop.f32.mrf.mxu0
      %v2193 = vadd.f32 0.0, %v2192
      %v2194 = vpop.f32.mrf.mxu0
      %2195 = vmatprep.mubr.f32.mxu0 0.0
      %2196 = vmatmul.mubr.f32.gmra.mxu0 %v1937
      %v2197 = vpop.f32.mrf.mxu0
      %v2198 = vadd.f32 0.0, %v2197
      %v2199 = vpop.f32.mrf.mxu0
      %2200 = vmatprep.mubr.f32.mxu0 0.0
      %2201 = vmatmul.mubr.f32.gmra.mxu0 %v1940
      %v2202 = vpop.f32.mrf.mxu0
      %v2203 = vadd.f32 0.0, %v2202
      %v2204 = vpop.f32.mrf.mxu0
      %2205 = vmatprep.mubr.f32.mxu0 0.0
      %2206 = vmatmul.mubr.f32.gmra.mxu0 %v1943
      %v2207 = vpop.f32.mrf.mxu0
      %v2208 = vadd.f32 0.0, %v2207
      %v2209 = vpop.f32.mrf.mxu0
      %2210 = vmatprep.mubr.f32.mxu0 0.0
      %2211 = vmatmul.mubr.f32.gmra.mxu0 %v1946
      %v2212 = vpop.f32.mrf.mxu0
      %v2213 = vadd.f32 0.0, %v2212
      %v2214 = vpop.f32.mrf.mxu0
      %2215 = vmatprep.mubr.f32.mxu0 0.0
      %2216 = vmatmul.mubr.f32.gmra.mxu0 %v1949
      %v2217 = vpop.f32.mrf.mxu0
      %v2218 = vadd.f32 0.0, %v2217
      %v2219 = vpop.f32.mrf.mxu0
      %2220 = vdwg.mxu0
      %v2221 = vadd.f32 %v1745, %v2018
      %v2222 = vadd.f32 %v1746, %v2023
      %v2223 = vadd.f32 %v1747, %v2028
      %v2224 = vadd.f32 %v1748, %v2033
      %v2225 = vadd.f32 %v1749, %v2038
      %v2226 = vadd.f32 %v1750, %v2043
      %v2227 = vadd.f32 %v1751, %v2048
      %v2228 = vadd.f32 %v1752, %v2053
      %v2229 = vadd.f32 %v1753, %v2058
      %v2230 = vadd.f32 %v1754, %v2063
      %v2231 = vadd.f32 %v1755, %v2068
      %v2232 = vadd.f32 %v1756, %v2073
      %v2233 = vadd.f32 %v1757, %v2078
      %v2234 = vadd.f32 %v1758, %v2083
      %v2235 = vadd.f32 %v1759, %v2088
      %v2236 = vadd.f32 %v1760, %v2093
      %v2237 = vadd.f32 %v1761, %v2098
      %v2238 = vadd.f32 %v1762, %v2103
      %v2239 = vadd.f32 %v1763, %v2108
      %v2240 = vadd.f32 %v1764, %v2113
      %v2241 = vadd.f32 %v1765, %v2118
      %v2242 = vadd.f32 %v1766, %v2123
      %v2243 = vadd.f32 %v1767, %v2128
      %v2244 = vadd.f32 %v1768, %v2133
      %v2245 = vadd.f32 %v1769, %v2138
      %v2246 = vadd.f32 %v1770, %v2143
      %v2247 = vadd.f32 %v1771, %v2148
      %v2248 = vadd.f32 %v1772, %v2153
      %v2249 = vadd.f32 %v1773, %v2158
      %v2250 = vadd.f32 %v1774, %v2163
      %v2251 = vadd.f32 %v1775, %v2168
      %v2252 = vadd.f32 %v1776, %v2173
      %v2253 = vadd.f32 %v1777, %v2178
      %v2254 = vadd.f32 %v1778, %v2183
      %v2255 = vadd.f32 %v1779, %v2188
      %v2256 = vadd.f32 %v1780, %v2193
      %v2257 = vadd.f32 %v1781, %v2198
      %v2258 = vadd.f32 %v1782, %v2203
      %v2259 = vadd.f32 %v1783, %v2208
      %v2260 = vadd.f32 %v1784, %v2213
      %v2261 = vadd.f32 %v1785, %v2218
      %v2262 = vld [vmem:[%s434 + $0x18] sm:$0xff]
      %v2263 = vld [vmem:[%s434 + $0x20] sm:$0xff]
      %v2264 = vld [vmem:[%s434 + $0x28] sm:$0xff]
      %v2265 = vld [vmem:[%s434 + $0x30] sm:$0xff]
      %v2266 = vld [vmem:[%s434 + $0x38] sm:$0xff]
      %v2267 = vld [vmem:[%s434 + $0x40] sm:$0xff]
      %v2268 = vld [vmem:[%s434 + $0x48] sm:$0xff]
      %v2269 = vld [vmem:[%s434 + $0x50] sm:$0xff]
      %v2270 = vld [vmem:[%s434 + $0x58] sm:$0xff]
      %v2271 = vld [vmem:[%s434 + $0x60] sm:$0xff]
      %v2272 = vld [vmem:[%s434 + $0x68] sm:$0xff]
      %v2273 = vld [vmem:[%s434 + $0x70] sm:$0xff]
      %v2274 = vld [vmem:[%s434 + $0x78] sm:$0xff]
      %v2275 = vld [vmem:[%s434 + $0x80] sm:$0xff]
      %v2276 = vld [vmem:[%s434 + $0x88] sm:$0xff]
      %v2277 = vld [vmem:[%s434 + $0x90] sm:$0xff]
      %v2278 = vld [vmem:[%s434 + $0x98] sm:$0xff]
      %v2279 = vld [vmem:[%s434 + $0xa0] sm:$0xff]
      %v2280 = vld [vmem:[%s434 + $0xa8] sm:$0xff]
      %v2281 = vld [vmem:[%s434 + $0xb0] sm:$0xff]
      %v2282 = vld [vmem:[%s434 + $0xb8] sm:$0xff]
      %v2283 = vld [vmem:[%s434 + $0xc0] sm:$0xff]
      %v2284 = vld [vmem:[%s434 + $0xc8] sm:$0xff]
      %v2285 = vld [vmem:[%s434 + $0xd0] sm:$0xff]
      %v2286 = vld [vmem:[%s434 + $0xd8] sm:$0xff]
      %v2287 = vld [vmem:[%s434 + $0xe0] sm:$0xff]
      %v2288 = vld [vmem:[%s434 + $0xe8] sm:$0xff]
      %v2289 = vld [vmem:[%s434 + $0xf0] sm:$0xff]
      %v2290 = vld [vmem:[%s434 + $0xf8] sm:$0xff]
      %v2291 = vld [vmem:[%s434 + $0x100] sm:$0xff]
      %v2292 = vld [vmem:[%s434 + $0x108] sm:$0xff]
      %v2293 = vld [vmem:[%s434 + $0x110] sm:$0xff]
      %v2294 = vld [vmem:[%s434 + $0x118] sm:$0xff]
      %v2295 = vld [vmem:[%s434 + $0x120] sm:$0xff]
      %v2296 = vld [vmem:[%s434 + $0x128] sm:$0xff]
      %v2297 = vld [vmem:[%s434 + $0x130] sm:$0xff]
      %v2298 = vld [vmem:[%s434 + $0x138] sm:$0xff]
      %v2299 = vld [vmem:[%s434 + $0x140] sm:$0xff]
      %v2300 = vld [vmem:[%s434 + $0x148] sm:$0xff]
      %v2301 = vld [vmem:[%s434 + $0x150] sm:$0xff]
      %v2302 = vld [vmem:[%s434 + $0x158] sm:$0xf]
      %v2303 = vld [vmem:[%s1 + $0x20] sm:$0xff]
      %v2305 = vsel %vm523, %v2262, 0
      %v2308 = vsel %vm523, %v2263, 0
      %v2311 = vsel %vm523, %v2264, 0
      %v2314 = vsel %vm523, %v2265, 0
      %v2317 = vsel %vm523, %v2266, 0
      %v2320 = vsel %vm523, %v2267, 0
      %v2323 = vsel %vm523, %v2268, 0
      %v2326 = vsel %vm523, %v2269, 0
      %v2329 = vsel %vm523, %v2270, 0
      %v2332 = vsel %vm523, %v2271, 0
      %v2335 = vsel %vm523, %v2272, 0
      %v2338 = vsel %vm523, %v2273, 0
      %v2341 = vsel %vm523, %v2274, 0
      %v2344 = vsel %vm523, %v2275, 0
      %v2347 = vsel %vm523, %v2276, 0
      %v2350 = vsel %vm523, %v2277, 0
      %v2353 = vsel %vm523, %v2278, 0
      %v2356 = vsel %vm523, %v2279, 0
      %v2359 = vsel %vm523, %v2280, 0
      %v2362 = vsel %vm523, %v2281, 0
      %v2365 = vsel %vm523, %v2282, 0
      %v2368 = vsel %vm523, %v2283, 0
      %v2371 = vsel %vm523, %v2284, 0
      %v2374 = vsel %vm523, %v2285, 0
      %v2377 = vsel %vm523, %v2286, 0
      %v2380 = vsel %vm523, %v2287, 0
      %v2383 = vsel %vm523, %v2288, 0
      %v2386 = vsel %vm523, %v2289, 0
      %v2389 = vsel %vm523, %v2290, 0
      %v2392 = vsel %vm523, %v2291, 0
      %v2395 = vsel %vm523, %v2292, 0
      %v2398 = vsel %vm523, %v2293, 0
      %v2401 = vsel %vm523, %v2294, 0
      %v2404 = vsel %vm523, %v2295, 0
      %v2407 = vsel %vm523, %v2296, 0
      %v2410 = vsel %vm523, %v2297, 0
      %v2413 = vsel %vm523, %v2298, 0
      %v2416 = vsel %vm523, %v2299, 0
      %v2419 = vsel %vm523, %v2300, 0
      %v2422 = vsel %vm523, %v2301, 0
      %v2425 = vsel %vm523, %v2302, 0
      %2427 = vmatprep.subr.mxu0 0.0
      %2428 = vmatpush1.msra.mxu0 0.0
      %2429 = vmatprep.subr.mxu0 0.0
      %2430 = vmatpush1.msra.mxu0 0.0
      %2431 = vmatprep.subr.mxu0 0.0
      %2432 = vmatpush1.msra.mxu0 0.0
      %2433 = vmatprep.subr.mxu0 0.0
      %2434 = vmatpush1.msra.mxu0 0.0
      %2435 = vmatprep.subr.mxu0 0.0
      %2436 = vmatpush1.msra.mxu0 0.0
      %2437 = vmatprep.subr.mxu0 0.0
      %2438 = vmatpush1.msra.mxu0 0.0
      %2439 = vmatprep.subr.mxu0 0.0
      %2440 = vmatpush1.msra.mxu0 0.0
      %2441 = vmatprep.subr.mxu0 0.0
      %2442 = vmatpush1.msra.mxu0 0.0
      %2443 = vmatprep.subr.mxu0 0.0
      %2444 = vmatpush1.msra.mxu0 0.0
      %2445 = vmatprep.subr.mxu0 0.0
      %2446 = vmatpush1.msra.mxu0 0.0
      %2447 = vmatprep.subr.mxu0 0.0
      %2448 = vmatpush1.msra.mxu0 0.0
      %2449 = vmatprep.subr.mxu0 0.0
      %2450 = vmatpush1.msra.mxu0 0.0
      %2451 = vmatprep.subr.mxu0 0.0
      %2452 = vmatpush1.msra.mxu0 0.0
      %2453 = vmatprep.subr.mxu0 0.0
      %2454 = vmatpush1.msra.mxu0 0.0
      %2455 = vmatprep.subr.mxu0 0.0
      %2456 = vmatpush1.msra.mxu0 0.0
      %2457 = vmatprep.subr.mxu0 0.0
      %2458 = vmatpush1.msra.mxu0 %v2303
      %2459 = vmatprep.subr.mxu0 0.0
      %2460 = vmatpush2.msra.mxu0 0.0
      %2461 = vmatprep.subr.mxu0 0.0
      %2462 = vmatpush2.msra.mxu0 0.0
      %2463 = vmatprep.subr.mxu0 0.0
      %2464 = vmatpush2.msra.mxu0 0.0
      %2465 = vmatprep.subr.mxu0 0.0
      %2466 = vmatpush2.msra.mxu0 0.0
      %2467 = vmatprep.subr.mxu0 0.0
      %2468 = vmatpush2.msra.mxu0 0.0
      %2469 = vmatprep.subr.mxu0 0.0
      %2470 = vmatpush2.msra.mxu0 0.0
      %2471 = vmatprep.subr.mxu0 0.0
      %2472 = vmatpush2.msra.mxu0 0.0
      %2473 = vmatprep.subr.mxu0 0.0
      %2474 = vmatpush2.msra.mxu0 0.0
      %2475 = vmatprep.subr.mxu0 0.0
      %2476 = vmatpush2.msra.mxu0 0.0
      %2477 = vmatprep.subr.mxu0 0.0
      %2478 = vmatpush2.msra.mxu0 0.0
      %2479 = vmatprep.subr.mxu0 0.0
      %2480 = vmatpush2.msra.mxu0 0.0
      %2481 = vmatprep.subr.mxu0 0.0
      %2482 = vmatpush2.msra.mxu0 0.0
      %2483 = vmatprep.subr.mxu0 0.0
      %2484 = vmatpush2.msra.mxu0 0.0
      %2485 = vmatprep.subr.mxu0 0.0
      %2486 = vmatpush2.msra.mxu0 0.0
      %2487 = vmatprep.subr.mxu0 0.0
      %2488 = vmatpush2.msra.mxu0 0.0
      %2489 = vmatprep.subr.mxu0 0.0
      %2490 = vmatpush2.msra.mxu0 0.0
      %2491 = vmatprep.mubr.f32.mxu0 0.0
      %2492 = vmatmul.mubr.f32.gmra.mxu0 %v2305
      %v2493 = vpop.f32.mrf.mxu0
      %v2494 = vadd.f32 0.0, %v2493
      %v2495 = vpop.f32.mrf.mxu0
      %2496 = vmatprep.mubr.f32.mxu0 0.0
      %2497 = vmatmul.mubr.f32.gmra.mxu0 %v2308
      %v2498 = vpop.f32.mrf.mxu0
      %v2499 = vadd.f32 0.0, %v2498
      %v2500 = vpop.f32.mrf.mxu0
      %2501 = vmatprep.mubr.f32.mxu0 0.0
      %2502 = vmatmul.mubr.f32.gmra.mxu0 %v2311
      %v2503 = vpop.f32.mrf.mxu0
      %v2504 = vadd.f32 0.0, %v2503
      %v2505 = vpop.f32.mrf.mxu0
      %2506 = vmatprep.mubr.f32.mxu0 0.0
      %2507 = vmatmul.mubr.f32.gmra.mxu0 %v2314
      %v2508 = vpop.f32.mrf.mxu0
      %v2509 = vadd.f32 0.0, %v2508
      %v2510 = vpop.f32.mrf.mxu0
      %2511 = vmatprep.mubr.f32.mxu0 0.0
      %2512 = vmatmul.mubr.f32.gmra.mxu0 %v2317
      %v2513 = vpop.f32.mrf.mxu0
      %v2514 = vadd.f32 0.0, %v2513
      %v2515 = vpop.f32.mrf.mxu0
      %2516 = vmatprep.mubr.f32.mxu0 0.0
      %2517 = vmatmul.mubr.f32.gmra.mxu0 %v2320
      %v2518 = vpop.f32.mrf.mxu0
      %v2519 = vadd.f32 0.0, %v2518
      %v2520 = vpop.f32.mrf.mxu0
      %2521 = vmatprep.mubr.f32.mxu0 0.0
      %2522 = vmatmul.mubr.f32.gmra.mxu0 %v2323
      %v2523 = vpop.f32.mrf.mxu0
      %v2524 = vadd.f32 0.0, %v2523
      %v2525 = vpop.f32.mrf.mxu0
      %2526 = vmatprep.mubr.f32.mxu0 0.0
      %2527 = vmatmul.mubr.f32.gmra.mxu0 %v2326
      %v2528 = vpop.f32.mrf.mxu0
      %v2529 = vadd.f32 0.0, %v2528
      %v2530 = vpop.f32.mrf.mxu0
      %2531 = vmatprep.mubr.f32.mxu0 0.0
      %2532 = vmatmul.mubr.f32.gmra.mxu0 %v2329
      %v2533 = vpop.f32.mrf.mxu0
      %v2534 = vadd.f32 0.0, %v2533
      %v2535 = vpop.f32.mrf.mxu0
      %2536 = vmatprep.mubr.f32.mxu0 0.0
      %2537 = vmatmul.mubr.f32.gmra.mxu0 %v2332
      %v2538 = vpop.f32.mrf.mxu0
      %v2539 = vadd.f32 0.0, %v2538
      %v2540 = vpop.f32.mrf.mxu0
      %2541 = vmatprep.mubr.f32.mxu0 0.0
      %2542 = vmatmul.mubr.f32.gmra.mxu0 %v2335
      %v2543 = vpop.f32.mrf.mxu0
      %v2544 = vadd.f32 0.0, %v2543
      %v2545 = vpop.f32.mrf.mxu0
      %2546 = vmatprep.mubr.f32.mxu0 0.0
      %2547 = vmatmul.mubr.f32.gmra.mxu0 %v2338
      %v2548 = vpop.f32.mrf.mxu0
      %v2549 = vadd.f32 0.0, %v2548
      %v2550 = vpop.f32.mrf.mxu0
      %2551 = vmatprep.mubr.f32.mxu0 0.0
      %2552 = vmatmul.mubr.f32.gmra.mxu0 %v2341
      %v2553 = vpop.f32.mrf.mxu0
      %v2554 = vadd.f32 0.0, %v2553
      %v2555 = vpop.f32.mrf.mxu0
      %2556 = vmatprep.mubr.f32.mxu0 0.0
      %2557 = vmatmul.mubr.f32.gmra.mxu0 %v2344
      %v2558 = vpop.f32.mrf.mxu0
      %v2559 = vadd.f32 0.0, %v2558
      %v2560 = vpop.f32.mrf.mxu0
      %2561 = vmatprep.mubr.f32.mxu0 0.0
      %2562 = vmatmul.mubr.f32.gmra.mxu0 %v2347
      %v2563 = vpop.f32.mrf.mxu0
      %v2564 = vadd.f32 0.0, %v2563
      %v2565 = vpop.f32.mrf.mxu0
      %2566 = vmatprep.mubr.f32.mxu0 0.0
      %2567 = vmatmul.mubr.f32.gmra.mxu0 %v2350
      %v2568 = vpop.f32.mrf.mxu0
      %v2569 = vadd.f32 0.0, %v2568
      %v2570 = vpop.f32.mrf.mxu0
      %2571 = vmatprep.mubr.f32.mxu0 0.0
      %2572 = vmatmul.mubr.f32.gmra.mxu0 %v2353
      %v2573 = vpop.f32.mrf.mxu0
      %v2574 = vadd.f32 0.0, %v2573
      %v2575 = vpop.f32.mrf.mxu0
      %2576 = vmatprep.mubr.f32.mxu0 0.0
      %2577 = vmatmul.mubr.f32.gmra.mxu0 %v2356
      %v2578 = vpop.f32.mrf.mxu0
      %v2579 = vadd.f32 0.0, %v2578
      %v2580 = vpop.f32.mrf.mxu0
      %2581 = vmatprep.mubr.f32.mxu0 0.0
      %2582 = vmatmul.mubr.f32.gmra.mxu0 %v2359
      %v2583 = vpop.f32.mrf.mxu0
      %v2584 = vadd.f32 0.0, %v2583
      %v2585 = vpop.f32.mrf.mxu0
      %2586 = vmatprep.mubr.f32.mxu0 0.0
      %2587 = vmatmul.mubr.f32.gmra.mxu0 %v2362
      %v2588 = vpop.f32.mrf.mxu0
      %v2589 = vadd.f32 0.0, %v2588
      %v2590 = vpop.f32.mrf.mxu0
      %2591 = vmatprep.mubr.f32.mxu0 0.0
      %2592 = vmatmul.mubr.f32.gmra.mxu0 %v2365
      %v2593 = vpop.f32.mrf.mxu0
      %v2594 = vadd.f32 0.0, %v2593
      %v2595 = vpop.f32.mrf.mxu0
      %2596 = vmatprep.mubr.f32.mxu0 0.0
      %2597 = vmatmul.mubr.f32.gmra.mxu0 %v2368
      %v2598 = vpop.f32.mrf.mxu0
      %v2599 = vadd.f32 0.0, %v2598
      %v2600 = vpop.f32.mrf.mxu0
      %2601 = vmatprep.mubr.f32.mxu0 0.0
      %2602 = vmatmul.mubr.f32.gmra.mxu0 %v2371
      %v2603 = vpop.f32.mrf.mxu0
      %v2604 = vadd.f32 0.0, %v2603
      %v2605 = vpop.f32.mrf.mxu0
      %2606 = vmatprep.mubr.f32.mxu0 0.0
      %2607 = vmatmul.mubr.f32.gmra.mxu0 %v2374
      %v2608 = vpop.f32.mrf.mxu0
      %v2609 = vadd.f32 0.0, %v2608
      %v2610 = vpop.f32.mrf.mxu0
      %2611 = vmatprep.mubr.f32.mxu0 0.0
      %2612 = vmatmul.mubr.f32.gmra.mxu0 %v2377
      %v2613 = vpop.f32.mrf.mxu0
      %v2614 = vadd.f32 0.0, %v2613
      %v2615 = vpop.f32.mrf.mxu0
      %2616 = vmatprep.mubr.f32.mxu0 0.0
      %2617 = vmatmul.mubr.f32.gmra.mxu0 %v2380
      %v2618 = vpop.f32.mrf.mxu0
      %v2619 = vadd.f32 0.0, %v2618
      %v2620 = vpop.f32.mrf.mxu0
      %2621 = vmatprep.mubr.f32.mxu0 0.0
      %2622 = vmatmul.mubr.f32.gmra.mxu0 %v2383
      %v2623 = vpop.f32.mrf.mxu0
      %v2624 = vadd.f32 0.0, %v2623
      %v2625 = vpop.f32.mrf.mxu0
      %2626 = vmatprep.mubr.f32.mxu0 0.0
      %2627 = vmatmul.mubr.f32.gmra.mxu0 %v2386
      %v2628 = vpop.f32.mrf.mxu0
      %v2629 = vadd.f32 0.0, %v2628
      %v2630 = vpop.f32.mrf.mxu0
      %2631 = vmatprep.mubr.f32.mxu0 0.0
      %2632 = vmatmul.mubr.f32.gmra.mxu0 %v2389
      %v2633 = vpop.f32.mrf.mxu0
      %v2634 = vadd.f32 0.0, %v2633
      %v2635 = vpop.f32.mrf.mxu0
      %2636 = vmatprep.mubr.f32.mxu0 0.0
      %2637 = vmatmul.mubr.f32.gmra.mxu0 %v2392
      %v2638 = vpop.f32.mrf.mxu0
      %v2639 = vadd.f32 0.0, %v2638
      %v2640 = vpop.f32.mrf.mxu0
      %2641 = vmatprep.mubr.f32.mxu0 0.0
      %2642 = vmatmul.mubr.f32.gmra.mxu0 %v2395
      %v2643 = vpop.f32.mrf.mxu0
      %v2644 = vadd.f32 0.0, %v2643
      %v2645 = vpop.f32.mrf.mxu0
      %2646 = vmatprep.mubr.f32.mxu0 0.0
      %2647 = vmatmul.mubr.f32.gmra.mxu0 %v2398
      %v2648 = vpop.f32.mrf.mxu0
      %v2649 = vadd.f32 0.0, %v2648
      %v2650 = vpop.f32.mrf.mxu0
      %2651 = vmatprep.mubr.f32.mxu0 0.0
      %2652 = vmatmul.mubr.f32.gmra.mxu0 %v2401
      %v2653 = vpop.f32.mrf.mxu0
      %v2654 = vadd.f32 0.0, %v2653
      %v2655 = vpop.f32.mrf.mxu0
      %2656 = vmatprep.mubr.f32.mxu0 0.0
      %2657 = vmatmul.mubr.f32.gmra.mxu0 %v2404
      %v2658 = vpop.f32.mrf.mxu0
      %v2659 = vadd.f32 0.0, %v2658
      %v2660 = vpop.f32.mrf.mxu0
      %2661 = vmatprep.mubr.f32.mxu0 0.0
      %2662 = vmatmul.mubr.f32.gmra.mxu0 %v2407
      %v2663 = vpop.f32.mrf.mxu0
      %v2664 = vadd.f32 0.0, %v2663
      %v2665 = vpop.f32.mrf.mxu0
      %2666 = vmatprep.mubr.f32.mxu0 0.0
      %2667 = vmatmul.mubr.f32.gmra.mxu0 %v2410
      %v2668 = vpop.f32.mrf.mxu0
      %v2669 = vadd.f32 0.0, %v2668
      %v2670 = vpop.f32.mrf.mxu0
      %2671 = vmatprep.mubr.f32.mxu0 0.0
      %2672 = vmatmul.mubr.f32.gmra.mxu0 %v2413
      %v2673 = vpop.f32.mrf.mxu0
      %v2674 = vadd.f32 0.0, %v2673
      %v2675 = vpop.f32.mrf.mxu0
      %2676 = vmatprep.mubr.f32.mxu0 0.0
      %2677 = vmatmul.mubr.f32.gmra.mxu0 %v2416
      %v2678 = vpop.f32.mrf.mxu0
      %v2679 = vadd.f32 0.0, %v2678
      %v2680 = vpop.f32.mrf.mxu0
      %2681 = vmatprep.mubr.f32.mxu0 0.0
      %2682 = vmatmul.mubr.f32.gmra.mxu0 %v2419
      %v2683 = vpop.f32.mrf.mxu0
      %v2684 = vadd.f32 0.0, %v2683
      %v2685 = vpop.f32.mrf.mxu0
      %2686 = vmatprep.mubr.f32.mxu0 0.0
      %2687 = vmatmul.mubr.f32.gmra.mxu0 %v2422
      %v2688 = vpop.f32.mrf.mxu0
      %v2689 = vadd.f32 0.0, %v2688
      %v2690 = vpop.f32.mrf.mxu0
      %2691 = vmatprep.mubr.f32.mxu0 0.0
      %2692 = vmatmul.mubr.f32.gmra.mxu0 %v2425
      %v2693 = vpop.f32.mrf.mxu0
      %v2694 = vadd.f32 0.0, %v2693
      %v2695 = vpop.f32.mrf.mxu0
      %2696 = vdwg.mxu0
      %v2697 = vadd.f32 %v2221, %v2494
      %v2698 = vadd.f32 %v2222, %v2499
      %v2699 = vadd.f32 %v2223, %v2504
      %v2700 = vadd.f32 %v2224, %v2509
      %v2701 = vadd.f32 %v2225, %v2514
      %v2702 = vadd.f32 %v2226, %v2519
      %v2703 = vadd.f32 %v2227, %v2524
      %v2704 = vadd.f32 %v2228, %v2529
      %v2705 = vadd.f32 %v2229, %v2534
      %v2706 = vadd.f32 %v2230, %v2539
      %v2707 = vadd.f32 %v2231, %v2544
      %v2708 = vadd.f32 %v2232, %v2549
      %v2709 = vadd.f32 %v2233, %v2554
      %v2710 = vadd.f32 %v2234, %v2559
      %v2711 = vadd.f32 %v2235, %v2564
      %v2712 = vadd.f32 %v2236, %v2569
      %v2713 = vadd.f32 %v2237, %v2574
      %v2714 = vadd.f32 %v2238, %v2579
      %v2715 = vadd.f32 %v2239, %v2584
      %v2716 = vadd.f32 %v2240, %v2589
      %v2717 = vadd.f32 %v2241, %v2594
      %v2718 = vadd.f32 %v2242, %v2599
      %v2719 = vadd.f32 %v2243, %v2604
      %v2720 = vadd.f32 %v2244, %v2609
      %v2721 = vadd.f32 %v2245, %v2614
      %v2722 = vadd.f32 %v2246, %v2619
      %v2723 = vadd.f32 %v2247, %v2624
      %v2724 = vadd.f32 %v2248, %v2629
      %v2725 = vadd.f32 %v2249, %v2634
      %v2726 = vadd.f32 %v2250, %v2639
      %v2727 = vadd.f32 %v2251, %v2644
      %v2728 = vadd.f32 %v2252, %v2649
      %v2729 = vadd.f32 %v2253, %v2654
      %v2730 = vadd.f32 %v2254, %v2659
      %v2731 = vadd.f32 %v2255, %v2664
      %v2732 = vadd.f32 %v2256, %v2669
      %v2733 = vadd.f32 %v2257, %v2674
      %v2734 = vadd.f32 %v2258, %v2679
      %v2735 = vadd.f32 %v2259, %v2684
      %v2736 = vadd.f32 %v2260, %v2689
      %v2737 = vadd.f32 %v2261, %v2694
      %v2738 = vld [vmem:[%s434 + $0x19] sm:$0xff]
      %v2739 = vld [vmem:[%s434 + $0x21] sm:$0xff]
      %v2740 = vld [vmem:[%s434 + $0x29] sm:$0xff]
      %v2741 = vld [vmem:[%s434 + $0x31] sm:$0xff]
      %v2742 = vld [vmem:[%s434 + $0x39] sm:$0xff]
      %v2743 = vld [vmem:[%s434 + $0x41] sm:$0xff]
      %v2744 = vld [vmem:[%s434 + $0x49] sm:$0xff]
      %v2745 = vld [vmem:[%s434 + $0x51] sm:$0xff]
      %v2746 = vld [vmem:[%s434 + $0x59] sm:$0xff]
      %v2747 = vld [vmem:[%s434 + $0x61] sm:$0xff]
      %v2748 = vld [vmem:[%s434 + $0x69] sm:$0xff]
      %v2749 = vld [vmem:[%s434 + $0x71] sm:$0xff]
      %v2750 = vld [vmem:[%s434 + $0x79] sm:$0xff]
      %v2751 = vld [vmem:[%s434 + $0x81] sm:$0xff]
      %v2752 = vld [vmem:[%s434 + $0x89] sm:$0xff]
      %v2753 = vld [vmem:[%s434 + $0x91] sm:$0xff]
      %v2754 = vld [vmem:[%s434 + $0x99] sm:$0xff]
      %v2755 = vld [vmem:[%s434 + $0xa1] sm:$0xff]
      %v2756 = vld [vmem:[%s434 + $0xa9] sm:$0xff]
      %v2757 = vld [vmem:[%s434 + $0xb1] sm:$0xff]
      %v2758 = vld [vmem:[%s434 + $0xb9] sm:$0xff]
      %v2759 = vld [vmem:[%s434 + $0xc1] sm:$0xff]
      %v2760 = vld [vmem:[%s434 + $0xc9] sm:$0xff]
      %v2761 = vld [vmem:[%s434 + $0xd1] sm:$0xff]
      %v2762 = vld [vmem:[%s434 + $0xd9] sm:$0xff]
      %v2763 = vld [vmem:[%s434 + $0xe1] sm:$0xff]
      %v2764 = vld [vmem:[%s434 + $0xe9] sm:$0xff]
      %v2765 = vld [vmem:[%s434 + $0xf1] sm:$0xff]
      %v2766 = vld [vmem:[%s434 + $0xf9] sm:$0xff]
      %v2767 = vld [vmem:[%s434 + $0x101] sm:$0xff]
      %v2768 = vld [vmem:[%s434 + $0x109] sm:$0xff]
      %v2769 = vld [vmem:[%s434 + $0x111] sm:$0xff]
      %v2770 = vld [vmem:[%s434 + $0x119] sm:$0xff]
      %v2771 = vld [vmem:[%s434 + $0x121] sm:$0xff]
      %v2772 = vld [vmem:[%s434 + $0x129] sm:$0xff]
      %v2773 = vld [vmem:[%s434 + $0x131] sm:$0xff]
      %v2774 = vld [vmem:[%s434 + $0x139] sm:$0xff]
      %v2775 = vld [vmem:[%s434 + $0x141] sm:$0xff]
      %v2776 = vld [vmem:[%s434 + $0x149] sm:$0xff]
      %v2777 = vld [vmem:[%s434 + $0x151] sm:$0xff]
      %v2778 = vld [vmem:[%s434 + $0x159] sm:$0xf]
      %v2779 = vld [vmem:[%s1 + $0x28] sm:$0xff]
      %v2781 = vsel %vm523, %v2738, 0
      %v2784 = vsel %vm523, %v2739, 0
      %v2787 = vsel %vm523, %v2740, 0
      %v2790 = vsel %vm523, %v2741, 0
      %v2793 = vsel %vm523, %v2742, 0
      %v2796 = vsel %vm523, %v2743, 0
      %v2799 = vsel %vm523, %v2744, 0
      %v2802 = vsel %vm523, %v2745, 0
      %v2805 = vsel %vm523, %v2746, 0
      %v2808 = vsel %vm523, %v2747, 0
      %v2811 = vsel %vm523, %v2748, 0
      %v2814 = vsel %vm523, %v2749, 0
      %v2817 = vsel %vm523, %v2750, 0
      %v2820 = vsel %vm523, %v2751, 0
      %v2823 = vsel %vm523, %v2752, 0
      %v2826 = vsel %vm523, %v2753, 0
      %v2829 = vsel %vm523, %v2754, 0
      %v2832 = vsel %vm523, %v2755, 0
      %v2835 = vsel %vm523, %v2756, 0
      %v2838 = vsel %vm523, %v2757, 0
      %v2841 = vsel %vm523, %v2758, 0
      %v2844 = vsel %vm523, %v2759, 0
      %v2847 = vsel %vm523, %v2760, 0
      %v2850 = vsel %vm523, %v2761, 0
      %v2853 = vsel %vm523, %v2762, 0
      %v2856 = vsel %vm523, %v2763, 0
      %v2859 = vsel %vm523, %v2764, 0
      %v2862 = vsel %vm523, %v2765, 0
      %v2865 = vsel %vm523, %v2766, 0
      %v2868 = vsel %vm523, %v2767, 0
      %v2871 = vsel %vm523, %v2768, 0
      %v2874 = vsel %vm523, %v2769, 0
      %v2877 = vsel %vm523, %v2770, 0
      %v2880 = vsel %vm523, %v2771, 0
      %v2883 = vsel %vm523, %v2772, 0
      %v2886 = vsel %vm523, %v2773, 0
      %v2889 = vsel %vm523, %v2774, 0
      %v2892 = vsel %vm523, %v2775, 0
      %v2895 = vsel %vm523, %v2776, 0
      %v2898 = vsel %vm523, %v2777, 0
      %v2901 = vsel %vm523, %v2778, 0
      %2903 = vmatprep.subr.mxu0 0.0
      %2904 = vmatpush1.msra.mxu0 0.0
      %2905 = vmatprep.subr.mxu0 0.0
      %2906 = vmatpush1.msra.mxu0 0.0
      %2907 = vmatprep.subr.mxu0 0.0
      %2908 = vmatpush1.msra.mxu0 0.0
      %2909 = vmatprep.subr.mxu0 0.0
      %2910 = vmatpush1.msra.mxu0 0.0
      %2911 = vmatprep.subr.mxu0 0.0
      %2912 = vmatpush1.msra.mxu0 0.0
      %2913 = vmatprep.subr.mxu0 0.0
      %2914 = vmatpush1.msra.mxu0 0.0
      %2915 = vmatprep.subr.mxu0 0.0
      %2916 = vmatpush1.msra.mxu0 0.0
      %2917 = vmatprep.subr.mxu0 0.0
      %2918 = vmatpush1.msra.mxu0 0.0
      %2919 = vmatprep.subr.mxu0 0.0
      %2920 = vmatpush1.msra.mxu0 0.0
      %2921 = vmatprep.subr.mxu0 0.0
      %2922 = vmatpush1.msra.mxu0 0.0
      %2923 = vmatprep.subr.mxu0 0.0
      %2924 = vmatpush1.msra.mxu0 0.0
      %2925 = vmatprep.subr.mxu0 0.0
      %2926 = vmatpush1.msra.mxu0 0.0
      %2927 = vmatprep.subr.mxu0 0.0
      %2928 = vmatpush1.msra.mxu0 0.0
      %2929 = vmatprep.subr.mxu0 0.0
      %2930 = vmatpush1.msra.mxu0 0.0
      %2931 = vmatprep.subr.mxu0 0.0
      %2932 = vmatpush1.msra.mxu0 0.0
      %2933 = vmatprep.subr.mxu0 0.0
      %2934 = vmatpush1.msra.mxu0 %v2779
      %2935 = vmatprep.subr.mxu0 0.0
      %2936 = vmatpush2.msra.mxu0 0.0
      %2937 = vmatprep.subr.mxu0 0.0
      %2938 = vmatpush2.msra.mxu0 0.0
      %2939 = vmatprep.subr.mxu0 0.0
      %2940 = vmatpush2.msra.mxu0 0.0
      %2941 = vmatprep.subr.mxu0 0.0
      %2942 = vmatpush2.msra.mxu0 0.0
      %2943 = vmatprep.subr.mxu0 0.0
      %2944 = vmatpush2.msra.mxu0 0.0
      %2945 = vmatprep.subr.mxu0 0.0
      %2946 = vmatpush2.msra.mxu0 0.0
      %2947 = vmatprep.subr.mxu0 0.0
      %2948 = vmatpush2.msra.mxu0 0.0
      %2949 = vmatprep.subr.mxu0 0.0
      %2950 = vmatpush2.msra.mxu0 0.0
      %2951 = vmatprep.subr.mxu0 0.0
      %2952 = vmatpush2.msra.mxu0 0.0
      %2953 = vmatprep.subr.mxu0 0.0
      %2954 = vmatpush2.msra.mxu0 0.0
      %2955 = vmatprep.subr.mxu0 0.0
      %2956 = vmatpush2.msra.mxu0 0.0
      %2957 = vmatprep.subr.mxu0 0.0
      %2958 = vmatpush2.msra.mxu0 0.0
      %2959 = vmatprep.subr.mxu0 0.0
      %2960 = vmatpush2.msra.mxu0 0.0
      %2961 = vmatprep.subr.mxu0 0.0
      %2962 = vmatpush2.msra.mxu0 0.0
      %2963 = vmatprep.subr.mxu0 0.0
      %2964 = vmatpush2.msra.mxu0 0.0
      %2965 = vmatprep.subr.mxu0 0.0
      %2966 = vmatpush2.msra.mxu0 0.0
      %2967 = vmatprep.mubr.f32.mxu0 0.0
      %2968 = vmatmul.mubr.f32.gmra.mxu0 %v2781
      %v2969 = vpop.f32.mrf.mxu0
      %v2970 = vadd.f32 0.0, %v2969
      %v2971 = vpop.f32.mrf.mxu0
      %2972 = vmatprep.mubr.f32.mxu0 0.0
      %2973 = vmatmul.mubr.f32.gmra.mxu0 %v2784
      %v2974 = vpop.f32.mrf.mxu0
      %v2975 = vadd.f32 0.0, %v2974
      %v2976 = vpop.f32.mrf.mxu0
      %2977 = vmatprep.mubr.f32.mxu0 0.0
      %2978 = vmatmul.mubr.f32.gmra.mxu0 %v2787
      %v2979 = vpop.f32.mrf.mxu0
      %v2980 = vadd.f32 0.0, %v2979
      %v2981 = vpop.f32.mrf.mxu0
      %2982 = vmatprep.mubr.f32.mxu0 0.0
      %2983 = vmatmul.mubr.f32.gmra.mxu0 %v2790
      %v2984 = vpop.f32.mrf.mxu0
      %v2985 = vadd.f32 0.0, %v2984
      %v2986 = vpop.f32.mrf.mxu0
      %2987 = vmatprep.mubr.f32.mxu0 0.0
      %2988 = vmatmul.mubr.f32.gmra.mxu0 %v2793
      %v2989 = vpop.f32.mrf.mxu0
      %v2990 = vadd.f32 0.0, %v2989
      %v2991 = vpop.f32.mrf.mxu0
      %2992 = vmatprep.mubr.f32.mxu0 0.0
      %2993 = vmatmul.mubr.f32.gmra.mxu0 %v2796
      %v2994 = vpop.f32.mrf.mxu0
      %v2995 = vadd.f32 0.0, %v2994
      %v2996 = vpop.f32.mrf.mxu0
      %2997 = vmatprep.mubr.f32.mxu0 0.0
      %2998 = vmatmul.mubr.f32.gmra.mxu0 %v2799
      %v2999 = vpop.f32.mrf.mxu0
      %v3000 = vadd.f32 0.0, %v2999
      %v3001 = vpop.f32.mrf.mxu0
      %3002 = vmatprep.mubr.f32.mxu0 0.0
      %3003 = vmatmul.mubr.f32.gmra.mxu0 %v2802
      %v3004 = vpop.f32.mrf.mxu0
      %v3005 = vadd.f32 0.0, %v3004
      %v3006 = vpop.f32.mrf.mxu0
      %3007 = vmatprep.mubr.f32.mxu0 0.0
      %3008 = vmatmul.mubr.f32.gmra.mxu0 %v2805
      %v3009 = vpop.f32.mrf.mxu0
      %v3010 = vadd.f32 0.0, %v3009
      %v3011 = vpop.f32.mrf.mxu0
      %3012 = vmatprep.mubr.f32.mxu0 0.0
      %3013 = vmatmul.mubr.f32.gmra.mxu0 %v2808
      %v3014 = vpop.f32.mrf.mxu0
      %v3015 = vadd.f32 0.0, %v3014
      %v3016 = vpop.f32.mrf.mxu0
      %3017 = vmatprep.mubr.f32.mxu0 0.0
      %3018 = vmatmul.mubr.f32.gmra.mxu0 %v2811
      %v3019 = vpop.f32.mrf.mxu0
      %v3020 = vadd.f32 0.0, %v3019
      %v3021 = vpop.f32.mrf.mxu0
      %3022 = vmatprep.mubr.f32.mxu0 0.0
      %3023 = vmatmul.mubr.f32.gmra.mxu0 %v2814
      %v3024 = vpop.f32.mrf.mxu0
      %v3025 = vadd.f32 0.0, %v3024
      %v3026 = vpop.f32.mrf.mxu0
      %3027 = vmatprep.mubr.f32.mxu0 0.0
      %3028 = vmatmul.mubr.f32.gmra.mxu0 %v2817
      %v3029 = vpop.f32.mrf.mxu0
      %v3030 = vadd.f32 0.0, %v3029
      %v3031 = vpop.f32.mrf.mxu0
      %3032 = vmatprep.mubr.f32.mxu0 0.0
      %3033 = vmatmul.mubr.f32.gmra.mxu0 %v2820
      %v3034 = vpop.f32.mrf.mxu0
      %v3035 = vadd.f32 0.0, %v3034
      %v3036 = vpop.f32.mrf.mxu0
      %3037 = vmatprep.mubr.f32.mxu0 0.0
      %3038 = vmatmul.mubr.f32.gmra.mxu0 %v2823
      %v3039 = vpop.f32.mrf.mxu0
      %v3040 = vadd.f32 0.0, %v3039
      %v3041 = vpop.f32.mrf.mxu0
      %3042 = vmatprep.mubr.f32.mxu0 0.0
      %3043 = vmatmul.mubr.f32.gmra.mxu0 %v2826
      %v3044 = vpop.f32.mrf.mxu0
      %v3045 = vadd.f32 0.0, %v3044
      %v3046 = vpop.f32.mrf.mxu0
      %3047 = vmatprep.mubr.f32.mxu0 0.0
      %3048 = vmatmul.mubr.f32.gmra.mxu0 %v2829
      %v3049 = vpop.f32.mrf.mxu0
      %v3050 = vadd.f32 0.0, %v3049
      %v3051 = vpop.f32.mrf.mxu0
      %3052 = vmatprep.mubr.f32.mxu0 0.0
      %3053 = vmatmul.mubr.f32.gmra.mxu0 %v2832
      %v3054 = vpop.f32.mrf.mxu0
      %v3055 = vadd.f32 0.0, %v3054
      %v3056 = vpop.f32.mrf.mxu0
      %3057 = vmatprep.mubr.f32.mxu0 0.0
      %3058 = vmatmul.mubr.f32.gmra.mxu0 %v2835
      %v3059 = vpop.f32.mrf.mxu0
      %v3060 = vadd.f32 0.0, %v3059
      %v3061 = vpop.f32.mrf.mxu0
      %3062 = vmatprep.mubr.f32.mxu0 0.0
      %3063 = vmatmul.mubr.f32.gmra.mxu0 %v2838
      %v3064 = vpop.f32.mrf.mxu0
      %v3065 = vadd.f32 0.0, %v3064
      %v3066 = vpop.f32.mrf.mxu0
      %3067 = vmatprep.mubr.f32.mxu0 0.0
      %3068 = vmatmul.mubr.f32.gmra.mxu0 %v2841
      %v3069 = vpop.f32.mrf.mxu0
      %v3070 = vadd.f32 0.0, %v3069
      %v3071 = vpop.f32.mrf.mxu0
      %3072 = vmatprep.mubr.f32.mxu0 0.0
      %3073 = vmatmul.mubr.f32.gmra.mxu0 %v2844
      %v3074 = vpop.f32.mrf.mxu0
      %v3075 = vadd.f32 0.0, %v3074
      %v3076 = vpop.f32.mrf.mxu0
      %3077 = vmatprep.mubr.f32.mxu0 0.0
      %3078 = vmatmul.mubr.f32.gmra.mxu0 %v2847
      %v3079 = vpop.f32.mrf.mxu0
      %v3080 = vadd.f32 0.0, %v3079
      %v3081 = vpop.f32.mrf.mxu0
      %3082 = vmatprep.mubr.f32.mxu0 0.0
      %3083 = vmatmul.mubr.f32.gmra.mxu0 %v2850
      %v3084 = vpop.f32.mrf.mxu0
      %v3085 = vadd.f32 0.0, %v3084
      %v3086 = vpop.f32.mrf.mxu0
      %3087 = vmatprep.mubr.f32.mxu0 0.0
      %3088 = vmatmul.mubr.f32.gmra.mxu0 %v2853
      %v3089 = vpop.f32.mrf.mxu0
      %v3090 = vadd.f32 0.0, %v3089
      %v3091 = vpop.f32.mrf.mxu0
      %3092 = vmatprep.mubr.f32.mxu0 0.0
      %3093 = vmatmul.mubr.f32.gmra.mxu0 %v2856
      %v3094 = vpop.f32.mrf.mxu0
      %v3095 = vadd.f32 0.0, %v3094
      %v3096 = vpop.f32.mrf.mxu0
      %3097 = vmatprep.mubr.f32.mxu0 0.0
      %3098 = vmatmul.mubr.f32.gmra.mxu0 %v2859
      %v3099 = vpop.f32.mrf.mxu0
      %v3100 = vadd.f32 0.0, %v3099
      %v3101 = vpop.f32.mrf.mxu0
      %3102 = vmatprep.mubr.f32.mxu0 0.0
      %3103 = vmatmul.mubr.f32.gmra.mxu0 %v2862
      %v3104 = vpop.f32.mrf.mxu0
      %v3105 = vadd.f32 0.0, %v3104
      %v3106 = vpop.f32.mrf.mxu0
      %3107 = vmatprep.mubr.f32.mxu0 0.0
      %3108 = vmatmul.mubr.f32.gmra.mxu0 %v2865
      %v3109 = vpop.f32.mrf.mxu0
      %v3110 = vadd.f32 0.0, %v3109
      %v3111 = vpop.f32.mrf.mxu0
      %3112 = vmatprep.mubr.f32.mxu0 0.0
      %3113 = vmatmul.mubr.f32.gmra.mxu0 %v2868
      %v3114 = vpop.f32.mrf.mxu0
      %v3115 = vadd.f32 0.0, %v3114
      %v3116 = vpop.f32.mrf.mxu0
      %3117 = vmatprep.mubr.f32.mxu0 0.0
      %3118 = vmatmul.mubr.f32.gmra.mxu0 %v2871
      %v3119 = vpop.f32.mrf.mxu0
      %v3120 = vadd.f32 0.0, %v3119
      %v3121 = vpop.f32.mrf.mxu0
      %3122 = vmatprep.mubr.f32.mxu0 0.0
      %3123 = vmatmul.mubr.f32.gmra.mxu0 %v2874
      %v3124 = vpop.f32.mrf.mxu0
      %v3125 = vadd.f32 0.0, %v3124
      %v3126 = vpop.f32.mrf.mxu0
      %3127 = vmatprep.mubr.f32.mxu0 0.0
      %3128 = vmatmul.mubr.f32.gmra.mxu0 %v2877
      %v3129 = vpop.f32.mrf.mxu0
      %v3130 = vadd.f32 0.0, %v3129
      %v3131 = vpop.f32.mrf.mxu0
      %3132 = vmatprep.mubr.f32.mxu0 0.0
      %3133 = vmatmul.mubr.f32.gmra.mxu0 %v2880
      %v3134 = vpop.f32.mrf.mxu0
      %v3135 = vadd.f32 0.0, %v3134
      %v3136 = vpop.f32.mrf.mxu0
      %3137 = vmatprep.mubr.f32.mxu0 0.0
      %3138 = vmatmul.mubr.f32.gmra.mxu0 %v2883
      %v3139 = vpop.f32.mrf.mxu0
      %v3140 = vadd.f32 0.0, %v3139
      %v3141 = vpop.f32.mrf.mxu0
      %3142 = vmatprep.mubr.f32.mxu0 0.0
      %3143 = vmatmul.mubr.f32.gmra.mxu0 %v2886
      %v3144 = vpop.f32.mrf.mxu0
      %v3145 = vadd.f32 0.0, %v3144
      %v3146 = vpop.f32.mrf.mxu0
      %3147 = vmatprep.mubr.f32.mxu0 0.0
      %3148 = vmatmul.mubr.f32.gmra.mxu0 %v2889
      %v3149 = vpop.f32.mrf.mxu0
      %v3150 = vadd.f32 0.0, %v3149
      %v3151 = vpop.f32.mrf.mxu0
      %3152 = vmatprep.mubr.f32.mxu0 0.0
      %3153 = vmatmul.mubr.f32.gmra.mxu0 %v2892
      %v3154 = vpop.f32.mrf.mxu0
      %v3155 = vadd.f32 0.0, %v3154
      %v3156 = vpop.f32.mrf.mxu0
      %3157 = vmatprep.mubr.f32.mxu0 0.0
      %3158 = vmatmul.mubr.f32.gmra.mxu0 %v2895
      %v3159 = vpop.f32.mrf.mxu0
      %v3160 = vadd.f32 0.0, %v3159
      %v3161 = vpop.f32.mrf.mxu0
      %3162 = vmatprep.mubr.f32.mxu0 0.0
      %3163 = vmatmul.mubr.f32.gmra.mxu0 %v2898
      %v3164 = vpop.f32.mrf.mxu0
      %v3165 = vadd.f32 0.0, %v3164
      %v3166 = vpop.f32.mrf.mxu0
      %3167 = vmatprep.mubr.f32.mxu0 0.0
      %3168 = vmatmul.mubr.f32.gmra.mxu0 %v2901
      %v3169 = vpop.f32.mrf.mxu0
      %v3170 = vadd.f32 0.0, %v3169
      %v3171 = vpop.f32.mrf.mxu0
      %3172 = vdwg.mxu0
      %v3173 = vadd.f32 %v2697, %v2970
      %v3174 = vadd.f32 %v2698, %v2975
      %v3175 = vadd.f32 %v2699, %v2980
      %v3176 = vadd.f32 %v2700, %v2985
      %v3177 = vadd.f32 %v2701, %v2990
      %v3178 = vadd.f32 %v2702, %v2995
      %v3179 = vadd.f32 %v2703, %v3000
      %v3180 = vadd.f32 %v2704, %v3005
      %v3181 = vadd.f32 %v2705, %v3010
      %v3182 = vadd.f32 %v2706, %v3015
      %v3183 = vadd.f32 %v2707, %v3020
      %v3184 = vadd.f32 %v2708, %v3025
      %v3185 = vadd.f32 %v2709, %v3030
      %v3186 = vadd.f32 %v2710, %v3035
      %v3187 = vadd.f32 %v2711, %v3040
      %v3188 = vadd.f32 %v2712, %v3045
      %v3189 = vadd.f32 %v2713, %v3050
      %v3190 = vadd.f32 %v2714, %v3055
      %v3191 = vadd.f32 %v2715, %v3060
      %v3192 = vadd.f32 %v2716, %v3065
      %v3193 = vadd.f32 %v2717, %v3070
      %v3194 = vadd.f32 %v2718, %v3075
      %v3195 = vadd.f32 %v2719, %v3080
      %v3196 = vadd.f32 %v2720, %v3085
      %v3197 = vadd.f32 %v2721, %v3090
      %v3198 = vadd.f32 %v2722, %v3095
      %v3199 = vadd.f32 %v2723, %v3100
      %v3200 = vadd.f32 %v2724, %v3105
      %v3201 = vadd.f32 %v2725, %v3110
      %v3202 = vadd.f32 %v2726, %v3115
      %v3203 = vadd.f32 %v2727, %v3120
      %v3204 = vadd.f32 %v2728, %v3125
      %v3205 = vadd.f32 %v2729, %v3130
      %v3206 = vadd.f32 %v2730, %v3135
      %v3207 = vadd.f32 %v2731, %v3140
      %v3208 = vadd.f32 %v2732, %v3145
      %v3209 = vadd.f32 %v2733, %v3150
      %v3210 = vadd.f32 %v2734, %v3155
      %v3211 = vadd.f32 %v2735, %v3160
      %v3212 = vadd.f32 %v2736, %v3165
      %v3213 = vadd.f32 %v2737, %v3170
      %v3214 = vld [vmem:[%s434 + $0x29] sm:$0xff]
      %v3215 = vld [vmem:[%s434 + $0x31] sm:$0xff]
      %v3216 = vld [vmem:[%s434 + $0x39] sm:$0xff]
      %v3217 = vld [vmem:[%s434 + $0x41] sm:$0xff]
      %v3218 = vld [vmem:[%s434 + $0x49] sm:$0xff]
      %v3219 = vld [vmem:[%s434 + $0x51] sm:$0xff]
      %v3220 = vld [vmem:[%s434 + $0x59] sm:$0xff]
      %v3221 = vld [vmem:[%s434 + $0x61] sm:$0xff]
      %v3222 = vld [vmem:[%s434 + $0x69] sm:$0xff]
      %v3223 = vld [vmem:[%s434 + $0x71] sm:$0xff]
      %v3224 = vld [vmem:[%s434 + $0x79] sm:$0xff]
      %v3225 = vld [vmem:[%s434 + $0x81] sm:$0xff]
      %v3226 = vld [vmem:[%s434 + $0x89] sm:$0xff]
      %v3227 = vld [vmem:[%s434 + $0x91] sm:$0xff]
      %v3228 = vld [vmem:[%s434 + $0x99] sm:$0xff]
      %v3229 = vld [vmem:[%s434 + $0xa1] sm:$0xff]
      %v3230 = vld [vmem:[%s434 + $0xa9] sm:$0xff]
      %v3231 = vld [vmem:[%s434 + $0xb1] sm:$0xff]
      %v3232 = vld [vmem:[%s434 + $0xb9] sm:$0xff]
      %v3233 = vld [vmem:[%s434 + $0xc1] sm:$0xff]
      %v3234 = vld [vmem:[%s434 + $0xc9] sm:$0xff]
      %v3235 = vld [vmem:[%s434 + $0xd1] sm:$0xff]
      %v3236 = vld [vmem:[%s434 + $0xd9] sm:$0xff]
      %v3237 = vld [vmem:[%s434 + $0xe1] sm:$0xff]
      %v3238 = vld [vmem:[%s434 + $0xe9] sm:$0xff]
      %v3239 = vld [vmem:[%s434 + $0xf1] sm:$0xff]
      %v3240 = vld [vmem:[%s434 + $0xf9] sm:$0xff]
      %v3241 = vld [vmem:[%s434 + $0x101] sm:$0xff]
      %v3242 = vld [vmem:[%s434 + $0x109] sm:$0xff]
      %v3243 = vld [vmem:[%s434 + $0x111] sm:$0xff]
      %v3244 = vld [vmem:[%s434 + $0x119] sm:$0xff]
      %v3245 = vld [vmem:[%s434 + $0x121] sm:$0xff]
      %v3246 = vld [vmem:[%s434 + $0x129] sm:$0xff]
      %v3247 = vld [vmem:[%s434 + $0x131] sm:$0xff]
      %v3248 = vld [vmem:[%s434 + $0x139] sm:$0xff]
      %v3249 = vld [vmem:[%s434 + $0x141] sm:$0xff]
      %v3250 = vld [vmem:[%s434 + $0x149] sm:$0xff]
      %v3251 = vld [vmem:[%s434 + $0x151] sm:$0xff]
      %v3252 = vld [vmem:[%s434 + $0x159] sm:$0xff]
      %v3253 = vld [vmem:[%s434 + $0x161] sm:$0xff]
      %v3254 = vld [vmem:[%s434 + $0x169] sm:$0xf]
      %v3255 = vld [vmem:[%s1 + $0x30] sm:$0xff]
      %v3257 = vsel %vm523, %v3214, 0
      %v3260 = vsel %vm523, %v3215, 0
      %v3263 = vsel %vm523, %v3216, 0
      %v3266 = vsel %vm523, %v3217, 0
      %v3269 = vsel %vm523, %v3218, 0
      %v3272 = vsel %vm523, %v3219, 0
      %v3275 = vsel %vm523, %v3220, 0
      %v3278 = vsel %vm523, %v3221, 0
      %v3281 = vsel %vm523, %v3222, 0
      %v3284 = vsel %vm523, %v3223, 0
      %v3287 = vsel %vm523, %v3224, 0
      %v3290 = vsel %vm523, %v3225, 0
      %v3293 = vsel %vm523, %v3226, 0
      %v3296 = vsel %vm523, %v3227, 0
      %v3299 = vsel %vm523, %v3228, 0
      %v3302 = vsel %vm523, %v3229, 0
      %v3305 = vsel %vm523, %v3230, 0
      %v3308 = vsel %vm523, %v3231, 0
      %v3311 = vsel %vm523, %v3232, 0
      %v3314 = vsel %vm523, %v3233, 0
      %v3317 = vsel %vm523, %v3234, 0
      %v3320 = vsel %vm523, %v3235, 0
      %v3323 = vsel %vm523, %v3236, 0
      %v3326 = vsel %vm523, %v3237, 0
      %v3329 = vsel %vm523, %v3238, 0
      %v3332 = vsel %vm523, %v3239, 0
      %v3335 = vsel %vm523, %v3240, 0
      %v3338 = vsel %vm523, %v3241, 0
      %v3341 = vsel %vm523, %v3242, 0
      %v3344 = vsel %vm523, %v3243, 0
      %v3347 = vsel %vm523, %v3244, 0
      %v3350 = vsel %vm523, %v3245, 0
      %v3353 = vsel %vm523, %v3246, 0
      %v3356 = vsel %vm523, %v3247, 0
      %v3359 = vsel %vm523, %v3248, 0
      %v3362 = vsel %vm523, %v3249, 0
      %v3365 = vsel %vm523, %v3250, 0
      %v3368 = vsel %vm523, %v3251, 0
      %v3371 = vsel %vm523, %v3252, 0
      %v3374 = vsel %vm523, %v3253, 0
      %v3377 = vsel %vm523, %v3254, 0
      %3379 = vmatprep.subr.mxu0 0.0
      %3380 = vmatpush1.msra.mxu0 0.0
      %3381 = vmatprep.subr.mxu0 0.0
      %3382 = vmatpush1.msra.mxu0 0.0
      %3383 = vmatprep.subr.mxu0 0.0
      %3384 = vmatpush1.msra.mxu0 0.0
      %3385 = vmatprep.subr.mxu0 0.0
      %3386 = vmatpush1.msra.mxu0 0.0
      %3387 = vmatprep.subr.mxu0 0.0
      %3388 = vmatpush1.msra.mxu0 0.0
      %3389 = vmatprep.subr.mxu0 0.0
      %3390 = vmatpush1.msra.mxu0 0.0
      %3391 = vmatprep.subr.mxu0 0.0
      %3392 = vmatpush1.msra.mxu0 0.0
      %3393 = vmatprep.subr.mxu0 0.0
      %3394 = vmatpush1.msra.mxu0 0.0
      %3395 = vmatprep.subr.mxu0 0.0
      %3396 = vmatpush1.msra.mxu0 0.0
      %3397 = vmatprep.subr.mxu0 0.0
      %3398 = vmatpush1.msra.mxu0 0.0
      %3399 = vmatprep.subr.mxu0 0.0
      %3400 = vmatpush1.msra.mxu0 0.0
      %3401 = vmatprep.subr.mxu0 0.0
      %3402 = vmatpush1.msra.mxu0 0.0
      %3403 = vmatprep.subr.mxu0 0.0
      %3404 = vmatpush1.msra.mxu0 0.0
      %3405 = vmatprep.subr.mxu0 0.0
      %3406 = vmatpush1.msra.mxu0 0.0
      %3407 = vmatprep.subr.mxu0 0.0
      %3408 = vmatpush1.msra.mxu0 0.0
      %3409 = vmatprep.subr.mxu0 0.0
      %3410 = vmatpush1.msra.mxu0 %v3255
      %3411 = vmatprep.subr.mxu0 0.0
      %3412 = vmatpush2.msra.mxu0 0.0
      %3413 = vmatprep.subr.mxu0 0.0
      %3414 = vmatpush2.msra.mxu0 0.0
      %3415 = vmatprep.subr.mxu0 0.0
      %3416 = vmatpush2.msra.mxu0 0.0
      %3417 = vmatprep.subr.mxu0 0.0
      %3418 = vmatpush2.msra.mxu0 0.0
      %3419 = vmatprep.subr.mxu0 0.0
      %3420 = vmatpush2.msra.mxu0 0.0
      %3421 = vmatprep.subr.mxu0 0.0
      %3422 = vmatpush2.msra.mxu0 0.0
      %3423 = vmatprep.subr.mxu0 0.0
      %3424 = vmatpush2.msra.mxu0 0.0
      %3425 = vmatprep.subr.mxu0 0.0
      %3426 = vmatpush2.msra.mxu0 0.0
      %3427 = vmatprep.subr.mxu0 0.0
      %3428 = vmatpush2.msra.mxu0 0.0
      %3429 = vmatprep.subr.mxu0 0.0
      %3430 = vmatpush2.msra.mxu0 0.0
      %3431 = vmatprep.subr.mxu0 0.0
      %3432 = vmatpush2.msra.mxu0 0.0
      %3433 = vmatprep.subr.mxu0 0.0
      %3434 = vmatpush2.msra.mxu0 0.0
      %3435 = vmatprep.subr.mxu0 0.0
      %3436 = vmatpush2.msra.mxu0 0.0
      %3437 = vmatprep.subr.mxu0 0.0
      %3438 = vmatpush2.msra.mxu0 0.0
      %3439 = vmatprep.subr.mxu0 0.0
      %3440 = vmatpush2.msra.mxu0 0.0
      %3441 = vmatprep.subr.mxu0 0.0
      %3442 = vmatpush2.msra.mxu0 0.0
      %3443 = vmatprep.mubr.f32.mxu0 0.0
      %3444 = vmatmul.mubr.f32.gmra.mxu0 %v3257
      %v3445 = vpop.f32.mrf.mxu0
      %v3446 = vadd.f32 0.0, %v3445
      %v3447 = vpop.f32.mrf.mxu0
      %3448 = vmatprep.mubr.f32.mxu0 0.0
      %3449 = vmatmul.mubr.f32.gmra.mxu0 %v3260
      %v3450 = vpop.f32.mrf.mxu0
      %v3451 = vadd.f32 0.0, %v3450
      %v3452 = vpop.f32.mrf.mxu0
      %3453 = vmatprep.mubr.f32.mxu0 0.0
      %3454 = vmatmul.mubr.f32.gmra.mxu0 %v3263
      %v3455 = vpop.f32.mrf.mxu0
      %v3456 = vadd.f32 0.0, %v3455
      %v3457 = vpop.f32.mrf.mxu0
      %3458 = vmatprep.mubr.f32.mxu0 0.0
      %3459 = vmatmul.mubr.f32.gmra.mxu0 %v3266
      %v3460 = vpop.f32.mrf.mxu0
      %v3461 = vadd.f32 0.0, %v3460
      %v3462 = vpop.f32.mrf.mxu0
      %3463 = vmatprep.mubr.f32.mxu0 0.0
      %3464 = vmatmul.mubr.f32.gmra.mxu0 %v3269
      %v3465 = vpop.f32.mrf.mxu0
      %v3466 = vadd.f32 0.0, %v3465
      %v3467 = vpop.f32.mrf.mxu0
      %3468 = vmatprep.mubr.f32.mxu0 0.0
      %3469 = vmatmul.mubr.f32.gmra.mxu0 %v3272
      %v3470 = vpop.f32.mrf.mxu0
      %v3471 = vadd.f32 0.0, %v3470
      %v3472 = vpop.f32.mrf.mxu0
      %3473 = vmatprep.mubr.f32.mxu0 0.0
      %3474 = vmatmul.mubr.f32.gmra.mxu0 %v3275
      %v3475 = vpop.f32.mrf.mxu0
      %v3476 = vadd.f32 0.0, %v3475
      %v3477 = vpop.f32.mrf.mxu0
      %3478 = vmatprep.mubr.f32.mxu0 0.0
      %3479 = vmatmul.mubr.f32.gmra.mxu0 %v3278
      %v3480 = vpop.f32.mrf.mxu0
      %v3481 = vadd.f32 0.0, %v3480
      %v3482 = vpop.f32.mrf.mxu0
      %3483 = vmatprep.mubr.f32.mxu0 0.0
      %3484 = vmatmul.mubr.f32.gmra.mxu0 %v3281
      %v3485 = vpop.f32.mrf.mxu0
      %v3486 = vadd.f32 0.0, %v3485
      %v3487 = vpop.f32.mrf.mxu0
      %3488 = vmatprep.mubr.f32.mxu0 0.0
      %3489 = vmatmul.mubr.f32.gmra.mxu0 %v3284
      %v3490 = vpop.f32.mrf.mxu0
      %v3491 = vadd.f32 0.0, %v3490
      %v3492 = vpop.f32.mrf.mxu0
      %3493 = vmatprep.mubr.f32.mxu0 0.0
      %3494 = vmatmul.mubr.f32.gmra.mxu0 %v3287
      %v3495 = vpop.f32.mrf.mxu0
      %v3496 = vadd.f32 0.0, %v3495
      %v3497 = vpop.f32.mrf.mxu0
      %3498 = vmatprep.mubr.f32.mxu0 0.0
      %3499 = vmatmul.mubr.f32.gmra.mxu0 %v3290
      %v3500 = vpop.f32.mrf.mxu0
      %v3501 = vadd.f32 0.0, %v3500
      %v3502 = vpop.f32.mrf.mxu0
      %3503 = vmatprep.mubr.f32.mxu0 0.0
      %3504 = vmatmul.mubr.f32.gmra.mxu0 %v3293
      %v3505 = vpop.f32.mrf.mxu0
      %v3506 = vadd.f32 0.0, %v3505
      %v3507 = vpop.f32.mrf.mxu0
      %3508 = vmatprep.mubr.f32.mxu0 0.0
      %3509 = vmatmul.mubr.f32.gmra.mxu0 %v3296
      %v3510 = vpop.f32.mrf.mxu0
      %v3511 = vadd.f32 0.0, %v3510
      %v3512 = vpop.f32.mrf.mxu0
      %3513 = vmatprep.mubr.f32.mxu0 0.0
      %3514 = vmatmul.mubr.f32.gmra.mxu0 %v3299
      %v3515 = vpop.f32.mrf.mxu0
      %v3516 = vadd.f32 0.0, %v3515
      %v3517 = vpop.f32.mrf.mxu0
      %3518 = vmatprep.mubr.f32.mxu0 0.0
      %3519 = vmatmul.mubr.f32.gmra.mxu0 %v3302
      %v3520 = vpop.f32.mrf.mxu0
      %v3521 = vadd.f32 0.0, %v3520
      %v3522 = vpop.f32.mrf.mxu0
      %3523 = vmatprep.mubr.f32.mxu0 0.0
      %3524 = vmatmul.mubr.f32.gmra.mxu0 %v3305
      %v3525 = vpop.f32.mrf.mxu0
      %v3526 = vadd.f32 0.0, %v3525
      %v3527 = vpop.f32.mrf.mxu0
      %3528 = vmatprep.mubr.f32.mxu0 0.0
      %3529 = vmatmul.mubr.f32.gmra.mxu0 %v3308
      %v3530 = vpop.f32.mrf.mxu0
      %v3531 = vadd.f32 0.0, %v3530
      %v3532 = vpop.f32.mrf.mxu0
      %3533 = vmatprep.mubr.f32.mxu0 0.0
      %3534 = vmatmul.mubr.f32.gmra.mxu0 %v3311
      %v3535 = vpop.f32.mrf.mxu0
      %v3536 = vadd.f32 0.0, %v3535
      %v3537 = vpop.f32.mrf.mxu0
      %3538 = vmatprep.mubr.f32.mxu0 0.0
      %3539 = vmatmul.mubr.f32.gmra.mxu0 %v3314
      %v3540 = vpop.f32.mrf.mxu0
      %v3541 = vadd.f32 0.0, %v3540
      %v3542 = vpop.f32.mrf.mxu0
      %3543 = vmatprep.mubr.f32.mxu0 0.0
      %3544 = vmatmul.mubr.f32.gmra.mxu0 %v3317
      %v3545 = vpop.f32.mrf.mxu0
      %v3546 = vadd.f32 0.0, %v3545
      %v3547 = vpop.f32.mrf.mxu0
      %3548 = vmatprep.mubr.f32.mxu0 0.0
      %3549 = vmatmul.mubr.f32.gmra.mxu0 %v3320
      %v3550 = vpop.f32.mrf.mxu0
      %v3551 = vadd.f32 0.0, %v3550
      %v3552 = vpop.f32.mrf.mxu0
      %3553 = vmatprep.mubr.f32.mxu0 0.0
      %3554 = vmatmul.mubr.f32.gmra.mxu0 %v3323
      %v3555 = vpop.f32.mrf.mxu0
      %v3556 = vadd.f32 0.0, %v3555
      %v3557 = vpop.f32.mrf.mxu0
      %3558 = vmatprep.mubr.f32.mxu0 0.0
      %3559 = vmatmul.mubr.f32.gmra.mxu0 %v3326
      %v3560 = vpop.f32.mrf.mxu0
      %v3561 = vadd.f32 0.0, %v3560
      %v3562 = vpop.f32.mrf.mxu0
      %3563 = vmatprep.mubr.f32.mxu0 0.0
      %3564 = vmatmul.mubr.f32.gmra.mxu0 %v3329
      %v3565 = vpop.f32.mrf.mxu0
      %v3566 = vadd.f32 0.0, %v3565
      %v3567 = vpop.f32.mrf.mxu0
      %3568 = vmatprep.mubr.f32.mxu0 0.0
      %3569 = vmatmul.mubr.f32.gmra.mxu0 %v3332
      %v3570 = vpop.f32.mrf.mxu0
      %v3571 = vadd.f32 0.0, %v3570
      %v3572 = vpop.f32.mrf.mxu0
      %3573 = vmatprep.mubr.f32.mxu0 0.0
      %3574 = vmatmul.mubr.f32.gmra.mxu0 %v3335
      %v3575 = vpop.f32.mrf.mxu0
      %v3576 = vadd.f32 0.0, %v3575
      %v3577 = vpop.f32.mrf.mxu0
      %3578 = vmatprep.mubr.f32.mxu0 0.0
      %3579 = vmatmul.mubr.f32.gmra.mxu0 %v3338
      %v3580 = vpop.f32.mrf.mxu0
      %v3581 = vadd.f32 0.0, %v3580
      %v3582 = vpop.f32.mrf.mxu0
      %3583 = vmatprep.mubr.f32.mxu0 0.0
      %3584 = vmatmul.mubr.f32.gmra.mxu0 %v3341
      %v3585 = vpop.f32.mrf.mxu0
      %v3586 = vadd.f32 0.0, %v3585
      %v3587 = vpop.f32.mrf.mxu0
      %3588 = vmatprep.mubr.f32.mxu0 0.0
      %3589 = vmatmul.mubr.f32.gmra.mxu0 %v3344
      %v3590 = vpop.f32.mrf.mxu0
      %v3591 = vadd.f32 0.0, %v3590
      %v3592 = vpop.f32.mrf.mxu0
      %3593 = vmatprep.mubr.f32.mxu0 0.0
      %3594 = vmatmul.mubr.f32.gmra.mxu0 %v3347
      %v3595 = vpop.f32.mrf.mxu0
      %v3596 = vadd.f32 0.0, %v3595
      %v3597 = vpop.f32.mrf.mxu0
      %3598 = vmatprep.mubr.f32.mxu0 0.0
      %3599 = vmatmul.mubr.f32.gmra.mxu0 %v3350
      %v3600 = vpop.f32.mrf.mxu0
      %v3601 = vadd.f32 0.0, %v3600
      %v3602 = vpop.f32.mrf.mxu0
      %3603 = vmatprep.mubr.f32.mxu0 0.0
      %3604 = vmatmul.mubr.f32.gmra.mxu0 %v3353
      %v3605 = vpop.f32.mrf.mxu0
      %v3606 = vadd.f32 0.0, %v3605
      %v3607 = vpop.f32.mrf.mxu0
      %3608 = vmatprep.mubr.f32.mxu0 0.0
      %3609 = vmatmul.mubr.f32.gmra.mxu0 %v3356
      %v3610 = vpop.f32.mrf.mxu0
      %v3611 = vadd.f32 0.0, %v3610
      %v3612 = vpop.f32.mrf.mxu0
      %3613 = vmatprep.mubr.f32.mxu0 0.0
      %3614 = vmatmul.mubr.f32.gmra.mxu0 %v3359
      %v3615 = vpop.f32.mrf.mxu0
      %v3616 = vadd.f32 0.0, %v3615
      %v3617 = vpop.f32.mrf.mxu0
      %3618 = vmatprep.mubr.f32.mxu0 0.0
      %3619 = vmatmul.mubr.f32.gmra.mxu0 %v3362
      %v3620 = vpop.f32.mrf.mxu0
      %v3621 = vadd.f32 0.0, %v3620
      %v3622 = vpop.f32.mrf.mxu0
      %3623 = vmatprep.mubr.f32.mxu0 0.0
      %3624 = vmatmul.mubr.f32.gmra.mxu0 %v3365
      %v3625 = vpop.f32.mrf.mxu0
      %v3626 = vadd.f32 0.0, %v3625
      %v3627 = vpop.f32.mrf.mxu0
      %3628 = vmatprep.mubr.f32.mxu0 0.0
      %3629 = vmatmul.mubr.f32.gmra.mxu0 %v3368
      %v3630 = vpop.f32.mrf.mxu0
      %v3631 = vadd.f32 0.0, %v3630
      %v3632 = vpop.f32.mrf.mxu0
      %3633 = vmatprep.mubr.f32.mxu0 0.0
      %3634 = vmatmul.mubr.f32.gmra.mxu0 %v3371
      %v3635 = vpop.f32.mrf.mxu0
      %v3636 = vadd.f32 0.0, %v3635
      %v3637 = vpop.f32.mrf.mxu0
      %3638 = vmatprep.mubr.f32.mxu0 0.0
      %3639 = vmatmul.mubr.f32.gmra.mxu0 %v3374
      %v3640 = vpop.f32.mrf.mxu0
      %v3641 = vadd.f32 0.0, %v3640
      %v3642 = vpop.f32.mrf.mxu0
      %3643 = vmatprep.mubr.f32.mxu0 0.0
      %3644 = vmatmul.mubr.f32.gmra.mxu0 %v3377
      %v3645 = vpop.f32.mrf.mxu0
      %v3646 = vadd.f32 0.0, %v3645
      %v3647 = vpop.f32.mrf.mxu0
      %3648 = vdwg.mxu0
      %v3649 = vadd.f32 %v3173, %v3446
      %v3650 = vadd.f32 %v3174, %v3451
      %v3651 = vadd.f32 %v3175, %v3456
      %v3652 = vadd.f32 %v3176, %v3461
      %v3653 = vadd.f32 %v3177, %v3466
      %v3654 = vadd.f32 %v3178, %v3471
      %v3655 = vadd.f32 %v3179, %v3476
      %v3656 = vadd.f32 %v3180, %v3481
      %v3657 = vadd.f32 %v3181, %v3486
      %v3658 = vadd.f32 %v3182, %v3491
      %v3659 = vadd.f32 %v3183, %v3496
      %v3660 = vadd.f32 %v3184, %v3501
      %v3661 = vadd.f32 %v3185, %v3506
      %v3662 = vadd.f32 %v3186, %v3511
      %v3663 = vadd.f32 %v3187, %v3516
      %v3664 = vadd.f32 %v3188, %v3521
      %v3665 = vadd.f32 %v3189, %v3526
      %v3666 = vadd.f32 %v3190, %v3531
      %v3667 = vadd.f32 %v3191, %v3536
      %v3668 = vadd.f32 %v3192, %v3541
      %v3669 = vadd.f32 %v3193, %v3546
      %v3670 = vadd.f32 %v3194, %v3551
      %v3671 = vadd.f32 %v3195, %v3556
      %v3672 = vadd.f32 %v3196, %v3561
      %v3673 = vadd.f32 %v3197, %v3566
      %v3674 = vadd.f32 %v3198, %v3571
      %v3675 = vadd.f32 %v3199, %v3576
      %v3676 = vadd.f32 %v3200, %v3581
      %v3677 = vadd.f32 %v3201, %v3586
      %v3678 = vadd.f32 %v3202, %v3591
      %v3679 = vadd.f32 %v3203, %v3596
      %v3680 = vadd.f32 %v3204, %v3601
      %v3681 = vadd.f32 %v3205, %v3606
      %v3682 = vadd.f32 %v3206, %v3611
      %v3683 = vadd.f32 %v3207, %v3616
      %v3684 = vadd.f32 %v3208, %v3621
      %v3685 = vadd.f32 %v3209, %v3626
      %v3686 = vadd.f32 %v3210, %v3631
      %v3687 = vadd.f32 %v3211, %v3636
      %v3688 = vadd.f32 %v3212, %v3641
      %v3689 = vadd.f32 %v3213, %v3646
      %v3690 = vld [vmem:[%s434 + $0x2a] sm:$0xff]
      %v3691 = vld [vmem:[%s434 + $0x32] sm:$0xff]
      %v3692 = vld [vmem:[%s434 + $0x3a] sm:$0xff]
      %v3693 = vld [vmem:[%s434 + $0x42] sm:$0xff]
      %v3694 = vld [vmem:[%s434 + $0x4a] sm:$0xff]
      %v3695 = vld [vmem:[%s434 + $0x52] sm:$0xff]
      %v3696 = vld [vmem:[%s434 + $0x5a] sm:$0xff]
      %v3697 = vld [vmem:[%s434 + $0x62] sm:$0xff]
      %v3698 = vld [vmem:[%s434 + $0x6a] sm:$0xff]
      %v3699 = vld [vmem:[%s434 + $0x72] sm:$0xff]
      %v3700 = vld [vmem:[%s434 + $0x7a] sm:$0xff]
      %v3701 = vld [vmem:[%s434 + $0x82] sm:$0xff]
      %v3702 = vld [vmem:[%s434 + $0x8a] sm:$0xff]
      %v3703 = vld [vmem:[%s434 + $0x92] sm:$0xff]
      %v3704 = vld [vmem:[%s434 + $0x9a] sm:$0xff]
      %v3705 = vld [vmem:[%s434 + $0xa2] sm:$0xff]
      %v3706 = vld [vmem:[%s434 + $0xaa] sm:$0xff]
      %v3707 = vld [vmem:[%s434 + $0xb2] sm:$0xff]
      %v3708 = vld [vmem:[%s434 + $0xba] sm:$0xff]
      %v3709 = vld [vmem:[%s434 + $0xc2] sm:$0xff]
      %v3710 = vld [vmem:[%s434 + $0xca] sm:$0xff]
      %v3711 = vld [vmem:[%s434 + $0xd2] sm:$0xff]
      %v3712 = vld [vmem:[%s434 + $0xda] sm:$0xff]
      %v3713 = vld [vmem:[%s434 + $0xe2] sm:$0xff]
      %v3714 = vld [vmem:[%s434 + $0xea] sm:$0xff]
      %v3715 = vld [vmem:[%s434 + $0xf2] sm:$0xff]
      %v3716 = vld [vmem:[%s434 + $0xfa] sm:$0xff]
      %v3717 = vld [vmem:[%s434 + $0x102] sm:$0xff]
      %v3718 = vld [vmem:[%s434 + $0x10a] sm:$0xff]
      %v3719 = vld [vmem:[%s434 + $0x112] sm:$0xff]
      %v3720 = vld [vmem:[%s434 + $0x11a] sm:$0xff]
      %v3721 = vld [vmem:[%s434 + $0x122] sm:$0xff]
      %v3722 = vld [vmem:[%s434 + $0x12a] sm:$0xff]
      %v3723 = vld [vmem:[%s434 + $0x132] sm:$0xff]
      %v3724 = vld [vmem:[%s434 + $0x13a] sm:$0xff]
      %v3725 = vld [vmem:[%s434 + $0x142] sm:$0xff]
      %v3726 = vld [vmem:[%s434 + $0x14a] sm:$0xff]
      %v3727 = vld [vmem:[%s434 + $0x152] sm:$0xff]
      %v3728 = vld [vmem:[%s434 + $0x15a] sm:$0xff]
      %v3729 = vld [vmem:[%s434 + $0x162] sm:$0xff]
      %v3730 = vld [vmem:[%s434 + $0x16a] sm:$0xf]
      %v3731 = vld [vmem:[%s1 + $0x38] sm:$0xff]
      %v3733 = vsel %vm523, %v3690, 0
      %v3736 = vsel %vm523, %v3691, 0
      %v3739 = vsel %vm523, %v3692, 0
      %v3742 = vsel %vm523, %v3693, 0
      %v3745 = vsel %vm523, %v3694, 0
      %v3748 = vsel %vm523, %v3695, 0
      %v3751 = vsel %vm523, %v3696, 0
      %v3754 = vsel %vm523, %v3697, 0
      %v3757 = vsel %vm523, %v3698, 0
      %v3760 = vsel %vm523, %v3699, 0
      %v3763 = vsel %vm523, %v3700, 0
      %v3766 = vsel %vm523, %v3701, 0
      %v3769 = vsel %vm523, %v3702, 0
      %v3772 = vsel %vm523, %v3703, 0
      %v3775 = vsel %vm523, %v3704, 0
      %v3778 = vsel %vm523, %v3705, 0
      %v3781 = vsel %vm523, %v3706, 0
      %v3784 = vsel %vm523, %v3707, 0
      %v3787 = vsel %vm523, %v3708, 0
      %v3790 = vsel %vm523, %v3709, 0
      %v3793 = vsel %vm523, %v3710, 0
      %v3796 = vsel %vm523, %v3711, 0
      %v3799 = vsel %vm523, %v3712, 0
      %v3802 = vsel %vm523, %v3713, 0
      %v3805 = vsel %vm523, %v3714, 0
      %v3808 = vsel %vm523, %v3715, 0
      %v3811 = vsel %vm523, %v3716, 0
      %v3814 = vsel %vm523, %v3717, 0
      %v3817 = vsel %vm523, %v3718, 0
      %v3820 = vsel %vm523, %v3719, 0
      %v3823 = vsel %vm523, %v3720, 0
      %v3826 = vsel %vm523, %v3721, 0
      %v3829 = vsel %vm523, %v3722, 0
      %v3832 = vsel %vm523, %v3723, 0
      %v3835 = vsel %vm523, %v3724, 0
      %v3838 = vsel %vm523, %v3725, 0
      %v3841 = vsel %vm523, %v3726, 0
      %v3844 = vsel %vm523, %v3727, 0
      %v3847 = vsel %vm523, %v3728, 0
      %v3850 = vsel %vm523, %v3729, 0
      %v3853 = vsel %vm523, %v3730, 0
      %3855 = vmatprep.subr.mxu0 0.0
      %3856 = vmatpush1.msra.mxu0 0.0
      %3857 = vmatprep.subr.mxu0 0.0
      %3858 = vmatpush1.msra.mxu0 0.0
      %3859 = vmatprep.subr.mxu0 0.0
      %3860 = vmatpush1.msra.mxu0 0.0
      %3861 = vmatprep.subr.mxu0 0.0
      %3862 = vmatpush1.msra.mxu0 0.0
      %3863 = vmatprep.subr.mxu0 0.0
      %3864 = vmatpush1.msra.mxu0 0.0
      %3865 = vmatprep.subr.mxu0 0.0
      %3866 = vmatpush1.msra.mxu0 0.0
      %3867 = vmatprep.subr.mxu0 0.0
      %3868 = vmatpush1.msra.mxu0 0.0
      %3869 = vmatprep.subr.mxu0 0.0
      %3870 = vmatpush1.msra.mxu0 0.0
      %3871 = vmatprep.subr.mxu0 0.0
      %3872 = vmatpush1.msra.mxu0 0.0
      %3873 = vmatprep.subr.mxu0 0.0
      %3874 = vmatpush1.msra.mxu0 0.0
      %3875 = vmatprep.subr.mxu0 0.0
      %3876 = vmatpush1.msra.mxu0 0.0
      %3877 = vmatprep.subr.mxu0 0.0
      %3878 = vmatpush1.msra.mxu0 0.0
      %3879 = vmatprep.subr.mxu0 0.0
      %3880 = vmatpush1.msra.mxu0 0.0
      %3881 = vmatprep.subr.mxu0 0.0
      %3882 = vmatpush1.msra.mxu0 0.0
      %3883 = vmatprep.subr.mxu0 0.0
      %3884 = vmatpush1.msra.mxu0 0.0
      %3885 = vmatprep.subr.mxu0 0.0
      %3886 = vmatpush1.msra.mxu0 %v3731
      %3887 = vmatprep.subr.mxu0 0.0
      %3888 = vmatpush2.msra.mxu0 0.0
      %3889 = vmatprep.subr.mxu0 0.0
      %3890 = vmatpush2.msra.mxu0 0.0
      %3891 = vmatprep.subr.mxu0 0.0
      %3892 = vmatpush2.msra.mxu0 0.0
      %3893 = vmatprep.subr.mxu0 0.0
      %3894 = vmatpush2.msra.mxu0 0.0
      %3895 = vmatprep.subr.mxu0 0.0
      %3896 = vmatpush2.msra.mxu0 0.0
      %3897 = vmatprep.subr.mxu0 0.0
      %3898 = vmatpush2.msra.mxu0 0.0
      %3899 = vmatprep.subr.mxu0 0.0
      %3900 = vmatpush2.msra.mxu0 0.0
      %3901 = vmatprep.subr.mxu0 0.0
      %3902 = vmatpush2.msra.mxu0 0.0
      %3903 = vmatprep.subr.mxu0 0.0
      %3904 = vmatpush2.msra.mxu0 0.0
      %3905 = vmatprep.subr.mxu0 0.0
      %3906 = vmatpush2.msra.mxu0 0.0
      %3907 = vmatprep.subr.mxu0 0.0
      %3908 = vmatpush2.msra.mxu0 0.0
      %3909 = vmatprep.subr.mxu0 0.0
      %3910 = vmatpush2.msra.mxu0 0.0
      %3911 = vmatprep.subr.mxu0 0.0
      %3912 = vmatpush2.msra.mxu0 0.0
      %3913 = vmatprep.subr.mxu0 0.0
      %3914 = vmatpush2.msra.mxu0 0.0
      %3915 = vmatprep.subr.mxu0 0.0
      %3916 = vmatpush2.msra.mxu0 0.0
      %3917 = vmatprep.subr.mxu0 0.0
      %3918 = vmatpush2.msra.mxu0 0.0
      %3919 = vmatprep.mubr.f32.mxu0 0.0
      %3920 = vmatmul.mubr.f32.gmra.mxu0 %v3733
      %v3921 = vpop.f32.mrf.mxu0
      %v3922 = vadd.f32 0.0, %v3921
      %v3923 = vpop.f32.mrf.mxu0
      %3924 = vmatprep.mubr.f32.mxu0 0.0
      %3925 = vmatmul.mubr.f32.gmra.mxu0 %v3736
      %v3926 = vpop.f32.mrf.mxu0
      %v3927 = vadd.f32 0.0, %v3926
      %v3928 = vpop.f32.mrf.mxu0
      %3929 = vmatprep.mubr.f32.mxu0 0.0
      %3930 = vmatmul.mubr.f32.gmra.mxu0 %v3739
      %v3931 = vpop.f32.mrf.mxu0
      %v3932 = vadd.f32 0.0, %v3931
      %v3933 = vpop.f32.mrf.mxu0
      %3934 = vmatprep.mubr.f32.mxu0 0.0
      %3935 = vmatmul.mubr.f32.gmra.mxu0 %v3742
      %v3936 = vpop.f32.mrf.mxu0
      %v3937 = vadd.f32 0.0, %v3936
      %v3938 = vpop.f32.mrf.mxu0
      %3939 = vmatprep.mubr.f32.mxu0 0.0
      %3940 = vmatmul.mubr.f32.gmra.mxu0 %v3745
      %v3941 = vpop.f32.mrf.mxu0
      %v3942 = vadd.f32 0.0, %v3941
      %v3943 = vpop.f32.mrf.mxu0
      %3944 = vmatprep.mubr.f32.mxu0 0.0
      %3945 = vmatmul.mubr.f32.gmra.mxu0 %v3748
      %v3946 = vpop.f32.mrf.mxu0
      %v3947 = vadd.f32 0.0, %v3946
      %v3948 = vpop.f32.mrf.mxu0
      %3949 = vmatprep.mubr.f32.mxu0 0.0
      %3950 = vmatmul.mubr.f32.gmra.mxu0 %v3751
      %v3951 = vpop.f32.mrf.mxu0
      %v3952 = vadd.f32 0.0, %v3951
      %v3953 = vpop.f32.mrf.mxu0
      %3954 = vmatprep.mubr.f32.mxu0 0.0
      %3955 = vmatmul.mubr.f32.gmra.mxu0 %v3754
      %v3956 = vpop.f32.mrf.mxu0
      %v3957 = vadd.f32 0.0, %v3956
      %v3958 = vpop.f32.mrf.mxu0
      %3959 = vmatprep.mubr.f32.mxu0 0.0
      %3960 = vmatmul.mubr.f32.gmra.mxu0 %v3757
      %v3961 = vpop.f32.mrf.mxu0
      %v3962 = vadd.f32 0.0, %v3961
      %v3963 = vpop.f32.mrf.mxu0
      %3964 = vmatprep.mubr.f32.mxu0 0.0
      %3965 = vmatmul.mubr.f32.gmra.mxu0 %v3760
      %v3966 = vpop.f32.mrf.mxu0
      %v3967 = vadd.f32 0.0, %v3966
      %v3968 = vpop.f32.mrf.mxu0
      %3969 = vmatprep.mubr.f32.mxu0 0.0
      %3970 = vmatmul.mubr.f32.gmra.mxu0 %v3763
      %v3971 = vpop.f32.mrf.mxu0
      %v3972 = vadd.f32 0.0, %v3971
      %v3973 = vpop.f32.mrf.mxu0
      %3974 = vmatprep.mubr.f32.mxu0 0.0
      %3975 = vmatmul.mubr.f32.gmra.mxu0 %v3766
      %v3976 = vpop.f32.mrf.mxu0
      %v3977 = vadd.f32 0.0, %v3976
      %v3978 = vpop.f32.mrf.mxu0
      %3979 = vmatprep.mubr.f32.mxu0 0.0
      %3980 = vmatmul.mubr.f32.gmra.mxu0 %v3769
      %v3981 = vpop.f32.mrf.mxu0
      %v3982 = vadd.f32 0.0, %v3981
      %v3983 = vpop.f32.mrf.mxu0
      %3984 = vmatprep.mubr.f32.mxu0 0.0
      %3985 = vmatmul.mubr.f32.gmra.mxu0 %v3772
      %v3986 = vpop.f32.mrf.mxu0
      %v3987 = vadd.f32 0.0, %v3986
      %v3988 = vpop.f32.mrf.mxu0
      %3989 = vmatprep.mubr.f32.mxu0 0.0
      %3990 = vmatmul.mubr.f32.gmra.mxu0 %v3775
      %v3991 = vpop.f32.mrf.mxu0
      %v3992 = vadd.f32 0.0, %v3991
      %v3993 = vpop.f32.mrf.mxu0
      %3994 = vmatprep.mubr.f32.mxu0 0.0
      %3995 = vmatmul.mubr.f32.gmra.mxu0 %v3778
      %v3996 = vpop.f32.mrf.mxu0
      %v3997 = vadd.f32 0.0, %v3996
      %v3998 = vpop.f32.mrf.mxu0
      %3999 = vmatprep.mubr.f32.mxu0 0.0
      %4000 = vmatmul.mubr.f32.gmra.mxu0 %v3781
      %v4001 = vpop.f32.mrf.mxu0
      %v4002 = vadd.f32 0.0, %v4001
      %v4003 = vpop.f32.mrf.mxu0
      %4004 = vmatprep.mubr.f32.mxu0 0.0
      %4005 = vmatmul.mubr.f32.gmra.mxu0 %v3784
      %v4006 = vpop.f32.mrf.mxu0
      %v4007 = vadd.f32 0.0, %v4006
      %v4008 = vpop.f32.mrf.mxu0
      %4009 = vmatprep.mubr.f32.mxu0 0.0
      %4010 = vmatmul.mubr.f32.gmra.mxu0 %v3787
      %v4011 = vpop.f32.mrf.mxu0
      %v4012 = vadd.f32 0.0, %v4011
      %v4013 = vpop.f32.mrf.mxu0
      %4014 = vmatprep.mubr.f32.mxu0 0.0
      %4015 = vmatmul.mubr.f32.gmra.mxu0 %v3790
      %v4016 = vpop.f32.mrf.mxu0
      %v4017 = vadd.f32 0.0, %v4016
      %v4018 = vpop.f32.mrf.mxu0
      %4019 = vmatprep.mubr.f32.mxu0 0.0
      %4020 = vmatmul.mubr.f32.gmra.mxu0 %v3793
      %v4021 = vpop.f32.mrf.mxu0
      %v4022 = vadd.f32 0.0, %v4021
      %v4023 = vpop.f32.mrf.mxu0
      %4024 = vmatprep.mubr.f32.mxu0 0.0
      %4025 = vmatmul.mubr.f32.gmra.mxu0 %v3796
      %v4026 = vpop.f32.mrf.mxu0
      %v4027 = vadd.f32 0.0, %v4026
      %v4028 = vpop.f32.mrf.mxu0
      %4029 = vmatprep.mubr.f32.mxu0 0.0
      %4030 = vmatmul.mubr.f32.gmra.mxu0 %v3799
      %v4031 = vpop.f32.mrf.mxu0
      %v4032 = vadd.f32 0.0, %v4031
      %v4033 = vpop.f32.mrf.mxu0
      %4034 = vmatprep.mubr.f32.mxu0 0.0
      %4035 = vmatmul.mubr.f32.gmra.mxu0 %v3802
      %v4036 = vpop.f32.mrf.mxu0
      %v4037 = vadd.f32 0.0, %v4036
      %v4038 = vpop.f32.mrf.mxu0
      %4039 = vmatprep.mubr.f32.mxu0 0.0
      %4040 = vmatmul.mubr.f32.gmra.mxu0 %v3805
      %v4041 = vpop.f32.mrf.mxu0
      %v4042 = vadd.f32 0.0, %v4041
      %v4043 = vpop.f32.mrf.mxu0
      %4044 = vmatprep.mubr.f32.mxu0 0.0
      %4045 = vmatmul.mubr.f32.gmra.mxu0 %v3808
      %v4046 = vpop.f32.mrf.mxu0
      %v4047 = vadd.f32 0.0, %v4046
      %v4048 = vpop.f32.mrf.mxu0
      %4049 = vmatprep.mubr.f32.mxu0 0.0
      %4050 = vmatmul.mubr.f32.gmra.mxu0 %v3811
      %v4051 = vpop.f32.mrf.mxu0
      %v4052 = vadd.f32 0.0, %v4051
      %v4053 = vpop.f32.mrf.mxu0
      %4054 = vmatprep.mubr.f32.mxu0 0.0
      %4055 = vmatmul.mubr.f32.gmra.mxu0 %v3814
      %v4056 = vpop.f32.mrf.mxu0
      %v4057 = vadd.f32 0.0, %v4056
      %v4058 = vpop.f32.mrf.mxu0
      %4059 = vmatprep.mubr.f32.mxu0 0.0
      %4060 = vmatmul.mubr.f32.gmra.mxu0 %v3817
      %v4061 = vpop.f32.mrf.mxu0
      %v4062 = vadd.f32 0.0, %v4061
      %v4063 = vpop.f32.mrf.mxu0
      %4064 = vmatprep.mubr.f32.mxu0 0.0
      %4065 = vmatmul.mubr.f32.gmra.mxu0 %v3820
      %v4066 = vpop.f32.mrf.mxu0
      %v4067 = vadd.f32 0.0, %v4066
      %v4068 = vpop.f32.mrf.mxu0
      %4069 = vmatprep.mubr.f32.mxu0 0.0
      %4070 = vmatmul.mubr.f32.gmra.mxu0 %v3823
      %v4071 = vpop.f32.mrf.mxu0
      %v4072 = vadd.f32 0.0, %v4071
      %v4073 = vpop.f32.mrf.mxu0
      %4074 = vmatprep.mubr.f32.mxu0 0.0
      %4075 = vmatmul.mubr.f32.gmra.mxu0 %v3826
      %v4076 = vpop.f32.mrf.mxu0
      %v4077 = vadd.f32 0.0, %v4076
      %v4078 = vpop.f32.mrf.mxu0
      %4079 = vmatprep.mubr.f32.mxu0 0.0
      %4080 = vmatmul.mubr.f32.gmra.mxu0 %v3829
      %v4081 = vpop.f32.mrf.mxu0
      %v4082 = vadd.f32 0.0, %v4081
      %v4083 = vpop.f32.mrf.mxu0
      %4084 = vmatprep.mubr.f32.mxu0 0.0
      %4085 = vmatmul.mubr.f32.gmra.mxu0 %v3832
      %v4086 = vpop.f32.mrf.mxu0
      %v4087 = vadd.f32 0.0, %v4086
      %v4088 = vpop.f32.mrf.mxu0
      %4089 = vmatprep.mubr.f32.mxu0 0.0
      %4090 = vmatmul.mubr.f32.gmra.mxu0 %v3835
      %v4091 = vpop.f32.mrf.mxu0
      %v4092 = vadd.f32 0.0, %v4091
      %v4093 = vpop.f32.mrf.mxu0
      %4094 = vmatprep.mubr.f32.mxu0 0.0
      %4095 = vmatmul.mubr.f32.gmra.mxu0 %v3838
      %v4096 = vpop.f32.mrf.mxu0
      %v4097 = vadd.f32 0.0, %v4096
      %v4098 = vpop.f32.mrf.mxu0
      %4099 = vmatprep.mubr.f32.mxu0 0.0
      %4100 = vmatmul.mubr.f32.gmra.mxu0 %v3841
      %v4101 = vpop.f32.mrf.mxu0
      %v4102 = vadd.f32 0.0, %v4101
      %v4103 = vpop.f32.mrf.mxu0
      %4104 = vmatprep.mubr.f32.mxu0 0.0
      %4105 = vmatmul.mubr.f32.gmra.mxu0 %v3844
      %v4106 = vpop.f32.mrf.mxu0
      %v4107 = vadd.f32 0.0, %v4106
      %v4108 = vpop.f32.mrf.mxu0
      %4109 = vmatprep.mubr.f32.mxu0 0.0
      %4110 = vmatmul.mubr.f32.gmra.mxu0 %v3847
      %v4111 = vpop.f32.mrf.mxu0
      %v4112 = vadd.f32 0.0, %v4111
      %v4113 = vpop.f32.mrf.mxu0
      %4114 = vmatprep.mubr.f32.mxu0 0.0
      %4115 = vmatmul.mubr.f32.gmra.mxu0 %v3850
      %v4116 = vpop.f32.mrf.mxu0
      %v4117 = vadd.f32 0.0, %v4116
      %v4118 = vpop.f32.mrf.mxu0
      %4119 = vmatprep.mubr.f32.mxu0 0.0
      %4120 = vmatmul.mubr.f32.gmra.mxu0 %v3853
      %v4121 = vpop.f32.mrf.mxu0
      %v4122 = vadd.f32 0.0, %v4121
      %v4123 = vpop.f32.mrf.mxu0
      %4124 = vdwg.mxu0
      %v4125 = vadd.f32 %v3649, %v3922
      %v4126 = vadd.f32 %v3650, %v3927
      %v4127 = vadd.f32 %v3651, %v3932
      %v4128 = vadd.f32 %v3652, %v3937
      %v4129 = vadd.f32 %v3653, %v3942
      %v4130 = vadd.f32 %v3654, %v3947
      %v4131 = vadd.f32 %v3655, %v3952
      %v4132 = vadd.f32 %v3656, %v3957
      %v4133 = vadd.f32 %v3657, %v3962
      %v4134 = vadd.f32 %v3658, %v3967
      %v4135 = vadd.f32 %v3659, %v3972
      %v4136 = vadd.f32 %v3660, %v3977
      %v4137 = vadd.f32 %v3661, %v3982
      %v4138 = vadd.f32 %v3662, %v3987
      %v4139 = vadd.f32 %v3663, %v3992
      %v4140 = vadd.f32 %v3664, %v3997
      %v4141 = vadd.f32 %v3665, %v4002
      %v4142 = vadd.f32 %v3666, %v4007
      %v4143 = vadd.f32 %v3667, %v4012
      %v4144 = vadd.f32 %v3668, %v4017
      %v4145 = vadd.f32 %v3669, %v4022
      %v4146 = vadd.f32 %v3670, %v4027
      %v4147 = vadd.f32 %v3671, %v4032
      %v4148 = vadd.f32 %v3672, %v4037
      %v4149 = vadd.f32 %v3673, %v4042
      %v4150 = vadd.f32 %v3674, %v4047
      %v4151 = vadd.f32 %v3675, %v4052
      %v4152 = vadd.f32 %v3676, %v4057
      %v4153 = vadd.f32 %v3677, %v4062
      %v4154 = vadd.f32 %v3678, %v4067
      %v4155 = vadd.f32 %v3679, %v4072
      %v4156 = vadd.f32 %v3680, %v4077
      %v4157 = vadd.f32 %v3681, %v4082
      %v4158 = vadd.f32 %v3682, %v4087
      %v4159 = vadd.f32 %v3683, %v4092
      %v4160 = vadd.f32 %v3684, %v4097
      %v4161 = vadd.f32 %v3685, %v4102
      %v4162 = vadd.f32 %v3686, %v4107
      %v4163 = vadd.f32 %v3687, %v4112
      %v4164 = vadd.f32 %v3688, %v4117
      %v4165 = vadd.f32 %v3689, %v4122
      %v4166 = vld [vmem:[%s434 + $0x2b] sm:$0xff]
      %v4167 = vld [vmem:[%s434 + $0x33] sm:$0xff]
      %v4168 = vld [vmem:[%s434 + $0x3b] sm:$0xff]
      %v4169 = vld [vmem:[%s434 + $0x43] sm:$0xff]
      %v4170 = vld [vmem:[%s434 + $0x4b] sm:$0xff]
      %v4171 = vld [vmem:[%s434 + $0x53] sm:$0xff]
      %v4172 = vld [vmem:[%s434 + $0x5b] sm:$0xff]
      %v4173 = vld [vmem:[%s434 + $0x63] sm:$0xff]
      %v4174 = vld [vmem:[%s434 + $0x6b] sm:$0xff]
      %v4175 = vld [vmem:[%s434 + $0x73] sm:$0xff]
      %v4176 = vld [vmem:[%s434 + $0x7b] sm:$0xff]
      %v4177 = vld [vmem:[%s434 + $0x83] sm:$0xff]
      %v4178 = vld [vmem:[%s434 + $0x8b] sm:$0xff]
      %v4179 = vld [vmem:[%s434 + $0x93] sm:$0xff]
      %v4180 = vld [vmem:[%s434 + $0x9b] sm:$0xff]
      %v4181 = vld [vmem:[%s434 + $0xa3] sm:$0xff]
      %v4182 = vld [vmem:[%s434 + $0xab] sm:$0xff]
      %v4183 = vld [vmem:[%s434 + $0xb3] sm:$0xff]
      %v4184 = vld [vmem:[%s434 + $0xbb] sm:$0xff]
      %v4185 = vld [vmem:[%s434 + $0xc3] sm:$0xff]
      %v4186 = vld [vmem:[%s434 + $0xcb] sm:$0xff]
      %v4187 = vld [vmem:[%s434 + $0xd3] sm:$0xff]
      %v4188 = vld [vmem:[%s434 + $0xdb] sm:$0xff]
      %v4189 = vld [vmem:[%s434 + $0xe3] sm:$0xff]
      %v4190 = vld [vmem:[%s434 + $0xeb] sm:$0xff]
      %v4191 = vld [vmem:[%s434 + $0xf3] sm:$0xff]
      %v4192 = vld [vmem:[%s434 + $0xfb] sm:$0xff]
      %v4193 = vld [vmem:[%s434 + $0x103] sm:$0xff]
      %v4194 = vld [vmem:[%s434 + $0x10b] sm:$0xff]
      %v4195 = vld [vmem:[%s434 + $0x113] sm:$0xff]
      %v4196 = vld [vmem:[%s434 + $0x11b] sm:$0xff]
      %v4197 = vld [vmem:[%s434 + $0x123] sm:$0xff]
      %v4198 = vld [vmem:[%s434 + $0x12b] sm:$0xff]
      %v4199 = vld [vmem:[%s434 + $0x133] sm:$0xff]
      %v4200 = vld [vmem:[%s434 + $0x13b] sm:$0xff]
      %v4201 = vld [vmem:[%s434 + $0x143] sm:$0xff]
      %v4202 = vld [vmem:[%s434 + $0x14b] sm:$0xff]
      %v4203 = vld [vmem:[%s434 + $0x153] sm:$0xff]
      %v4204 = vld [vmem:[%s434 + $0x15b] sm:$0xff]
      %v4205 = vld [vmem:[%s434 + $0x163] sm:$0xff]
      %v4206 = vld [vmem:[%s434 + $0x16b] sm:$0xf]
      %v4207 = vld [vmem:[%s1 + $0x40] sm:$0xff]
      %v4209 = vsel %vm523, %v4166, 0
      %v4212 = vsel %vm523, %v4167, 0
      %v4215 = vsel %vm523, %v4168, 0
      %v4218 = vsel %vm523, %v4169, 0
      %v4221 = vsel %vm523, %v4170, 0
      %v4224 = vsel %vm523, %v4171, 0
      %v4227 = vsel %vm523, %v4172, 0
      %v4230 = vsel %vm523, %v4173, 0
      %v4233 = vsel %vm523, %v4174, 0
      %v4236 = vsel %vm523, %v4175, 0
      %v4239 = vsel %vm523, %v4176, 0
      %v4242 = vsel %vm523, %v4177, 0
      %v4245 = vsel %vm523, %v4178, 0
      %v4248 = vsel %vm523, %v4179, 0
      %v4251 = vsel %vm523, %v4180, 0
      %v4254 = vsel %vm523, %v4181, 0
      %v4257 = vsel %vm523, %v4182, 0
      %v4260 = vsel %vm523, %v4183, 0
      %v4263 = vsel %vm523, %v4184, 0
      %v4266 = vsel %vm523, %v4185, 0
      %v4269 = vsel %vm523, %v4186, 0
      %v4272 = vsel %vm523, %v4187, 0
      %v4275 = vsel %vm523, %v4188, 0
      %v4278 = vsel %vm523, %v4189, 0
      %v4281 = vsel %vm523, %v4190, 0
      %v4284 = vsel %vm523, %v4191, 0
      %v4287 = vsel %vm523, %v4192, 0
      %v4290 = vsel %vm523, %v4193, 0
      %v4293 = vsel %vm523, %v4194, 0
      %v4296 = vsel %vm523, %v4195, 0
      %v4299 = vsel %vm523, %v4196, 0
      %v4302 = vsel %vm523, %v4197, 0
      %v4305 = vsel %vm523, %v4198, 0
      %v4308 = vsel %vm523, %v4199, 0
      %v4311 = vsel %vm523, %v4200, 0
      %v4314 = vsel %vm523, %v4201, 0
      %v4317 = vsel %vm523, %v4202, 0
      %v4320 = vsel %vm523, %v4203, 0
      %v4323 = vsel %vm523, %v4204, 0
      %v4326 = vsel %vm523, %v4205, 0
      %v4329 = vsel %vm523, %v4206, 0
      %4331 = vmatprep.subr.mxu0 0.0
      %4332 = vmatpush1.msra.mxu0 0.0
      %4333 = vmatprep.subr.mxu0 0.0
      %4334 = vmatpush1.msra.mxu0 0.0
      %4335 = vmatprep.subr.mxu0 0.0
      %4336 = vmatpush1.msra.mxu0 0.0
      %4337 = vmatprep.subr.mxu0 0.0
      %4338 = vmatpush1.msra.mxu0 0.0
      %4339 = vmatprep.subr.mxu0 0.0
      %4340 = vmatpush1.msra.mxu0 0.0
      %4341 = vmatprep.subr.mxu0 0.0
      %4342 = vmatpush1.msra.mxu0 0.0
      %4343 = vmatprep.subr.mxu0 0.0
      %4344 = vmatpush1.msra.mxu0 0.0
      %4345 = vmatprep.subr.mxu0 0.0
      %4346 = vmatpush1.msra.mxu0 0.0
      %4347 = vmatprep.subr.mxu0 0.0
      %4348 = vmatpush1.msra.mxu0 0.0
      %4349 = vmatprep.subr.mxu0 0.0
      %4350 = vmatpush1.msra.mxu0 0.0
      %4351 = vmatprep.subr.mxu0 0.0
      %4352 = vmatpush1.msra.mxu0 0.0
      %4353 = vmatprep.subr.mxu0 0.0
      %4354 = vmatpush1.msra.mxu0 0.0
      %4355 = vmatprep.subr.mxu0 0.0
      %4356 = vmatpush1.msra.mxu0 0.0
      %4357 = vmatprep.subr.mxu0 0.0
      %4358 = vmatpush1.msra.mxu0 0.0
      %4359 = vmatprep.subr.mxu0 0.0
      %4360 = vmatpush1.msra.mxu0 0.0
      %4361 = vmatprep.subr.mxu0 0.0
      %4362 = vmatpush1.msra.mxu0 %v4207
      %4363 = vmatprep.subr.mxu0 0.0
      %4364 = vmatpush2.msra.mxu0 0.0
      %4365 = vmatprep.subr.mxu0 0.0
      %4366 = vmatpush2.msra.mxu0 0.0
      %4367 = vmatprep.subr.mxu0 0.0
      %4368 = vmatpush2.msra.mxu0 0.0
      %4369 = vmatprep.subr.mxu0 0.0
      %4370 = vmatpush2.msra.mxu0 0.0
      %4371 = vmatprep.subr.mxu0 0.0
      %4372 = vmatpush2.msra.mxu0 0.0
      %4373 = vmatprep.subr.mxu0 0.0
      %4374 = vmatpush2.msra.mxu0 0.0
      %4375 = vmatprep.subr.mxu0 0.0
      %4376 = vmatpush2.msra.mxu0 0.0
      %4377 = vmatprep.subr.mxu0 0.0
      %4378 = vmatpush2.msra.mxu0 0.0
      %4379 = vmatprep.subr.mxu0 0.0
      %4380 = vmatpush2.msra.mxu0 0.0
      %4381 = vmatprep.subr.mxu0 0.0
      %4382 = vmatpush2.msra.mxu0 0.0
      %4383 = vmatprep.subr.mxu0 0.0
      %4384 = vmatpush2.msra.mxu0 0.0
      %4385 = vmatprep.subr.mxu0 0.0
      %4386 = vmatpush2.msra.mxu0 0.0
      %4387 = vmatprep.subr.mxu0 0.0
      %4388 = vmatpush2.msra.mxu0 0.0
      %4389 = vmatprep.subr.mxu0 0.0
      %4390 = vmatpush2.msra.mxu0 0.0
      %4391 = vmatprep.subr.mxu0 0.0
      %4392 = vmatpush2.msra.mxu0 0.0
      %4393 = vmatprep.subr.mxu0 0.0
      %4394 = vmatpush2.msra.mxu0 0.0
      %4395 = vmatprep.mubr.f32.mxu0 0.0
      %4396 = vmatmul.mubr.f32.gmra.mxu0 %v4209
      %v4397 = vpop.f32.mrf.mxu0
      %v4398 = vadd.f32 0.0, %v4397
      %v4399 = vpop.f32.mrf.mxu0
      %4400 = vmatprep.mubr.f32.mxu0 0.0
      %4401 = vmatmul.mubr.f32.gmra.mxu0 %v4212
      %v4402 = vpop.f32.mrf.mxu0
      %v4403 = vadd.f32 0.0, %v4402
      %v4404 = vpop.f32.mrf.mxu0
      %4405 = vmatprep.mubr.f32.mxu0 0.0
      %4406 = vmatmul.mubr.f32.gmra.mxu0 %v4215
      %v4407 = vpop.f32.mrf.mxu0
      %v4408 = vadd.f32 0.0, %v4407
      %v4409 = vpop.f32.mrf.mxu0
      %4410 = vmatprep.mubr.f32.mxu0 0.0
      %4411 = vmatmul.mubr.f32.gmra.mxu0 %v4218
      %v4412 = vpop.f32.mrf.mxu0
      %v4413 = vadd.f32 0.0, %v4412
      %v4414 = vpop.f32.mrf.mxu0
      %4415 = vmatprep.mubr.f32.mxu0 0.0
      %4416 = vmatmul.mubr.f32.gmra.mxu0 %v4221
      %v4417 = vpop.f32.mrf.mxu0
      %v4418 = vadd.f32 0.0, %v4417
      %v4419 = vpop.f32.mrf.mxu0
      %4420 = vmatprep.mubr.f32.mxu0 0.0
      %4421 = vmatmul.mubr.f32.gmra.mxu0 %v4224
      %v4422 = vpop.f32.mrf.mxu0
      %v4423 = vadd.f32 0.0, %v4422
      %v4424 = vpop.f32.mrf.mxu0
      %4425 = vmatprep.mubr.f32.mxu0 0.0
      %4426 = vmatmul.mubr.f32.gmra.mxu0 %v4227
      %v4427 = vpop.f32.mrf.mxu0
      %v4428 = vadd.f32 0.0, %v4427
      %v4429 = vpop.f32.mrf.mxu0
      %4430 = vmatprep.mubr.f32.mxu0 0.0
      %4431 = vmatmul.mubr.f32.gmra.mxu0 %v4230
      %v4432 = vpop.f32.mrf.mxu0
      %v4433 = vadd.f32 0.0, %v4432
      %v4434 = vpop.f32.mrf.mxu0
      %4435 = vmatprep.mubr.f32.mxu0 0.0
      %4436 = vmatmul.mubr.f32.gmra.mxu0 %v4233
      %v4437 = vpop.f32.mrf.mxu0
      %v4438 = vadd.f32 0.0, %v4437
      %v4439 = vpop.f32.mrf.mxu0
      %4440 = vmatprep.mubr.f32.mxu0 0.0
      %4441 = vmatmul.mubr.f32.gmra.mxu0 %v4236
      %v4442 = vpop.f32.mrf.mxu0
      %v4443 = vadd.f32 0.0, %v4442
      %v4444 = vpop.f32.mrf.mxu0
      %4445 = vmatprep.mubr.f32.mxu0 0.0
      %4446 = vmatmul.mubr.f32.gmra.mxu0 %v4239
      %v4447 = vpop.f32.mrf.mxu0
      %v4448 = vadd.f32 0.0, %v4447
      %v4449 = vpop.f32.mrf.mxu0
      %4450 = vmatprep.mubr.f32.mxu0 0.0
      %4451 = vmatmul.mubr.f32.gmra.mxu0 %v4242
      %v4452 = vpop.f32.mrf.mxu0
      %v4453 = vadd.f32 0.0, %v4452
      %v4454 = vpop.f32.mrf.mxu0
      %4455 = vmatprep.mubr.f32.mxu0 0.0
      %4456 = vmatmul.mubr.f32.gmra.mxu0 %v4245
      %v4457 = vpop.f32.mrf.mxu0
      %v4458 = vadd.f32 0.0, %v4457
      %v4459 = vpop.f32.mrf.mxu0
      %4460 = vmatprep.mubr.f32.mxu0 0.0
      %4461 = vmatmul.mubr.f32.gmra.mxu0 %v4248
      %v4462 = vpop.f32.mrf.mxu0
      %v4463 = vadd.f32 0.0, %v4462
      %v4464 = vpop.f32.mrf.mxu0
      %4465 = vmatprep.mubr.f32.mxu0 0.0
      %4466 = vmatmul.mubr.f32.gmra.mxu0 %v4251
      %v4467 = vpop.f32.mrf.mxu0
      %v4468 = vadd.f32 0.0, %v4467
      %v4469 = vpop.f32.mrf.mxu0
      %4470 = vmatprep.mubr.f32.mxu0 0.0
      %4471 = vmatmul.mubr.f32.gmra.mxu0 %v4254
      %v4472 = vpop.f32.mrf.mxu0
      %v4473 = vadd.f32 0.0, %v4472
      %v4474 = vpop.f32.mrf.mxu0
      %4475 = vmatprep.mubr.f32.mxu0 0.0
      %4476 = vmatmul.mubr.f32.gmra.mxu0 %v4257
      %v4477 = vpop.f32.mrf.mxu0
      %v4478 = vadd.f32 0.0, %v4477
      %v4479 = vpop.f32.mrf.mxu0
      %4480 = vmatprep.mubr.f32.mxu0 0.0
      %4481 = vmatmul.mubr.f32.gmra.mxu0 %v4260
      %v4482 = vpop.f32.mrf.mxu0
      %v4483 = vadd.f32 0.0, %v4482
      %v4484 = vpop.f32.mrf.mxu0
      %4485 = vmatprep.mubr.f32.mxu0 0.0
      %4486 = vmatmul.mubr.f32.gmra.mxu0 %v4263
      %v4487 = vpop.f32.mrf.mxu0
      %v4488 = vadd.f32 0.0, %v4487
      %v4489 = vpop.f32.mrf.mxu0
      %4490 = vmatprep.mubr.f32.mxu0 0.0
      %4491 = vmatmul.mubr.f32.gmra.mxu0 %v4266
      %v4492 = vpop.f32.mrf.mxu0
      %v4493 = vadd.f32 0.0, %v4492
      %v4494 = vpop.f32.mrf.mxu0
      %4495 = vmatprep.mubr.f32.mxu0 0.0
      %4496 = vmatmul.mubr.f32.gmra.mxu0 %v4269
      %v4497 = vpop.f32.mrf.mxu0
      %v4498 = vadd.f32 0.0, %v4497
      %v4499 = vpop.f32.mrf.mxu0
      %4500 = vmatprep.mubr.f32.mxu0 0.0
      %4501 = vmatmul.mubr.f32.gmra.mxu0 %v4272
      %v4502 = vpop.f32.mrf.mxu0
      %v4503 = vadd.f32 0.0, %v4502
      %v4504 = vpop.f32.mrf.mxu0
      %4505 = vmatprep.mubr.f32.mxu0 0.0
      %4506 = vmatmul.mubr.f32.gmra.mxu0 %v4275
      %v4507 = vpop.f32.mrf.mxu0
      %v4508 = vadd.f32 0.0, %v4507
      %v4509 = vpop.f32.mrf.mxu0
      %4510 = vmatprep.mubr.f32.mxu0 0.0
      %4511 = vmatmul.mubr.f32.gmra.mxu0 %v4278
      %v4512 = vpop.f32.mrf.mxu0
      %v4513 = vadd.f32 0.0, %v4512
      %v4514 = vpop.f32.mrf.mxu0
      %4515 = vmatprep.mubr.f32.mxu0 0.0
      %4516 = vmatmul.mubr.f32.gmra.mxu0 %v4281
      %v4517 = vpop.f32.mrf.mxu0
      %v4518 = vadd.f32 0.0, %v4517
      %v4519 = vpop.f32.mrf.mxu0
      %4520 = vmatprep.mubr.f32.mxu0 0.0
      %4521 = vmatmul.mubr.f32.gmra.mxu0 %v4284
      %v4522 = vpop.f32.mrf.mxu0
      %v4523 = vadd.f32 0.0, %v4522
      %v4524 = vpop.f32.mrf.mxu0
      %4525 = vmatprep.mubr.f32.mxu0 0.0
      %4526 = vmatmul.mubr.f32.gmra.mxu0 %v4287
      %v4527 = vpop.f32.mrf.mxu0
      %v4528 = vadd.f32 0.0, %v4527
      %v4529 = vpop.f32.mrf.mxu0
      %4530 = vmatprep.mubr.f32.mxu0 0.0
      %4531 = vmatmul.mubr.f32.gmra.mxu0 %v4290
      %v4532 = vpop.f32.mrf.mxu0
      %v4533 = vadd.f32 0.0, %v4532
      %v4534 = vpop.f32.mrf.mxu0
      %4535 = vmatprep.mubr.f32.mxu0 0.0
      %4536 = vmatmul.mubr.f32.gmra.mxu0 %v4293
      %v4537 = vpop.f32.mrf.mxu0
      %v4538 = vadd.f32 0.0, %v4537
      %v4539 = vpop.f32.mrf.mxu0
      %4540 = vmatprep.mubr.f32.mxu0 0.0
      %4541 = vmatmul.mubr.f32.gmra.mxu0 %v4296
      %v4542 = vpop.f32.mrf.mxu0
      %v4543 = vadd.f32 0.0, %v4542
      %v4544 = vpop.f32.mrf.mxu0
      %4545 = vmatprep.mubr.f32.mxu0 0.0
      %4546 = vmatmul.mubr.f32.gmra.mxu0 %v4299
      %v4547 = vpop.f32.mrf.mxu0
      %v4548 = vadd.f32 0.0, %v4547
      %v4549 = vpop.f32.mrf.mxu0
      %4550 = vmatprep.mubr.f32.mxu0 0.0
      %4551 = vmatmul.mubr.f32.gmra.mxu0 %v4302
      %v4552 = vpop.f32.mrf.mxu0
      %v4553 = vadd.f32 0.0, %v4552
      %v4554 = vpop.f32.mrf.mxu0
      %4555 = vmatprep.mubr.f32.mxu0 0.0
      %4556 = vmatmul.mubr.f32.gmra.mxu0 %v4305
      %v4557 = vpop.f32.mrf.mxu0
      %v4558 = vadd.f32 0.0, %v4557
      %v4559 = vpop.f32.mrf.mxu0
      %4560 = vmatprep.mubr.f32.mxu0 0.0
      %4561 = vmatmul.mubr.f32.gmra.mxu0 %v4308
      %v4562 = vpop.f32.mrf.mxu0
      %v4563 = vadd.f32 0.0, %v4562
      %v4564 = vpop.f32.mrf.mxu0
      %4565 = vmatprep.mubr.f32.mxu0 0.0
      %4566 = vmatmul.mubr.f32.gmra.mxu0 %v4311
      %v4567 = vpop.f32.mrf.mxu0
      %v4568 = vadd.f32 0.0, %v4567
      %v4569 = vpop.f32.mrf.mxu0
      %4570 = vmatprep.mubr.f32.mxu0 0.0
      %4571 = vmatmul.mubr.f32.gmra.mxu0 %v4314
      %v4572 = vpop.f32.mrf.mxu0
      %v4573 = vadd.f32 0.0, %v4572
      %v4574 = vpop.f32.mrf.mxu0
      %4575 = vmatprep.mubr.f32.mxu0 0.0
      %4576 = vmatmul.mubr.f32.gmra.mxu0 %v4317
      %v4577 = vpop.f32.mrf.mxu0
      %v4578 = vadd.f32 0.0, %v4577
      %v4579 = vpop.f32.mrf.mxu0
      %4580 = vmatprep.mubr.f32.mxu0 0.0
      %4581 = vmatmul.mubr.f32.gmra.mxu0 %v4320
      %v4582 = vpop.f32.mrf.mxu0
      %v4583 = vadd.f32 0.0, %v4582
      %v4584 = vpop.f32.mrf.mxu0
      %4585 = vmatprep.mubr.f32.mxu0 0.0
      %4586 = vmatmul.mubr.f32.gmra.mxu0 %v4323
      %v4587 = vpop.f32.mrf.mxu0
      %v4588 = vadd.f32 0.0, %v4587
      %v4589 = vpop.f32.mrf.mxu0
      %4590 = vmatprep.mubr.f32.mxu0 0.0
      %4591 = vmatmul.mubr.f32.gmra.mxu0 %v4326
      %v4592 = vpop.f32.mrf.mxu0
      %v4593 = vadd.f32 0.0, %v4592
      %v4594 = vpop.f32.mrf.mxu0
      %4595 = vmatprep.mubr.f32.mxu0 0.0
      %4596 = vmatmul.mubr.f32.gmra.mxu0 %v4329
      %v4597 = vpop.f32.mrf.mxu0
      %v4598 = vadd.f32 0.0, %v4597
      %v4599 = vpop.f32.mrf.mxu0
      %4600 = vdwg.mxu0
      %v4601 = vadd.f32 %v4125, %v4398
      %v4602 = vadd.f32 %v4126, %v4403
      %v4603 = vadd.f32 %v4127, %v4408
      %v4604 = vadd.f32 %v4128, %v4413
      %v4605 = vadd.f32 %v4129, %v4418
      %v4606 = vadd.f32 %v4130, %v4423
      %v4607 = vadd.f32 %v4131, %v4428
      %v4608 = vadd.f32 %v4132, %v4433
      %v4609 = vadd.f32 %v4133, %v4438
      %v4610 = vadd.f32 %v4134, %v4443
      %v4611 = vadd.f32 %v4135, %v4448
      %v4612 = vadd.f32 %v4136, %v4453
      %v4613 = vadd.f32 %v4137, %v4458
      %v4614 = vadd.f32 %v4138, %v4463
      %v4615 = vadd.f32 %v4139, %v4468
      %v4616 = vadd.f32 %v4140, %v4473
      %v4617 = vadd.f32 %v4141, %v4478
      %v4618 = vadd.f32 %v4142, %v4483
      %v4619 = vadd.f32 %v4143, %v4488
      %v4620 = vadd.f32 %v4144, %v4493
      %v4621 = vadd.f32 %v4145, %v4498
      %v4622 = vadd.f32 %v4146, %v4503
      %v4623 = vadd.f32 %v4147, %v4508
      %v4624 = vadd.f32 %v4148, %v4513
      %v4625 = vadd.f32 %v4149, %v4518
      %v4626 = vadd.f32 %v4150, %v4523
      %v4627 = vadd.f32 %v4151, %v4528
      %v4628 = vadd.f32 %v4152, %v4533
      %v4629 = vadd.f32 %v4153, %v4538
      %v4630 = vadd.f32 %v4154, %v4543
      %v4631 = vadd.f32 %v4155, %v4548
      %v4632 = vadd.f32 %v4156, %v4553
      %v4633 = vadd.f32 %v4157, %v4558
      %v4634 = vadd.f32 %v4158, %v4563
      %v4635 = vadd.f32 %v4159, %v4568
      %v4636 = vadd.f32 %v4160, %v4573
      %v4637 = vadd.f32 %v4161, %v4578
      %v4638 = vadd.f32 %v4162, %v4583
      %v4639 = vadd.f32 %v4163, %v4588
      %v4640 = vadd.f32 %v4164, %v4593
      %v4641 = vadd.f32 %v4165, %v4598
      %v4642 = vld [vmem:[%s2] sm:$0x1]
      %v4644 = vlaneseq
      %v4645 = vshrl.u32 %v4644, 7
      %v4646 = vsub.s32 0, %v4645
      %v4647 = vrot.slane %v4642, %v4646
      %v4649 = vadd.f32 %v4601, %v4647
      %v4650 = vadd.f32 %v4602, %v4647
      %v4651 = vadd.f32 %v4603, %v4647
      %v4652 = vadd.f32 %v4604, %v4647
      %v4653 = vadd.f32 %v4605, %v4647
      %v4654 = vadd.f32 %v4606, %v4647
      %v4655 = vadd.f32 %v4607, %v4647
      %v4656 = vadd.f32 %v4608, %v4647
      %v4657 = vadd.f32 %v4609, %v4647
      %v4658 = vadd.f32 %v4610, %v4647
      %v4659 = vadd.f32 %v4611, %v4647
      %v4660 = vadd.f32 %v4612, %v4647
      %v4661 = vadd.f32 %v4613, %v4647
      %v4662 = vadd.f32 %v4614, %v4647
      %v4663 = vadd.f32 %v4615, %v4647
      %v4664 = vadd.f32 %v4616, %v4647
      %v4665 = vadd.f32 %v4617, %v4647
      %v4666 = vadd.f32 %v4618, %v4647
      %v4667 = vadd.f32 %v4619, %v4647
      %v4668 = vadd.f32 %v4620, %v4647
      %v4669 = vadd.f32 %v4621, %v4647
      %v4670 = vadd.f32 %v4622, %v4647
      %v4671 = vadd.f32 %v4623, %v4647
      %v4672 = vadd.f32 %v4624, %v4647
      %v4673 = vadd.f32 %v4625, %v4647
      %v4674 = vadd.f32 %v4626, %v4647
      %v4675 = vadd.f32 %v4627, %v4647
      %v4676 = vadd.f32 %v4628, %v4647
      %v4677 = vadd.f32 %v4629, %v4647
      %v4678 = vadd.f32 %v4630, %v4647
      %v4679 = vadd.f32 %v4631, %v4647
      %v4680 = vadd.f32 %v4632, %v4647
      %v4681 = vadd.f32 %v4633, %v4647
      %v4682 = vadd.f32 %v4634, %v4647
      %v4683 = vadd.f32 %v4635, %v4647
      %v4684 = vadd.f32 %v4636, %v4647
      %v4685 = vadd.f32 %v4637, %v4647
      %v4686 = vadd.f32 %v4638, %v4647
      %v4687 = vadd.f32 %v4639, %v4647
      %v4688 = vadd.f32 %v4640, %v4647
      %v4689 = vadd.f32 %v4641, %v4647
      %v4690 = vmax.f32 %v4649, 0.0
      %v4691 = vmax.f32 %v4650, 0.0
      %v4692 = vmax.f32 %v4651, 0.0
      %v4693 = vmax.f32 %v4652, 0.0
      %v4694 = vmax.f32 %v4653, 0.0
      %v4695 = vmax.f32 %v4654, 0.0
      %v4696 = vmax.f32 %v4655, 0.0
      %v4697 = vmax.f32 %v4656, 0.0
      %v4698 = vmax.f32 %v4657, 0.0
      %v4699 = vmax.f32 %v4658, 0.0
      %v4700 = vmax.f32 %v4659, 0.0
      %v4701 = vmax.f32 %v4660, 0.0
      %v4702 = vmax.f32 %v4661, 0.0
      %v4703 = vmax.f32 %v4662, 0.0
      %v4704 = vmax.f32 %v4663, 0.0
      %v4705 = vmax.f32 %v4664, 0.0
      %v4706 = vmax.f32 %v4665, 0.0
      %v4707 = vmax.f32 %v4666, 0.0
      %v4708 = vmax.f32 %v4667, 0.0
      %v4709 = vmax.f32 %v4668, 0.0
      %v4710 = vmax.f32 %v4669, 0.0
      %v4711 = vmax.f32 %v4670, 0.0
      %v4712 = vmax.f32 %v4671, 0.0
      %v4713 = vmax.f32 %v4672, 0.0
      %v4714 = vmax.f32 %v4673, 0.0
      %v4715 = vmax.f32 %v4674, 0.0
      %v4716 = vmax.f32 %v4675, 0.0
      %v4717 = vmax.f32 %v4676, 0.0
      %v4718 = vmax.f32 %v4677, 0.0
      %v4719 = vmax.f32 %v4678, 0.0
      %v4720 = vmax.f32 %v4679, 0.0
      %v4721 = vmax.f32 %v4680, 0.0
      %v4722 = vmax.f32 %v4681, 0.0
      %v4723 = vmax.f32 %v4682, 0.0
      %v4724 = vmax.f32 %v4683, 0.0
      %v4725 = vmax.f32 %v4684, 0.0
      %v4726 = vmax.f32 %v4685, 0.0
      %v4727 = vmax.f32 %v4686, 0.0
      %v4728 = vmax.f32 %v4687, 0.0
      %v4729 = vmax.f32 %v4688, 0.0
      %v4730 = vmax.f32 %v4689, 0.0
      %v4731 = vld [vmem:[%s10] sm:$0xff]
      %v4732 = vld [vmem:[%s10 + $0x8] sm:$0xff]
      %v4733 = vld [vmem:[%s10 + $0x10] sm:$0xff]
      %v4734 = vld [vmem:[%s10 + $0x18] sm:$0xff]
      %v4735 = vld [vmem:[%s10 + $0x20] sm:$0xff]
      %v4736 = vld [vmem:[%s10 + $0x28] sm:$0xff]
      %v4737 = vld [vmem:[%s10 + $0x30] sm:$0xff]
      %v4738 = vld [vmem:[%s10 + $0x38] sm:$0xff]
      %v4739 = vld [vmem:[%s10 + $0x40] sm:$0xff]
      %v4740 = vld [vmem:[%s10 + $0x48] sm:$0xff]
      %v4741 = vld [vmem:[%s10 + $0x50] sm:$0xff]
      %v4742 = vld [vmem:[%s10 + $0x58] sm:$0xff]
      %v4743 = vld [vmem:[%s10 + $0x60] sm:$0xff]
      %v4744 = vld [vmem:[%s10 + $0x68] sm:$0xff]
      %v4745 = vld [vmem:[%s10 + $0x70] sm:$0xff]
      %v4746 = vld [vmem:[%s10 + $0x78] sm:$0xff]
      %v4747 = vld [vmem:[%s10 + $0x80] sm:$0xff]
      %v4748 = vld [vmem:[%s10 + $0x88] sm:$0xff]
      %v4749 = vld [vmem:[%s10 + $0x90] sm:$0xff]
      %v4750 = vld [vmem:[%s10 + $0x98] sm:$0xff]
      %v4751 = vld [vmem:[%s10 + $0xa0] sm:$0xff]
      %v4752 = vld [vmem:[%s10 + $0xa8] sm:$0xff]
      %v4753 = vld [vmem:[%s10 + $0xb0] sm:$0xff]
      %v4754 = vld [vmem:[%s10 + $0xb8] sm:$0xff]
      %v4755 = vld [vmem:[%s10 + $0xc0] sm:$0xff]
      %v4756 = vld [vmem:[%s10 + $0xc8] sm:$0xff]
      %v4757 = vld [vmem:[%s10 + $0xd0] sm:$0xff]
      %v4758 = vld [vmem:[%s10 + $0xd8] sm:$0xff]
      %v4759 = vld [vmem:[%s10 + $0xe0] sm:$0xff]
      %v4760 = vld [vmem:[%s10 + $0xe8] sm:$0xff]
      %v4761 = vld [vmem:[%s10 + $0xf0] sm:$0xff]
      %v4762 = vld [vmem:[%s10 + $0xf8] sm:$0xff]
      %v4763 = vld [vmem:[%s10 + $0x100] sm:$0xff]
      %v4764 = vld [vmem:[%s10 + $0x108] sm:$0xff]
      %v4765 = vld [vmem:[%s10 + $0x110] sm:$0xff]
      %v4766 = vld [vmem:[%s10 + $0x118] sm:$0xff]
      %v4767 = vld [vmem:[%s10 + $0x120] sm:$0xff]
      %v4768 = vld [vmem:[%s10 + $0x128] sm:$0xff]
      %v4769 = vld [vmem:[%s10 + $0x130] sm:$0xff]
      %v4770 = vld [vmem:[%s10 + $0x138] sm:$0xff]
      %v4771 = vld [vmem:[%s10 + $0x140] sm:$0xf]
      %4773 = vset.pattern.permute.xlu0 0
      %4774 = vperm.xlu0 %4773, %v4731
      %v4775 = vpop.permute.xlu0 %4774
      %4778 = vset.pattern.permute.xlu0 0
      %4779 = vperm.xlu0 %4778, %v4732
      %v4780 = vpop.permute.xlu0 %4779
      %4783 = vset.pattern.permute.xlu0 0
      %4784 = vperm.xlu0 %4783, %v4733
      %v4785 = vpop.permute.xlu0 %4784
      %4788 = vset.pattern.permute.xlu0 0
      %4789 = vperm.xlu0 %4788, %v4734
      %v4790 = vpop.permute.xlu0 %4789
      %4793 = vset.pattern.permute.xlu0 0
      %4794 = vperm.xlu0 %4793, %v4735
      %v4795 = vpop.permute.xlu0 %4794
      %4798 = vset.pattern.permute.xlu0 0
      %4799 = vperm.xlu0 %4798, %v4736
      %v4800 = vpop.permute.xlu0 %4799
      %4803 = vset.pattern.permute.xlu0 0
      %4804 = vperm.xlu0 %4803, %v4737
      %v4805 = vpop.permute.xlu0 %4804
      %4808 = vset.pattern.permute.xlu0 0
      %4809 = vperm.xlu0 %4808, %v4738
      %v4810 = vpop.permute.xlu0 %4809
      %4813 = vset.pattern.permute.xlu0 0
      %4814 = vperm.xlu0 %4813, %v4739
      %v4815 = vpop.permute.xlu0 %4814
      %4818 = vset.pattern.permute.xlu0 0
      %4819 = vperm.xlu0 %4818, %v4740
      %v4820 = vpop.permute.xlu0 %4819
      %4823 = vset.pattern.permute.xlu0 0
      %4824 = vperm.xlu0 %4823, %v4741
      %v4825 = vpop.permute.xlu0 %4824
      %4828 = vset.pattern.permute.xlu0 0
      %4829 = vperm.xlu0 %4828, %v4742
      %v4830 = vpop.permute.xlu0 %4829
      %4833 = vset.pattern.permute.xlu0 0
      %4834 = vperm.xlu0 %4833, %v4743
      %v4835 = vpop.permute.xlu0 %4834
      %4838 = vset.pattern.permute.xlu0 0
      %4839 = vperm.xlu0 %4838, %v4744
      %v4840 = vpop.permute.xlu0 %4839
      %4843 = vset.pattern.permute.xlu0 0
      %4844 = vperm.xlu0 %4843, %v4745
      %v4845 = vpop.permute.xlu0 %4844
      %4848 = vset.pattern.permute.xlu0 0
      %4849 = vperm.xlu0 %4848, %v4746
      %v4850 = vpop.permute.xlu0 %4849
      %4853 = vset.pattern.permute.xlu0 0
      %4854 = vperm.xlu0 %4853, %v4747
      %v4855 = vpop.permute.xlu0 %4854
      %4858 = vset.pattern.permute.xlu0 0
      %4859 = vperm.xlu0 %4858, %v4748
      %v4860 = vpop.permute.xlu0 %4859
      %4863 = vset.pattern.permute.xlu0 0
      %4864 = vperm.xlu0 %4863, %v4749
      %v4865 = vpop.permute.xlu0 %4864
      %4868 = vset.pattern.permute.xlu0 0
      %4869 = vperm.xlu0 %4868, %v4750
      %v4870 = vpop.permute.xlu0 %4869
      %4873 = vset.pattern.permute.xlu0 0
      %4874 = vperm.xlu0 %4873, %v4751
      %v4875 = vpop.permute.xlu0 %4874
      %4878 = vset.pattern.permute.xlu0 0
      %4879 = vperm.xlu0 %4878, %v4752
      %v4880 = vpop.permute.xlu0 %4879
      %4883 = vset.pattern.permute.xlu0 0
      %4884 = vperm.xlu0 %4883, %v4753
      %v4885 = vpop.permute.xlu0 %4884
      %4888 = vset.pattern.permute.xlu0 0
      %4889 = vperm.xlu0 %4888, %v4754
      %v4890 = vpop.permute.xlu0 %4889
      %4893 = vset.pattern.permute.xlu0 0
      %4894 = vperm.xlu0 %4893, %v4755
      %v4895 = vpop.permute.xlu0 %4894
      %4898 = vset.pattern.permute.xlu0 0
      %4899 = vperm.xlu0 %4898, %v4756
      %v4900 = vpop.permute.xlu0 %4899
      %4903 = vset.pattern.permute.xlu0 0
      %4904 = vperm.xlu0 %4903, %v4757
      %v4905 = vpop.permute.xlu0 %4904
      %4908 = vset.pattern.permute.xlu0 0
      %4909 = vperm.xlu0 %4908, %v4758
      %v4910 = vpop.permute.xlu0 %4909
      %4913 = vset.pattern.permute.xlu0 0
      %4914 = vperm.xlu0 %4913, %v4759
      %v4915 = vpop.permute.xlu0 %4914
      %4918 = vset.pattern.permute.xlu0 0
      %4919 = vperm.xlu0 %4918, %v4760
      %v4920 = vpop.permute.xlu0 %4919
      %4923 = vset.pattern.permute.xlu0 0
      %4924 = vperm.xlu0 %4923, %v4761
      %v4925 = vpop.permute.xlu0 %4924
      %4928 = vset.pattern.permute.xlu0 0
      %4929 = vperm.xlu0 %4928, %v4762
      %v4930 = vpop.permute.xlu0 %4929
      %4933 = vset.pattern.permute.xlu0 0
      %4934 = vperm.xlu0 %4933, %v4763
      %v4935 = vpop.permute.xlu0 %4934
      %4938 = vset.pattern.permute.xlu0 0
      %4939 = vperm.xlu0 %4938, %v4764
      %v4940 = vpop.permute.xlu0 %4939
      %4943 = vset.pattern.permute.xlu0 0
      %4944 = vperm.xlu0 %4943, %v4765
      %v4945 = vpop.permute.xlu0 %4944
      %4948 = vset.pattern.permute.xlu0 0
      %4949 = vperm.xlu0 %4948, %v4766
      %v4950 = vpop.permute.xlu0 %4949
      %4953 = vset.pattern.permute.xlu0 0
      %4954 = vperm.xlu0 %4953, %v4767
      %v4955 = vpop.permute.xlu0 %4954
      %4958 = vset.pattern.permute.xlu0 0
      %4959 = vperm.xlu0 %4958, %v4768
      %v4960 = vpop.permute.xlu0 %4959
      %4963 = vset.pattern.permute.xlu0 0
      %4964 = vperm.xlu0 %4963, %v4769
      %v4965 = vpop.permute.xlu0 %4964
      %4968 = vset.pattern.permute.xlu0 0
      %4969 = vperm.xlu0 %4968, %v4770
      %v4970 = vpop.permute.xlu0 %4969
      %4973 = vset.pattern.permute.xlu0 0
      %4974 = vperm.xlu0 %4973, %v4771
      %v4975 = vpop.permute.xlu0 %4974
      %v4977 = vmul.f32 %v4690, %v4775
      %v4978 = vmul.f32 %v4691, %v4780
      %v4979 = vmul.f32 %v4692, %v4785
      %v4980 = vmul.f32 %v4693, %v4790
      %v4981 = vmul.f32 %v4694, %v4795
      %v4982 = vmul.f32 %v4695, %v4800
      %v4983 = vmul.f32 %v4696, %v4805
      %v4984 = vmul.f32 %v4697, %v4810
      %v4985 = vmul.f32 %v4698, %v4815
      %v4986 = vmul.f32 %v4699, %v4820
      %v4987 = vmul.f32 %v4700, %v4825
      %v4988 = vmul.f32 %v4701, %v4830
      %v4989 = vmul.f32 %v4702, %v4835
      %v4990 = vmul.f32 %v4703, %v4840
      %v4991 = vmul.f32 %v4704, %v4845
      %v4992 = vmul.f32 %v4705, %v4850
      %v4993 = vmul.f32 %v4706, %v4855
      %v4994 = vmul.f32 %v4707, %v4860
      %v4995 = vmul.f32 %v4708, %v4865
      %v4996 = vmul.f32 %v4709, %v4870
      %v4997 = vmul.f32 %v4710, %v4875
      %v4998 = vmul.f32 %v4711, %v4880
      %v4999 = vmul.f32 %v4712, %v4885
      %v5000 = vmul.f32 %v4713, %v4890
      %v5001 = vmul.f32 %v4714, %v4895
      %v5002 = vmul.f32 %v4715, %v4900
      %v5003 = vmul.f32 %v4716, %v4905
      %v5004 = vmul.f32 %v4717, %v4910
      %v5005 = vmul.f32 %v4718, %v4915
      %v5006 = vmul.f32 %v4719, %v4920
      %v5007 = vmul.f32 %v4720, %v4925
      %v5008 = vmul.f32 %v4721, %v4930
      %v5009 = vmul.f32 %v4722, %v4935
      %v5010 = vmul.f32 %v4723, %v4940
      %v5011 = vmul.f32 %v4724, %v4945
      %v5012 = vmul.f32 %v4725, %v4950
      %v5013 = vmul.f32 %v4726, %v4955
      %v5014 = vmul.f32 %v4727, %v4960
      %v5015 = vmul.f32 %v4728, %v4965
      %v5016 = vmul.f32 %v4729, %v4970
      %v5017 = vmul.f32 %v4730, %v4975
      %vm5018 = vcmask 130048
      %5019 = vst.msk [vmem:[#allocation2] sm:$0xff] %vm5018, 0.0
      %5020 = vst.msk [vmem:[#allocation2 + $0x8] sm:$0xff] %vm5018, 0.0
      %5021 = vst.msk [vmem:[#allocation2 + $0x10] sm:$0xff] %vm5018, 0.0
      %5022 = vst.msk [vmem:[#allocation2 + $0x15c] sm:$0xff] %vm5018, 0.0
      %5023 = vst.msk [vmem:[#allocation2 + $0x164] sm:$0xff] %vm5018, 0.0
      %5024 = vst.msk [vmem:[#allocation2 + $0x16c] sm:$0xff] %vm5018, 0.0
      %vm5025 = vcmask 125952
      %5026 = vst.msk [vmem:[#allocation2 + $0x174] sm:$0xf] %vm5025, 0.0
      %5027 = vst.msk [vmem:[#allocation2 + $0x18] sm:$0xff] %vm5018, %v4977
      %5028 = vst.msk [vmem:[#allocation2 + $0x20] sm:$0xff] %vm5018, %v4978
      %5029 = vst.msk [vmem:[#allocation2 + $0x28] sm:$0xff] %vm5018, %v4979
      %5030 = vst.msk [vmem:[#allocation2 + $0x30] sm:$0xff] %vm5018, %v4980
      %5031 = vst.msk [vmem:[#allocation2 + $0x38] sm:$0xff] %vm5018, %v4981
      %5032 = vst.msk [vmem:[#allocation2 + $0x40] sm:$0xff] %vm5018, %v4982
      %5033 = vst.msk [vmem:[#allocation2 + $0x48] sm:$0xff] %vm5018, %v4983
      %5034 = vst.msk [vmem:[#allocation2 + $0x50] sm:$0xff] %vm5018, %v4984
      %5035 = vst.msk [vmem:[#allocation2 + $0x58] sm:$0xff] %vm5018, %v4985
      %5036 = vst.msk [vmem:[#allocation2 + $0x60] sm:$0xff] %vm5018, %v4986
      %5037 = vst.msk [vmem:[#allocation2 + $0x68] sm:$0xff] %vm5018, %v4987
      %5038 = vst.msk [vmem:[#allocation2 + $0x70] sm:$0xff] %vm5018, %v4988
      %5039 = vst.msk [vmem:[#allocation2 + $0x78] sm:$0xff] %vm5018, %v4989
      %5040 = vst.msk [vmem:[#allocation2 + $0x80] sm:$0xff] %vm5018, %v4990
      %5041 = vst.msk [vmem:[#allocation2 + $0x88] sm:$0xff] %vm5018, %v4991
      %5042 = vst.msk [vmem:[#allocation2 + $0x90] sm:$0xff] %vm5018, %v4992
      %5043 = vst.msk [vmem:[#allocation2 + $0x98] sm:$0xff] %vm5018, %v4993
      %5044 = vst.msk [vmem:[#allocation2 + $0xa0] sm:$0xff] %vm5018, %v4994
      %5045 = vst.msk [vmem:[#allocation2 + $0xa8] sm:$0xff] %vm5018, %v4995
      %5046 = vst.msk [vmem:[#allocation2 + $0xb0] sm:$0xff] %vm5018, %v4996
      %5047 = vst.msk [vmem:[#allocation2 + $0xb8] sm:$0xff] %vm5018, %v4997
      %5048 = vst.msk [vmem:[#allocation2 + $0xc0] sm:$0xff] %vm5018, %v4998
      %5049 = vst.msk [vmem:[#allocation2 + $0xc8] sm:$0xff] %vm5018, %v4999
      %5050 = vst.msk [vmem:[#allocation2 + $0xd0] sm:$0xff] %vm5018, %v5000
      %5051 = vst.msk [vmem:[#allocation2 + $0xd8] sm:$0xff] %vm5018, %v5001
      %5052 = vst.msk [vmem:[#allocation2 + $0xe0] sm:$0xff] %vm5018, %v5002
      %5053 = vst.msk [vmem:[#allocation2 + $0xe8] sm:$0xff] %vm5018, %v5003
      %5054 = vst.msk [vmem:[#allocation2 + $0xf0] sm:$0xff] %vm5018, %v5004
      %5055 = vst.msk [vmem:[#allocation2 + $0xf8] sm:$0xff] %vm5018, %v5005
      %5056 = vst.msk [vmem:[#allocation2 + $0x100] sm:$0xff] %vm5018, %v5006
      %5057 = vst.msk [vmem:[#allocation2 + $0x108] sm:$0xff] %vm5018, %v5007
      %5058 = vst.msk [vmem:[#allocation2 + $0x110] sm:$0xff] %vm5018, %v5008
      %5059 = vst.msk [vmem:[#allocation2 + $0x118] sm:$0xff] %vm5018, %v5009
      %5060 = vst.msk [vmem:[#allocation2 + $0x120] sm:$0xff] %vm5018, %v5010
      %5061 = vst.msk [vmem:[#allocation2 + $0x128] sm:$0xff] %vm5018, %v5011
      %5062 = vst.msk [vmem:[#allocation2 + $0x130] sm:$0xff] %vm5018, %v5012
      %5063 = vst.msk [vmem:[#allocation2 + $0x138] sm:$0xff] %vm5018, %v5013
      %5064 = vst.msk [vmem:[#allocation2 + $0x140] sm:$0xff] %vm5018, %v5014
      %5065 = vst.msk [vmem:[#allocation2 + $0x148] sm:$0xff] %vm5018, %v5015
      %5066 = vst.msk [vmem:[#allocation2 + $0x150] sm:$0xff] %vm5018, %v5016
      %5067 = vst.msk [vmem:[#allocation2 + $0x158] sm:$0xf] %vm5025, %v5017
      %v5068 = vld [vmem:[#allocation2 + $0x5] sm:$0xff]
      %v5069 = vld [vmem:[#allocation2 + $0xd] sm:$0xff]
      %v5070 = vld [vmem:[#allocation2 + $0x15] sm:$0xff]
      %v5071 = vld [vmem:[#allocation2 + $0x1d] sm:$0xff]
      %v5072 = vld [vmem:[#allocation2 + $0x25] sm:$0xff]
      %v5073 = vld [vmem:[#allocation2 + $0x2d] sm:$0xff]
      %v5074 = vld [vmem:[#allocation2 + $0x35] sm:$0xff]
      %v5075 = vld [vmem:[#allocation2 + $0x3d] sm:$0xff]
      %v5076 = vld [vmem:[#allocation2 + $0x45] sm:$0xff]
      %v5077 = vld [vmem:[#allocation2 + $0x4d] sm:$0xff]
      %v5078 = vld [vmem:[#allocation2 + $0x55] sm:$0xff]
      %v5079 = vld [vmem:[#allocation2 + $0x5d] sm:$0xff]
      %v5080 = vld [vmem:[#allocation2 + $0x65] sm:$0xff]
      %v5081 = vld [vmem:[#allocation2 + $0x6d] sm:$0xff]
      %v5082 = vld [vmem:[#allocation2 + $0x75] sm:$0xff]
      %v5083 = vld [vmem:[#allocation2 + $0x7d] sm:$0xff]
      %v5084 = vld [vmem:[#allocation2 + $0x85] sm:$0xff]
      %v5085 = vld [vmem:[#allocation2 + $0x8d] sm:$0xff]
      %v5086 = vld [vmem:[#allocation2 + $0x95] sm:$0xff]
      %v5087 = vld [vmem:[#allocation2 + $0x9d] sm:$0xff]
      %v5088 = vld [vmem:[#allocation2 + $0xa5] sm:$0xff]
      %v5089 = vld [vmem:[#allocation2 + $0xad] sm:$0xff]
      %v5090 = vld [vmem:[#allocation2 + $0xb5] sm:$0xff]
      %v5091 = vld [vmem:[#allocation2 + $0xbd] sm:$0xff]
      %v5092 = vld [vmem:[#allocation2 + $0xc5] sm:$0xff]
      %v5093 = vld [vmem:[#allocation2 + $0xcd] sm:$0xff]
      %v5094 = vld [vmem:[#allocation2 + $0xd5] sm:$0xff]
      %v5095 = vld [vmem:[#allocation2 + $0xdd] sm:$0xff]
      %v5096 = vld [vmem:[#allocation2 + $0xe5] sm:$0xff]
      %v5097 = vld [vmem:[#allocation2 + $0xed] sm:$0xff]
      %v5098 = vld [vmem:[#allocation2 + $0xf5] sm:$0xff]
      %v5099 = vld [vmem:[#allocation2 + $0xfd] sm:$0xff]
      %v5100 = vld [vmem:[#allocation2 + $0x105] sm:$0xff]
      %v5101 = vld [vmem:[#allocation2 + $0x10d] sm:$0xff]
      %v5102 = vld [vmem:[#allocation2 + $0x115] sm:$0xff]
      %v5103 = vld [vmem:[#allocation2 + $0x11d] sm:$0xff]
      %v5104 = vld [vmem:[#allocation2 + $0x125] sm:$0xff]
      %v5105 = vld [vmem:[#allocation2 + $0x12d] sm:$0xff]
      %v5106 = vld [vmem:[#allocation2 + $0x135] sm:$0xff]
      %v5107 = vld [vmem:[#allocation2 + $0x13d] sm:$0xff]
      %v5108 = vld [vmem:[#allocation2 + $0x145] sm:$0xf]
      %v5109 = vld [vmem:[%s3] sm:$0xff]
      %v5110 = vld [vmem:[%s3 + $0x8] sm:$0xff]
      %v5111 = vld [vmem:[#allocation2 + $0x6] sm:$0xff]
      %v5112 = vld [vmem:[#allocation2 + $0xe] sm:$0xff]
      %v5113 = vld [vmem:[#allocation2 + $0x16] sm:$0xff]
      %v5114 = vld [vmem:[#allocation2 + $0x1e] sm:$0xff]
      %v5115 = vld [vmem:[#allocation2 + $0x26] sm:$0xff]
      %v5116 = vld [vmem:[#allocation2 + $0x2e] sm:$0xff]
      %v5117 = vld [vmem:[#allocation2 + $0x36] sm:$0xff]
      %v5118 = vld [vmem:[#allocation2 + $0x3e] sm:$0xff]
      %v5119 = vld [vmem:[#allocation2 + $0x46] sm:$0xff]
      %v5120 = vld [vmem:[#allocation2 + $0x4e] sm:$0xff]
      %v5121 = vld [vmem:[#allocation2 + $0x56] sm:$0xff]
      %v5122 = vld [vmem:[#allocation2 + $0x5e] sm:$0xff]
      %v5123 = vld [vmem:[#allocation2 + $0x66] sm:$0xff]
      %v5124 = vld [vmem:[#allocation2 + $0x6e] sm:$0xff]
      %v5125 = vld [vmem:[#allocation2 + $0x76] sm:$0xff]
      %v5126 = vld [vmem:[#allocation2 + $0x7e] sm:$0xff]
      %v5127 = vld [vmem:[#allocation2 + $0x86] sm:$0xff]
      %v5128 = vld [vmem:[#allocation2 + $0x8e] sm:$0xff]
      %v5129 = vld [vmem:[#allocation2 + $0x96] sm:$0xff]
      %v5130 = vld [vmem:[#allocation2 + $0x9e] sm:$0xff]
      %v5131 = vld [vmem:[#allocation2 + $0xa6] sm:$0xff]
      %v5132 = vld [vmem:[#allocation2 + $0xae] sm:$0xff]
      %v5133 = vld [vmem:[#allocation2 + $0xb6] sm:$0xff]
      %v5134 = vld [vmem:[#allocation2 + $0xbe] sm:$0xff]
      %v5135 = vld [vmem:[#allocation2 + $0xc6] sm:$0xff]
      %v5136 = vld [vmem:[#allocation2 + $0xce] sm:$0xff]
      %v5137 = vld [vmem:[#allocation2 + $0xd6] sm:$0xff]
      %v5138 = vld [vmem:[#allocation2 + $0xde] sm:$0xff]
      %v5139 = vld [vmem:[#allocation2 + $0xe6] sm:$0xff]
      %v5140 = vld [vmem:[#allocation2 + $0xee] sm:$0xff]
      %v5141 = vld [vmem:[#allocation2 + $0xf6] sm:$0xff]
      %v5142 = vld [vmem:[#allocation2 + $0xfe] sm:$0xff]
      %v5143 = vld [vmem:[#allocation2 + $0x106] sm:$0xff]
      %v5144 = vld [vmem:[#allocation2 + $0x10e] sm:$0xff]
      %v5145 = vld [vmem:[#allocation2 + $0x116] sm:$0xff]
      %v5146 = vld [vmem:[#allocation2 + $0x11e] sm:$0xff]
      %v5147 = vld [vmem:[#allocation2 + $0x126] sm:$0xff]
      %v5148 = vld [vmem:[#allocation2 + $0x12e] sm:$0xff]
      %v5149 = vld [vmem:[#allocation2 + $0x136] sm:$0xff]
      %v5150 = vld [vmem:[#allocation2 + $0x13e] sm:$0xff]
      %v5151 = vld [vmem:[#allocation2 + $0x146] sm:$0xf]
      %v5152 = vld [vmem:[%s3 + $0x10] sm:$0xff]
      %v5153 = vld [vmem:[%s3 + $0x18] sm:$0xff]
      %v5155 = vsel %vm5018, %v5111, 0
      %v5158 = vsel %vm5018, %v5112, 0
      %v5161 = vsel %vm5018, %v5113, 0
      %v5164 = vsel %vm5018, %v5114, 0
      %v5167 = vsel %vm5018, %v5115, 0
      %v5170 = vsel %vm5018, %v5116, 0
      %v5173 = vsel %vm5018, %v5117, 0
      %v5176 = vsel %vm5018, %v5118, 0
      %v5179 = vsel %vm5018, %v5119, 0
      %v5182 = vsel %vm5018, %v5120, 0
      %v5185 = vsel %vm5018, %v5121, 0
      %v5188 = vsel %vm5018, %v5122, 0
      %v5191 = vsel %vm5018, %v5123, 0
      %v5194 = vsel %vm5018, %v5124, 0
      %v5197 = vsel %vm5018, %v5125, 0
      %v5200 = vsel %vm5018, %v5126, 0
      %v5203 = vsel %vm5018, %v5127, 0
      %v5206 = vsel %vm5018, %v5128, 0
      %v5209 = vsel %vm5018, %v5129, 0
      %v5212 = vsel %vm5018, %v5130, 0
      %v5215 = vsel %vm5018, %v5131, 0
      %v5218 = vsel %vm5018, %v5132, 0
      %v5221 = vsel %vm5018, %v5133, 0
      %v5224 = vsel %vm5018, %v5134, 0
      %v5227 = vsel %vm5018, %v5135, 0
      %v5230 = vsel %vm5018, %v5136, 0
      %v5233 = vsel %vm5018, %v5137, 0
      %v5236 = vsel %vm5018, %v5138, 0
      %v5239 = vsel %vm5018, %v5139, 0
      %v5242 = vsel %vm5018, %v5140, 0
      %v5245 = vsel %vm5018, %v5141, 0
      %v5248 = vsel %vm5018, %v5142, 0
      %v5251 = vsel %vm5018, %v5143, 0
      %v5254 = vsel %vm5018, %v5144, 0
      %v5257 = vsel %vm5018, %v5145, 0
      %v5260 = vsel %vm5018, %v5146, 0
      %v5263 = vsel %vm5018, %v5147, 0
      %v5266 = vsel %vm5018, %v5148, 0
      %v5269 = vsel %vm5018, %v5149, 0
      %v5272 = vsel %vm5018, %v5150, 0
      %v5275 = vsel %vm5018, %v5151, 0
      %5277 = vmatprep.subr.mxu0 0.0
      %5278 = vmatpush1.msra.mxu0 0.0
      %5279 = vmatprep.subr.mxu0 0.0
      %5280 = vmatpush1.msra.mxu0 0.0
      %5281 = vmatprep.subr.mxu0 0.0
      %5282 = vmatpush1.msra.mxu0 0.0
      %5283 = vmatprep.subr.mxu0 0.0
      %5284 = vmatpush1.msra.mxu0 0.0
      %5285 = vmatprep.subr.mxu0 0.0
      %5286 = vmatpush1.msra.mxu0 0.0
      %5287 = vmatprep.subr.mxu0 0.0
      %5288 = vmatpush1.msra.mxu0 0.0
      %5289 = vmatprep.subr.mxu0 0.0
      %5290 = vmatpush1.msra.mxu0 0.0
      %5291 = vmatprep.subr.mxu0 0.0
      %5292 = vmatpush1.msra.mxu0 0.0
      %5293 = vmatprep.subr.mxu0 0.0
      %5294 = vmatpush1.msra.mxu0 0.0
      %5295 = vmatprep.subr.mxu0 0.0
      %5296 = vmatpush1.msra.mxu0 0.0
      %5297 = vmatprep.subr.mxu0 0.0
      %5298 = vmatpush1.msra.mxu0 0.0
      %5299 = vmatprep.subr.mxu0 0.0
      %5300 = vmatpush1.msra.mxu0 0.0
      %5301 = vmatprep.subr.mxu0 0.0
      %5302 = vmatpush1.msra.mxu0 0.0
      %5303 = vmatprep.subr.mxu0 0.0
      %5304 = vmatpush1.msra.mxu0 0.0
      %5305 = vmatprep.subr.mxu0 0.0
      %5306 = vmatpush1.msra.mxu0 %v5153
      %5307 = vmatprep.subr.mxu0 0.0
      %5308 = vmatpush1.msra.mxu0 %v5152
      %5309 = vmatprep.subr.mxu0 0.0
      %5310 = vmatpush2.msra.mxu0 0.0
      %5311 = vmatprep.subr.mxu0 0.0
      %5312 = vmatpush2.msra.mxu0 0.0
      %5313 = vmatprep.subr.mxu0 0.0
      %5314 = vmatpush2.msra.mxu0 0.0
      %5315 = vmatprep.subr.mxu0 0.0
      %5316 = vmatpush2.msra.mxu0 0.0
      %5317 = vmatprep.subr.mxu0 0.0
      %5318 = vmatpush2.msra.mxu0 0.0
      %5319 = vmatprep.subr.mxu0 0.0
      %5320 = vmatpush2.msra.mxu0 0.0
      %5321 = vmatprep.subr.mxu0 0.0
      %5322 = vmatpush2.msra.mxu0 0.0
      %5323 = vmatprep.subr.mxu0 0.0
      %5324 = vmatpush2.msra.mxu0 0.0
      %5325 = vmatprep.subr.mxu0 0.0
      %5326 = vmatpush2.msra.mxu0 0.0
      %5327 = vmatprep.subr.mxu0 0.0
      %5328 = vmatpush2.msra.mxu0 0.0
      %5329 = vmatprep.subr.mxu0 0.0
      %5330 = vmatpush2.msra.mxu0 0.0
      %5331 = vmatprep.subr.mxu0 0.0
      %5332 = vmatpush2.msra.mxu0 0.0
      %5333 = vmatprep.subr.mxu0 0.0
      %5334 = vmatpush2.msra.mxu0 0.0
      %5335 = vmatprep.subr.mxu0 0.0
      %5336 = vmatpush2.msra.mxu0 0.0
      %5337 = vmatprep.subr.mxu0 0.0
      %5338 = vmatpush2.msra.mxu0 0.0
      %5339 = vmatprep.subr.mxu0 0.0
      %5340 = vmatpush2.msra.mxu0 0.0
      %5341 = vmatprep.mubr.f32.mxu0 0.0
      %5342 = vmatmul.mubr.f32.gmra.mxu0 %v5155
      %v5343 = vpop.f32.mrf.mxu0
      %v5344 = vadd.f32 0.0, %v5343
      %v5345 = vpop.f32.mrf.mxu0
      %5346 = vmatprep.mubr.f32.mxu0 0.0
      %5347 = vmatmul.mubr.f32.gmra.mxu0 %v5158
      %v5348 = vpop.f32.mrf.mxu0
      %v5349 = vadd.f32 0.0, %v5348
      %v5350 = vpop.f32.mrf.mxu0
      %5351 = vmatprep.mubr.f32.mxu0 0.0
      %5352 = vmatmul.mubr.f32.gmra.mxu0 %v5161
      %v5353 = vpop.f32.mrf.mxu0
      %v5354 = vadd.f32 0.0, %v5353
      %v5355 = vpop.f32.mrf.mxu0
      %5356 = vmatprep.mubr.f32.mxu0 0.0
      %5357 = vmatmul.mubr.f32.gmra.mxu0 %v5164
      %v5358 = vpop.f32.mrf.mxu0
      %v5359 = vadd.f32 0.0, %v5358
      %v5360 = vpop.f32.mrf.mxu0
      %5361 = vmatprep.mubr.f32.mxu0 0.0
      %5362 = vmatmul.mubr.f32.gmra.mxu0 %v5167
      %v5363 = vpop.f32.mrf.mxu0
      %v5364 = vadd.f32 0.0, %v5363
      %v5365 = vpop.f32.mrf.mxu0
      %5366 = vmatprep.mubr.f32.mxu0 0.0
      %5367 = vmatmul.mubr.f32.gmra.mxu0 %v5170
      %v5368 = vpop.f32.mrf.mxu0
      %v5369 = vadd.f32 0.0, %v5368
      %v5370 = vpop.f32.mrf.mxu0
      %5371 = vmatprep.mubr.f32.mxu0 0.0
      %5372 = vmatmul.mubr.f32.gmra.mxu0 %v5173
      %v5373 = vpop.f32.mrf.mxu0
      %v5374 = vadd.f32 0.0, %v5373
      %v5375 = vpop.f32.mrf.mxu0
      %5376 = vmatprep.mubr.f32.mxu0 0.0
      %5377 = vmatmul.mubr.f32.gmra.mxu0 %v5176
      %v5378 = vpop.f32.mrf.mxu0
      %v5379 = vadd.f32 0.0, %v5378
      %v5380 = vpop.f32.mrf.mxu0
      %5381 = vmatprep.mubr.f32.mxu0 0.0
      %5382 = vmatmul.mubr.f32.gmra.mxu0 %v5179
      %v5383 = vpop.f32.mrf.mxu0
      %v5384 = vadd.f32 0.0, %v5383
      %v5385 = vpop.f32.mrf.mxu0
      %5386 = vmatprep.mubr.f32.mxu0 0.0
      %5387 = vmatmul.mubr.f32.gmra.mxu0 %v5182
      %v5388 = vpop.f32.mrf.mxu0
      %v5389 = vadd.f32 0.0, %v5388
      %v5390 = vpop.f32.mrf.mxu0
      %5391 = vmatprep.mubr.f32.mxu0 0.0
      %5392 = vmatmul.mubr.f32.gmra.mxu0 %v5185
      %v5393 = vpop.f32.mrf.mxu0
      %v5394 = vadd.f32 0.0, %v5393
      %v5395 = vpop.f32.mrf.mxu0
      %5396 = vmatprep.mubr.f32.mxu0 0.0
      %5397 = vmatmul.mubr.f32.gmra.mxu0 %v5188
      %v5398 = vpop.f32.mrf.mxu0
      %v5399 = vadd.f32 0.0, %v5398
      %v5400 = vpop.f32.mrf.mxu0
      %5401 = vmatprep.mubr.f32.mxu0 0.0
      %5402 = vmatmul.mubr.f32.gmra.mxu0 %v5191
      %v5403 = vpop.f32.mrf.mxu0
      %v5404 = vadd.f32 0.0, %v5403
      %v5405 = vpop.f32.mrf.mxu0
      %5406 = vmatprep.mubr.f32.mxu0 0.0
      %5407 = vmatmul.mubr.f32.gmra.mxu0 %v5194
      %v5408 = vpop.f32.mrf.mxu0
      %v5409 = vadd.f32 0.0, %v5408
      %v5410 = vpop.f32.mrf.mxu0
      %5411 = vmatprep.mubr.f32.mxu0 0.0
      %5412 = vmatmul.mubr.f32.gmra.mxu0 %v5197
      %v5413 = vpop.f32.mrf.mxu0
      %v5414 = vadd.f32 0.0, %v5413
      %v5415 = vpop.f32.mrf.mxu0
      %5416 = vmatprep.mubr.f32.mxu0 0.0
      %5417 = vmatmul.mubr.f32.gmra.mxu0 %v5200
      %v5418 = vpop.f32.mrf.mxu0
      %v5419 = vadd.f32 0.0, %v5418
      %v5420 = vpop.f32.mrf.mxu0
      %5421 = vmatprep.mubr.f32.mxu0 0.0
      %5422 = vmatmul.mubr.f32.gmra.mxu0 %v5203
      %v5423 = vpop.f32.mrf.mxu0
      %v5424 = vadd.f32 0.0, %v5423
      %v5425 = vpop.f32.mrf.mxu0
      %5426 = vmatprep.mubr.f32.mxu0 0.0
      %5427 = vmatmul.mubr.f32.gmra.mxu0 %v5206
      %v5428 = vpop.f32.mrf.mxu0
      %v5429 = vadd.f32 0.0, %v5428
      %v5430 = vpop.f32.mrf.mxu0
      %5431 = vmatprep.mubr.f32.mxu0 0.0
      %5432 = vmatmul.mubr.f32.gmra.mxu0 %v5209
      %v5433 = vpop.f32.mrf.mxu0
      %v5434 = vadd.f32 0.0, %v5433
      %v5435 = vpop.f32.mrf.mxu0
      %5436 = vmatprep.mubr.f32.mxu0 0.0
      %5437 = vmatmul.mubr.f32.gmra.mxu0 %v5212
      %v5438 = vpop.f32.mrf.mxu0
      %v5439 = vadd.f32 0.0, %v5438
      %v5440 = vpop.f32.mrf.mxu0
      %5441 = vmatprep.mubr.f32.mxu0 0.0
      %5442 = vmatmul.mubr.f32.gmra.mxu0 %v5215
      %v5443 = vpop.f32.mrf.mxu0
      %v5444 = vadd.f32 0.0, %v5443
      %v5445 = vpop.f32.mrf.mxu0
      %5446 = vmatprep.mubr.f32.mxu0 0.0
      %5447 = vmatmul.mubr.f32.gmra.mxu0 %v5218
      %v5448 = vpop.f32.mrf.mxu0
      %v5449 = vadd.f32 0.0, %v5448
      %v5450 = vpop.f32.mrf.mxu0
      %5451 = vmatprep.mubr.f32.mxu0 0.0
      %5452 = vmatmul.mubr.f32.gmra.mxu0 %v5221
      %v5453 = vpop.f32.mrf.mxu0
      %v5454 = vadd.f32 0.0, %v5453
      %v5455 = vpop.f32.mrf.mxu0
      %5456 = vmatprep.mubr.f32.mxu0 0.0
      %5457 = vmatmul.mubr.f32.gmra.mxu0 %v5224
      %v5458 = vpop.f32.mrf.mxu0
      %v5459 = vadd.f32 0.0, %v5458
      %v5460 = vpop.f32.mrf.mxu0
      %5461 = vmatprep.mubr.f32.mxu0 0.0
      %5462 = vmatmul.mubr.f32.gmra.mxu0 %v5227
      %v5463 = vpop.f32.mrf.mxu0
      %v5464 = vadd.f32 0.0, %v5463
      %v5465 = vpop.f32.mrf.mxu0
      %5466 = vmatprep.mubr.f32.mxu0 0.0
      %5467 = vmatmul.mubr.f32.gmra.mxu0 %v5230
      %v5468 = vpop.f32.mrf.mxu0
      %v5469 = vadd.f32 0.0, %v5468
      %v5470 = vpop.f32.mrf.mxu0
      %5471 = vmatprep.mubr.f32.mxu0 0.0
      %5472 = vmatmul.mubr.f32.gmra.mxu0 %v5233
      %v5473 = vpop.f32.mrf.mxu0
      %v5474 = vadd.f32 0.0, %v5473
      %v5475 = vpop.f32.mrf.mxu0
      %5476 = vmatprep.mubr.f32.mxu0 0.0
      %5477 = vmatmul.mubr.f32.gmra.mxu0 %v5236
      %v5478 = vpop.f32.mrf.mxu0
      %v5479 = vadd.f32 0.0, %v5478
      %v5480 = vpop.f32.mrf.mxu0
      %5481 = vmatprep.mubr.f32.mxu0 0.0
      %5482 = vmatmul.mubr.f32.gmra.mxu0 %v5239
      %v5483 = vpop.f32.mrf.mxu0
      %v5484 = vadd.f32 0.0, %v5483
      %v5485 = vpop.f32.mrf.mxu0
      %5486 = vmatprep.mubr.f32.mxu0 0.0
      %5487 = vmatmul.mubr.f32.gmra.mxu0 %v5242
      %v5488 = vpop.f32.mrf.mxu0
      %v5489 = vadd.f32 0.0, %v5488
      %v5490 = vpop.f32.mrf.mxu0
      %5491 = vmatprep.mubr.f32.mxu0 0.0
      %5492 = vmatmul.mubr.f32.gmra.mxu0 %v5245
      %v5493 = vpop.f32.mrf.mxu0
      %v5494 = vadd.f32 0.0, %v5493
      %v5495 = vpop.f32.mrf.mxu0
      %5496 = vmatprep.mubr.f32.mxu0 0.0
      %5497 = vmatmul.mubr.f32.gmra.mxu0 %v5248
      %v5498 = vpop.f32.mrf.mxu0
      %v5499 = vadd.f32 0.0, %v5498
      %v5500 = vpop.f32.mrf.mxu0
      %5501 = vmatprep.mubr.f32.mxu0 0.0
      %5502 = vmatmul.mubr.f32.gmra.mxu0 %v5251
      %v5503 = vpop.f32.mrf.mxu0
      %v5504 = vadd.f32 0.0, %v5503
      %v5505 = vpop.f32.mrf.mxu0
      %5506 = vmatprep.mubr.f32.mxu0 0.0
      %5507 = vmatmul.mubr.f32.gmra.mxu0 %v5254
      %v5508 = vpop.f32.mrf.mxu0
      %v5509 = vadd.f32 0.0, %v5508
      %v5510 = vpop.f32.mrf.mxu0
      %5511 = vmatprep.mubr.f32.mxu0 0.0
      %5512 = vmatmul.mubr.f32.gmra.mxu0 %v5257
      %v5513 = vpop.f32.mrf.mxu0
      %v5514 = vadd.f32 0.0, %v5513
      %v5515 = vpop.f32.mrf.mxu0
      %5516 = vmatprep.mubr.f32.mxu0 0.0
      %5517 = vmatmul.mubr.f32.gmra.mxu0 %v5260
      %v5518 = vpop.f32.mrf.mxu0
      %v5519 = vadd.f32 0.0, %v5518
      %v5520 = vpop.f32.mrf.mxu0
      %5521 = vmatprep.mubr.f32.mxu0 0.0
      %5522 = vmatmul.mubr.f32.gmra.mxu0 %v5263
      %v5523 = vpop.f32.mrf.mxu0
      %v5524 = vadd.f32 0.0, %v5523
      %v5525 = vpop.f32.mrf.mxu0
      %5526 = vmatprep.mubr.f32.mxu0 0.0
      %5527 = vmatmul.mubr.f32.gmra.mxu0 %v5266
      %v5528 = vpop.f32.mrf.mxu0
      %v5529 = vadd.f32 0.0, %v5528
      %v5530 = vpop.f32.mrf.mxu0
      %5531 = vmatprep.mubr.f32.mxu0 0.0
      %5532 = vmatmul.mubr.f32.gmra.mxu0 %v5269
      %v5533 = vpop.f32.mrf.mxu0
      %v5534 = vadd.f32 0.0, %v5533
      %v5535 = vpop.f32.mrf.mxu0
      %5536 = vmatprep.mubr.f32.mxu0 0.0
      %5537 = vmatmul.mubr.f32.gmra.mxu0 %v5272
      %v5538 = vpop.f32.mrf.mxu0
      %v5539 = vadd.f32 0.0, %v5538
      %v5540 = vpop.f32.mrf.mxu0
      %5541 = vmatprep.mubr.f32.mxu0 0.0
      %5542 = vmatmul.mubr.f32.gmra.mxu0 %v5275
      %v5543 = vpop.f32.mrf.mxu0
      %v5544 = vadd.f32 0.0, %v5543
      %v5545 = vpop.f32.mrf.mxu0
      %5546 = vdwg.mxu0
      %v5548 = vsel %vm5018, %v5068, 0
      %v5551 = vsel %vm5018, %v5069, 0
      %v5554 = vsel %vm5018, %v5070, 0
      %v5557 = vsel %vm5018, %v5071, 0
      %v5560 = vsel %vm5018, %v5072, 0
      %v5563 = vsel %vm5018, %v5073, 0
      %v5566 = vsel %vm5018, %v5074, 0
      %v5569 = vsel %vm5018, %v5075, 0
      %v5572 = vsel %vm5018, %v5076, 0
      %v5575 = vsel %vm5018, %v5077, 0
      %v5578 = vsel %vm5018, %v5078, 0
      %v5581 = vsel %vm5018, %v5079, 0
      %v5584 = vsel %vm5018, %v5080, 0
      %v5587 = vsel %vm5018, %v5081, 0
      %v5590 = vsel %vm5018, %v5082, 0
      %v5593 = vsel %vm5018, %v5083, 0
      %v5596 = vsel %vm5018, %v5084, 0
      %v5599 = vsel %vm5018, %v5085, 0
      %v5602 = vsel %vm5018, %v5086, 0
      %v5605 = vsel %vm5018, %v5087, 0
      %v5608 = vsel %vm5018, %v5088, 0
      %v5611 = vsel %vm5018, %v5089, 0
      %v5614 = vsel %vm5018, %v5090, 0
      %v5617 = vsel %vm5018, %v5091, 0
      %v5620 = vsel %vm5018, %v5092, 0
      %v5623 = vsel %vm5018, %v5093, 0
      %v5626 = vsel %vm5018, %v5094, 0
      %v5629 = vsel %vm5018, %v5095, 0
      %v5632 = vsel %vm5018, %v5096, 0
      %v5635 = vsel %vm5018, %v5097, 0
      %v5638 = vsel %vm5018, %v5098, 0
      %v5641 = vsel %vm5018, %v5099, 0
      %v5644 = vsel %vm5018, %v5100, 0
      %v5647 = vsel %vm5018, %v5101, 0
      %v5650 = vsel %vm5018, %v5102, 0
      %v5653 = vsel %vm5018, %v5103, 0
      %v5656 = vsel %vm5018, %v5104, 0
      %v5659 = vsel %vm5018, %v5105, 0
      %v5662 = vsel %vm5018, %v5106, 0
      %v5665 = vsel %vm5018, %v5107, 0
      %v5668 = vsel %vm5018, %v5108, 0
      %5670 = vmatprep.subr.mxu0 0.0
      %5671 = vmatpush1.msra.mxu0 0.0
      %5672 = vmatprep.subr.mxu0 0.0
      %5673 = vmatpush1.msra.mxu0 0.0
      %5674 = vmatprep.subr.mxu0 0.0
      %5675 = vmatpush1.msra.mxu0 0.0
      %5676 = vmatprep.subr.mxu0 0.0
      %5677 = vmatpush1.msra.mxu0 0.0
      %5678 = vmatprep.subr.mxu0 0.0
      %5679 = vmatpush1.msra.mxu0 0.0
      %5680 = vmatprep.subr.mxu0 0.0
      %5681 = vmatpush1.msra.mxu0 0.0
      %5682 = vmatprep.subr.mxu0 0.0
      %5683 = vmatpush1.msra.mxu0 0.0
      %5684 = vmatprep.subr.mxu0 0.0
      %5685 = vmatpush1.msra.mxu0 0.0
      %5686 = vmatprep.subr.mxu0 0.0
      %5687 = vmatpush1.msra.mxu0 0.0
      %5688 = vmatprep.subr.mxu0 0.0
      %5689 = vmatpush1.msra.mxu0 0.0
      %5690 = vmatprep.subr.mxu0 0.0
      %5691 = vmatpush1.msra.mxu0 0.0
      %5692 = vmatprep.subr.mxu0 0.0
      %5693 = vmatpush1.msra.mxu0 0.0
      %5694 = vmatprep.subr.mxu0 0.0
      %5695 = vmatpush1.msra.mxu0 0.0
      %5696 = vmatprep.subr.mxu0 0.0
      %5697 = vmatpush1.msra.mxu0 0.0
      %5698 = vmatprep.subr.mxu0 0.0
      %5699 = vmatpush1.msra.mxu0 %v5110
      %5700 = vmatprep.subr.mxu0 0.0
      %5701 = vmatpush1.msra.mxu0 %v5109
      %5702 = vmatprep.subr.mxu0 0.0
      %5703 = vmatpush2.msra.mxu0 0.0
      %5704 = vmatprep.subr.mxu0 0.0
      %5705 = vmatpush2.msra.mxu0 0.0
      %5706 = vmatprep.subr.mxu0 0.0
      %5707 = vmatpush2.msra.mxu0 0.0
      %5708 = vmatprep.subr.mxu0 0.0
      %5709 = vmatpush2.msra.mxu0 0.0
      %5710 = vmatprep.subr.mxu0 0.0
      %5711 = vmatpush2.msra.mxu0 0.0
      %5712 = vmatprep.subr.mxu0 0.0
      %5713 = vmatpush2.msra.mxu0 0.0
      %5714 = vmatprep.subr.mxu0 0.0
      %5715 = vmatpush2.msra.mxu0 0.0
      %5716 = vmatprep.subr.mxu0 0.0
      %5717 = vmatpush2.msra.mxu0 0.0
      %5718 = vmatprep.subr.mxu0 0.0
      %5719 = vmatpush2.msra.mxu0 0.0
      %5720 = vmatprep.subr.mxu0 0.0
      %5721 = vmatpush2.msra.mxu0 0.0
      %5722 = vmatprep.subr.mxu0 0.0
      %5723 = vmatpush2.msra.mxu0 0.0
      %5724 = vmatprep.subr.mxu0 0.0
      %5725 = vmatpush2.msra.mxu0 0.0
      %5726 = vmatprep.subr.mxu0 0.0
      %5727 = vmatpush2.msra.mxu0 0.0
      %5728 = vmatprep.subr.mxu0 0.0
      %5729 = vmatpush2.msra.mxu0 0.0
      %5730 = vmatprep.subr.mxu0 0.0
      %5731 = vmatpush2.msra.mxu0 0.0
      %5732 = vmatprep.subr.mxu0 0.0
      %5733 = vmatpush2.msra.mxu0 0.0
      %5734 = vmatprep.mubr.f32.mxu0 0.0
      %5735 = vmatmul.mubr.f32.gmra.mxu0 %v5548
      %v5736 = vpop.f32.mrf.mxu0
      %v5737 = vadd.f32 %v5344, %v5736
      %v5738 = vpop.f32.mrf.mxu0
      %5739 = vmatprep.mubr.f32.mxu0 0.0
      %5740 = vmatmul.mubr.f32.gmra.mxu0 %v5551
      %v5741 = vpop.f32.mrf.mxu0
      %v5742 = vadd.f32 %v5349, %v5741
      %v5743 = vpop.f32.mrf.mxu0
      %5744 = vmatprep.mubr.f32.mxu0 0.0
      %5745 = vmatmul.mubr.f32.gmra.mxu0 %v5554
      %v5746 = vpop.f32.mrf.mxu0
      %v5747 = vadd.f32 %v5354, %v5746
      %v5748 = vpop.f32.mrf.mxu0
      %5749 = vmatprep.mubr.f32.mxu0 0.0
      %5750 = vmatmul.mubr.f32.gmra.mxu0 %v5557
      %v5751 = vpop.f32.mrf.mxu0
      %v5752 = vadd.f32 %v5359, %v5751
      %v5753 = vpop.f32.mrf.mxu0
      %5754 = vmatprep.mubr.f32.mxu0 0.0
      %5755 = vmatmul.mubr.f32.gmra.mxu0 %v5560
      %v5756 = vpop.f32.mrf.mxu0
      %v5757 = vadd.f32 %v5364, %v5756
      %v5758 = vpop.f32.mrf.mxu0
      %5759 = vmatprep.mubr.f32.mxu0 0.0
      %5760 = vmatmul.mubr.f32.gmra.mxu0 %v5563
      %v5761 = vpop.f32.mrf.mxu0
      %v5762 = vadd.f32 %v5369, %v5761
      %v5763 = vpop.f32.mrf.mxu0
      %5764 = vmatprep.mubr.f32.mxu0 0.0
      %5765 = vmatmul.mubr.f32.gmra.mxu0 %v5566
      %v5766 = vpop.f32.mrf.mxu0
      %v5767 = vadd.f32 %v5374, %v5766
      %v5768 = vpop.f32.mrf.mxu0
      %5769 = vmatprep.mubr.f32.mxu0 0.0
      %5770 = vmatmul.mubr.f32.gmra.mxu0 %v5569
      %v5771 = vpop.f32.mrf.mxu0
      %v5772 = vadd.f32 %v5379, %v5771
      %v5773 = vpop.f32.mrf.mxu0
      %5774 = vmatprep.mubr.f32.mxu0 0.0
      %5775 = vmatmul.mubr.f32.gmra.mxu0 %v5572
      %v5776 = vpop.f32.mrf.mxu0
      %v5777 = vadd.f32 %v5384, %v5776
      %v5778 = vpop.f32.mrf.mxu0
      %5779 = vmatprep.mubr.f32.mxu0 0.0
      %5780 = vmatmul.mubr.f32.gmra.mxu0 %v5575
      %v5781 = vpop.f32.mrf.mxu0
      %v5782 = vadd.f32 %v5389, %v5781
      %v5783 = vpop.f32.mrf.mxu0
      %5784 = vmatprep.mubr.f32.mxu0 0.0
      %5785 = vmatmul.mubr.f32.gmra.mxu0 %v5578
      %v5786 = vpop.f32.mrf.mxu0
      %v5787 = vadd.f32 %v5394, %v5786
      %v5788 = vpop.f32.mrf.mxu0
      %5789 = vmatprep.mubr.f32.mxu0 0.0
      %5790 = vmatmul.mubr.f32.gmra.mxu0 %v5581
      %v5791 = vpop.f32.mrf.mxu0
      %v5792 = vadd.f32 %v5399, %v5791
      %v5793 = vpop.f32.mrf.mxu0
      %5794 = vmatprep.mubr.f32.mxu0 0.0
      %5795 = vmatmul.mubr.f32.gmra.mxu0 %v5584
      %v5796 = vpop.f32.mrf.mxu0
      %v5797 = vadd.f32 %v5404, %v5796
      %v5798 = vpop.f32.mrf.mxu0
      %5799 = vmatprep.mubr.f32.mxu0 0.0
      %5800 = vmatmul.mubr.f32.gmra.mxu0 %v5587
      %v5801 = vpop.f32.mrf.mxu0
      %v5802 = vadd.f32 %v5409, %v5801
      %v5803 = vpop.f32.mrf.mxu0
      %5804 = vmatprep.mubr.f32.mxu0 0.0
      %5805 = vmatmul.mubr.f32.gmra.mxu0 %v5590
      %v5806 = vpop.f32.mrf.mxu0
      %v5807 = vadd.f32 %v5414, %v5806
      %v5808 = vpop.f32.mrf.mxu0
      %5809 = vmatprep.mubr.f32.mxu0 0.0
      %5810 = vmatmul.mubr.f32.gmra.mxu0 %v5593
      %v5811 = vpop.f32.mrf.mxu0
      %v5812 = vadd.f32 %v5419, %v5811
      %v5813 = vpop.f32.mrf.mxu0
      %5814 = vmatprep.mubr.f32.mxu0 0.0
      %5815 = vmatmul.mubr.f32.gmra.mxu0 %v5596
      %v5816 = vpop.f32.mrf.mxu0
      %v5817 = vadd.f32 %v5424, %v5816
      %v5818 = vpop.f32.mrf.mxu0
      %5819 = vmatprep.mubr.f32.mxu0 0.0
      %5820 = vmatmul.mubr.f32.gmra.mxu0 %v5599
      %v5821 = vpop.f32.mrf.mxu0
      %v5822 = vadd.f32 %v5429, %v5821
      %v5823 = vpop.f32.mrf.mxu0
      %5824 = vmatprep.mubr.f32.mxu0 0.0
      %5825 = vmatmul.mubr.f32.gmra.mxu0 %v5602
      %v5826 = vpop.f32.mrf.mxu0
      %v5827 = vadd.f32 %v5434, %v5826
      %v5828 = vpop.f32.mrf.mxu0
      %5829 = vmatprep.mubr.f32.mxu0 0.0
      %5830 = vmatmul.mubr.f32.gmra.mxu0 %v5605
      %v5831 = vpop.f32.mrf.mxu0
      %v5832 = vadd.f32 %v5439, %v5831
      %v5833 = vpop.f32.mrf.mxu0
      %5834 = vmatprep.mubr.f32.mxu0 0.0
      %5835 = vmatmul.mubr.f32.gmra.mxu0 %v5608
      %v5836 = vpop.f32.mrf.mxu0
      %v5837 = vadd.f32 %v5444, %v5836
      %v5838 = vpop.f32.mrf.mxu0
      %5839 = vmatprep.mubr.f32.mxu0 0.0
      %5840 = vmatmul.mubr.f32.gmra.mxu0 %v5611
      %v5841 = vpop.f32.mrf.mxu0
      %v5842 = vadd.f32 %v5449, %v5841
      %v5843 = vpop.f32.mrf.mxu0
      %5844 = vmatprep.mubr.f32.mxu0 0.0
      %5845 = vmatmul.mubr.f32.gmra.mxu0 %v5614
      %v5846 = vpop.f32.mrf.mxu0
      %v5847 = vadd.f32 %v5454, %v5846
      %v5848 = vpop.f32.mrf.mxu0
      %5849 = vmatprep.mubr.f32.mxu0 0.0
      %5850 = vmatmul.mubr.f32.gmra.mxu0 %v5617
      %v5851 = vpop.f32.mrf.mxu0
      %v5852 = vadd.f32 %v5459, %v5851
      %v5853 = vpop.f32.mrf.mxu0
      %5854 = vmatprep.mubr.f32.mxu0 0.0
      %5855 = vmatmul.mubr.f32.gmra.mxu0 %v5620
      %v5856 = vpop.f32.mrf.mxu0
      %v5857 = vadd.f32 %v5464, %v5856
      %v5858 = vpop.f32.mrf.mxu0
      %5859 = vmatprep.mubr.f32.mxu0 0.0
      %5860 = vmatmul.mubr.f32.gmra.mxu0 %v5623
      %v5861 = vpop.f32.mrf.mxu0
      %v5862 = vadd.f32 %v5469, %v5861
      %v5863 = vpop.f32.mrf.mxu0
      %5864 = vmatprep.mubr.f32.mxu0 0.0
      %5865 = vmatmul.mubr.f32.gmra.mxu0 %v5626
      %v5866 = vpop.f32.mrf.mxu0
      %v5867 = vadd.f32 %v5474, %v5866
      %v5868 = vpop.f32.mrf.mxu0
      %5869 = vmatprep.mubr.f32.mxu0 0.0
      %5870 = vmatmul.mubr.f32.gmra.mxu0 %v5629
      %v5871 = vpop.f32.mrf.mxu0
      %v5872 = vadd.f32 %v5479, %v5871
      %v5873 = vpop.f32.mrf.mxu0
      %5874 = vmatprep.mubr.f32.mxu0 0.0
      %5875 = vmatmul.mubr.f32.gmra.mxu0 %v5632
      %v5876 = vpop.f32.mrf.mxu0
      %v5877 = vadd.f32 %v5484, %v5876
      %v5878 = vpop.f32.mrf.mxu0
      %5879 = vmatprep.mubr.f32.mxu0 0.0
      %5880 = vmatmul.mubr.f32.gmra.mxu0 %v5635
      %v5881 = vpop.f32.mrf.mxu0
      %v5882 = vadd.f32 %v5489, %v5881
      %v5883 = vpop.f32.mrf.mxu0
      %5884 = vmatprep.mubr.f32.mxu0 0.0
      %5885 = vmatmul.mubr.f32.gmra.mxu0 %v5638
      %v5886 = vpop.f32.mrf.mxu0
      %v5887 = vadd.f32 %v5494, %v5886
      %v5888 = vpop.f32.mrf.mxu0
      %5889 = vmatprep.mubr.f32.mxu0 0.0
      %5890 = vmatmul.mubr.f32.gmra.mxu0 %v5641
      %v5891 = vpop.f32.mrf.mxu0
      %v5892 = vadd.f32 %v5499, %v5891
      %v5893 = vpop.f32.mrf.mxu0
      %5894 = vmatprep.mubr.f32.mxu0 0.0
      %5895 = vmatmul.mubr.f32.gmra.mxu0 %v5644
      %v5896 = vpop.f32.mrf.mxu0
      %v5897 = vadd.f32 %v5504, %v5896
      %v5898 = vpop.f32.mrf.mxu0
      %5899 = vmatprep.mubr.f32.mxu0 0.0
      %5900 = vmatmul.mubr.f32.gmra.mxu0 %v5647
      %v5901 = vpop.f32.mrf.mxu0
      %v5902 = vadd.f32 %v5509, %v5901
      %v5903 = vpop.f32.mrf.mxu0
      %5904 = vmatprep.mubr.f32.mxu0 0.0
      %5905 = vmatmul.mubr.f32.gmra.mxu0 %v5650
      %v5906 = vpop.f32.mrf.mxu0
      %v5907 = vadd.f32 %v5514, %v5906
      %v5908 = vpop.f32.mrf.mxu0
      %5909 = vmatprep.mubr.f32.mxu0 0.0
      %5910 = vmatmul.mubr.f32.gmra.mxu0 %v5653
      %v5911 = vpop.f32.mrf.mxu0
      %v5912 = vadd.f32 %v5519, %v5911
      %v5913 = vpop.f32.mrf.mxu0
      %5914 = vmatprep.mubr.f32.mxu0 0.0
      %5915 = vmatmul.mubr.f32.gmra.mxu0 %v5656
      %v5916 = vpop.f32.mrf.mxu0
      %v5917 = vadd.f32 %v5524, %v5916
      %v5918 = vpop.f32.mrf.mxu0
      %5919 = vmatprep.mubr.f32.mxu0 0.0
      %5920 = vmatmul.mubr.f32.gmra.mxu0 %v5659
      %v5921 = vpop.f32.mrf.mxu0
      %v5922 = vadd.f32 %v5529, %v5921
      %v5923 = vpop.f32.mrf.mxu0
      %5924 = vmatprep.mubr.f32.mxu0 0.0
      %5925 = vmatmul.mubr.f32.gmra.mxu0 %v5662
      %v5926 = vpop.f32.mrf.mxu0
      %v5927 = vadd.f32 %v5534, %v5926
      %v5928 = vpop.f32.mrf.mxu0
      %5929 = vmatprep.mubr.f32.mxu0 0.0
      %5930 = vmatmul.mubr.f32.gmra.mxu0 %v5665
      %v5931 = vpop.f32.mrf.mxu0
      %v5932 = vadd.f32 %v5539, %v5931
      %v5933 = vpop.f32.mrf.mxu0
      %5934 = vmatprep.mubr.f32.mxu0 0.0
      %5935 = vmatmul.mubr.f32.gmra.mxu0 %v5668
      %v5936 = vpop.f32.mrf.mxu0
      %v5937 = vadd.f32 %v5544, %v5936
      %v5938 = vpop.f32.mrf.mxu0
      %5939 = vdwg.mxu0
      %v5940 = vld [vmem:[#allocation2 + $0x7] sm:$0xff]
      %v5941 = vld [vmem:[#allocation2 + $0xf] sm:$0xff]
      %v5942 = vld [vmem:[#allocation2 + $0x17] sm:$0xff]
      %v5943 = vld [vmem:[#allocation2 + $0x1f] sm:$0xff]
      %v5944 = vld [vmem:[#allocation2 + $0x27] sm:$0xff]
      %v5945 = vld [vmem:[#allocation2 + $0x2f] sm:$0xff]
      %v5946 = vld [vmem:[#allocation2 + $0x37] sm:$0xff]
      %v5947 = vld [vmem:[#allocation2 + $0x3f] sm:$0xff]
      %v5948 = vld [vmem:[#allocation2 + $0x47] sm:$0xff]
      %v5949 = vld [vmem:[#allocation2 + $0x4f] sm:$0xff]
      %v5950 = vld [vmem:[#allocation2 + $0x57] sm:$0xff]
      %v5951 = vld [vmem:[#allocation2 + $0x5f] sm:$0xff]
      %v5952 = vld [vmem:[#allocation2 + $0x67] sm:$0xff]
      %v5953 = vld [vmem:[#allocation2 + $0x6f] sm:$0xff]
      %v5954 = vld [vmem:[#allocation2 + $0x77] sm:$0xff]
      %v5955 = vld [vmem:[#allocation2 + $0x7f] sm:$0xff]
      %v5956 = vld [vmem:[#allocation2 + $0x87] sm:$0xff]
      %v5957 = vld [vmem:[#allocation2 + $0x8f] sm:$0xff]
      %v5958 = vld [vmem:[#allocation2 + $0x97] sm:$0xff]
      %v5959 = vld [vmem:[#allocation2 + $0x9f] sm:$0xff]
      %v5960 = vld [vmem:[#allocation2 + $0xa7] sm:$0xff]
      %v5961 = vld [vmem:[#allocation2 + $0xaf] sm:$0xff]
      %v5962 = vld [vmem:[#allocation2 + $0xb7] sm:$0xff]
      %v5963 = vld [vmem:[#allocation2 + $0xbf] sm:$0xff]
      %v5964 = vld [vmem:[#allocation2 + $0xc7] sm:$0xff]
      %v5965 = vld [vmem:[#allocation2 + $0xcf] sm:$0xff]
      %v5966 = vld [vmem:[#allocation2 + $0xd7] sm:$0xff]
      %v5967 = vld [vmem:[#allocation2 + $0xdf] sm:$0xff]
      %v5968 = vld [vmem:[#allocation2 + $0xe7] sm:$0xff]
      %v5969 = vld [vmem:[#allocation2 + $0xef] sm:$0xff]
      %v5970 = vld [vmem:[#allocation2 + $0xf7] sm:$0xff]
      %v5971 = vld [vmem:[#allocation2 + $0xff] sm:$0xff]
      %v5972 = vld [vmem:[#allocation2 + $0x107] sm:$0xff]
      %v5973 = vld [vmem:[#allocation2 + $0x10f] sm:$0xff]
      %v5974 = vld [vmem:[#allocation2 + $0x117] sm:$0xff]
      %v5975 = vld [vmem:[#allocation2 + $0x11f] sm:$0xff]
      %v5976 = vld [vmem:[#allocation2 + $0x127] sm:$0xff]
      %v5977 = vld [vmem:[#allocation2 + $0x12f] sm:$0xff]
      %v5978 = vld [vmem:[#allocation2 + $0x137] sm:$0xff]
      %v5979 = vld [vmem:[#allocation2 + $0x13f] sm:$0xff]
      %v5980 = vld [vmem:[#allocation2 + $0x147] sm:$0xf]
      %v5981 = vld [vmem:[%s3 + $0x20] sm:$0xff]
      %v5982 = vld [vmem:[%s3 + $0x28] sm:$0xff]
      %v5984 = vsel %vm5018, %v5940, 0
      %v5987 = vsel %vm5018, %v5941, 0
      %v5990 = vsel %vm5018, %v5942, 0
      %v5993 = vsel %vm5018, %v5943, 0
      %v5996 = vsel %vm5018, %v5944, 0
      %v5999 = vsel %vm5018, %v5945, 0
      %v6002 = vsel %vm5018, %v5946, 0
      %v6005 = vsel %vm5018, %v5947, 0
      %v6008 = vsel %vm5018, %v5948, 0
      %v6011 = vsel %vm5018, %v5949, 0
      %v6014 = vsel %vm5018, %v5950, 0
      %v6017 = vsel %vm5018, %v5951, 0
      %v6020 = vsel %vm5018, %v5952, 0
      %v6023 = vsel %vm5018, %v5953, 0
      %v6026 = vsel %vm5018, %v5954, 0
      %v6029 = vsel %vm5018, %v5955, 0
      %v6032 = vsel %vm5018, %v5956, 0
      %v6035 = vsel %vm5018, %v5957, 0
      %v6038 = vsel %vm5018, %v5958, 0
      %v6041 = vsel %vm5018, %v5959, 0
      %v6044 = vsel %vm5018, %v5960, 0
      %v6047 = vsel %vm5018, %v5961, 0
      %v6050 = vsel %vm5018, %v5962, 0
      %v6053 = vsel %vm5018, %v5963, 0
      %v6056 = vsel %vm5018, %v5964, 0
      %v6059 = vsel %vm5018, %v5965, 0
      %v6062 = vsel %vm5018, %v5966, 0
      %v6065 = vsel %vm5018, %v5967, 0
      %v6068 = vsel %vm5018, %v5968, 0
      %v6071 = vsel %vm5018, %v5969, 0
      %v6074 = vsel %vm5018, %v5970, 0
      %v6077 = vsel %vm5018, %v5971, 0
      %v6080 = vsel %vm5018, %v5972, 0
      %v6083 = vsel %vm5018, %v5973, 0
      %v6086 = vsel %vm5018, %v5974, 0
      %v6089 = vsel %vm5018, %v5975, 0
      %v6092 = vsel %vm5018, %v5976, 0
      %v6095 = vsel %vm5018, %v5977, 0
      %v6098 = vsel %vm5018, %v5978, 0
      %v6101 = vsel %vm5018, %v5979, 0
      %v6104 = vsel %vm5018, %v5980, 0
      %6106 = vmatprep.subr.mxu0 0.0
      %6107 = vmatpush1.msra.mxu0 0.0
      %6108 = vmatprep.subr.mxu0 0.0
      %6109 = vmatpush1.msra.mxu0 0.0
      %6110 = vmatprep.subr.mxu0 0.0
      %6111 = vmatpush1.msra.mxu0 0.0
      %6112 = vmatprep.subr.mxu0 0.0
      %6113 = vmatpush1.msra.mxu0 0.0
      %6114 = vmatprep.subr.mxu0 0.0
      %6115 = vmatpush1.msra.mxu0 0.0
      %6116 = vmatprep.subr.mxu0 0.0
      %6117 = vmatpush1.msra.mxu0 0.0
      %6118 = vmatprep.subr.mxu0 0.0
      %6119 = vmatpush1.msra.mxu0 0.0
      %6120 = vmatprep.subr.mxu0 0.0
      %6121 = vmatpush1.msra.mxu0 0.0
      %6122 = vmatprep.subr.mxu0 0.0
      %6123 = vmatpush1.msra.mxu0 0.0
      %6124 = vmatprep.subr.mxu0 0.0
      %6125 = vmatpush1.msra.mxu0 0.0
      %6126 = vmatprep.subr.mxu0 0.0
      %6127 = vmatpush1.msra.mxu0 0.0
      %6128 = vmatprep.subr.mxu0 0.0
      %6129 = vmatpush1.msra.mxu0 0.0
      %6130 = vmatprep.subr.mxu0 0.0
      %6131 = vmatpush1.msra.mxu0 0.0
      %6132 = vmatprep.subr.mxu0 0.0
      %6133 = vmatpush1.msra.mxu0 0.0
      %6134 = vmatprep.subr.mxu0 0.0
      %6135 = vmatpush1.msra.mxu0 %v5982
      %6136 = vmatprep.subr.mxu0 0.0
      %6137 = vmatpush1.msra.mxu0 %v5981
      %6138 = vmatprep.subr.mxu0 0.0
      %6139 = vmatpush2.msra.mxu0 0.0
      %6140 = vmatprep.subr.mxu0 0.0
      %6141 = vmatpush2.msra.mxu0 0.0
      %6142 = vmatprep.subr.mxu0 0.0
      %6143 = vmatpush2.msra.mxu0 0.0
      %6144 = vmatprep.subr.mxu0 0.0
      %6145 = vmatpush2.msra.mxu0 0.0
      %6146 = vmatprep.subr.mxu0 0.0
      %6147 = vmatpush2.msra.mxu0 0.0
      %6148 = vmatprep.subr.mxu0 0.0
      %6149 = vmatpush2.msra.mxu0 0.0
      %6150 = vmatprep.subr.mxu0 0.0
      %6151 = vmatpush2.msra.mxu0 0.0
      %6152 = vmatprep.subr.mxu0 0.0
      %6153 = vmatpush2.msra.mxu0 0.0
      %6154 = vmatprep.subr.mxu0 0.0
      %6155 = vmatpush2.msra.mxu0 0.0
      %6156 = vmatprep.subr.mxu0 0.0
      %6157 = vmatpush2.msra.mxu0 0.0
      %6158 = vmatprep.subr.mxu0 0.0
      %6159 = vmatpush2.msra.mxu0 0.0
      %6160 = vmatprep.subr.mxu0 0.0
      %6161 = vmatpush2.msra.mxu0 0.0
      %6162 = vmatprep.subr.mxu0 0.0
      %6163 = vmatpush2.msra.mxu0 0.0
      %6164 = vmatprep.subr.mxu0 0.0
      %6165 = vmatpush2.msra.mxu0 0.0
      %6166 = vmatprep.subr.mxu0 0.0
      %6167 = vmatpush2.msra.mxu0 0.0
      %6168 = vmatprep.subr.mxu0 0.0
      %6169 = vmatpush2.msra.mxu0 0.0
      %6170 = vmatprep.mubr.f32.mxu0 0.0
      %6171 = vmatmul.mubr.f32.gmra.mxu0 %v5984
      %v6172 = vpop.f32.mrf.mxu0
      %v6173 = vadd.f32 0.0, %v6172
      %v6174 = vpop.f32.mrf.mxu0
      %6175 = vmatprep.mubr.f32.mxu0 0.0
      %6176 = vmatmul.mubr.f32.gmra.mxu0 %v5987
      %v6177 = vpop.f32.mrf.mxu0
      %v6178 = vadd.f32 0.0, %v6177
      %v6179 = vpop.f32.mrf.mxu0
      %6180 = vmatprep.mubr.f32.mxu0 0.0
      %6181 = vmatmul.mubr.f32.gmra.mxu0 %v5990
      %v6182 = vpop.f32.mrf.mxu0
      %v6183 = vadd.f32 0.0, %v6182
      %v6184 = vpop.f32.mrf.mxu0
      %6185 = vmatprep.mubr.f32.mxu0 0.0
      %6186 = vmatmul.mubr.f32.gmra.mxu0 %v5993
      %v6187 = vpop.f32.mrf.mxu0
      %v6188 = vadd.f32 0.0, %v6187
      %v6189 = vpop.f32.mrf.mxu0
      %6190 = vmatprep.mubr.f32.mxu0 0.0
      %6191 = vmatmul.mubr.f32.gmra.mxu0 %v5996
      %v6192 = vpop.f32.mrf.mxu0
      %v6193 = vadd.f32 0.0, %v6192
      %v6194 = vpop.f32.mrf.mxu0
      %6195 = vmatprep.mubr.f32.mxu0 0.0
      %6196 = vmatmul.mubr.f32.gmra.mxu0 %v5999
      %v6197 = vpop.f32.mrf.mxu0
      %v6198 = vadd.f32 0.0, %v6197
      %v6199 = vpop.f32.mrf.mxu0
      %6200 = vmatprep.mubr.f32.mxu0 0.0
      %6201 = vmatmul.mubr.f32.gmra.mxu0 %v6002
      %v6202 = vpop.f32.mrf.mxu0
      %v6203 = vadd.f32 0.0, %v6202
      %v6204 = vpop.f32.mrf.mxu0
      %6205 = vmatprep.mubr.f32.mxu0 0.0
      %6206 = vmatmul.mubr.f32.gmra.mxu0 %v6005
      %v6207 = vpop.f32.mrf.mxu0
      %v6208 = vadd.f32 0.0, %v6207
      %v6209 = vpop.f32.mrf.mxu0
      %6210 = vmatprep.mubr.f32.mxu0 0.0
      %6211 = vmatmul.mubr.f32.gmra.mxu0 %v6008
      %v6212 = vpop.f32.mrf.mxu0
      %v6213 = vadd.f32 0.0, %v6212
      %v6214 = vpop.f32.mrf.mxu0
      %6215 = vmatprep.mubr.f32.mxu0 0.0
      %6216 = vmatmul.mubr.f32.gmra.mxu0 %v6011
      %v6217 = vpop.f32.mrf.mxu0
      %v6218 = vadd.f32 0.0, %v6217
      %v6219 = vpop.f32.mrf.mxu0
      %6220 = vmatprep.mubr.f32.mxu0 0.0
      %6221 = vmatmul.mubr.f32.gmra.mxu0 %v6014
      %v6222 = vpop.f32.mrf.mxu0
      %v6223 = vadd.f32 0.0, %v6222
      %v6224 = vpop.f32.mrf.mxu0
      %6225 = vmatprep.mubr.f32.mxu0 0.0
      %6226 = vmatmul.mubr.f32.gmra.mxu0 %v6017
      %v6227 = vpop.f32.mrf.mxu0
      %v6228 = vadd.f32 0.0, %v6227
      %v6229 = vpop.f32.mrf.mxu0
      %6230 = vmatprep.mubr.f32.mxu0 0.0
      %6231 = vmatmul.mubr.f32.gmra.mxu0 %v6020
      %v6232 = vpop.f32.mrf.mxu0
      %v6233 = vadd.f32 0.0, %v6232
      %v6234 = vpop.f32.mrf.mxu0
      %6235 = vmatprep.mubr.f32.mxu0 0.0
      %6236 = vmatmul.mubr.f32.gmra.mxu0 %v6023
      %v6237 = vpop.f32.mrf.mxu0
      %v6238 = vadd.f32 0.0, %v6237
      %v6239 = vpop.f32.mrf.mxu0
      %6240 = vmatprep.mubr.f32.mxu0 0.0
      %6241 = vmatmul.mubr.f32.gmra.mxu0 %v6026
      %v6242 = vpop.f32.mrf.mxu0
      %v6243 = vadd.f32 0.0, %v6242
      %v6244 = vpop.f32.mrf.mxu0
      %6245 = vmatprep.mubr.f32.mxu0 0.0
      %6246 = vmatmul.mubr.f32.gmra.mxu0 %v6029
      %v6247 = vpop.f32.mrf.mxu0
      %v6248 = vadd.f32 0.0, %v6247
      %v6249 = vpop.f32.mrf.mxu0
      %6250 = vmatprep.mubr.f32.mxu0 0.0
      %6251 = vmatmul.mubr.f32.gmra.mxu0 %v6032
      %v6252 = vpop.f32.mrf.mxu0
      %v6253 = vadd.f32 0.0, %v6252
      %v6254 = vpop.f32.mrf.mxu0
      %6255 = vmatprep.mubr.f32.mxu0 0.0
      %6256 = vmatmul.mubr.f32.gmra.mxu0 %v6035
      %v6257 = vpop.f32.mrf.mxu0
      %v6258 = vadd.f32 0.0, %v6257
      %v6259 = vpop.f32.mrf.mxu0
      %6260 = vmatprep.mubr.f32.mxu0 0.0
      %6261 = vmatmul.mubr.f32.gmra.mxu0 %v6038
      %v6262 = vpop.f32.mrf.mxu0
      %v6263 = vadd.f32 0.0, %v6262
      %v6264 = vpop.f32.mrf.mxu0
      %6265 = vmatprep.mubr.f32.mxu0 0.0
      %6266 = vmatmul.mubr.f32.gmra.mxu0 %v6041
      %v6267 = vpop.f32.mrf.mxu0
      %v6268 = vadd.f32 0.0, %v6267
      %v6269 = vpop.f32.mrf.mxu0
      %6270 = vmatprep.mubr.f32.mxu0 0.0
      %6271 = vmatmul.mubr.f32.gmra.mxu0 %v6044
      %v6272 = vpop.f32.mrf.mxu0
      %v6273 = vadd.f32 0.0, %v6272
      %v6274 = vpop.f32.mrf.mxu0
      %6275 = vmatprep.mubr.f32.mxu0 0.0
      %6276 = vmatmul.mubr.f32.gmra.mxu0 %v6047
      %v6277 = vpop.f32.mrf.mxu0
      %v6278 = vadd.f32 0.0, %v6277
      %v6279 = vpop.f32.mrf.mxu0
      %6280 = vmatprep.mubr.f32.mxu0 0.0
      %6281 = vmatmul.mubr.f32.gmra.mxu0 %v6050
      %v6282 = vpop.f32.mrf.mxu0
      %v6283 = vadd.f32 0.0, %v6282
      %v6284 = vpop.f32.mrf.mxu0
      %6285 = vmatprep.mubr.f32.mxu0 0.0
      %6286 = vmatmul.mubr.f32.gmra.mxu0 %v6053
      %v6287 = vpop.f32.mrf.mxu0
      %v6288 = vadd.f32 0.0, %v6287
      %v6289 = vpop.f32.mrf.mxu0
      %6290 = vmatprep.mubr.f32.mxu0 0.0
      %6291 = vmatmul.mubr.f32.gmra.mxu0 %v6056
      %v6292 = vpop.f32.mrf.mxu0
      %v6293 = vadd.f32 0.0, %v6292
      %v6294 = vpop.f32.mrf.mxu0
      %6295 = vmatprep.mubr.f32.mxu0 0.0
      %6296 = vmatmul.mubr.f32.gmra.mxu0 %v6059
      %v6297 = vpop.f32.mrf.mxu0
      %v6298 = vadd.f32 0.0, %v6297
      %v6299 = vpop.f32.mrf.mxu0
      %6300 = vmatprep.mubr.f32.mxu0 0.0
      %6301 = vmatmul.mubr.f32.gmra.mxu0 %v6062
      %v6302 = vpop.f32.mrf.mxu0
      %v6303 = vadd.f32 0.0, %v6302
      %v6304 = vpop.f32.mrf.mxu0
      %6305 = vmatprep.mubr.f32.mxu0 0.0
      %6306 = vmatmul.mubr.f32.gmra.mxu0 %v6065
      %v6307 = vpop.f32.mrf.mxu0
      %v6308 = vadd.f32 0.0, %v6307
      %v6309 = vpop.f32.mrf.mxu0
      %6310 = vmatprep.mubr.f32.mxu0 0.0
      %6311 = vmatmul.mubr.f32.gmra.mxu0 %v6068
      %v6312 = vpop.f32.mrf.mxu0
      %v6313 = vadd.f32 0.0, %v6312
      %v6314 = vpop.f32.mrf.mxu0
      %6315 = vmatprep.mubr.f32.mxu0 0.0
      %6316 = vmatmul.mubr.f32.gmra.mxu0 %v6071
      %v6317 = vpop.f32.mrf.mxu0
      %v6318 = vadd.f32 0.0, %v6317
      %v6319 = vpop.f32.mrf.mxu0
      %6320 = vmatprep.mubr.f32.mxu0 0.0
      %6321 = vmatmul.mubr.f32.gmra.mxu0 %v6074
      %v6322 = vpop.f32.mrf.mxu0
      %v6323 = vadd.f32 0.0, %v6322
      %v6324 = vpop.f32.mrf.mxu0
      %6325 = vmatprep.mubr.f32.mxu0 0.0
      %6326 = vmatmul.mubr.f32.gmra.mxu0 %v6077
      %v6327 = vpop.f32.mrf.mxu0
      %v6328 = vadd.f32 0.0, %v6327
      %v6329 = vpop.f32.mrf.mxu0
      %6330 = vmatprep.mubr.f32.mxu0 0.0
      %6331 = vmatmul.mubr.f32.gmra.mxu0 %v6080
      %v6332 = vpop.f32.mrf.mxu0
      %v6333 = vadd.f32 0.0, %v6332
      %v6334 = vpop.f32.mrf.mxu0
      %6335 = vmatprep.mubr.f32.mxu0 0.0
      %6336 = vmatmul.mubr.f32.gmra.mxu0 %v6083
      %v6337 = vpop.f32.mrf.mxu0
      %v6338 = vadd.f32 0.0, %v6337
      %v6339 = vpop.f32.mrf.mxu0
      %6340 = vmatprep.mubr.f32.mxu0 0.0
      %6341 = vmatmul.mubr.f32.gmra.mxu0 %v6086
      %v6342 = vpop.f32.mrf.mxu0
      %v6343 = vadd.f32 0.0, %v6342
      %v6344 = vpop.f32.mrf.mxu0
      %6345 = vmatprep.mubr.f32.mxu0 0.0
      %6346 = vmatmul.mubr.f32.gmra.mxu0 %v6089
      %v6347 = vpop.f32.mrf.mxu0
      %v6348 = vadd.f32 0.0, %v6347
      %v6349 = vpop.f32.mrf.mxu0
      %6350 = vmatprep.mubr.f32.mxu0 0.0
      %6351 = vmatmul.mubr.f32.gmra.mxu0 %v6092
      %v6352 = vpop.f32.mrf.mxu0
      %v6353 = vadd.f32 0.0, %v6352
      %v6354 = vpop.f32.mrf.mxu0
      %6355 = vmatprep.mubr.f32.mxu0 0.0
      %6356 = vmatmul.mubr.f32.gmra.mxu0 %v6095
      %v6357 = vpop.f32.mrf.mxu0
      %v6358 = vadd.f32 0.0, %v6357
      %v6359 = vpop.f32.mrf.mxu0
      %6360 = vmatprep.mubr.f32.mxu0 0.0
      %6361 = vmatmul.mubr.f32.gmra.mxu0 %v6098
      %v6362 = vpop.f32.mrf.mxu0
      %v6363 = vadd.f32 0.0, %v6362
      %v6364 = vpop.f32.mrf.mxu0
      %6365 = vmatprep.mubr.f32.mxu0 0.0
      %6366 = vmatmul.mubr.f32.gmra.mxu0 %v6101
      %v6367 = vpop.f32.mrf.mxu0
      %v6368 = vadd.f32 0.0, %v6367
      %v6369 = vpop.f32.mrf.mxu0
      %6370 = vmatprep.mubr.f32.mxu0 0.0
      %6371 = vmatmul.mubr.f32.gmra.mxu0 %v6104
      %v6372 = vpop.f32.mrf.mxu0
      %v6373 = vadd.f32 0.0, %v6372
      %v6374 = vpop.f32.mrf.mxu0
      %6375 = vdwg.mxu0
      %v6376 = vadd.f32 %v5737, %v6173
      %v6377 = vadd.f32 %v5742, %v6178
      %v6378 = vadd.f32 %v5747, %v6183
      %v6379 = vadd.f32 %v5752, %v6188
      %v6380 = vadd.f32 %v5757, %v6193
      %v6381 = vadd.f32 %v5762, %v6198
      %v6382 = vadd.f32 %v5767, %v6203
      %v6383 = vadd.f32 %v5772, %v6208
      %v6384 = vadd.f32 %v5777, %v6213
      %v6385 = vadd.f32 %v5782, %v6218
      %v6386 = vadd.f32 %v5787, %v6223
      %v6387 = vadd.f32 %v5792, %v6228
      %v6388 = vadd.f32 %v5797, %v6233
      %v6389 = vadd.f32 %v5802, %v6238
      %v6390 = vadd.f32 %v5807, %v6243
      %v6391 = vadd.f32 %v5812, %v6248
      %v6392 = vadd.f32 %v5817, %v6253
      %v6393 = vadd.f32 %v5822, %v6258
      %v6394 = vadd.f32 %v5827, %v6263
      %v6395 = vadd.f32 %v5832, %v6268
      %v6396 = vadd.f32 %v5837, %v6273
      %v6397 = vadd.f32 %v5842, %v6278
      %v6398 = vadd.f32 %v5847, %v6283
      %v6399 = vadd.f32 %v5852, %v6288
      %v6400 = vadd.f32 %v5857, %v6293
      %v6401 = vadd.f32 %v5862, %v6298
      %v6402 = vadd.f32 %v5867, %v6303
      %v6403 = vadd.f32 %v5872, %v6308
      %v6404 = vadd.f32 %v5877, %v6313
      %v6405 = vadd.f32 %v5882, %v6318
      %v6406 = vadd.f32 %v5887, %v6323
      %v6407 = vadd.f32 %v5892, %v6328
      %v6408 = vadd.f32 %v5897, %v6333
      %v6409 = vadd.f32 %v5902, %v6338
      %v6410 = vadd.f32 %v5907, %v6343
      %v6411 = vadd.f32 %v5912, %v6348
      %v6412 = vadd.f32 %v5917, %v6353
      %v6413 = vadd.f32 %v5922, %v6358
      %v6414 = vadd.f32 %v5927, %v6363
      %v6415 = vadd.f32 %v5932, %v6368
      %v6416 = vadd.f32 %v5937, %v6373
      %v6417 = vld [vmem:[#allocation2 + $0x17] sm:$0xff]
      %v6418 = vld [vmem:[#allocation2 + $0x1f] sm:$0xff]
      %v6419 = vld [vmem:[#allocation2 + $0x27] sm:$0xff]
      %v6420 = vld [vmem:[#allocation2 + $0x2f] sm:$0xff]
      %v6421 = vld [vmem:[#allocation2 + $0x37] sm:$0xff]
      %v6422 = vld [vmem:[#allocation2 + $0x3f] sm:$0xff]
      %v6423 = vld [vmem:[#allocation2 + $0x47] sm:$0xff]
      %v6424 = vld [vmem:[#allocation2 + $0x4f] sm:$0xff]
      %v6425 = vld [vmem:[#allocation2 + $0x57] sm:$0xff]
      %v6426 = vld [vmem:[#allocation2 + $0x5f] sm:$0xff]
      %v6427 = vld [vmem:[#allocation2 + $0x67] sm:$0xff]
      %v6428 = vld [vmem:[#allocation2 + $0x6f] sm:$0xff]
      %v6429 = vld [vmem:[#allocation2 + $0x77] sm:$0xff]
      %v6430 = vld [vmem:[#allocation2 + $0x7f] sm:$0xff]
      %v6431 = vld [vmem:[#allocation2 + $0x87] sm:$0xff]
      %v6432 = vld [vmem:[#allocation2 + $0x8f] sm:$0xff]
      %v6433 = vld [vmem:[#allocation2 + $0x97] sm:$0xff]
      %v6434 = vld [vmem:[#allocation2 + $0x9f] sm:$0xff]
      %v6435 = vld [vmem:[#allocation2 + $0xa7] sm:$0xff]
      %v6436 = vld [vmem:[#allocation2 + $0xaf] sm:$0xff]
      %v6437 = vld [vmem:[#allocation2 + $0xb7] sm:$0xff]
      %v6438 = vld [vmem:[#allocation2 + $0xbf] sm:$0xff]
      %v6439 = vld [vmem:[#allocation2 + $0xc7] sm:$0xff]
      %v6440 = vld [vmem:[#allocation2 + $0xcf] sm:$0xff]
      %v6441 = vld [vmem:[#allocation2 + $0xd7] sm:$0xff]
      %v6442 = vld [vmem:[#allocation2 + $0xdf] sm:$0xff]
      %v6443 = vld [vmem:[#allocation2 + $0xe7] sm:$0xff]
      %v6444 = vld [vmem:[#allocation2 + $0xef] sm:$0xff]
      %v6445 = vld [vmem:[#allocation2 + $0xf7] sm:$0xff]
      %v6446 = vld [vmem:[#allocation2 + $0xff] sm:$0xff]
      %v6447 = vld [vmem:[#allocation2 + $0x107] sm:$0xff]
      %v6448 = vld [vmem:[#allocation2 + $0x10f] sm:$0xff]
      %v6449 = vld [vmem:[#allocation2 + $0x117] sm:$0xff]
      %v6450 = vld [vmem:[#allocation2 + $0x11f] sm:$0xff]
      %v6451 = vld [vmem:[#allocation2 + $0x127] sm:$0xff]
      %v6452 = vld [vmem:[#allocation2 + $0x12f] sm:$0xff]
      %v6453 = vld [vmem:[#allocation2 + $0x137] sm:$0xff]
      %v6454 = vld [vmem:[#allocation2 + $0x13f] sm:$0xff]
      %v6455 = vld [vmem:[#allocation2 + $0x147] sm:$0xff]
      %v6456 = vld [vmem:[#allocation2 + $0x14f] sm:$0xff]
      %v6457 = vld [vmem:[#allocation2 + $0x157] sm:$0xf]
      %v6458 = vld [vmem:[%s3 + $0x30] sm:$0xff]
      %v6459 = vld [vmem:[%s3 + $0x38] sm:$0xff]
      %v6461 = vsel %vm5018, %v6417, 0
      %v6464 = vsel %vm5018, %v6418, 0
      %v6467 = vsel %vm5018, %v6419, 0
      %v6470 = vsel %vm5018, %v6420, 0
      %v6473 = vsel %vm5018, %v6421, 0
      %v6476 = vsel %vm5018, %v6422, 0
      %v6479 = vsel %vm5018, %v6423, 0
      %v6482 = vsel %vm5018, %v6424, 0
      %v6485 = vsel %vm5018, %v6425, 0
      %v6488 = vsel %vm5018, %v6426, 0
      %v6491 = vsel %vm5018, %v6427, 0
      %v6494 = vsel %vm5018, %v6428, 0
      %v6497 = vsel %vm5018, %v6429, 0
      %v6500 = vsel %vm5018, %v6430, 0
      %v6503 = vsel %vm5018, %v6431, 0
      %v6506 = vsel %vm5018, %v6432, 0
      %v6509 = vsel %vm5018, %v6433, 0
      %v6512 = vsel %vm5018, %v6434, 0
      %v6515 = vsel %vm5018, %v6435, 0
      %v6518 = vsel %vm5018, %v6436, 0
      %v6521 = vsel %vm5018, %v6437, 0
      %v6524 = vsel %vm5018, %v6438, 0
      %v6527 = vsel %vm5018, %v6439, 0
      %v6530 = vsel %vm5018, %v6440, 0
      %v6533 = vsel %vm5018, %v6441, 0
      %v6536 = vsel %vm5018, %v6442, 0
      %v6539 = vsel %vm5018, %v6443, 0
      %v6542 = vsel %vm5018, %v6444, 0
      %v6545 = vsel %vm5018, %v6445, 0
      %v6548 = vsel %vm5018, %v6446, 0
      %v6551 = vsel %vm5018, %v6447, 0
      %v6554 = vsel %vm5018, %v6448, 0
      %v6557 = vsel %vm5018, %v6449, 0
      %v6560 = vsel %vm5018, %v6450, 0
      %v6563 = vsel %vm5018, %v6451, 0
      %v6566 = vsel %vm5018, %v6452, 0
      %v6569 = vsel %vm5018, %v6453, 0
      %v6572 = vsel %vm5018, %v6454, 0
      %v6575 = vsel %vm5018, %v6455, 0
      %v6578 = vsel %vm5018, %v6456, 0
      %v6581 = vsel %vm5018, %v6457, 0
      %6583 = vmatprep.subr.mxu0 0.0
      %6584 = vmatpush1.msra.mxu0 0.0
      %6585 = vmatprep.subr.mxu0 0.0
      %6586 = vmatpush1.msra.mxu0 0.0
      %6587 = vmatprep.subr.mxu0 0.0
      %6588 = vmatpush1.msra.mxu0 0.0
      %6589 = vmatprep.subr.mxu0 0.0
      %6590 = vmatpush1.msra.mxu0 0.0
      %6591 = vmatprep.subr.mxu0 0.0
      %6592 = vmatpush1.msra.mxu0 0.0
      %6593 = vmatprep.subr.mxu0 0.0
      %6594 = vmatpush1.msra.mxu0 0.0
      %6595 = vmatprep.subr.mxu0 0.0
      %6596 = vmatpush1.msra.mxu0 0.0
      %6597 = vmatprep.subr.mxu0 0.0
      %6598 = vmatpush1.msra.mxu0 0.0
      %6599 = vmatprep.subr.mxu0 0.0
      %6600 = vmatpush1.msra.mxu0 0.0
      %6601 = vmatprep.subr.mxu0 0.0
      %6602 = vmatpush1.msra.mxu0 0.0
      %6603 = vmatprep.subr.mxu0 0.0
      %6604 = vmatpush1.msra.mxu0 0.0
      %6605 = vmatprep.subr.mxu0 0.0
      %6606 = vmatpush1.msra.mxu0 0.0
      %6607 = vmatprep.subr.mxu0 0.0
      %6608 = vmatpush1.msra.mxu0 0.0
      %6609 = vmatprep.subr.mxu0 0.0
      %6610 = vmatpush1.msra.mxu0 0.0
      %6611 = vmatprep.subr.mxu0 0.0
      %6612 = vmatpush1.msra.mxu0 %v6459
      %6613 = vmatprep.subr.mxu0 0.0
      %6614 = vmatpush1.msra.mxu0 %v6458
      %6615 = vmatprep.subr.mxu0 0.0
      %6616 = vmatpush2.msra.mxu0 0.0
      %6617 = vmatprep.subr.mxu0 0.0
      %6618 = vmatpush2.msra.mxu0 0.0
      %6619 = vmatprep.subr.mxu0 0.0
      %6620 = vmatpush2.msra.mxu0 0.0
      %6621 = vmatprep.subr.mxu0 0.0
      %6622 = vmatpush2.msra.mxu0 0.0
      %6623 = vmatprep.subr.mxu0 0.0
      %6624 = vmatpush2.msra.mxu0 0.0
      %6625 = vmatprep.subr.mxu0 0.0
      %6626 = vmatpush2.msra.mxu0 0.0
      %6627 = vmatprep.subr.mxu0 0.0
      %6628 = vmatpush2.msra.mxu0 0.0
      %6629 = vmatprep.subr.mxu0 0.0
      %6630 = vmatpush2.msra.mxu0 0.0
      %6631 = vmatprep.subr.mxu0 0.0
      %6632 = vmatpush2.msra.mxu0 0.0
      %6633 = vmatprep.subr.mxu0 0.0
      %6634 = vmatpush2.msra.mxu0 0.0
      %6635 = vmatprep.subr.mxu0 0.0
      %6636 = vmatpush2.msra.mxu0 0.0
      %6637 = vmatprep.subr.mxu0 0.0
      %6638 = vmatpush2.msra.mxu0 0.0
      %6639 = vmatprep.subr.mxu0 0.0
      %6640 = vmatpush2.msra.mxu0 0.0
      %6641 = vmatprep.subr.mxu0 0.0
      %6642 = vmatpush2.msra.mxu0 0.0
      %6643 = vmatprep.subr.mxu0 0.0
      %6644 = vmatpush2.msra.mxu0 0.0
      %6645 = vmatprep.subr.mxu0 0.0
      %6646 = vmatpush2.msra.mxu0 0.0
      %6647 = vmatprep.mubr.f32.mxu0 0.0
      %6648 = vmatmul.mubr.f32.gmra.mxu0 %v6461
      %v6649 = vpop.f32.mrf.mxu0
      %v6650 = vadd.f32 0.0, %v6649
      %v6651 = vpop.f32.mrf.mxu0
      %6652 = vmatprep.mubr.f32.mxu0 0.0
      %6653 = vmatmul.mubr.f32.gmra.mxu0 %v6464
      %v6654 = vpop.f32.mrf.mxu0
      %v6655 = vadd.f32 0.0, %v6654
      %v6656 = vpop.f32.mrf.mxu0
      %6657 = vmatprep.mubr.f32.mxu0 0.0
      %6658 = vmatmul.mubr.f32.gmra.mxu0 %v6467
      %v6659 = vpop.f32.mrf.mxu0
      %v6660 = vadd.f32 0.0, %v6659
      %v6661 = vpop.f32.mrf.mxu0
      %6662 = vmatprep.mubr.f32.mxu0 0.0
      %6663 = vmatmul.mubr.f32.gmra.mxu0 %v6470
      %v6664 = vpop.f32.mrf.mxu0
      %v6665 = vadd.f32 0.0, %v6664
      %v6666 = vpop.f32.mrf.mxu0
      %6667 = vmatprep.mubr.f32.mxu0 0.0
      %6668 = vmatmul.mubr.f32.gmra.mxu0 %v6473
      %v6669 = vpop.f32.mrf.mxu0
      %v6670 = vadd.f32 0.0, %v6669
      %v6671 = vpop.f32.mrf.mxu0
      %6672 = vmatprep.mubr.f32.mxu0 0.0
      %6673 = vmatmul.mubr.f32.gmra.mxu0 %v6476
      %v6674 = vpop.f32.mrf.mxu0
      %v6675 = vadd.f32 0.0, %v6674
      %v6676 = vpop.f32.mrf.mxu0
      %6677 = vmatprep.mubr.f32.mxu0 0.0
      %6678 = vmatmul.mubr.f32.gmra.mxu0 %v6479
      %v6679 = vpop.f32.mrf.mxu0
      %v6680 = vadd.f32 0.0, %v6679
      %v6681 = vpop.f32.mrf.mxu0
      %6682 = vmatprep.mubr.f32.mxu0 0.0
      %6683 = vmatmul.mubr.f32.gmra.mxu0 %v6482
      %v6684 = vpop.f32.mrf.mxu0
      %v6685 = vadd.f32 0.0, %v6684
      %v6686 = vpop.f32.mrf.mxu0
      %6687 = vmatprep.mubr.f32.mxu0 0.0
      %6688 = vmatmul.mubr.f32.gmra.mxu0 %v6485
      %v6689 = vpop.f32.mrf.mxu0
      %v6690 = vadd.f32 0.0, %v6689
      %v6691 = vpop.f32.mrf.mxu0
      %6692 = vmatprep.mubr.f32.mxu0 0.0
      %6693 = vmatmul.mubr.f32.gmra.mxu0 %v6488
      %v6694 = vpop.f32.mrf.mxu0
      %v6695 = vadd.f32 0.0, %v6694
      %v6696 = vpop.f32.mrf.mxu0
      %6697 = vmatprep.mubr.f32.mxu0 0.0
      %6698 = vmatmul.mubr.f32.gmra.mxu0 %v6491
      %v6699 = vpop.f32.mrf.mxu0
      %v6700 = vadd.f32 0.0, %v6699
      %v6701 = vpop.f32.mrf.mxu0
      %6702 = vmatprep.mubr.f32.mxu0 0.0
      %6703 = vmatmul.mubr.f32.gmra.mxu0 %v6494
      %v6704 = vpop.f32.mrf.mxu0
      %v6705 = vadd.f32 0.0, %v6704
      %v6706 = vpop.f32.mrf.mxu0
      %6707 = vmatprep.mubr.f32.mxu0 0.0
      %6708 = vmatmul.mubr.f32.gmra.mxu0 %v6497
      %v6709 = vpop.f32.mrf.mxu0
      %v6710 = vadd.f32 0.0, %v6709
      %v6711 = vpop.f32.mrf.mxu0
      %6712 = vmatprep.mubr.f32.mxu0 0.0
      %6713 = vmatmul.mubr.f32.gmra.mxu0 %v6500
      %v6714 = vpop.f32.mrf.mxu0
      %v6715 = vadd.f32 0.0, %v6714
      %v6716 = vpop.f32.mrf.mxu0
      %6717 = vmatprep.mubr.f32.mxu0 0.0
      %6718 = vmatmul.mubr.f32.gmra.mxu0 %v6503
      %v6719 = vpop.f32.mrf.mxu0
      %v6720 = vadd.f32 0.0, %v6719
      %v6721 = vpop.f32.mrf.mxu0
      %6722 = vmatprep.mubr.f32.mxu0 0.0
      %6723 = vmatmul.mubr.f32.gmra.mxu0 %v6506
      %v6724 = vpop.f32.mrf.mxu0
      %v6725 = vadd.f32 0.0, %v6724
      %v6726 = vpop.f32.mrf.mxu0
      %6727 = vmatprep.mubr.f32.mxu0 0.0
      %6728 = vmatmul.mubr.f32.gmra.mxu0 %v6509
      %v6729 = vpop.f32.mrf.mxu0
      %v6730 = vadd.f32 0.0, %v6729
      %v6731 = vpop.f32.mrf.mxu0
      %6732 = vmatprep.mubr.f32.mxu0 0.0
      %6733 = vmatmul.mubr.f32.gmra.mxu0 %v6512
      %v6734 = vpop.f32.mrf.mxu0
      %v6735 = vadd.f32 0.0, %v6734
      %v6736 = vpop.f32.mrf.mxu0
      %6737 = vmatprep.mubr.f32.mxu0 0.0
      %6738 = vmatmul.mubr.f32.gmra.mxu0 %v6515
      %v6739 = vpop.f32.mrf.mxu0
      %v6740 = vadd.f32 0.0, %v6739
      %v6741 = vpop.f32.mrf.mxu0
      %6742 = vmatprep.mubr.f32.mxu0 0.0
      %6743 = vmatmul.mubr.f32.gmra.mxu0 %v6518
      %v6744 = vpop.f32.mrf.mxu0
      %v6745 = vadd.f32 0.0, %v6744
      %v6746 = vpop.f32.mrf.mxu0
      %6747 = vmatprep.mubr.f32.mxu0 0.0
      %6748 = vmatmul.mubr.f32.gmra.mxu0 %v6521
      %v6749 = vpop.f32.mrf.mxu0
      %v6750 = vadd.f32 0.0, %v6749
      %v6751 = vpop.f32.mrf.mxu0
      %6752 = vmatprep.mubr.f32.mxu0 0.0
      %6753 = vmatmul.mubr.f32.gmra.mxu0 %v6524
      %v6754 = vpop.f32.mrf.mxu0
      %v6755 = vadd.f32 0.0, %v6754
      %v6756 = vpop.f32.mrf.mxu0
      %6757 = vmatprep.mubr.f32.mxu0 0.0
      %6758 = vmatmul.mubr.f32.gmra.mxu0 %v6527
      %v6759 = vpop.f32.mrf.mxu0
      %v6760 = vadd.f32 0.0, %v6759
      %v6761 = vpop.f32.mrf.mxu0
      %6762 = vmatprep.mubr.f32.mxu0 0.0
      %6763 = vmatmul.mubr.f32.gmra.mxu0 %v6530
      %v6764 = vpop.f32.mrf.mxu0
      %v6765 = vadd.f32 0.0, %v6764
      %v6766 = vpop.f32.mrf.mxu0
      %6767 = vmatprep.mubr.f32.mxu0 0.0
      %6768 = vmatmul.mubr.f32.gmra.mxu0 %v6533
      %v6769 = vpop.f32.mrf.mxu0
      %v6770 = vadd.f32 0.0, %v6769
      %v6771 = vpop.f32.mrf.mxu0
      %6772 = vmatprep.mubr.f32.mxu0 0.0
      %6773 = vmatmul.mubr.f32.gmra.mxu0 %v6536
      %v6774 = vpop.f32.mrf.mxu0
      %v6775 = vadd.f32 0.0, %v6774
      %v6776 = vpop.f32.mrf.mxu0
      %6777 = vmatprep.mubr.f32.mxu0 0.0
      %6778 = vmatmul.mubr.f32.gmra.mxu0 %v6539
      %v6779 = vpop.f32.mrf.mxu0
      %v6780 = vadd.f32 0.0, %v6779
      %v6781 = vpop.f32.mrf.mxu0
      %6782 = vmatprep.mubr.f32.mxu0 0.0
      %6783 = vmatmul.mubr.f32.gmra.mxu0 %v6542
      %v6784 = vpop.f32.mrf.mxu0
      %v6785 = vadd.f32 0.0, %v6784
      %v6786 = vpop.f32.mrf.mxu0
      %6787 = vmatprep.mubr.f32.mxu0 0.0
      %6788 = vmatmul.mubr.f32.gmra.mxu0 %v6545
      %v6789 = vpop.f32.mrf.mxu0
      %v6790 = vadd.f32 0.0, %v6789
      %v6791 = vpop.f32.mrf.mxu0
      %6792 = vmatprep.mubr.f32.mxu0 0.0
      %6793 = vmatmul.mubr.f32.gmra.mxu0 %v6548
      %v6794 = vpop.f32.mrf.mxu0
      %v6795 = vadd.f32 0.0, %v6794
      %v6796 = vpop.f32.mrf.mxu0
      %6797 = vmatprep.mubr.f32.mxu0 0.0
      %6798 = vmatmul.mubr.f32.gmra.mxu0 %v6551
      %v6799 = vpop.f32.mrf.mxu0
      %v6800 = vadd.f32 0.0, %v6799
      %v6801 = vpop.f32.mrf.mxu0
      %6802 = vmatprep.mubr.f32.mxu0 0.0
      %6803 = vmatmul.mubr.f32.gmra.mxu0 %v6554
      %v6804 = vpop.f32.mrf.mxu0
      %v6805 = vadd.f32 0.0, %v6804
      %v6806 = vpop.f32.mrf.mxu0
      %6807 = vmatprep.mubr.f32.mxu0 0.0
      %6808 = vmatmul.mubr.f32.gmra.mxu0 %v6557
      %v6809 = vpop.f32.mrf.mxu0
      %v6810 = vadd.f32 0.0, %v6809
      %v6811 = vpop.f32.mrf.mxu0
      %6812 = vmatprep.mubr.f32.mxu0 0.0
      %6813 = vmatmul.mubr.f32.gmra.mxu0 %v6560
      %v6814 = vpop.f32.mrf.mxu0
      %v6815 = vadd.f32 0.0, %v6814
      %v6816 = vpop.f32.mrf.mxu0
      %6817 = vmatprep.mubr.f32.mxu0 0.0
      %6818 = vmatmul.mubr.f32.gmra.mxu0 %v6563
      %v6819 = vpop.f32.mrf.mxu0
      %v6820 = vadd.f32 0.0, %v6819
      %v6821 = vpop.f32.mrf.mxu0
      %6822 = vmatprep.mubr.f32.mxu0 0.0
      %6823 = vmatmul.mubr.f32.gmra.mxu0 %v6566
      %v6824 = vpop.f32.mrf.mxu0
      %v6825 = vadd.f32 0.0, %v6824
      %v6826 = vpop.f32.mrf.mxu0
      %6827 = vmatprep.mubr.f32.mxu0 0.0
      %6828 = vmatmul.mubr.f32.gmra.mxu0 %v6569
      %v6829 = vpop.f32.mrf.mxu0
      %v6830 = vadd.f32 0.0, %v6829
      %v6831 = vpop.f32.mrf.mxu0
      %6832 = vmatprep.mubr.f32.mxu0 0.0
      %6833 = vmatmul.mubr.f32.gmra.mxu0 %v6572
      %v6834 = vpop.f32.mrf.mxu0
      %v6835 = vadd.f32 0.0, %v6834
      %v6836 = vpop.f32.mrf.mxu0
      %6837 = vmatprep.mubr.f32.mxu0 0.0
      %6838 = vmatmul.mubr.f32.gmra.mxu0 %v6575
      %v6839 = vpop.f32.mrf.mxu0
      %v6840 = vadd.f32 0.0, %v6839
      %v6841 = vpop.f32.mrf.mxu0
      %6842 = vmatprep.mubr.f32.mxu0 0.0
      %6843 = vmatmul.mubr.f32.gmra.mxu0 %v6578
      %v6844 = vpop.f32.mrf.mxu0
      %v6845 = vadd.f32 0.0, %v6844
      %v6846 = vpop.f32.mrf.mxu0
      %6847 = vmatprep.mubr.f32.mxu0 0.0
      %6848 = vmatmul.mubr.f32.gmra.mxu0 %v6581
      %v6849 = vpop.f32.mrf.mxu0
      %v6850 = vadd.f32 0.0, %v6849
      %v6851 = vpop.f32.mrf.mxu0
      %6852 = vdwg.mxu0
      %v6853 = vadd.f32 %v6376, %v6650
      %v6854 = vadd.f32 %v6377, %v6655
      %v6855 = vadd.f32 %v6378, %v6660
      %v6856 = vadd.f32 %v6379, %v6665
      %v6857 = vadd.f32 %v6380, %v6670
      %v6858 = vadd.f32 %v6381, %v6675
      %v6859 = vadd.f32 %v6382, %v6680
      %v6860 = vadd.f32 %v6383, %v6685
      %v6861 = vadd.f32 %v6384, %v6690
      %v6862 = vadd.f32 %v6385, %v6695
      %v6863 = vadd.f32 %v6386, %v6700
      %v6864 = vadd.f32 %v6387, %v6705
      %v6865 = vadd.f32 %v6388, %v6710
      %v6866 = vadd.f32 %v6389, %v6715
      %v6867 = vadd.f32 %v6390, %v6720
      %v6868 = vadd.f32 %v6391, %v6725
      %v6869 = vadd.f32 %v6392, %v6730
      %v6870 = vadd.f32 %v6393, %v6735
      %v6871 = vadd.f32 %v6394, %v6740
      %v6872 = vadd.f32 %v6395, %v6745
      %v6873 = vadd.f32 %v6396, %v6750
      %v6874 = vadd.f32 %v6397, %v6755
      %v6875 = vadd.f32 %v6398, %v6760
      %v6876 = vadd.f32 %v6399, %v6765
      %v6877 = vadd.f32 %v6400, %v6770
      %v6878 = vadd.f32 %v6401, %v6775
      %v6879 = vadd.f32 %v6402, %v6780
      %v6880 = vadd.f32 %v6403, %v6785
      %v6881 = vadd.f32 %v6404, %v6790
      %v6882 = vadd.f32 %v6405, %v6795
      %v6883 = vadd.f32 %v6406, %v6800
      %v6884 = vadd.f32 %v6407, %v6805
      %v6885 = vadd.f32 %v6408, %v6810
      %v6886 = vadd.f32 %v6409, %v6815
      %v6887 = vadd.f32 %v6410, %v6820
      %v6888 = vadd.f32 %v6411, %v6825
      %v6889 = vadd.f32 %v6412, %v6830
      %v6890 = vadd.f32 %v6413, %v6835
      %v6891 = vadd.f32 %v6414, %v6840
      %v6892 = vadd.f32 %v6415, %v6845
      %v6893 = vadd.f32 %v6416, %v6850
      %v6894 = vld [vmem:[#allocation2 + $0x18] sm:$0xff]
      %v6895 = vld [vmem:[#allocation2 + $0x20] sm:$0xff]
      %v6896 = vld [vmem:[#allocation2 + $0x28] sm:$0xff]
      %v6897 = vld [vmem:[#allocation2 + $0x30] sm:$0xff]
      %v6898 = vld [vmem:[#allocation2 + $0x38] sm:$0xff]
      %v6899 = vld [vmem:[#allocation2 + $0x40] sm:$0xff]
      %v6900 = vld [vmem:[#allocation2 + $0x48] sm:$0xff]
      %v6901 = vld [vmem:[#allocation2 + $0x50] sm:$0xff]
      %v6902 = vld [vmem:[#allocation2 + $0x58] sm:$0xff]
      %v6903 = vld [vmem:[#allocation2 + $0x60] sm:$0xff]
      %v6904 = vld [vmem:[#allocation2 + $0x68] sm:$0xff]
      %v6905 = vld [vmem:[#allocation2 + $0x70] sm:$0xff]
      %v6906 = vld [vmem:[#allocation2 + $0x78] sm:$0xff]
      %v6907 = vld [vmem:[#allocation2 + $0x80] sm:$0xff]
      %v6908 = vld [vmem:[#allocation2 + $0x88] sm:$0xff]
      %v6909 = vld [vmem:[#allocation2 + $0x90] sm:$0xff]
      %v6910 = vld [vmem:[#allocation2 + $0x98] sm:$0xff]
      %v6911 = vld [vmem:[#allocation2 + $0xa0] sm:$0xff]
      %v6912 = vld [vmem:[#allocation2 + $0xa8] sm:$0xff]
      %v6913 = vld [vmem:[#allocation2 + $0xb0] sm:$0xff]
      %v6914 = vld [vmem:[#allocation2 + $0xb8] sm:$0xff]
      %v6915 = vld [vmem:[#allocation2 + $0xc0] sm:$0xff]
      %v6916 = vld [vmem:[#allocation2 + $0xc8] sm:$0xff]
      %v6917 = vld [vmem:[#allocation2 + $0xd0] sm:$0xff]
      %v6918 = vld [vmem:[#allocation2 + $0xd8] sm:$0xff]
      %v6919 = vld [vmem:[#allocation2 + $0xe0] sm:$0xff]
      %v6920 = vld [vmem:[#allocation2 + $0xe8] sm:$0xff]
      %v6921 = vld [vmem:[#allocation2 + $0xf0] sm:$0xff]
      %v6922 = vld [vmem:[#allocation2 + $0xf8] sm:$0xff]
      %v6923 = vld [vmem:[#allocation2 + $0x100] sm:$0xff]
      %v6924 = vld [vmem:[#allocation2 + $0x108] sm:$0xff]
      %v6925 = vld [vmem:[#allocation2 + $0x110] sm:$0xff]
      %v6926 = vld [vmem:[#allocation2 + $0x118] sm:$0xff]
      %v6927 = vld [vmem:[#allocation2 + $0x120] sm:$0xff]
      %v6928 = vld [vmem:[#allocation2 + $0x128] sm:$0xff]
      %v6929 = vld [vmem:[#allocation2 + $0x130] sm:$0xff]
      %v6930 = vld [vmem:[#allocation2 + $0x138] sm:$0xff]
      %v6931 = vld [vmem:[#allocation2 + $0x140] sm:$0xff]
      %v6932 = vld [vmem:[#allocation2 + $0x148] sm:$0xff]
      %v6933 = vld [vmem:[#allocation2 + $0x150] sm:$0xff]
      %v6934 = vld [vmem:[#allocation2 + $0x158] sm:$0xf]
      %v6935 = vld [vmem:[%s3 + $0x40] sm:$0xff]
      %v6936 = vld [vmem:[%s3 + $0x48] sm:$0xff]
      %v6938 = vsel %vm5018, %v6894, 0
      %v6941 = vsel %vm5018, %v6895, 0
      %v6944 = vsel %vm5018, %v6896, 0
      %v6947 = vsel %vm5018, %v6897, 0
      %v6950 = vsel %vm5018, %v6898, 0
      %v6953 = vsel %vm5018, %v6899, 0
      %v6956 = vsel %vm5018, %v6900, 0
      %v6959 = vsel %vm5018, %v6901, 0
      %v6962 = vsel %vm5018, %v6902, 0
      %v6965 = vsel %vm5018, %v6903, 0
      %v6968 = vsel %vm5018, %v6904, 0
      %v6971 = vsel %vm5018, %v6905, 0
      %v6974 = vsel %vm5018, %v6906, 0
      %v6977 = vsel %vm5018, %v6907, 0
      %v6980 = vsel %vm5018, %v6908, 0
      %v6983 = vsel %vm5018, %v6909, 0
      %v6986 = vsel %vm5018, %v6910, 0
      %v6989 = vsel %vm5018, %v6911, 0
      %v6992 = vsel %vm5018, %v6912, 0
      %v6995 = vsel %vm5018, %v6913, 0
      %v6998 = vsel %vm5018, %v6914, 0
      %v7001 = vsel %vm5018, %v6915, 0
      %v7004 = vsel %vm5018, %v6916, 0
      %v7007 = vsel %vm5018, %v6917, 0
      %v7010 = vsel %vm5018, %v6918, 0
      %v7013 = vsel %vm5018, %v6919, 0
      %v7016 = vsel %vm5018, %v6920, 0
      %v7019 = vsel %vm5018, %v6921, 0
      %v7022 = vsel %vm5018, %v6922, 0
      %v7025 = vsel %vm5018, %v6923, 0
      %v7028 = vsel %vm5018, %v6924, 0
      %v7031 = vsel %vm5018, %v6925, 0
      %v7034 = vsel %vm5018, %v6926, 0
      %v7037 = vsel %vm5018, %v6927, 0
      %v7040 = vsel %vm5018, %v6928, 0
      %v7043 = vsel %vm5018, %v6929, 0
      %v7046 = vsel %vm5018, %v6930, 0
      %v7049 = vsel %vm5018, %v6931, 0
      %v7052 = vsel %vm5018, %v6932, 0
      %v7055 = vsel %vm5018, %v6933, 0
      %v7058 = vsel %vm5018, %v6934, 0
      %7060 = vmatprep.subr.mxu0 0.0
      %7061 = vmatpush1.msra.mxu0 0.0
      %7062 = vmatprep.subr.mxu0 0.0
      %7063 = vmatpush1.msra.mxu0 0.0
      %7064 = vmatprep.subr.mxu0 0.0
      %7065 = vmatpush1.msra.mxu0 0.0
      %7066 = vmatprep.subr.mxu0 0.0
      %7067 = vmatpush1.msra.mxu0 0.0
      %7068 = vmatprep.subr.mxu0 0.0
      %7069 = vmatpush1.msra.mxu0 0.0
      %7070 = vmatprep.subr.mxu0 0.0
      %7071 = vmatpush1.msra.mxu0 0.0
      %7072 = vmatprep.subr.mxu0 0.0
      %7073 = vmatpush1.msra.mxu0 0.0
      %7074 = vmatprep.subr.mxu0 0.0
      %7075 = vmatpush1.msra.mxu0 0.0
      %7076 = vmatprep.subr.mxu0 0.0
      %7077 = vmatpush1.msra.mxu0 0.0
      %7078 = vmatprep.subr.mxu0 0.0
      %7079 = vmatpush1.msra.mxu0 0.0
      %7080 = vmatprep.subr.mxu0 0.0
      %7081 = vmatpush1.msra.mxu0 0.0
      %7082 = vmatprep.subr.mxu0 0.0
      %7083 = vmatpush1.msra.mxu0 0.0
      %7084 = vmatprep.subr.mxu0 0.0
      %7085 = vmatpush1.msra.mxu0 0.0
      %7086 = vmatprep.subr.mxu0 0.0
      %7087 = vmatpush1.msra.mxu0 0.0
      %7088 = vmatprep.subr.mxu0 0.0
      %7089 = vmatpush1.msra.mxu0 %v6936
      %7090 = vmatprep.subr.mxu0 0.0
      %7091 = vmatpush1.msra.mxu0 %v6935
      %7092 = vmatprep.subr.mxu0 0.0
      %7093 = vmatpush2.msra.mxu0 0.0
      %7094 = vmatprep.subr.mxu0 0.0
      %7095 = vmatpush2.msra.mxu0 0.0
      %7096 = vmatprep.subr.mxu0 0.0
      %7097 = vmatpush2.msra.mxu0 0.0
      %7098 = vmatprep.subr.mxu0 0.0
      %7099 = vmatpush2.msra.mxu0 0.0
      %7100 = vmatprep.subr.mxu0 0.0
      %7101 = vmatpush2.msra.mxu0 0.0
      %7102 = vmatprep.subr.mxu0 0.0
      %7103 = vmatpush2.msra.mxu0 0.0
      %7104 = vmatprep.subr.mxu0 0.0
      %7105 = vmatpush2.msra.mxu0 0.0
      %7106 = vmatprep.subr.mxu0 0.0
      %7107 = vmatpush2.msra.mxu0 0.0
      %7108 = vmatprep.subr.mxu0 0.0
      %7109 = vmatpush2.msra.mxu0 0.0
      %7110 = vmatprep.subr.mxu0 0.0
      %7111 = vmatpush2.msra.mxu0 0.0
      %7112 = vmatprep.subr.mxu0 0.0
      %7113 = vmatpush2.msra.mxu0 0.0
      %7114 = vmatprep.subr.mxu0 0.0
      %7115 = vmatpush2.msra.mxu0 0.0
      %7116 = vmatprep.subr.mxu0 0.0
      %7117 = vmatpush2.msra.mxu0 0.0
      %7118 = vmatprep.subr.mxu0 0.0
      %7119 = vmatpush2.msra.mxu0 0.0
      %7120 = vmatprep.subr.mxu0 0.0
      %7121 = vmatpush2.msra.mxu0 0.0
      %7122 = vmatprep.subr.mxu0 0.0
      %7123 = vmatpush2.msra.mxu0 0.0
      %7124 = vmatprep.mubr.f32.mxu0 0.0
      %7125 = vmatmul.mubr.f32.gmra.mxu0 %v6938
      %v7126 = vpop.f32.mrf.mxu0
      %v7127 = vadd.f32 0.0, %v7126
      %v7128 = vpop.f32.mrf.mxu0
      %7129 = vmatprep.mubr.f32.mxu0 0.0
      %7130 = vmatmul.mubr.f32.gmra.mxu0 %v6941
      %v7131 = vpop.f32.mrf.mxu0
      %v7132 = vadd.f32 0.0, %v7131
      %v7133 = vpop.f32.mrf.mxu0
      %7134 = vmatprep.mubr.f32.mxu0 0.0
      %7135 = vmatmul.mubr.f32.gmra.mxu0 %v6944
      %v7136 = vpop.f32.mrf.mxu0
      %v7137 = vadd.f32 0.0, %v7136
      %v7138 = vpop.f32.mrf.mxu0
      %7139 = vmatprep.mubr.f32.mxu0 0.0
      %7140 = vmatmul.mubr.f32.gmra.mxu0 %v6947
      %v7141 = vpop.f32.mrf.mxu0
      %v7142 = vadd.f32 0.0, %v7141
      %v7143 = vpop.f32.mrf.mxu0
      %7144 = vmatprep.mubr.f32.mxu0 0.0
      %7145 = vmatmul.mubr.f32.gmra.mxu0 %v6950
      %v7146 = vpop.f32.mrf.mxu0
      %v7147 = vadd.f32 0.0, %v7146
      %v7148 = vpop.f32.mrf.mxu0
      %7149 = vmatprep.mubr.f32.mxu0 0.0
      %7150 = vmatmul.mubr.f32.gmra.mxu0 %v6953
      %v7151 = vpop.f32.mrf.mxu0
      %v7152 = vadd.f32 0.0, %v7151
      %v7153 = vpop.f32.mrf.mxu0
      %7154 = vmatprep.mubr.f32.mxu0 0.0
      %7155 = vmatmul.mubr.f32.gmra.mxu0 %v6956
      %v7156 = vpop.f32.mrf.mxu0
      %v7157 = vadd.f32 0.0, %v7156
      %v7158 = vpop.f32.mrf.mxu0
      %7159 = vmatprep.mubr.f32.mxu0 0.0
      %7160 = vmatmul.mubr.f32.gmra.mxu0 %v6959
      %v7161 = vpop.f32.mrf.mxu0
      %v7162 = vadd.f32 0.0, %v7161
      %v7163 = vpop.f32.mrf.mxu0
      %7164 = vmatprep.mubr.f32.mxu0 0.0
      %7165 = vmatmul.mubr.f32.gmra.mxu0 %v6962
      %v7166 = vpop.f32.mrf.mxu0
      %v7167 = vadd.f32 0.0, %v7166
      %v7168 = vpop.f32.mrf.mxu0
      %7169 = vmatprep.mubr.f32.mxu0 0.0
      %7170 = vmatmul.mubr.f32.gmra.mxu0 %v6965
      %v7171 = vpop.f32.mrf.mxu0
      %v7172 = vadd.f32 0.0, %v7171
      %v7173 = vpop.f32.mrf.mxu0
      %7174 = vmatprep.mubr.f32.mxu0 0.0
      %7175 = vmatmul.mubr.f32.gmra.mxu0 %v6968
      %v7176 = vpop.f32.mrf.mxu0
      %v7177 = vadd.f32 0.0, %v7176
      %v7178 = vpop.f32.mrf.mxu0
      %7179 = vmatprep.mubr.f32.mxu0 0.0
      %7180 = vmatmul.mubr.f32.gmra.mxu0 %v6971
      %v7181 = vpop.f32.mrf.mxu0
      %v7182 = vadd.f32 0.0, %v7181
      %v7183 = vpop.f32.mrf.mxu0
      %7184 = vmatprep.mubr.f32.mxu0 0.0
      %7185 = vmatmul.mubr.f32.gmra.mxu0 %v6974
      %v7186 = vpop.f32.mrf.mxu0
      %v7187 = vadd.f32 0.0, %v7186
      %v7188 = vpop.f32.mrf.mxu0
      %7189 = vmatprep.mubr.f32.mxu0 0.0
      %7190 = vmatmul.mubr.f32.gmra.mxu0 %v6977
      %v7191 = vpop.f32.mrf.mxu0
      %v7192 = vadd.f32 0.0, %v7191
      %v7193 = vpop.f32.mrf.mxu0
      %7194 = vmatprep.mubr.f32.mxu0 0.0
      %7195 = vmatmul.mubr.f32.gmra.mxu0 %v6980
      %v7196 = vpop.f32.mrf.mxu0
      %v7197 = vadd.f32 0.0, %v7196
      %v7198 = vpop.f32.mrf.mxu0
      %7199 = vmatprep.mubr.f32.mxu0 0.0
      %7200 = vmatmul.mubr.f32.gmra.mxu0 %v6983
      %v7201 = vpop.f32.mrf.mxu0
      %v7202 = vadd.f32 0.0, %v7201
      %v7203 = vpop.f32.mrf.mxu0
      %7204 = vmatprep.mubr.f32.mxu0 0.0
      %7205 = vmatmul.mubr.f32.gmra.mxu0 %v6986
      %v7206 = vpop.f32.mrf.mxu0
      %v7207 = vadd.f32 0.0, %v7206
      %v7208 = vpop.f32.mrf.mxu0
      %7209 = vmatprep.mubr.f32.mxu0 0.0
      %7210 = vmatmul.mubr.f32.gmra.mxu0 %v6989
      %v7211 = vpop.f32.mrf.mxu0
      %v7212 = vadd.f32 0.0, %v7211
      %v7213 = vpop.f32.mrf.mxu0
      %7214 = vmatprep.mubr.f32.mxu0 0.0
      %7215 = vmatmul.mubr.f32.gmra.mxu0 %v6992
      %v7216 = vpop.f32.mrf.mxu0
      %v7217 = vadd.f32 0.0, %v7216
      %v7218 = vpop.f32.mrf.mxu0
      %7219 = vmatprep.mubr.f32.mxu0 0.0
      %7220 = vmatmul.mubr.f32.gmra.mxu0 %v6995
      %v7221 = vpop.f32.mrf.mxu0
      %v7222 = vadd.f32 0.0, %v7221
      %v7223 = vpop.f32.mrf.mxu0
      %7224 = vmatprep.mubr.f32.mxu0 0.0
      %7225 = vmatmul.mubr.f32.gmra.mxu0 %v6998
      %v7226 = vpop.f32.mrf.mxu0
      %v7227 = vadd.f32 0.0, %v7226
      %v7228 = vpop.f32.mrf.mxu0
      %7229 = vmatprep.mubr.f32.mxu0 0.0
      %7230 = vmatmul.mubr.f32.gmra.mxu0 %v7001
      %v7231 = vpop.f32.mrf.mxu0
      %v7232 = vadd.f32 0.0, %v7231
      %v7233 = vpop.f32.mrf.mxu0
      %7234 = vmatprep.mubr.f32.mxu0 0.0
      %7235 = vmatmul.mubr.f32.gmra.mxu0 %v7004
      %v7236 = vpop.f32.mrf.mxu0
      %v7237 = vadd.f32 0.0, %v7236
      %v7238 = vpop.f32.mrf.mxu0
      %7239 = vmatprep.mubr.f32.mxu0 0.0
      %7240 = vmatmul.mubr.f32.gmra.mxu0 %v7007
      %v7241 = vpop.f32.mrf.mxu0
      %v7242 = vadd.f32 0.0, %v7241
      %v7243 = vpop.f32.mrf.mxu0
      %7244 = vmatprep.mubr.f32.mxu0 0.0
      %7245 = vmatmul.mubr.f32.gmra.mxu0 %v7010
      %v7246 = vpop.f32.mrf.mxu0
      %v7247 = vadd.f32 0.0, %v7246
      %v7248 = vpop.f32.mrf.mxu0
      %7249 = vmatprep.mubr.f32.mxu0 0.0
      %7250 = vmatmul.mubr.f32.gmra.mxu0 %v7013
      %v7251 = vpop.f32.mrf.mxu0
      %v7252 = vadd.f32 0.0, %v7251
      %v7253 = vpop.f32.mrf.mxu0
      %7254 = vmatprep.mubr.f32.mxu0 0.0
      %7255 = vmatmul.mubr.f32.gmra.mxu0 %v7016
      %v7256 = vpop.f32.mrf.mxu0
      %v7257 = vadd.f32 0.0, %v7256
      %v7258 = vpop.f32.mrf.mxu0
      %7259 = vmatprep.mubr.f32.mxu0 0.0
      %7260 = vmatmul.mubr.f32.gmra.mxu0 %v7019
      %v7261 = vpop.f32.mrf.mxu0
      %v7262 = vadd.f32 0.0, %v7261
      %v7263 = vpop.f32.mrf.mxu0
      %7264 = vmatprep.mubr.f32.mxu0 0.0
      %7265 = vmatmul.mubr.f32.gmra.mxu0 %v7022
      %v7266 = vpop.f32.mrf.mxu0
      %v7267 = vadd.f32 0.0, %v7266
      %v7268 = vpop.f32.mrf.mxu0
      %7269 = vmatprep.mubr.f32.mxu0 0.0
      %7270 = vmatmul.mubr.f32.gmra.mxu0 %v7025
      %v7271 = vpop.f32.mrf.mxu0
      %v7272 = vadd.f32 0.0, %v7271
      %v7273 = vpop.f32.mrf.mxu0
      %7274 = vmatprep.mubr.f32.mxu0 0.0
      %7275 = vmatmul.mubr.f32.gmra.mxu0 %v7028
      %v7276 = vpop.f32.mrf.mxu0
      %v7277 = vadd.f32 0.0, %v7276
      %v7278 = vpop.f32.mrf.mxu0
      %7279 = vmatprep.mubr.f32.mxu0 0.0
      %7280 = vmatmul.mubr.f32.gmra.mxu0 %v7031
      %v7281 = vpop.f32.mrf.mxu0
      %v7282 = vadd.f32 0.0, %v7281
      %v7283 = vpop.f32.mrf.mxu0
      %7284 = vmatprep.mubr.f32.mxu0 0.0
      %7285 = vmatmul.mubr.f32.gmra.mxu0 %v7034
      %v7286 = vpop.f32.mrf.mxu0
      %v7287 = vadd.f32 0.0, %v7286
      %v7288 = vpop.f32.mrf.mxu0
      %7289 = vmatprep.mubr.f32.mxu0 0.0
      %7290 = vmatmul.mubr.f32.gmra.mxu0 %v7037
      %v7291 = vpop.f32.mrf.mxu0
      %v7292 = vadd.f32 0.0, %v7291
      %v7293 = vpop.f32.mrf.mxu0
      %7294 = vmatprep.mubr.f32.mxu0 0.0
      %7295 = vmatmul.mubr.f32.gmra.mxu0 %v7040
      %v7296 = vpop.f32.mrf.mxu0
      %v7297 = vadd.f32 0.0, %v7296
      %v7298 = vpop.f32.mrf.mxu0
      %7299 = vmatprep.mubr.f32.mxu0 0.0
      %7300 = vmatmul.mubr.f32.gmra.mxu0 %v7043
      %v7301 = vpop.f32.mrf.mxu0
      %v7302 = vadd.f32 0.0, %v7301
      %v7303 = vpop.f32.mrf.mxu0
      %7304 = vmatprep.mubr.f32.mxu0 0.0
      %7305 = vmatmul.mubr.f32.gmra.mxu0 %v7046
      %v7306 = vpop.f32.mrf.mxu0
      %v7307 = vadd.f32 0.0, %v7306
      %v7308 = vpop.f32.mrf.mxu0
      %7309 = vmatprep.mubr.f32.mxu0 0.0
      %7310 = vmatmul.mubr.f32.gmra.mxu0 %v7049
      %v7311 = vpop.f32.mrf.mxu0
      %v7312 = vadd.f32 0.0, %v7311
      %v7313 = vpop.f32.mrf.mxu0
      %7314 = vmatprep.mubr.f32.mxu0 0.0
      %7315 = vmatmul.mubr.f32.gmra.mxu0 %v7052
      %v7316 = vpop.f32.mrf.mxu0
      %v7317 = vadd.f32 0.0, %v7316
      %v7318 = vpop.f32.mrf.mxu0
      %7319 = vmatprep.mubr.f32.mxu0 0.0
      %7320 = vmatmul.mubr.f32.gmra.mxu0 %v7055
      %v7321 = vpop.f32.mrf.mxu0
      %v7322 = vadd.f32 0.0, %v7321
      %v7323 = vpop.f32.mrf.mxu0
      %7324 = vmatprep.mubr.f32.mxu0 0.0
      %7325 = vmatmul.mubr.f32.gmra.mxu0 %v7058
      %v7326 = vpop.f32.mrf.mxu0
      %v7327 = vadd.f32 0.0, %v7326
      %v7328 = vpop.f32.mrf.mxu0
      %7329 = vdwg.mxu0
      %v7330 = vadd.f32 %v6853, %v7127
      %v7331 = vadd.f32 %v6854, %v7132
      %v7332 = vadd.f32 %v6855, %v7137
      %v7333 = vadd.f32 %v6856, %v7142
      %v7334 = vadd.f32 %v6857, %v7147
      %v7335 = vadd.f32 %v6858, %v7152
      %v7336 = vadd.f32 %v6859, %v7157
      %v7337 = vadd.f32 %v6860, %v7162
      %v7338 = vadd.f32 %v6861, %v7167
      %v7339 = vadd.f32 %v6862, %v7172
      %v7340 = vadd.f32 %v6863, %v7177
      %v7341 = vadd.f32 %v6864, %v7182
      %v7342 = vadd.f32 %v6865, %v7187
      %v7343 = vadd.f32 %v6866, %v7192
      %v7344 = vadd.f32 %v6867, %v7197
      %v7345 = vadd.f32 %v6868, %v7202
      %v7346 = vadd.f32 %v6869, %v7207
      %v7347 = vadd.f32 %v6870, %v7212
      %v7348 = vadd.f32 %v6871, %v7217
      %v7349 = vadd.f32 %v6872, %v7222
      %v7350 = vadd.f32 %v6873, %v7227
      %v7351 = vadd.f32 %v6874, %v7232
      %v7352 = vadd.f32 %v6875, %v7237
      %v7353 = vadd.f32 %v6876, %v7242
      %v7354 = vadd.f32 %v6877, %v7247
      %v7355 = vadd.f32 %v6878, %v7252
      %v7356 = vadd.f32 %v6879, %v7257
      %v7357 = vadd.f32 %v6880, %v7262
      %v7358 = vadd.f32 %v6881, %v7267
      %v7359 = vadd.f32 %v6882, %v7272
      %v7360 = vadd.f32 %v6883, %v7277
      %v7361 = vadd.f32 %v6884, %v7282
      %v7362 = vadd.f32 %v6885, %v7287
      %v7363 = vadd.f32 %v6886, %v7292
      %v7364 = vadd.f32 %v6887, %v7297
      %v7365 = vadd.f32 %v6888, %v7302
      %v7366 = vadd.f32 %v6889, %v7307
      %v7367 = vadd.f32 %v6890, %v7312
      %v7368 = vadd.f32 %v6891, %v7317
      %v7369 = vadd.f32 %v6892, %v7322
      %v7370 = vadd.f32 %v6893, %v7327
      %v7371 = vld [vmem:[#allocation2 + $0x19] sm:$0xff]
      %v7372 = vld [vmem:[#allocation2 + $0x21] sm:$0xff]
      %v7373 = vld [vmem:[#allocation2 + $0x29] sm:$0xff]
      %v7374 = vld [vmem:[#allocation2 + $0x31] sm:$0xff]
      %v7375 = vld [vmem:[#allocation2 + $0x39] sm:$0xff]
      %v7376 = vld [vmem:[#allocation2 + $0x41] sm:$0xff]
      %v7377 = vld [vmem:[#allocation2 + $0x49] sm:$0xff]
      %v7378 = vld [vmem:[#allocation2 + $0x51] sm:$0xff]
      %v7379 = vld [vmem:[#allocation2 + $0x59] sm:$0xff]
      %v7380 = vld [vmem:[#allocation2 + $0x61] sm:$0xff]
      %v7381 = vld [vmem:[#allocation2 + $0x69] sm:$0xff]
      %v7382 = vld [vmem:[#allocation2 + $0x71] sm:$0xff]
      %v7383 = vld [vmem:[#allocation2 + $0x79] sm:$0xff]
      %v7384 = vld [vmem:[#allocation2 + $0x81] sm:$0xff]
      %v7385 = vld [vmem:[#allocation2 + $0x89] sm:$0xff]
      %v7386 = vld [vmem:[#allocation2 + $0x91] sm:$0xff]
      %v7387 = vld [vmem:[#allocation2 + $0x99] sm:$0xff]
      %v7388 = vld [vmem:[#allocation2 + $0xa1] sm:$0xff]
      %v7389 = vld [vmem:[#allocation2 + $0xa9] sm:$0xff]
      %v7390 = vld [vmem:[#allocation2 + $0xb1] sm:$0xff]
      %v7391 = vld [vmem:[#allocation2 + $0xb9] sm:$0xff]
      %v7392 = vld [vmem:[#allocation2 + $0xc1] sm:$0xff]
      %v7393 = vld [vmem:[#allocation2 + $0xc9] sm:$0xff]
      %v7394 = vld [vmem:[#allocation2 + $0xd1] sm:$0xff]
      %v7395 = vld [vmem:[#allocation2 + $0xd9] sm:$0xff]
      %v7396 = vld [vmem:[#allocation2 + $0xe1] sm:$0xff]
      %v7397 = vld [vmem:[#allocation2 + $0xe9] sm:$0xff]
      %v7398 = vld [vmem:[#allocation2 + $0xf1] sm:$0xff]
      %v7399 = vld [vmem:[#allocation2 + $0xf9] sm:$0xff]
      %v7400 = vld [vmem:[#allocation2 + $0x101] sm:$0xff]
      %v7401 = vld [vmem:[#allocation2 + $0x109] sm:$0xff]
      %v7402 = vld [vmem:[#allocation2 + $0x111] sm:$0xff]
      %v7403 = vld [vmem:[#allocation2 + $0x119] sm:$0xff]
      %v7404 = vld [vmem:[#allocation2 + $0x121] sm:$0xff]
      %v7405 = vld [vmem:[#allocation2 + $0x129] sm:$0xff]
      %v7406 = vld [vmem:[#allocation2 + $0x131] sm:$0xff]
      %v7407 = vld [vmem:[#allocation2 + $0x139] sm:$0xff]
      %v7408 = vld [vmem:[#allocation2 + $0x141] sm:$0xff]
      %v7409 = vld [vmem:[#allocation2 + $0x149] sm:$0xff]
      %v7410 = vld [vmem:[#allocation2 + $0x151] sm:$0xff]
      %v7411 = vld [vmem:[#allocation2 + $0x159] sm:$0xf]
      %v7412 = vld [vmem:[%s3 + $0x50] sm:$0xff]
      %v7413 = vld [vmem:[%s3 + $0x58] sm:$0xff]
      %v7415 = vsel %vm5018, %v7371, 0
      %v7418 = vsel %vm5018, %v7372, 0
      %v7421 = vsel %vm5018, %v7373, 0
      %v7424 = vsel %vm5018, %v7374, 0
      %v7427 = vsel %vm5018, %v7375, 0
      %v7430 = vsel %vm5018, %v7376, 0
      %v7433 = vsel %vm5018, %v7377, 0
      %v7436 = vsel %vm5018, %v7378, 0
      %v7439 = vsel %vm5018, %v7379, 0
      %v7442 = vsel %vm5018, %v7380, 0
      %v7445 = vsel %vm5018, %v7381, 0
      %v7448 = vsel %vm5018, %v7382, 0
      %v7451 = vsel %vm5018, %v7383, 0
      %v7454 = vsel %vm5018, %v7384, 0
      %v7457 = vsel %vm5018, %v7385, 0
      %v7460 = vsel %vm5018, %v7386, 0
      %v7463 = vsel %vm5018, %v7387, 0
      %v7466 = vsel %vm5018, %v7388, 0
      %v7469 = vsel %vm5018, %v7389, 0
      %v7472 = vsel %vm5018, %v7390, 0
      %v7475 = vsel %vm5018, %v7391, 0
      %v7478 = vsel %vm5018, %v7392, 0
      %v7481 = vsel %vm5018, %v7393, 0
      %v7484 = vsel %vm5018, %v7394, 0
      %v7487 = vsel %vm5018, %v7395, 0
      %v7490 = vsel %vm5018, %v7396, 0
      %v7493 = vsel %vm5018, %v7397, 0
      %v7496 = vsel %vm5018, %v7398, 0
      %v7499 = vsel %vm5018, %v7399, 0
      %v7502 = vsel %vm5018, %v7400, 0
      %v7505 = vsel %vm5018, %v7401, 0
      %v7508 = vsel %vm5018, %v7402, 0
      %v7511 = vsel %vm5018, %v7403, 0
      %v7514 = vsel %vm5018, %v7404, 0
      %v7517 = vsel %vm5018, %v7405, 0
      %v7520 = vsel %vm5018, %v7406, 0
      %v7523 = vsel %vm5018, %v7407, 0
      %v7526 = vsel %vm5018, %v7408, 0
      %v7529 = vsel %vm5018, %v7409, 0
      %v7532 = vsel %vm5018, %v7410, 0
      %v7535 = vsel %vm5018, %v7411, 0
      %7537 = vmatprep.subr.mxu0 0.0
      %7538 = vmatpush1.msra.mxu0 0.0
      %7539 = vmatprep.subr.mxu0 0.0
      %7540 = vmatpush1.msra.mxu0 0.0
      %7541 = vmatprep.subr.mxu0 0.0
      %7542 = vmatpush1.msra.mxu0 0.0
      %7543 = vmatprep.subr.mxu0 0.0
      %7544 = vmatpush1.msra.mxu0 0.0
      %7545 = vmatprep.subr.mxu0 0.0
      %7546 = vmatpush1.msra.mxu0 0.0
      %7547 = vmatprep.subr.mxu0 0.0
      %7548 = vmatpush1.msra.mxu0 0.0
      %7549 = vmatprep.subr.mxu0 0.0
      %7550 = vmatpush1.msra.mxu0 0.0
      %7551 = vmatprep.subr.mxu0 0.0
      %7552 = vmatpush1.msra.mxu0 0.0
      %7553 = vmatprep.subr.mxu0 0.0
      %7554 = vmatpush1.msra.mxu0 0.0
      %7555 = vmatprep.subr.mxu0 0.0
      %7556 = vmatpush1.msra.mxu0 0.0
      %7557 = vmatprep.subr.mxu0 0.0
      %7558 = vmatpush1.msra.mxu0 0.0
      %7559 = vmatprep.subr.mxu0 0.0
      %7560 = vmatpush1.msra.mxu0 0.0
      %7561 = vmatprep.subr.mxu0 0.0
      %7562 = vmatpush1.msra.mxu0 0.0
      %7563 = vmatprep.subr.mxu0 0.0
      %7564 = vmatpush1.msra.mxu0 0.0
      %7565 = vmatprep.subr.mxu0 0.0
      %7566 = vmatpush1.msra.mxu0 %v7413
      %7567 = vmatprep.subr.mxu0 0.0
      %7568 = vmatpush1.msra.mxu0 %v7412
      %7569 = vmatprep.subr.mxu0 0.0
      %7570 = vmatpush2.msra.mxu0 0.0
      %7571 = vmatprep.subr.mxu0 0.0
      %7572 = vmatpush2.msra.mxu0 0.0
      %7573 = vmatprep.subr.mxu0 0.0
      %7574 = vmatpush2.msra.mxu0 0.0
      %7575 = vmatprep.subr.mxu0 0.0
      %7576 = vmatpush2.msra.mxu0 0.0
      %7577 = vmatprep.subr.mxu0 0.0
      %7578 = vmatpush2.msra.mxu0 0.0
      %7579 = vmatprep.subr.mxu0 0.0
      %7580 = vmatpush2.msra.mxu0 0.0
      %7581 = vmatprep.subr.mxu0 0.0
      %7582 = vmatpush2.msra.mxu0 0.0
      %7583 = vmatprep.subr.mxu0 0.0
      %7584 = vmatpush2.msra.mxu0 0.0
      %7585 = vmatprep.subr.mxu0 0.0
      %7586 = vmatpush2.msra.mxu0 0.0
      %7587 = vmatprep.subr.mxu0 0.0
      %7588 = vmatpush2.msra.mxu0 0.0
      %7589 = vmatprep.subr.mxu0 0.0
      %7590 = vmatpush2.msra.mxu0 0.0
      %7591 = vmatprep.subr.mxu0 0.0
      %7592 = vmatpush2.msra.mxu0 0.0
      %7593 = vmatprep.subr.mxu0 0.0
      %7594 = vmatpush2.msra.mxu0 0.0
      %7595 = vmatprep.subr.mxu0 0.0
      %7596 = vmatpush2.msra.mxu0 0.0
      %7597 = vmatprep.subr.mxu0 0.0
      %7598 = vmatpush2.msra.mxu0 0.0
      %7599 = vmatprep.subr.mxu0 0.0
      %7600 = vmatpush2.msra.mxu0 0.0
      %7601 = vmatprep.mubr.f32.mxu0 0.0
      %7602 = vmatmul.mubr.f32.gmra.mxu0 %v7415
      %v7603 = vpop.f32.mrf.mxu0
      %v7604 = vadd.f32 0.0, %v7603
      %v7605 = vpop.f32.mrf.mxu0
      %7606 = vmatprep.mubr.f32.mxu0 0.0
      %7607 = vmatmul.mubr.f32.gmra.mxu0 %v7418
      %v7608 = vpop.f32.mrf.mxu0
      %v7609 = vadd.f32 0.0, %v7608
      %v7610 = vpop.f32.mrf.mxu0
      %7611 = vmatprep.mubr.f32.mxu0 0.0
      %7612 = vmatmul.mubr.f32.gmra.mxu0 %v7421
      %v7613 = vpop.f32.mrf.mxu0
      %v7614 = vadd.f32 0.0, %v7613
      %v7615 = vpop.f32.mrf.mxu0
      %7616 = vmatprep.mubr.f32.mxu0 0.0
      %7617 = vmatmul.mubr.f32.gmra.mxu0 %v7424
      %v7618 = vpop.f32.mrf.mxu0
      %v7619 = vadd.f32 0.0, %v7618
      %v7620 = vpop.f32.mrf.mxu0
      %7621 = vmatprep.mubr.f32.mxu0 0.0
      %7622 = vmatmul.mubr.f32.gmra.mxu0 %v7427
      %v7623 = vpop.f32.mrf.mxu0
      %v7624 = vadd.f32 0.0, %v7623
      %v7625 = vpop.f32.mrf.mxu0
      %7626 = vmatprep.mubr.f32.mxu0 0.0
      %7627 = vmatmul.mubr.f32.gmra.mxu0 %v7430
      %v7628 = vpop.f32.mrf.mxu0
      %v7629 = vadd.f32 0.0, %v7628
      %v7630 = vpop.f32.mrf.mxu0
      %7631 = vmatprep.mubr.f32.mxu0 0.0
      %7632 = vmatmul.mubr.f32.gmra.mxu0 %v7433
      %v7633 = vpop.f32.mrf.mxu0
      %v7634 = vadd.f32 0.0, %v7633
      %v7635 = vpop.f32.mrf.mxu0
      %7636 = vmatprep.mubr.f32.mxu0 0.0
      %7637 = vmatmul.mubr.f32.gmra.mxu0 %v7436
      %v7638 = vpop.f32.mrf.mxu0
      %v7639 = vadd.f32 0.0, %v7638
      %v7640 = vpop.f32.mrf.mxu0
      %7641 = vmatprep.mubr.f32.mxu0 0.0
      %7642 = vmatmul.mubr.f32.gmra.mxu0 %v7439
      %v7643 = vpop.f32.mrf.mxu0
      %v7644 = vadd.f32 0.0, %v7643
      %v7645 = vpop.f32.mrf.mxu0
      %7646 = vmatprep.mubr.f32.mxu0 0.0
      %7647 = vmatmul.mubr.f32.gmra.mxu0 %v7442
      %v7648 = vpop.f32.mrf.mxu0
      %v7649 = vadd.f32 0.0, %v7648
      %v7650 = vpop.f32.mrf.mxu0
      %7651 = vmatprep.mubr.f32.mxu0 0.0
      %7652 = vmatmul.mubr.f32.gmra.mxu0 %v7445
      %v7653 = vpop.f32.mrf.mxu0
      %v7654 = vadd.f32 0.0, %v7653
      %v7655 = vpop.f32.mrf.mxu0
      %7656 = vmatprep.mubr.f32.mxu0 0.0
      %7657 = vmatmul.mubr.f32.gmra.mxu0 %v7448
      %v7658 = vpop.f32.mrf.mxu0
      %v7659 = vadd.f32 0.0, %v7658
      %v7660 = vpop.f32.mrf.mxu0
      %7661 = vmatprep.mubr.f32.mxu0 0.0
      %7662 = vmatmul.mubr.f32.gmra.mxu0 %v7451
      %v7663 = vpop.f32.mrf.mxu0
      %v7664 = vadd.f32 0.0, %v7663
      %v7665 = vpop.f32.mrf.mxu0
      %7666 = vmatprep.mubr.f32.mxu0 0.0
      %7667 = vmatmul.mubr.f32.gmra.mxu0 %v7454
      %v7668 = vpop.f32.mrf.mxu0
      %v7669 = vadd.f32 0.0, %v7668
      %v7670 = vpop.f32.mrf.mxu0
      %7671 = vmatprep.mubr.f32.mxu0 0.0
      %7672 = vmatmul.mubr.f32.gmra.mxu0 %v7457
      %v7673 = vpop.f32.mrf.mxu0
      %v7674 = vadd.f32 0.0, %v7673
      %v7675 = vpop.f32.mrf.mxu0
      %7676 = vmatprep.mubr.f32.mxu0 0.0
      %7677 = vmatmul.mubr.f32.gmra.mxu0 %v7460
      %v7678 = vpop.f32.mrf.mxu0
      %v7679 = vadd.f32 0.0, %v7678
      %v7680 = vpop.f32.mrf.mxu0
      %7681 = vmatprep.mubr.f32.mxu0 0.0
      %7682 = vmatmul.mubr.f32.gmra.mxu0 %v7463
      %v7683 = vpop.f32.mrf.mxu0
      %v7684 = vadd.f32 0.0, %v7683
      %v7685 = vpop.f32.mrf.mxu0
      %7686 = vmatprep.mubr.f32.mxu0 0.0
      %7687 = vmatmul.mubr.f32.gmra.mxu0 %v7466
      %v7688 = vpop.f32.mrf.mxu0
      %v7689 = vadd.f32 0.0, %v7688
      %v7690 = vpop.f32.mrf.mxu0
      %7691 = vmatprep.mubr.f32.mxu0 0.0
      %7692 = vmatmul.mubr.f32.gmra.mxu0 %v7469
      %v7693 = vpop.f32.mrf.mxu0
      %v7694 = vadd.f32 0.0, %v7693
      %v7695 = vpop.f32.mrf.mxu0
      %7696 = vmatprep.mubr.f32.mxu0 0.0
      %7697 = vmatmul.mubr.f32.gmra.mxu0 %v7472
      %v7698 = vpop.f32.mrf.mxu0
      %v7699 = vadd.f32 0.0, %v7698
      %v7700 = vpop.f32.mrf.mxu0
      %7701 = vmatprep.mubr.f32.mxu0 0.0
      %7702 = vmatmul.mubr.f32.gmra.mxu0 %v7475
      %v7703 = vpop.f32.mrf.mxu0
      %v7704 = vadd.f32 0.0, %v7703
      %v7705 = vpop.f32.mrf.mxu0
      %7706 = vmatprep.mubr.f32.mxu0 0.0
      %7707 = vmatmul.mubr.f32.gmra.mxu0 %v7478
      %v7708 = vpop.f32.mrf.mxu0
      %v7709 = vadd.f32 0.0, %v7708
      %v7710 = vpop.f32.mrf.mxu0
      %7711 = vmatprep.mubr.f32.mxu0 0.0
      %7712 = vmatmul.mubr.f32.gmra.mxu0 %v7481
      %v7713 = vpop.f32.mrf.mxu0
      %v7714 = vadd.f32 0.0, %v7713
      %v7715 = vpop.f32.mrf.mxu0
      %7716 = vmatprep.mubr.f32.mxu0 0.0
      %7717 = vmatmul.mubr.f32.gmra.mxu0 %v7484
      %v7718 = vpop.f32.mrf.mxu0
      %v7719 = vadd.f32 0.0, %v7718
      %v7720 = vpop.f32.mrf.mxu0
      %7721 = vmatprep.mubr.f32.mxu0 0.0
      %7722 = vmatmul.mubr.f32.gmra.mxu0 %v7487
      %v7723 = vpop.f32.mrf.mxu0
      %v7724 = vadd.f32 0.0, %v7723
      %v7725 = vpop.f32.mrf.mxu0
      %7726 = vmatprep.mubr.f32.mxu0 0.0
      %7727 = vmatmul.mubr.f32.gmra.mxu0 %v7490
      %v7728 = vpop.f32.mrf.mxu0
      %v7729 = vadd.f32 0.0, %v7728
      %v7730 = vpop.f32.mrf.mxu0
      %7731 = vmatprep.mubr.f32.mxu0 0.0
      %7732 = vmatmul.mubr.f32.gmra.mxu0 %v7493
      %v7733 = vpop.f32.mrf.mxu0
      %v7734 = vadd.f32 0.0, %v7733
      %v7735 = vpop.f32.mrf.mxu0
      %7736 = vmatprep.mubr.f32.mxu0 0.0
      %7737 = vmatmul.mubr.f32.gmra.mxu0 %v7496
      %v7738 = vpop.f32.mrf.mxu0
      %v7739 = vadd.f32 0.0, %v7738
      %v7740 = vpop.f32.mrf.mxu0
      %7741 = vmatprep.mubr.f32.mxu0 0.0
      %7742 = vmatmul.mubr.f32.gmra.mxu0 %v7499
      %v7743 = vpop.f32.mrf.mxu0
      %v7744 = vadd.f32 0.0, %v7743
      %v7745 = vpop.f32.mrf.mxu0
      %7746 = vmatprep.mubr.f32.mxu0 0.0
      %7747 = vmatmul.mubr.f32.gmra.mxu0 %v7502
      %v7748 = vpop.f32.mrf.mxu0
      %v7749 = vadd.f32 0.0, %v7748
      %v7750 = vpop.f32.mrf.mxu0
      %7751 = vmatprep.mubr.f32.mxu0 0.0
      %7752 = vmatmul.mubr.f32.gmra.mxu0 %v7505
      %v7753 = vpop.f32.mrf.mxu0
      %v7754 = vadd.f32 0.0, %v7753
      %v7755 = vpop.f32.mrf.mxu0
      %7756 = vmatprep.mubr.f32.mxu0 0.0
      %7757 = vmatmul.mubr.f32.gmra.mxu0 %v7508
      %v7758 = vpop.f32.mrf.mxu0
      %v7759 = vadd.f32 0.0, %v7758
      %v7760 = vpop.f32.mrf.mxu0
      %7761 = vmatprep.mubr.f32.mxu0 0.0
      %7762 = vmatmul.mubr.f32.gmra.mxu0 %v7511
      %v7763 = vpop.f32.mrf.mxu0
      %v7764 = vadd.f32 0.0, %v7763
      %v7765 = vpop.f32.mrf.mxu0
      %7766 = vmatprep.mubr.f32.mxu0 0.0
      %7767 = vmatmul.mubr.f32.gmra.mxu0 %v7514
      %v7768 = vpop.f32.mrf.mxu0
      %v7769 = vadd.f32 0.0, %v7768
      %v7770 = vpop.f32.mrf.mxu0
      %7771 = vmatprep.mubr.f32.mxu0 0.0
      %7772 = vmatmul.mubr.f32.gmra.mxu0 %v7517
      %v7773 = vpop.f32.mrf.mxu0
      %v7774 = vadd.f32 0.0, %v7773
      %v7775 = vpop.f32.mrf.mxu0
      %7776 = vmatprep.mubr.f32.mxu0 0.0
      %7777 = vmatmul.mubr.f32.gmra.mxu0 %v7520
      %v7778 = vpop.f32.mrf.mxu0
      %v7779 = vadd.f32 0.0, %v7778
      %v7780 = vpop.f32.mrf.mxu0
      %7781 = vmatprep.mubr.f32.mxu0 0.0
      %7782 = vmatmul.mubr.f32.gmra.mxu0 %v7523
      %v7783 = vpop.f32.mrf.mxu0
      %v7784 = vadd.f32 0.0, %v7783
      %v7785 = vpop.f32.mrf.mxu0
      %7786 = vmatprep.mubr.f32.mxu0 0.0
      %7787 = vmatmul.mubr.f32.gmra.mxu0 %v7526
      %v7788 = vpop.f32.mrf.mxu0
      %v7789 = vadd.f32 0.0, %v7788
      %v7790 = vpop.f32.mrf.mxu0
      %7791 = vmatprep.mubr.f32.mxu0 0.0
      %7792 = vmatmul.mubr.f32.gmra.mxu0 %v7529
      %v7793 = vpop.f32.mrf.mxu0
      %v7794 = vadd.f32 0.0, %v7793
      %v7795 = vpop.f32.mrf.mxu0
      %7796 = vmatprep.mubr.f32.mxu0 0.0
      %7797 = vmatmul.mubr.f32.gmra.mxu0 %v7532
      %v7798 = vpop.f32.mrf.mxu0
      %v7799 = vadd.f32 0.0, %v7798
      %v7800 = vpop.f32.mrf.mxu0
      %7801 = vmatprep.mubr.f32.mxu0 0.0
      %7802 = vmatmul.mubr.f32.gmra.mxu0 %v7535
      %v7803 = vpop.f32.mrf.mxu0
      %v7804 = vadd.f32 0.0, %v7803
      %v7805 = vpop.f32.mrf.mxu0
      %7806 = vdwg.mxu0
      %v7807 = vadd.f32 %v7330, %v7604
      %v7808 = vadd.f32 %v7331, %v7609
      %v7809 = vadd.f32 %v7332, %v7614
      %v7810 = vadd.f32 %v7333, %v7619
      %v7811 = vadd.f32 %v7334, %v7624
      %v7812 = vadd.f32 %v7335, %v7629
      %v7813 = vadd.f32 %v7336, %v7634
      %v7814 = vadd.f32 %v7337, %v7639
      %v7815 = vadd.f32 %v7338, %v7644
      %v7816 = vadd.f32 %v7339, %v7649
      %v7817 = vadd.f32 %v7340, %v7654
      %v7818 = vadd.f32 %v7341, %v7659
      %v7819 = vadd.f32 %v7342, %v7664
      %v7820 = vadd.f32 %v7343, %v7669
      %v7821 = vadd.f32 %v7344, %v7674
      %v7822 = vadd.f32 %v7345, %v7679
      %v7823 = vadd.f32 %v7346, %v7684
      %v7824 = vadd.f32 %v7347, %v7689
      %v7825 = vadd.f32 %v7348, %v7694
      %v7826 = vadd.f32 %v7349, %v7699
      %v7827 = vadd.f32 %v7350, %v7704
      %v7828 = vadd.f32 %v7351, %v7709
      %v7829 = vadd.f32 %v7352, %v7714
      %v7830 = vadd.f32 %v7353, %v7719
      %v7831 = vadd.f32 %v7354, %v7724
      %v7832 = vadd.f32 %v7355, %v7729
      %v7833 = vadd.f32 %v7356, %v7734
      %v7834 = vadd.f32 %v7357, %v7739
      %v7835 = vadd.f32 %v7358, %v7744
      %v7836 = vadd.f32 %v7359, %v7749
      %v7837 = vadd.f32 %v7360, %v7754
      %v7838 = vadd.f32 %v7361, %v7759
      %v7839 = vadd.f32 %v7362, %v7764
      %v7840 = vadd.f32 %v7363, %v7769
      %v7841 = vadd.f32 %v7364, %v7774
      %v7842 = vadd.f32 %v7365, %v7779
      %v7843 = vadd.f32 %v7366, %v7784
      %v7844 = vadd.f32 %v7367, %v7789
      %v7845 = vadd.f32 %v7368, %v7794
      %v7846 = vadd.f32 %v7369, %v7799
      %v7847 = vadd.f32 %v7370, %v7804
      %v7848 = vld [vmem:[#allocation2 + $0x29] sm:$0xff]
      %v7849 = vld [vmem:[#allocation2 + $0x31] sm:$0xff]
      %v7850 = vld [vmem:[#allocation2 + $0x39] sm:$0xff]
      %v7851 = vld [vmem:[#allocation2 + $0x41] sm:$0xff]
      %v7852 = vld [vmem:[#allocation2 + $0x49] sm:$0xff]
      %v7853 = vld [vmem:[#allocation2 + $0x51] sm:$0xff]
      %v7854 = vld [vmem:[#allocation2 + $0x59] sm:$0xff]
      %v7855 = vld [vmem:[#allocation2 + $0x61] sm:$0xff]
      %v7856 = vld [vmem:[#allocation2 + $0x69] sm:$0xff]
      %v7857 = vld [vmem:[#allocation2 + $0x71] sm:$0xff]
      %v7858 = vld [vmem:[#allocation2 + $0x79] sm:$0xff]
      %v7859 = vld [vmem:[#allocation2 + $0x81] sm:$0xff]
      %v7860 = vld [vmem:[#allocation2 + $0x89] sm:$0xff]
      %v7861 = vld [vmem:[#allocation2 + $0x91] sm:$0xff]
      %v7862 = vld [vmem:[#allocation2 + $0x99] sm:$0xff]
      %v7863 = vld [vmem:[#allocation2 + $0xa1] sm:$0xff]
      %v7864 = vld [vmem:[#allocation2 + $0xa9] sm:$0xff]
      %v7865 = vld [vmem:[#allocation2 + $0xb1] sm:$0xff]
      %v7866 = vld [vmem:[#allocation2 + $0xb9] sm:$0xff]
      %v7867 = vld [vmem:[#allocation2 + $0xc1] sm:$0xff]
      %v7868 = vld [vmem:[#allocation2 + $0xc9] sm:$0xff]
      %v7869 = vld [vmem:[#allocation2 + $0xd1] sm:$0xff]
      %v7870 = vld [vmem:[#allocation2 + $0xd9] sm:$0xff]
      %v7871 = vld [vmem:[#allocation2 + $0xe1] sm:$0xff]
      %v7872 = vld [vmem:[#allocation2 + $0xe9] sm:$0xff]
      %v7873 = vld [vmem:[#allocation2 + $0xf1] sm:$0xff]
      %v7874 = vld [vmem:[#allocation2 + $0xf9] sm:$0xff]
      %v7875 = vld [vmem:[#allocation2 + $0x101] sm:$0xff]
      %v7876 = vld [vmem:[#allocation2 + $0x109] sm:$0xff]
      %v7877 = vld [vmem:[#allocation2 + $0x111] sm:$0xff]
      %v7878 = vld [vmem:[#allocation2 + $0x119] sm:$0xff]
      %v7879 = vld [vmem:[#allocation2 + $0x121] sm:$0xff]
      %v7880 = vld [vmem:[#allocation2 + $0x129] sm:$0xff]
      %v7881 = vld [vmem:[#allocation2 + $0x131] sm:$0xff]
      %v7882 = vld [vmem:[#allocation2 + $0x139] sm:$0xff]
      %v7883 = vld [vmem:[#allocation2 + $0x141] sm:$0xff]
      %v7884 = vld [vmem:[#allocation2 + $0x149] sm:$0xff]
      %v7885 = vld [vmem:[#allocation2 + $0x151] sm:$0xff]
      %v7886 = vld [vmem:[#allocation2 + $0x159] sm:$0xff]
      %v7887 = vld [vmem:[#allocation2 + $0x161] sm:$0xff]
      %v7888 = vld [vmem:[#allocation2 + $0x169] sm:$0xf]
      %v7889 = vld [vmem:[%s3 + $0x60] sm:$0xff]
      %v7890 = vld [vmem:[%s3 + $0x68] sm:$0xff]
      %v7892 = vsel %vm5018, %v7848, 0
      %v7895 = vsel %vm5018, %v7849, 0
      %v7898 = vsel %vm5018, %v7850, 0
      %v7901 = vsel %vm5018, %v7851, 0
      %v7904 = vsel %vm5018, %v7852, 0
      %v7907 = vsel %vm5018, %v7853, 0
      %v7910 = vsel %vm5018, %v7854, 0
      %v7913 = vsel %vm5018, %v7855, 0
      %v7916 = vsel %vm5018, %v7856, 0
      %v7919 = vsel %vm5018, %v7857, 0
      %v7922 = vsel %vm5018, %v7858, 0
      %v7925 = vsel %vm5018, %v7859, 0
      %v7928 = vsel %vm5018, %v7860, 0
      %v7931 = vsel %vm5018, %v7861, 0
      %v7934 = vsel %vm5018, %v7862, 0
      %v7937 = vsel %vm5018, %v7863, 0
      %v7940 = vsel %vm5018, %v7864, 0
      %v7943 = vsel %vm5018, %v7865, 0
      %v7946 = vsel %vm5018, %v7866, 0
      %v7949 = vsel %vm5018, %v7867, 0
      %v7952 = vsel %vm5018, %v7868, 0
      %v7955 = vsel %vm5018, %v7869, 0
      %v7958 = vsel %vm5018, %v7870, 0
      %v7961 = vsel %vm5018, %v7871, 0
      %v7964 = vsel %vm5018, %v7872, 0
      %v7967 = vsel %vm5018, %v7873, 0
      %v7970 = vsel %vm5018, %v7874, 0
      %v7973 = vsel %vm5018, %v7875, 0
      %v7976 = vsel %vm5018, %v7876, 0
      %v7979 = vsel %vm5018, %v7877, 0
      %v7982 = vsel %vm5018, %v7878, 0
      %v7985 = vsel %vm5018, %v7879, 0
      %v7988 = vsel %vm5018, %v7880, 0
      %v7991 = vsel %vm5018, %v7881, 0
      %v7994 = vsel %vm5018, %v7882, 0
      %v7997 = vsel %vm5018, %v7883, 0
      %v8000 = vsel %vm5018, %v7884, 0
      %v8003 = vsel %vm5018, %v7885, 0
      %v8006 = vsel %vm5018, %v7886, 0
      %v8009 = vsel %vm5018, %v7887, 0
      %v8012 = vsel %vm5018, %v7888, 0
      %8014 = vmatprep.subr.mxu0 0.0
      %8015 = vmatpush1.msra.mxu0 0.0
      %8016 = vmatprep.subr.mxu0 0.0
      %8017 = vmatpush1.msra.mxu0 0.0
      %8018 = vmatprep.subr.mxu0 0.0
      %8019 = vmatpush1.msra.mxu0 0.0
      %8020 = vmatprep.subr.mxu0 0.0
      %8021 = vmatpush1.msra.mxu0 0.0
      %8022 = vmatprep.subr.mxu0 0.0
      %8023 = vmatpush1.msra.mxu0 0.0
      %8024 = vmatprep.subr.mxu0 0.0
      %8025 = vmatpush1.msra.mxu0 0.0
      %8026 = vmatprep.subr.mxu0 0.0
      %8027 = vmatpush1.msra.mxu0 0.0
      %8028 = vmatprep.subr.mxu0 0.0
      %8029 = vmatpush1.msra.mxu0 0.0
      %8030 = vmatprep.subr.mxu0 0.0
      %8031 = vmatpush1.msra.mxu0 0.0
      %8032 = vmatprep.subr.mxu0 0.0
      %8033 = vmatpush1.msra.mxu0 0.0
      %8034 = vmatprep.subr.mxu0 0.0
      %8035 = vmatpush1.msra.mxu0 0.0
      %8036 = vmatprep.subr.mxu0 0.0
      %8037 = vmatpush1.msra.mxu0 0.0
      %8038 = vmatprep.subr.mxu0 0.0
      %8039 = vmatpush1.msra.mxu0 0.0
      %8040 = vmatprep.subr.mxu0 0.0
      %8041 = vmatpush1.msra.mxu0 0.0
      %8042 = vmatprep.subr.mxu0 0.0
      %8043 = vmatpush1.msra.mxu0 %v7890
      %8044 = vmatprep.subr.mxu0 0.0
      %8045 = vmatpush1.msra.mxu0 %v7889
      %8046 = vmatprep.subr.mxu0 0.0
      %8047 = vmatpush2.msra.mxu0 0.0
      %8048 = vmatprep.subr.mxu0 0.0
      %8049 = vmatpush2.msra.mxu0 0.0
      %8050 = vmatprep.subr.mxu0 0.0
      %8051 = vmatpush2.msra.mxu0 0.0
      %8052 = vmatprep.subr.mxu0 0.0
      %8053 = vmatpush2.msra.mxu0 0.0
      %8054 = vmatprep.subr.mxu0 0.0
      %8055 = vmatpush2.msra.mxu0 0.0
      %8056 = vmatprep.subr.mxu0 0.0
      %8057 = vmatpush2.msra.mxu0 0.0
      %8058 = vmatprep.subr.mxu0 0.0
      %8059 = vmatpush2.msra.mxu0 0.0
      %8060 = vmatprep.subr.mxu0 0.0
      %8061 = vmatpush2.msra.mxu0 0.0
      %8062 = vmatprep.subr.mxu0 0.0
      %8063 = vmatpush2.msra.mxu0 0.0
      %8064 = vmatprep.subr.mxu0 0.0
      %8065 = vmatpush2.msra.mxu0 0.0
      %8066 = vmatprep.subr.mxu0 0.0
      %8067 = vmatpush2.msra.mxu0 0.0
      %8068 = vmatprep.subr.mxu0 0.0
      %8069 = vmatpush2.msra.mxu0 0.0
      %8070 = vmatprep.subr.mxu0 0.0
      %8071 = vmatpush2.msra.mxu0 0.0
      %8072 = vmatprep.subr.mxu0 0.0
      %8073 = vmatpush2.msra.mxu0 0.0
      %8074 = vmatprep.subr.mxu0 0.0
      %8075 = vmatpush2.msra.mxu0 0.0
      %8076 = vmatprep.subr.mxu0 0.0
      %8077 = vmatpush2.msra.mxu0 0.0
      %8078 = vmatprep.mubr.f32.mxu0 0.0
      %8079 = vmatmul.mubr.f32.gmra.mxu0 %v7892
      %v8080 = vpop.f32.mrf.mxu0
      %v8081 = vadd.f32 0.0, %v8080
      %v8082 = vpop.f32.mrf.mxu0
      %8083 = vmatprep.mubr.f32.mxu0 0.0
      %8084 = vmatmul.mubr.f32.gmra.mxu0 %v7895
      %v8085 = vpop.f32.mrf.mxu0
      %v8086 = vadd.f32 0.0, %v8085
      %v8087 = vpop.f32.mrf.mxu0
      %8088 = vmatprep.mubr.f32.mxu0 0.0
      %8089 = vmatmul.mubr.f32.gmra.mxu0 %v7898
      %v8090 = vpop.f32.mrf.mxu0
      %v8091 = vadd.f32 0.0, %v8090
      %v8092 = vpop.f32.mrf.mxu0
      %8093 = vmatprep.mubr.f32.mxu0 0.0
      %8094 = vmatmul.mubr.f32.gmra.mxu0 %v7901
      %v8095 = vpop.f32.mrf.mxu0
      %v8096 = vadd.f32 0.0, %v8095
      %v8097 = vpop.f32.mrf.mxu0
      %8098 = vmatprep.mubr.f32.mxu0 0.0
      %8099 = vmatmul.mubr.f32.gmra.mxu0 %v7904
      %v8100 = vpop.f32.mrf.mxu0
      %v8101 = vadd.f32 0.0, %v8100
      %v8102 = vpop.f32.mrf.mxu0
      %8103 = vmatprep.mubr.f32.mxu0 0.0
      %8104 = vmatmul.mubr.f32.gmra.mxu0 %v7907
      %v8105 = vpop.f32.mrf.mxu0
      %v8106 = vadd.f32 0.0, %v8105
      %v8107 = vpop.f32.mrf.mxu0
      %8108 = vmatprep.mubr.f32.mxu0 0.0
      %8109 = vmatmul.mubr.f32.gmra.mxu0 %v7910
      %v8110 = vpop.f32.mrf.mxu0
      %v8111 = vadd.f32 0.0, %v8110
      %v8112 = vpop.f32.mrf.mxu0
      %8113 = vmatprep.mubr.f32.mxu0 0.0
      %8114 = vmatmul.mubr.f32.gmra.mxu0 %v7913
      %v8115 = vpop.f32.mrf.mxu0
      %v8116 = vadd.f32 0.0, %v8115
      %v8117 = vpop.f32.mrf.mxu0
      %8118 = vmatprep.mubr.f32.mxu0 0.0
      %8119 = vmatmul.mubr.f32.gmra.mxu0 %v7916
      %v8120 = vpop.f32.mrf.mxu0
      %v8121 = vadd.f32 0.0, %v8120
      %v8122 = vpop.f32.mrf.mxu0
      %8123 = vmatprep.mubr.f32.mxu0 0.0
      %8124 = vmatmul.mubr.f32.gmra.mxu0 %v7919
      %v8125 = vpop.f32.mrf.mxu0
      %v8126 = vadd.f32 0.0, %v8125
      %v8127 = vpop.f32.mrf.mxu0
      %8128 = vmatprep.mubr.f32.mxu0 0.0
      %8129 = vmatmul.mubr.f32.gmra.mxu0 %v7922
      %v8130 = vpop.f32.mrf.mxu0
      %v8131 = vadd.f32 0.0, %v8130
      %v8132 = vpop.f32.mrf.mxu0
      %8133 = vmatprep.mubr.f32.mxu0 0.0
      %8134 = vmatmul.mubr.f32.gmra.mxu0 %v7925
      %v8135 = vpop.f32.mrf.mxu0
      %v8136 = vadd.f32 0.0, %v8135
      %v8137 = vpop.f32.mrf.mxu0
      %8138 = vmatprep.mubr.f32.mxu0 0.0
      %8139 = vmatmul.mubr.f32.gmra.mxu0 %v7928
      %v8140 = vpop.f32.mrf.mxu0
      %v8141 = vadd.f32 0.0, %v8140
      %v8142 = vpop.f32.mrf.mxu0
      %8143 = vmatprep.mubr.f32.mxu0 0.0
      %8144 = vmatmul.mubr.f32.gmra.mxu0 %v7931
      %v8145 = vpop.f32.mrf.mxu0
      %v8146 = vadd.f32 0.0, %v8145
      %v8147 = vpop.f32.mrf.mxu0
      %8148 = vmatprep.mubr.f32.mxu0 0.0
      %8149 = vmatmul.mubr.f32.gmra.mxu0 %v7934
      %v8150 = vpop.f32.mrf.mxu0
      %v8151 = vadd.f32 0.0, %v8150
      %v8152 = vpop.f32.mrf.mxu0
      %8153 = vmatprep.mubr.f32.mxu0 0.0
      %8154 = vmatmul.mubr.f32.gmra.mxu0 %v7937
      %v8155 = vpop.f32.mrf.mxu0
      %v8156 = vadd.f32 0.0, %v8155
      %v8157 = vpop.f32.mrf.mxu0
      %8158 = vmatprep.mubr.f32.mxu0 0.0
      %8159 = vmatmul.mubr.f32.gmra.mxu0 %v7940
      %v8160 = vpop.f32.mrf.mxu0
      %v8161 = vadd.f32 0.0, %v8160
      %v8162 = vpop.f32.mrf.mxu0
      %8163 = vmatprep.mubr.f32.mxu0 0.0
      %8164 = vmatmul.mubr.f32.gmra.mxu0 %v7943
      %v8165 = vpop.f32.mrf.mxu0
      %v8166 = vadd.f32 0.0, %v8165
      %v8167 = vpop.f32.mrf.mxu0
      %8168 = vmatprep.mubr.f32.mxu0 0.0
      %8169 = vmatmul.mubr.f32.gmra.mxu0 %v7946
      %v8170 = vpop.f32.mrf.mxu0
      %v8171 = vadd.f32 0.0, %v8170
      %v8172 = vpop.f32.mrf.mxu0
      %8173 = vmatprep.mubr.f32.mxu0 0.0
      %8174 = vmatmul.mubr.f32.gmra.mxu0 %v7949
      %v8175 = vpop.f32.mrf.mxu0
      %v8176 = vadd.f32 0.0, %v8175
      %v8177 = vpop.f32.mrf.mxu0
      %8178 = vmatprep.mubr.f32.mxu0 0.0
      %8179 = vmatmul.mubr.f32.gmra.mxu0 %v7952
      %v8180 = vpop.f32.mrf.mxu0
      %v8181 = vadd.f32 0.0, %v8180
      %v8182 = vpop.f32.mrf.mxu0
      %8183 = vmatprep.mubr.f32.mxu0 0.0
      %8184 = vmatmul.mubr.f32.gmra.mxu0 %v7955
      %v8185 = vpop.f32.mrf.mxu0
      %v8186 = vadd.f32 0.0, %v8185
      %v8187 = vpop.f32.mrf.mxu0
      %8188 = vmatprep.mubr.f32.mxu0 0.0
      %8189 = vmatmul.mubr.f32.gmra.mxu0 %v7958
      %v8190 = vpop.f32.mrf.mxu0
      %v8191 = vadd.f32 0.0, %v8190
      %v8192 = vpop.f32.mrf.mxu0
      %8193 = vmatprep.mubr.f32.mxu0 0.0
      %8194 = vmatmul.mubr.f32.gmra.mxu0 %v7961
      %v8195 = vpop.f32.mrf.mxu0
      %v8196 = vadd.f32 0.0, %v8195
      %v8197 = vpop.f32.mrf.mxu0
      %8198 = vmatprep.mubr.f32.mxu0 0.0
      %8199 = vmatmul.mubr.f32.gmra.mxu0 %v7964
      %v8200 = vpop.f32.mrf.mxu0
      %v8201 = vadd.f32 0.0, %v8200
      %v8202 = vpop.f32.mrf.mxu0
      %8203 = vmatprep.mubr.f32.mxu0 0.0
      %8204 = vmatmul.mubr.f32.gmra.mxu0 %v7967
      %v8205 = vpop.f32.mrf.mxu0
      %v8206 = vadd.f32 0.0, %v8205
      %v8207 = vpop.f32.mrf.mxu0
      %8208 = vmatprep.mubr.f32.mxu0 0.0
      %8209 = vmatmul.mubr.f32.gmra.mxu0 %v7970
      %v8210 = vpop.f32.mrf.mxu0
      %v8211 = vadd.f32 0.0, %v8210
      %v8212 = vpop.f32.mrf.mxu0
      %8213 = vmatprep.mubr.f32.mxu0 0.0
      %8214 = vmatmul.mubr.f32.gmra.mxu0 %v7973
      %v8215 = vpop.f32.mrf.mxu0
      %v8216 = vadd.f32 0.0, %v8215
      %v8217 = vpop.f32.mrf.mxu0
      %8218 = vmatprep.mubr.f32.mxu0 0.0
      %8219 = vmatmul.mubr.f32.gmra.mxu0 %v7976
      %v8220 = vpop.f32.mrf.mxu0
      %v8221 = vadd.f32 0.0, %v8220
      %v8222 = vpop.f32.mrf.mxu0
      %8223 = vmatprep.mubr.f32.mxu0 0.0
      %8224 = vmatmul.mubr.f32.gmra.mxu0 %v7979
      %v8225 = vpop.f32.mrf.mxu0
      %v8226 = vadd.f32 0.0, %v8225
      %v8227 = vpop.f32.mrf.mxu0
      %8228 = vmatprep.mubr.f32.mxu0 0.0
      %8229 = vmatmul.mubr.f32.gmra.mxu0 %v7982
      %v8230 = vpop.f32.mrf.mxu0
      %v8231 = vadd.f32 0.0, %v8230
      %v8232 = vpop.f32.mrf.mxu0
      %8233 = vmatprep.mubr.f32.mxu0 0.0
      %8234 = vmatmul.mubr.f32.gmra.mxu0 %v7985
      %v8235 = vpop.f32.mrf.mxu0
      %v8236 = vadd.f32 0.0, %v8235
      %v8237 = vpop.f32.mrf.mxu0
      %8238 = vmatprep.mubr.f32.mxu0 0.0
      %8239 = vmatmul.mubr.f32.gmra.mxu0 %v7988
      %v8240 = vpop.f32.mrf.mxu0
      %v8241 = vadd.f32 0.0, %v8240
      %v8242 = vpop.f32.mrf.mxu0
      %8243 = vmatprep.mubr.f32.mxu0 0.0
      %8244 = vmatmul.mubr.f32.gmra.mxu0 %v7991
      %v8245 = vpop.f32.mrf.mxu0
      %v8246 = vadd.f32 0.0, %v8245
      %v8247 = vpop.f32.mrf.mxu0
      %8248 = vmatprep.mubr.f32.mxu0 0.0
      %8249 = vmatmul.mubr.f32.gmra.mxu0 %v7994
      %v8250 = vpop.f32.mrf.mxu0
      %v8251 = vadd.f32 0.0, %v8250
      %v8252 = vpop.f32.mrf.mxu0
      %8253 = vmatprep.mubr.f32.mxu0 0.0
      %8254 = vmatmul.mubr.f32.gmra.mxu0 %v7997
      %v8255 = vpop.f32.mrf.mxu0
      %v8256 = vadd.f32 0.0, %v8255
      %v8257 = vpop.f32.mrf.mxu0
      %8258 = vmatprep.mubr.f32.mxu0 0.0
      %8259 = vmatmul.mubr.f32.gmra.mxu0 %v8000
      %v8260 = vpop.f32.mrf.mxu0
      %v8261 = vadd.f32 0.0, %v8260
      %v8262 = vpop.f32.mrf.mxu0
      %8263 = vmatprep.mubr.f32.mxu0 0.0
      %8264 = vmatmul.mubr.f32.gmra.mxu0 %v8003
      %v8265 = vpop.f32.mrf.mxu0
      %v8266 = vadd.f32 0.0, %v8265
      %v8267 = vpop.f32.mrf.mxu0
      %8268 = vmatprep.mubr.f32.mxu0 0.0
      %8269 = vmatmul.mubr.f32.gmra.mxu0 %v8006
      %v8270 = vpop.f32.mrf.mxu0
      %v8271 = vadd.f32 0.0, %v8270
      %v8272 = vpop.f32.mrf.mxu0
      %8273 = vmatprep.mubr.f32.mxu0 0.0
      %8274 = vmatmul.mubr.f32.gmra.mxu0 %v8009
      %v8275 = vpop.f32.mrf.mxu0
      %v8276 = vadd.f32 0.0, %v8275
      %v8277 = vpop.f32.mrf.mxu0
      %8278 = vmatprep.mubr.f32.mxu0 0.0
      %8279 = vmatmul.mubr.f32.gmra.mxu0 %v8012
      %v8280 = vpop.f32.mrf.mxu0
      %v8281 = vadd.f32 0.0, %v8280
      %v8282 = vpop.f32.mrf.mxu0
      %8283 = vdwg.mxu0
      %v8284 = vadd.f32 %v7807, %v8081
      %v8285 = vadd.f32 %v7808, %v8086
      %v8286 = vadd.f32 %v7809, %v8091
      %v8287 = vadd.f32 %v7810, %v8096
      %v8288 = vadd.f32 %v7811, %v8101
      %v8289 = vadd.f32 %v7812, %v8106
      %v8290 = vadd.f32 %v7813, %v8111
      %v8291 = vadd.f32 %v7814, %v8116
      %v8292 = vadd.f32 %v7815, %v8121
      %v8293 = vadd.f32 %v7816, %v8126
      %v8294 = vadd.f32 %v7817, %v8131
      %v8295 = vadd.f32 %v7818, %v8136
      %v8296 = vadd.f32 %v7819, %v8141
      %v8297 = vadd.f32 %v7820, %v8146
      %v8298 = vadd.f32 %v7821, %v8151
      %v8299 = vadd.f32 %v7822, %v8156
      %v8300 = vadd.f32 %v7823, %v8161
      %v8301 = vadd.f32 %v7824, %v8166
      %v8302 = vadd.f32 %v7825, %v8171
      %v8303 = vadd.f32 %v7826, %v8176
      %v8304 = vadd.f32 %v7827, %v8181
      %v8305 = vadd.f32 %v7828, %v8186
      %v8306 = vadd.f32 %v7829, %v8191
      %v8307 = vadd.f32 %v7830, %v8196
      %v8308 = vadd.f32 %v7831, %v8201
      %v8309 = vadd.f32 %v7832, %v8206
      %v8310 = vadd.f32 %v7833, %v8211
      %v8311 = vadd.f32 %v7834, %v8216
      %v8312 = vadd.f32 %v7835, %v8221
      %v8313 = vadd.f32 %v7836, %v8226
      %v8314 = vadd.f32 %v7837, %v8231
      %v8315 = vadd.f32 %v7838, %v8236
      %v8316 = vadd.f32 %v7839, %v8241
      %v8317 = vadd.f32 %v7840, %v8246
      %v8318 = vadd.f32 %v7841, %v8251
      %v8319 = vadd.f32 %v7842, %v8256
      %v8320 = vadd.f32 %v7843, %v8261
      %v8321 = vadd.f32 %v7844, %v8266
      %v8322 = vadd.f32 %v7845, %v8271
      %v8323 = vadd.f32 %v7846, %v8276
      %v8324 = vadd.f32 %v7847, %v8281
      %v8325 = vld [vmem:[#allocation2 + $0x2a] sm:$0xff]
      %v8326 = vld [vmem:[#allocation2 + $0x32] sm:$0xff]
      %v8327 = vld [vmem:[#allocation2 + $0x3a] sm:$0xff]
      %v8328 = vld [vmem:[#allocation2 + $0x42] sm:$0xff]
      %v8329 = vld [vmem:[#allocation2 + $0x4a] sm:$0xff]
      %v8330 = vld [vmem:[#allocation2 + $0x52] sm:$0xff]
      %v8331 = vld [vmem:[#allocation2 + $0x5a] sm:$0xff]
      %v8332 = vld [vmem:[#allocation2 + $0x62] sm:$0xff]
      %v8333 = vld [vmem:[#allocation2 + $0x6a] sm:$0xff]
      %v8334 = vld [vmem:[#allocation2 + $0x72] sm:$0xff]
      %v8335 = vld [vmem:[#allocation2 + $0x7a] sm:$0xff]
      %v8336 = vld [vmem:[#allocation2 + $0x82] sm:$0xff]
      %v8337 = vld [vmem:[#allocation2 + $0x8a] sm:$0xff]
      %v8338 = vld [vmem:[#allocation2 + $0x92] sm:$0xff]
      %v8339 = vld [vmem:[#allocation2 + $0x9a] sm:$0xff]
      %v8340 = vld [vmem:[#allocation2 + $0xa2] sm:$0xff]
      %v8341 = vld [vmem:[#allocation2 + $0xaa] sm:$0xff]
      %v8342 = vld [vmem:[#allocation2 + $0xb2] sm:$0xff]
      %v8343 = vld [vmem:[#allocation2 + $0xba] sm:$0xff]
      %v8344 = vld [vmem:[#allocation2 + $0xc2] sm:$0xff]
      %v8345 = vld [vmem:[#allocation2 + $0xca] sm:$0xff]
      %v8346 = vld [vmem:[#allocation2 + $0xd2] sm:$0xff]
      %v8347 = vld [vmem:[#allocation2 + $0xda] sm:$0xff]
      %v8348 = vld [vmem:[#allocation2 + $0xe2] sm:$0xff]
      %v8349 = vld [vmem:[#allocation2 + $0xea] sm:$0xff]
      %v8350 = vld [vmem:[#allocation2 + $0xf2] sm:$0xff]
      %v8351 = vld [vmem:[#allocation2 + $0xfa] sm:$0xff]
      %v8352 = vld [vmem:[#allocation2 + $0x102] sm:$0xff]
      %v8353 = vld [vmem:[#allocation2 + $0x10a] sm:$0xff]
      %v8354 = vld [vmem:[#allocation2 + $0x112] sm:$0xff]
      %v8355 = vld [vmem:[#allocation2 + $0x11a] sm:$0xff]
      %v8356 = vld [vmem:[#allocation2 + $0x122] sm:$0xff]
      %v8357 = vld [vmem:[#allocation2 + $0x12a] sm:$0xff]
      %v8358 = vld [vmem:[#allocation2 + $0x132] sm:$0xff]
      %v8359 = vld [vmem:[#allocation2 + $0x13a] sm:$0xff]
      %v8360 = vld [vmem:[#allocation2 + $0x142] sm:$0xff]
      %v8361 = vld [vmem:[#allocation2 + $0x14a] sm:$0xff]
      %v8362 = vld [vmem:[#allocation2 + $0x152] sm:$0xff]
      %v8363 = vld [vmem:[#allocation2 + $0x15a] sm:$0xff]
      %v8364 = vld [vmem:[#allocation2 + $0x162] sm:$0xff]
      %v8365 = vld [vmem:[#allocation2 + $0x16a] sm:$0xf]
      %v8366 = vld [vmem:[%s3 + $0x70] sm:$0xff]
      %v8367 = vld [vmem:[%s3 + $0x78] sm:$0xff]
      %v8369 = vsel %vm5018, %v8325, 0
      %v8372 = vsel %vm5018, %v8326, 0
      %v8375 = vsel %vm5018, %v8327, 0
      %v8378 = vsel %vm5018, %v8328, 0
      %v8381 = vsel %vm5018, %v8329, 0
      %v8384 = vsel %vm5018, %v8330, 0
      %v8387 = vsel %vm5018, %v8331, 0
      %v8390 = vsel %vm5018, %v8332, 0
      %v8393 = vsel %vm5018, %v8333, 0
      %v8396 = vsel %vm5018, %v8334, 0
      %v8399 = vsel %vm5018, %v8335, 0
      %v8402 = vsel %vm5018, %v8336, 0
      %v8405 = vsel %vm5018, %v8337, 0
      %v8408 = vsel %vm5018, %v8338, 0
      %v8411 = vsel %vm5018, %v8339, 0
      %v8414 = vsel %vm5018, %v8340, 0
      %v8417 = vsel %vm5018, %v8341, 0
      %v8420 = vsel %vm5018, %v8342, 0
      %v8423 = vsel %vm5018, %v8343, 0
      %v8426 = vsel %vm5018, %v8344, 0
      %v8429 = vsel %vm5018, %v8345, 0
      %v8432 = vsel %vm5018, %v8346, 0
      %v8435 = vsel %vm5018, %v8347, 0
      %v8438 = vsel %vm5018, %v8348, 0
      %v8441 = vsel %vm5018, %v8349, 0
      %v8444 = vsel %vm5018, %v8350, 0
      %v8447 = vsel %vm5018, %v8351, 0
      %v8450 = vsel %vm5018, %v8352, 0
      %v8453 = vsel %vm5018, %v8353, 0
      %v8456 = vsel %vm5018, %v8354, 0
      %v8459 = vsel %vm5018, %v8355, 0
      %v8462 = vsel %vm5018, %v8356, 0
      %v8465 = vsel %vm5018, %v8357, 0
      %v8468 = vsel %vm5018, %v8358, 0
      %v8471 = vsel %vm5018, %v8359, 0
      %v8474 = vsel %vm5018, %v8360, 0
      %v8477 = vsel %vm5018, %v8361, 0
      %v8480 = vsel %vm5018, %v8362, 0
      %v8483 = vsel %vm5018, %v8363, 0
      %v8486 = vsel %vm5018, %v8364, 0
      %v8489 = vsel %vm5018, %v8365, 0
      %8491 = vmatprep.subr.mxu0 0.0
      %8492 = vmatpush1.msra.mxu0 0.0
      %8493 = vmatprep.subr.mxu0 0.0
      %8494 = vmatpush1.msra.mxu0 0.0
      %8495 = vmatprep.subr.mxu0 0.0
      %8496 = vmatpush1.msra.mxu0 0.0
      %8497 = vmatprep.subr.mxu0 0.0
      %8498 = vmatpush1.msra.mxu0 0.0
      %8499 = vmatprep.subr.mxu0 0.0
      %8500 = vmatpush1.msra.mxu0 0.0
      %8501 = vmatprep.subr.mxu0 0.0
      %8502 = vmatpush1.msra.mxu0 0.0
      %8503 = vmatprep.subr.mxu0 0.0
      %8504 = vmatpush1.msra.mxu0 0.0
      %8505 = vmatprep.subr.mxu0 0.0
      %8506 = vmatpush1.msra.mxu0 0.0
      %8507 = vmatprep.subr.mxu0 0.0
      %8508 = vmatpush1.msra.mxu0 0.0
      %8509 = vmatprep.subr.mxu0 0.0
      %8510 = vmatpush1.msra.mxu0 0.0
      %8511 = vmatprep.subr.mxu0 0.0
      %8512 = vmatpush1.msra.mxu0 0.0
      %8513 = vmatprep.subr.mxu0 0.0
      %8514 = vmatpush1.msra.mxu0 0.0
      %8515 = vmatprep.subr.mxu0 0.0
      %8516 = vmatpush1.msra.mxu0 0.0
      %8517 = vmatprep.subr.mxu0 0.0
      %8518 = vmatpush1.msra.mxu0 0.0
      %8519 = vmatprep.subr.mxu0 0.0
      %8520 = vmatpush1.msra.mxu0 %v8367
      %8521 = vmatprep.subr.mxu0 0.0
      %8522 = vmatpush1.msra.mxu0 %v8366
      %8523 = vmatprep.subr.mxu0 0.0
      %8524 = vmatpush2.msra.mxu0 0.0
      %8525 = vmatprep.subr.mxu0 0.0
      %8526 = vmatpush2.msra.mxu0 0.0
      %8527 = vmatprep.subr.mxu0 0.0
      %8528 = vmatpush2.msra.mxu0 0.0
      %8529 = vmatprep.subr.mxu0 0.0
      %8530 = vmatpush2.msra.mxu0 0.0
      %8531 = vmatprep.subr.mxu0 0.0
      %8532 = vmatpush2.msra.mxu0 0.0
      %8533 = vmatprep.subr.mxu0 0.0
      %8534 = vmatpush2.msra.mxu0 0.0
      %8535 = vmatprep.subr.mxu0 0.0
      %8536 = vmatpush2.msra.mxu0 0.0
      %8537 = vmatprep.subr.mxu0 0.0
      %8538 = vmatpush2.msra.mxu0 0.0
      %8539 = vmatprep.subr.mxu0 0.0
      %8540 = vmatpush2.msra.mxu0 0.0
      %8541 = vmatprep.subr.mxu0 0.0
      %8542 = vmatpush2.msra.mxu0 0.0
      %8543 = vmatprep.subr.mxu0 0.0
      %8544 = vmatpush2.msra.mxu0 0.0
      %8545 = vmatprep.subr.mxu0 0.0
      %8546 = vmatpush2.msra.mxu0 0.0
      %8547 = vmatprep.subr.mxu0 0.0
      %8548 = vmatpush2.msra.mxu0 0.0
      %8549 = vmatprep.subr.mxu0 0.0
      %8550 = vmatpush2.msra.mxu0 0.0
      %8551 = vmatprep.subr.mxu0 0.0
      %8552 = vmatpush2.msra.mxu0 0.0
      %8553 = vmatprep.subr.mxu0 0.0
      %8554 = vmatpush2.msra.mxu0 0.0
      %8555 = vmatprep.mubr.f32.mxu0 0.0
      %8556 = vmatmul.mubr.f32.gmra.mxu0 %v8369
      %v8557 = vpop.f32.mrf.mxu0
      %v8558 = vadd.f32 0.0, %v8557
      %v8559 = vpop.f32.mrf.mxu0
      %8560 = vmatprep.mubr.f32.mxu0 0.0
      %8561 = vmatmul.mubr.f32.gmra.mxu0 %v8372
      %v8562 = vpop.f32.mrf.mxu0
      %v8563 = vadd.f32 0.0, %v8562
      %v8564 = vpop.f32.mrf.mxu0
      %8565 = vmatprep.mubr.f32.mxu0 0.0
      %8566 = vmatmul.mubr.f32.gmra.mxu0 %v8375
      %v8567 = vpop.f32.mrf.mxu0
      %v8568 = vadd.f32 0.0, %v8567
      %v8569 = vpop.f32.mrf.mxu0
      %8570 = vmatprep.mubr.f32.mxu0 0.0
      %8571 = vmatmul.mubr.f32.gmra.mxu0 %v8378
      %v8572 = vpop.f32.mrf.mxu0
      %v8573 = vadd.f32 0.0, %v8572
      %v8574 = vpop.f32.mrf.mxu0
      %8575 = vmatprep.mubr.f32.mxu0 0.0
      %8576 = vmatmul.mubr.f32.gmra.mxu0 %v8381
      %v8577 = vpop.f32.mrf.mxu0
      %v8578 = vadd.f32 0.0, %v8577
      %v8579 = vpop.f32.mrf.mxu0
      %8580 = vmatprep.mubr.f32.mxu0 0.0
      %8581 = vmatmul.mubr.f32.gmra.mxu0 %v8384
      %v8582 = vpop.f32.mrf.mxu0
      %v8583 = vadd.f32 0.0, %v8582
      %v8584 = vpop.f32.mrf.mxu0
      %8585 = vmatprep.mubr.f32.mxu0 0.0
      %8586 = vmatmul.mubr.f32.gmra.mxu0 %v8387
      %v8587 = vpop.f32.mrf.mxu0
      %v8588 = vadd.f32 0.0, %v8587
      %v8589 = vpop.f32.mrf.mxu0
      %8590 = vmatprep.mubr.f32.mxu0 0.0
      %8591 = vmatmul.mubr.f32.gmra.mxu0 %v8390
      %v8592 = vpop.f32.mrf.mxu0
      %v8593 = vadd.f32 0.0, %v8592
      %v8594 = vpop.f32.mrf.mxu0
      %8595 = vmatprep.mubr.f32.mxu0 0.0
      %8596 = vmatmul.mubr.f32.gmra.mxu0 %v8393
      %v8597 = vpop.f32.mrf.mxu0
      %v8598 = vadd.f32 0.0, %v8597
      %v8599 = vpop.f32.mrf.mxu0
      %8600 = vmatprep.mubr.f32.mxu0 0.0
      %8601 = vmatmul.mubr.f32.gmra.mxu0 %v8396
      %v8602 = vpop.f32.mrf.mxu0
      %v8603 = vadd.f32 0.0, %v8602
      %v8604 = vpop.f32.mrf.mxu0
      %8605 = vmatprep.mubr.f32.mxu0 0.0
      %8606 = vmatmul.mubr.f32.gmra.mxu0 %v8399
      %v8607 = vpop.f32.mrf.mxu0
      %v8608 = vadd.f32 0.0, %v8607
      %v8609 = vpop.f32.mrf.mxu0
      %8610 = vmatprep.mubr.f32.mxu0 0.0
      %8611 = vmatmul.mubr.f32.gmra.mxu0 %v8402
      %v8612 = vpop.f32.mrf.mxu0
      %v8613 = vadd.f32 0.0, %v8612
      %v8614 = vpop.f32.mrf.mxu0
      %8615 = vmatprep.mubr.f32.mxu0 0.0
      %8616 = vmatmul.mubr.f32.gmra.mxu0 %v8405
      %v8617 = vpop.f32.mrf.mxu0
      %v8618 = vadd.f32 0.0, %v8617
      %v8619 = vpop.f32.mrf.mxu0
      %8620 = vmatprep.mubr.f32.mxu0 0.0
      %8621 = vmatmul.mubr.f32.gmra.mxu0 %v8408
      %v8622 = vpop.f32.mrf.mxu0
      %v8623 = vadd.f32 0.0, %v8622
      %v8624 = vpop.f32.mrf.mxu0
      %8625 = vmatprep.mubr.f32.mxu0 0.0
      %8626 = vmatmul.mubr.f32.gmra.mxu0 %v8411
      %v8627 = vpop.f32.mrf.mxu0
      %v8628 = vadd.f32 0.0, %v8627
      %v8629 = vpop.f32.mrf.mxu0
      %8630 = vmatprep.mubr.f32.mxu0 0.0
      %8631 = vmatmul.mubr.f32.gmra.mxu0 %v8414
      %v8632 = vpop.f32.mrf.mxu0
      %v8633 = vadd.f32 0.0, %v8632
      %v8634 = vpop.f32.mrf.mxu0
      %8635 = vmatprep.mubr.f32.mxu0 0.0
      %8636 = vmatmul.mubr.f32.gmra.mxu0 %v8417
      %v8637 = vpop.f32.mrf.mxu0
      %v8638 = vadd.f32 0.0, %v8637
      %v8639 = vpop.f32.mrf.mxu0
      %8640 = vmatprep.mubr.f32.mxu0 0.0
      %8641 = vmatmul.mubr.f32.gmra.mxu0 %v8420
      %v8642 = vpop.f32.mrf.mxu0
      %v8643 = vadd.f32 0.0, %v8642
      %v8644 = vpop.f32.mrf.mxu0
      %8645 = vmatprep.mubr.f32.mxu0 0.0
      %8646 = vmatmul.mubr.f32.gmra.mxu0 %v8423
      %v8647 = vpop.f32.mrf.mxu0
      %v8648 = vadd.f32 0.0, %v8647
      %v8649 = vpop.f32.mrf.mxu0
      %8650 = vmatprep.mubr.f32.mxu0 0.0
      %8651 = vmatmul.mubr.f32.gmra.mxu0 %v8426
      %v8652 = vpop.f32.mrf.mxu0
      %v8653 = vadd.f32 0.0, %v8652
      %v8654 = vpop.f32.mrf.mxu0
      %8655 = vmatprep.mubr.f32.mxu0 0.0
      %8656 = vmatmul.mubr.f32.gmra.mxu0 %v8429
      %v8657 = vpop.f32.mrf.mxu0
      %v8658 = vadd.f32 0.0, %v8657
      %v8659 = vpop.f32.mrf.mxu0
      %8660 = vmatprep.mubr.f32.mxu0 0.0
      %8661 = vmatmul.mubr.f32.gmra.mxu0 %v8432
      %v8662 = vpop.f32.mrf.mxu0
      %v8663 = vadd.f32 0.0, %v8662
      %v8664 = vpop.f32.mrf.mxu0
      %8665 = vmatprep.mubr.f32.mxu0 0.0
      %8666 = vmatmul.mubr.f32.gmra.mxu0 %v8435
      %v8667 = vpop.f32.mrf.mxu0
      %v8668 = vadd.f32 0.0, %v8667
      %v8669 = vpop.f32.mrf.mxu0
      %8670 = vmatprep.mubr.f32.mxu0 0.0
      %8671 = vmatmul.mubr.f32.gmra.mxu0 %v8438
      %v8672 = vpop.f32.mrf.mxu0
      %v8673 = vadd.f32 0.0, %v8672
      %v8674 = vpop.f32.mrf.mxu0
      %8675 = vmatprep.mubr.f32.mxu0 0.0
      %8676 = vmatmul.mubr.f32.gmra.mxu0 %v8441
      %v8677 = vpop.f32.mrf.mxu0
      %v8678 = vadd.f32 0.0, %v8677
      %v8679 = vpop.f32.mrf.mxu0
      %8680 = vmatprep.mubr.f32.mxu0 0.0
      %8681 = vmatmul.mubr.f32.gmra.mxu0 %v8444
      %v8682 = vpop.f32.mrf.mxu0
      %v8683 = vadd.f32 0.0, %v8682
      %v8684 = vpop.f32.mrf.mxu0
      %8685 = vmatprep.mubr.f32.mxu0 0.0
      %8686 = vmatmul.mubr.f32.gmra.mxu0 %v8447
      %v8687 = vpop.f32.mrf.mxu0
      %v8688 = vadd.f32 0.0, %v8687
      %v8689 = vpop.f32.mrf.mxu0
      %8690 = vmatprep.mubr.f32.mxu0 0.0
      %8691 = vmatmul.mubr.f32.gmra.mxu0 %v8450
      %v8692 = vpop.f32.mrf.mxu0
      %v8693 = vadd.f32 0.0, %v8692
      %v8694 = vpop.f32.mrf.mxu0
      %8695 = vmatprep.mubr.f32.mxu0 0.0
      %8696 = vmatmul.mubr.f32.gmra.mxu0 %v8453
      %v8697 = vpop.f32.mrf.mxu0
      %v8698 = vadd.f32 0.0, %v8697
      %v8699 = vpop.f32.mrf.mxu0
      %8700 = vmatprep.mubr.f32.mxu0 0.0
      %8701 = vmatmul.mubr.f32.gmra.mxu0 %v8456
      %v8702 = vpop.f32.mrf.mxu0
      %v8703 = vadd.f32 0.0, %v8702
      %v8704 = vpop.f32.mrf.mxu0
      %8705 = vmatprep.mubr.f32.mxu0 0.0
      %8706 = vmatmul.mubr.f32.gmra.mxu0 %v8459
      %v8707 = vpop.f32.mrf.mxu0
      %v8708 = vadd.f32 0.0, %v8707
      %v8709 = vpop.f32.mrf.mxu0
      %8710 = vmatprep.mubr.f32.mxu0 0.0
      %8711 = vmatmul.mubr.f32.gmra.mxu0 %v8462
      %v8712 = vpop.f32.mrf.mxu0
      %v8713 = vadd.f32 0.0, %v8712
      %v8714 = vpop.f32.mrf.mxu0
      %8715 = vmatprep.mubr.f32.mxu0 0.0
      %8716 = vmatmul.mubr.f32.gmra.mxu0 %v8465
      %v8717 = vpop.f32.mrf.mxu0
      %v8718 = vadd.f32 0.0, %v8717
      %v8719 = vpop.f32.mrf.mxu0
      %8720 = vmatprep.mubr.f32.mxu0 0.0
      %8721 = vmatmul.mubr.f32.gmra.mxu0 %v8468
      %v8722 = vpop.f32.mrf.mxu0
      %v8723 = vadd.f32 0.0, %v8722
      %v8724 = vpop.f32.mrf.mxu0
      %8725 = vmatprep.mubr.f32.mxu0 0.0
      %8726 = vmatmul.mubr.f32.gmra.mxu0 %v8471
      %v8727 = vpop.f32.mrf.mxu0
      %v8728 = vadd.f32 0.0, %v8727
      %v8729 = vpop.f32.mrf.mxu0
      %8730 = vmatprep.mubr.f32.mxu0 0.0
      %8731 = vmatmul.mubr.f32.gmra.mxu0 %v8474
      %v8732 = vpop.f32.mrf.mxu0
      %v8733 = vadd.f32 0.0, %v8732
      %v8734 = vpop.f32.mrf.mxu0
      %8735 = vmatprep.mubr.f32.mxu0 0.0
      %8736 = vmatmul.mubr.f32.gmra.mxu0 %v8477
      %v8737 = vpop.f32.mrf.mxu0
      %v8738 = vadd.f32 0.0, %v8737
      %v8739 = vpop.f32.mrf.mxu0
      %8740 = vmatprep.mubr.f32.mxu0 0.0
      %8741 = vmatmul.mubr.f32.gmra.mxu0 %v8480
      %v8742 = vpop.f32.mrf.mxu0
      %v8743 = vadd.f32 0.0, %v8742
      %v8744 = vpop.f32.mrf.mxu0
      %8745 = vmatprep.mubr.f32.mxu0 0.0
      %8746 = vmatmul.mubr.f32.gmra.mxu0 %v8483
      %v8747 = vpop.f32.mrf.mxu0
      %v8748 = vadd.f32 0.0, %v8747
      %v8749 = vpop.f32.mrf.mxu0
      %8750 = vmatprep.mubr.f32.mxu0 0.0
      %8751 = vmatmul.mubr.f32.gmra.mxu0 %v8486
      %v8752 = vpop.f32.mrf.mxu0
      %v8753 = vadd.f32 0.0, %v8752
      %v8754 = vpop.f32.mrf.mxu0
      %8755 = vmatprep.mubr.f32.mxu0 0.0
      %8756 = vmatmul.mubr.f32.gmra.mxu0 %v8489
      %v8757 = vpop.f32.mrf.mxu0
      %v8758 = vadd.f32 0.0, %v8757
      %v8759 = vpop.f32.mrf.mxu0
      %8760 = vdwg.mxu0
      %v8761 = vadd.f32 %v8284, %v8558
      %v8762 = vadd.f32 %v8285, %v8563
      %v8763 = vadd.f32 %v8286, %v8568
      %v8764 = vadd.f32 %v8287, %v8573
      %v8765 = vadd.f32 %v8288, %v8578
      %v8766 = vadd.f32 %v8289, %v8583
      %v8767 = vadd.f32 %v8290, %v8588
      %v8768 = vadd.f32 %v8291, %v8593
      %v8769 = vadd.f32 %v8292, %v8598
      %v8770 = vadd.f32 %v8293, %v8603
      %v8771 = vadd.f32 %v8294, %v8608
      %v8772 = vadd.f32 %v8295, %v8613
      %v8773 = vadd.f32 %v8296, %v8618
      %v8774 = vadd.f32 %v8297, %v8623
      %v8775 = vadd.f32 %v8298, %v8628
      %v8776 = vadd.f32 %v8299, %v8633
      %v8777 = vadd.f32 %v8300, %v8638
      %v8778 = vadd.f32 %v8301, %v8643
      %v8779 = vadd.f32 %v8302, %v8648
      %v8780 = vadd.f32 %v8303, %v8653
      %v8781 = vadd.f32 %v8304, %v8658
      %v8782 = vadd.f32 %v8305, %v8663
      %v8783 = vadd.f32 %v8306, %v8668
      %v8784 = vadd.f32 %v8307, %v8673
      %v8785 = vadd.f32 %v8308, %v8678
      %v8786 = vadd.f32 %v8309, %v8683
      %v8787 = vadd.f32 %v8310, %v8688
      %v8788 = vadd.f32 %v8311, %v8693
      %v8789 = vadd.f32 %v8312, %v8698
      %v8790 = vadd.f32 %v8313, %v8703
      %v8791 = vadd.f32 %v8314, %v8708
      %v8792 = vadd.f32 %v8315, %v8713
      %v8793 = vadd.f32 %v8316, %v8718
      %v8794 = vadd.f32 %v8317, %v8723
      %v8795 = vadd.f32 %v8318, %v8728
      %v8796 = vadd.f32 %v8319, %v8733
      %v8797 = vadd.f32 %v8320, %v8738
      %v8798 = vadd.f32 %v8321, %v8743
      %v8799 = vadd.f32 %v8322, %v8748
      %v8800 = vadd.f32 %v8323, %v8753
      %v8801 = vadd.f32 %v8324, %v8758
      %v8802 = vld [vmem:[#allocation2 + $0x2b] sm:$0xff]
      %v8803 = vld [vmem:[#allocation2 + $0x33] sm:$0xff]
      %v8804 = vld [vmem:[#allocation2 + $0x3b] sm:$0xff]
      %v8805 = vld [vmem:[#allocation2 + $0x43] sm:$0xff]
      %v8806 = vld [vmem:[#allocation2 + $0x4b] sm:$0xff]
      %v8807 = vld [vmem:[#allocation2 + $0x53] sm:$0xff]
      %v8808 = vld [vmem:[#allocation2 + $0x5b] sm:$0xff]
      %v8809 = vld [vmem:[#allocation2 + $0x63] sm:$0xff]
      %v8810 = vld [vmem:[#allocation2 + $0x6b] sm:$0xff]
      %v8811 = vld [vmem:[#allocation2 + $0x73] sm:$0xff]
      %v8812 = vld [vmem:[#allocation2 + $0x7b] sm:$0xff]
      %v8813 = vld [vmem:[#allocation2 + $0x83] sm:$0xff]
      %v8814 = vld [vmem:[#allocation2 + $0x8b] sm:$0xff]
      %v8815 = vld [vmem:[#allocation2 + $0x93] sm:$0xff]
      %v8816 = vld [vmem:[#allocation2 + $0x9b] sm:$0xff]
      %v8817 = vld [vmem:[#allocation2 + $0xa3] sm:$0xff]
      %v8818 = vld [vmem:[#allocation2 + $0xab] sm:$0xff]
      %v8819 = vld [vmem:[#allocation2 + $0xb3] sm:$0xff]
      %v8820 = vld [vmem:[#allocation2 + $0xbb] sm:$0xff]
      %v8821 = vld [vmem:[#allocation2 + $0xc3] sm:$0xff]
      %v8822 = vld [vmem:[#allocation2 + $0xcb] sm:$0xff]
      %v8823 = vld [vmem:[#allocation2 + $0xd3] sm:$0xff]
      %v8824 = vld [vmem:[#allocation2 + $0xdb] sm:$0xff]
      %v8825 = vld [vmem:[#allocation2 + $0xe3] sm:$0xff]
      %v8826 = vld [vmem:[#allocation2 + $0xeb] sm:$0xff]
      %v8827 = vld [vmem:[#allocation2 + $0xf3] sm:$0xff]
      %v8828 = vld [vmem:[#allocation2 + $0xfb] sm:$0xff]
      %v8829 = vld [vmem:[#allocation2 + $0x103] sm:$0xff]
      %v8830 = vld [vmem:[#allocation2 + $0x10b] sm:$0xff]
      %v8831 = vld [vmem:[#allocation2 + $0x113] sm:$0xff]
      %v8832 = vld [vmem:[#allocation2 + $0x11b] sm:$0xff]
      %v8833 = vld [vmem:[#allocation2 + $0x123] sm:$0xff]
      %v8834 = vld [vmem:[#allocation2 + $0x12b] sm:$0xff]
      %v8835 = vld [vmem:[#allocation2 + $0x133] sm:$0xff]
      %v8836 = vld [vmem:[#allocation2 + $0x13b] sm:$0xff]
      %v8837 = vld [vmem:[#allocation2 + $0x143] sm:$0xff]
      %v8838 = vld [vmem:[#allocation2 + $0x14b] sm:$0xff]
      %v8839 = vld [vmem:[#allocation2 + $0x153] sm:$0xff]
      %v8840 = vld [vmem:[#allocation2 + $0x15b] sm:$0xff]
      %v8841 = vld [vmem:[#allocation2 + $0x163] sm:$0xff]
      %v8842 = vld [vmem:[#allocation2 + $0x16b] sm:$0xf]
      %v8843 = vld [vmem:[%s3 + $0x80] sm:$0xff]
      %v8844 = vld [vmem:[%s3 + $0x88] sm:$0xff]
      %v8846 = vsel %vm5018, %v8802, 0
      %v8849 = vsel %vm5018, %v8803, 0
      %v8852 = vsel %vm5018, %v8804, 0
      %v8855 = vsel %vm5018, %v8805, 0
      %v8858 = vsel %vm5018, %v8806, 0
      %v8861 = vsel %vm5018, %v8807, 0
      %v8864 = vsel %vm5018, %v8808, 0
      %v8867 = vsel %vm5018, %v8809, 0
      %v8870 = vsel %vm5018, %v8810, 0
      %v8873 = vsel %vm5018, %v8811, 0
      %v8876 = vsel %vm5018, %v8812, 0
      %v8879 = vsel %vm5018, %v8813, 0
      %v8882 = vsel %vm5018, %v8814, 0
      %v8885 = vsel %vm5018, %v8815, 0
      %v8888 = vsel %vm5018, %v8816, 0
      %v8891 = vsel %vm5018, %v8817, 0
      %v8894 = vsel %vm5018, %v8818, 0
      %v8897 = vsel %vm5018, %v8819, 0
      %v8900 = vsel %vm5018, %v8820, 0
      %v8903 = vsel %vm5018, %v8821, 0
      %v8906 = vsel %vm5018, %v8822, 0
      %v8909 = vsel %vm5018, %v8823, 0
      %v8912 = vsel %vm5018, %v8824, 0
      %v8915 = vsel %vm5018, %v8825, 0
      %v8918 = vsel %vm5018, %v8826, 0
      %v8921 = vsel %vm5018, %v8827, 0
      %v8924 = vsel %vm5018, %v8828, 0
      %v8927 = vsel %vm5018, %v8829, 0
      %v8930 = vsel %vm5018, %v8830, 0
      %v8933 = vsel %vm5018, %v8831, 0
      %v8936 = vsel %vm5018, %v8832, 0
      %v8939 = vsel %vm5018, %v8833, 0
      %v8942 = vsel %vm5018, %v8834, 0
      %v8945 = vsel %vm5018, %v8835, 0
      %v8948 = vsel %vm5018, %v8836, 0
      %v8951 = vsel %vm5018, %v8837, 0
      %v8954 = vsel %vm5018, %v8838, 0
      %v8957 = vsel %vm5018, %v8839, 0
      %v8960 = vsel %vm5018, %v8840, 0
      %v8963 = vsel %vm5018, %v8841, 0
      %v8966 = vsel %vm5018, %v8842, 0
      %8968 = vmatprep.subr.mxu0 0.0
      %8969 = vmatpush1.msra.mxu0 0.0
      %8970 = vmatprep.subr.mxu0 0.0
      %8971 = vmatpush1.msra.mxu0 0.0
      %8972 = vmatprep.subr.mxu0 0.0
      %8973 = vmatpush1.msra.mxu0 0.0
      %8974 = vmatprep.subr.mxu0 0.0
      %8975 = vmatpush1.msra.mxu0 0.0
      %8976 = vmatprep.subr.mxu0 0.0
      %8977 = vmatpush1.msra.mxu0 0.0
      %8978 = vmatprep.subr.mxu0 0.0
      %8979 = vmatpush1.msra.mxu0 0.0
      %8980 = vmatprep.subr.mxu0 0.0
      %8981 = vmatpush1.msra.mxu0 0.0
      %8982 = vmatprep.subr.mxu0 0.0
      %8983 = vmatpush1.msra.mxu0 0.0
      %8984 = vmatprep.subr.mxu0 0.0
      %8985 = vmatpush1.msra.mxu0 0.0
      %8986 = vmatprep.subr.mxu0 0.0
      %8987 = vmatpush1.msra.mxu0 0.0
      %8988 = vmatprep.subr.mxu0 0.0
      %8989 = vmatpush1.msra.mxu0 0.0
      %8990 = vmatprep.subr.mxu0 0.0
      %8991 = vmatpush1.msra.mxu0 0.0
      %8992 = vmatprep.subr.mxu0 0.0
      %8993 = vmatpush1.msra.mxu0 0.0
      %8994 = vmatprep.subr.mxu0 0.0
      %8995 = vmatpush1.msra.mxu0 0.0
      %8996 = vmatprep.subr.mxu0 0.0
      %8997 = vmatpush1.msra.mxu0 %v8844
      %8998 = vmatprep.subr.mxu0 0.0
      %8999 = vmatpush1.msra.mxu0 %v8843
      %9000 = vmatprep.subr.mxu0 0.0
      %9001 = vmatpush2.msra.mxu0 0.0
      %9002 = vmatprep.subr.mxu0 0.0
      %9003 = vmatpush2.msra.mxu0 0.0
      %9004 = vmatprep.subr.mxu0 0.0
      %9005 = vmatpush2.msra.mxu0 0.0
      %9006 = vmatprep.subr.mxu0 0.0
      %9007 = vmatpush2.msra.mxu0 0.0
      %9008 = vmatprep.subr.mxu0 0.0
      %9009 = vmatpush2.msra.mxu0 0.0
      %9010 = vmatprep.subr.mxu0 0.0
      %9011 = vmatpush2.msra.mxu0 0.0
      %9012 = vmatprep.subr.mxu0 0.0
      %9013 = vmatpush2.msra.mxu0 0.0
      %9014 = vmatprep.subr.mxu0 0.0
      %9015 = vmatpush2.msra.mxu0 0.0
      %9016 = vmatprep.subr.mxu0 0.0
      %9017 = vmatpush2.msra.mxu0 0.0
      %9018 = vmatprep.subr.mxu0 0.0
      %9019 = vmatpush2.msra.mxu0 0.0
      %9020 = vmatprep.subr.mxu0 0.0
      %9021 = vmatpush2.msra.mxu0 0.0
      %9022 = vmatprep.subr.mxu0 0.0
      %9023 = vmatpush2.msra.mxu0 0.0
      %9024 = vmatprep.subr.mxu0 0.0
      %9025 = vmatpush2.msra.mxu0 0.0
      %9026 = vmatprep.subr.mxu0 0.0
      %9027 = vmatpush2.msra.mxu0 0.0
      %9028 = vmatprep.subr.mxu0 0.0
      %9029 = vmatpush2.msra.mxu0 0.0
      %9030 = vmatprep.subr.mxu0 0.0
      %9031 = vmatpush2.msra.mxu0 0.0
      %9032 = vmatprep.mubr.f32.mxu0 0.0
      %9033 = vmatmul.mubr.f32.gmra.mxu0 %v8846
      %v9034 = vpop.f32.mrf.mxu0
      %v9035 = vadd.f32 0.0, %v9034
      %v9036 = vpop.f32.mrf.mxu0
      %9037 = vmatprep.mubr.f32.mxu0 0.0
      %9038 = vmatmul.mubr.f32.gmra.mxu0 %v8849
      %v9039 = vpop.f32.mrf.mxu0
      %v9040 = vadd.f32 0.0, %v9039
      %v9041 = vpop.f32.mrf.mxu0
      %9042 = vmatprep.mubr.f32.mxu0 0.0
      %9043 = vmatmul.mubr.f32.gmra.mxu0 %v8852
      %v9044 = vpop.f32.mrf.mxu0
      %v9045 = vadd.f32 0.0, %v9044
      %v9046 = vpop.f32.mrf.mxu0
      %9047 = vmatprep.mubr.f32.mxu0 0.0
      %9048 = vmatmul.mubr.f32.gmra.mxu0 %v8855
      %v9049 = vpop.f32.mrf.mxu0
      %v9050 = vadd.f32 0.0, %v9049
      %v9051 = vpop.f32.mrf.mxu0
      %9052 = vmatprep.mubr.f32.mxu0 0.0
      %9053 = vmatmul.mubr.f32.gmra.mxu0 %v8858
      %v9054 = vpop.f32.mrf.mxu0
      %v9055 = vadd.f32 0.0, %v9054
      %v9056 = vpop.f32.mrf.mxu0
      %9057 = vmatprep.mubr.f32.mxu0 0.0
      %9058 = vmatmul.mubr.f32.gmra.mxu0 %v8861
      %v9059 = vpop.f32.mrf.mxu0
      %v9060 = vadd.f32 0.0, %v9059
      %v9061 = vpop.f32.mrf.mxu0
      %9062 = vmatprep.mubr.f32.mxu0 0.0
      %9063 = vmatmul.mubr.f32.gmra.mxu0 %v8864
      %v9064 = vpop.f32.mrf.mxu0
      %v9065 = vadd.f32 0.0, %v9064
      %v9066 = vpop.f32.mrf.mxu0
      %9067 = vmatprep.mubr.f32.mxu0 0.0
      %9068 = vmatmul.mubr.f32.gmra.mxu0 %v8867
      %v9069 = vpop.f32.mrf.mxu0
      %v9070 = vadd.f32 0.0, %v9069
      %v9071 = vpop.f32.mrf.mxu0
      %9072 = vmatprep.mubr.f32.mxu0 0.0
      %9073 = vmatmul.mubr.f32.gmra.mxu0 %v8870
      %v9074 = vpop.f32.mrf.mxu0
      %v9075 = vadd.f32 0.0, %v9074
      %v9076 = vpop.f32.mrf.mxu0
      %9077 = vmatprep.mubr.f32.mxu0 0.0
      %9078 = vmatmul.mubr.f32.gmra.mxu0 %v8873
      %v9079 = vpop.f32.mrf.mxu0
      %v9080 = vadd.f32 0.0, %v9079
      %v9081 = vpop.f32.mrf.mxu0
      %9082 = vmatprep.mubr.f32.mxu0 0.0
      %9083 = vmatmul.mubr.f32.gmra.mxu0 %v8876
      %v9084 = vpop.f32.mrf.mxu0
      %v9085 = vadd.f32 0.0, %v9084
      %v9086 = vpop.f32.mrf.mxu0
      %9087 = vmatprep.mubr.f32.mxu0 0.0
      %9088 = vmatmul.mubr.f32.gmra.mxu0 %v8879
      %v9089 = vpop.f32.mrf.mxu0
      %v9090 = vadd.f32 0.0, %v9089
      %v9091 = vpop.f32.mrf.mxu0
      %9092 = vmatprep.mubr.f32.mxu0 0.0
      %9093 = vmatmul.mubr.f32.gmra.mxu0 %v8882
      %v9094 = vpop.f32.mrf.mxu0
      %v9095 = vadd.f32 0.0, %v9094
      %v9096 = vpop.f32.mrf.mxu0
      %9097 = vmatprep.mubr.f32.mxu0 0.0
      %9098 = vmatmul.mubr.f32.gmra.mxu0 %v8885
      %v9099 = vpop.f32.mrf.mxu0
      %v9100 = vadd.f32 0.0, %v9099
      %v9101 = vpop.f32.mrf.mxu0
      %9102 = vmatprep.mubr.f32.mxu0 0.0
      %9103 = vmatmul.mubr.f32.gmra.mxu0 %v8888
      %v9104 = vpop.f32.mrf.mxu0
      %v9105 = vadd.f32 0.0, %v9104
      %v9106 = vpop.f32.mrf.mxu0
      %9107 = vmatprep.mubr.f32.mxu0 0.0
      %9108 = vmatmul.mubr.f32.gmra.mxu0 %v8891
      %v9109 = vpop.f32.mrf.mxu0
      %v9110 = vadd.f32 0.0, %v9109
      %v9111 = vpop.f32.mrf.mxu0
      %9112 = vmatprep.mubr.f32.mxu0 0.0
      %9113 = vmatmul.mubr.f32.gmra.mxu0 %v8894
      %v9114 = vpop.f32.mrf.mxu0
      %v9115 = vadd.f32 0.0, %v9114
      %v9116 = vpop.f32.mrf.mxu0
      %9117 = vmatprep.mubr.f32.mxu0 0.0
      %9118 = vmatmul.mubr.f32.gmra.mxu0 %v8897
      %v9119 = vpop.f32.mrf.mxu0
      %v9120 = vadd.f32 0.0, %v9119
      %v9121 = vpop.f32.mrf.mxu0
      %9122 = vmatprep.mubr.f32.mxu0 0.0
      %9123 = vmatmul.mubr.f32.gmra.mxu0 %v8900
      %v9124 = vpop.f32.mrf.mxu0
      %v9125 = vadd.f32 0.0, %v9124
      %v9126 = vpop.f32.mrf.mxu0
      %9127 = vmatprep.mubr.f32.mxu0 0.0
      %9128 = vmatmul.mubr.f32.gmra.mxu0 %v8903
      %v9129 = vpop.f32.mrf.mxu0
      %v9130 = vadd.f32 0.0, %v9129
      %v9131 = vpop.f32.mrf.mxu0
      %9132 = vmatprep.mubr.f32.mxu0 0.0
      %9133 = vmatmul.mubr.f32.gmra.mxu0 %v8906
      %v9134 = vpop.f32.mrf.mxu0
      %v9135 = vadd.f32 0.0, %v9134
      %v9136 = vpop.f32.mrf.mxu0
      %9137 = vmatprep.mubr.f32.mxu0 0.0
      %9138 = vmatmul.mubr.f32.gmra.mxu0 %v8909
      %v9139 = vpop.f32.mrf.mxu0
      %v9140 = vadd.f32 0.0, %v9139
      %v9141 = vpop.f32.mrf.mxu0
      %9142 = vmatprep.mubr.f32.mxu0 0.0
      %9143 = vmatmul.mubr.f32.gmra.mxu0 %v8912
      %v9144 = vpop.f32.mrf.mxu0
      %v9145 = vadd.f32 0.0, %v9144
      %v9146 = vpop.f32.mrf.mxu0
      %9147 = vmatprep.mubr.f32.mxu0 0.0
      %9148 = vmatmul.mubr.f32.gmra.mxu0 %v8915
      %v9149 = vpop.f32.mrf.mxu0
      %v9150 = vadd.f32 0.0, %v9149
      %v9151 = vpop.f32.mrf.mxu0
      %9152 = vmatprep.mubr.f32.mxu0 0.0
      %9153 = vmatmul.mubr.f32.gmra.mxu0 %v8918
      %v9154 = vpop.f32.mrf.mxu0
      %v9155 = vadd.f32 0.0, %v9154
      %v9156 = vpop.f32.mrf.mxu0
      %9157 = vmatprep.mubr.f32.mxu0 0.0
      %9158 = vmatmul.mubr.f32.gmra.mxu0 %v8921
      %v9159 = vpop.f32.mrf.mxu0
      %v9160 = vadd.f32 0.0, %v9159
      %v9161 = vpop.f32.mrf.mxu0
      %9162 = vmatprep.mubr.f32.mxu0 0.0
      %9163 = vmatmul.mubr.f32.gmra.mxu0 %v8924
      %v9164 = vpop.f32.mrf.mxu0
      %v9165 = vadd.f32 0.0, %v9164
      %v9166 = vpop.f32.mrf.mxu0
      %9167 = vmatprep.mubr.f32.mxu0 0.0
      %9168 = vmatmul.mubr.f32.gmra.mxu0 %v8927
      %v9169 = vpop.f32.mrf.mxu0
      %v9170 = vadd.f32 0.0, %v9169
      %v9171 = vpop.f32.mrf.mxu0
      %9172 = vmatprep.mubr.f32.mxu0 0.0
      %9173 = vmatmul.mubr.f32.gmra.mxu0 %v8930
      %v9174 = vpop.f32.mrf.mxu0
      %v9175 = vadd.f32 0.0, %v9174
      %v9176 = vpop.f32.mrf.mxu0
      %9177 = vmatprep.mubr.f32.mxu0 0.0
      %9178 = vmatmul.mubr.f32.gmra.mxu0 %v8933
      %v9179 = vpop.f32.mrf.mxu0
      %v9180 = vadd.f32 0.0, %v9179
      %v9181 = vpop.f32.mrf.mxu0
      %9182 = vmatprep.mubr.f32.mxu0 0.0
      %9183 = vmatmul.mubr.f32.gmra.mxu0 %v8936
      %v9184 = vpop.f32.mrf.mxu0
      %v9185 = vadd.f32 0.0, %v9184
      %v9186 = vpop.f32.mrf.mxu0
      %9187 = vmatprep.mubr.f32.mxu0 0.0
      %9188 = vmatmul.mubr.f32.gmra.mxu0 %v8939
      %v9189 = vpop.f32.mrf.mxu0
      %v9190 = vadd.f32 0.0, %v9189
      %v9191 = vpop.f32.mrf.mxu0
      %9192 = vmatprep.mubr.f32.mxu0 0.0
      %9193 = vmatmul.mubr.f32.gmra.mxu0 %v8942
      %v9194 = vpop.f32.mrf.mxu0
      %v9195 = vadd.f32 0.0, %v9194
      %v9196 = vpop.f32.mrf.mxu0
      %9197 = vmatprep.mubr.f32.mxu0 0.0
      %9198 = vmatmul.mubr.f32.gmra.mxu0 %v8945
      %v9199 = vpop.f32.mrf.mxu0
      %v9200 = vadd.f32 0.0, %v9199
      %v9201 = vpop.f32.mrf.mxu0
      %9202 = vmatprep.mubr.f32.mxu0 0.0
      %9203 = vmatmul.mubr.f32.gmra.mxu0 %v8948
      %v9204 = vpop.f32.mrf.mxu0
      %v9205 = vadd.f32 0.0, %v9204
      %v9206 = vpop.f32.mrf.mxu0
      %9207 = vmatprep.mubr.f32.mxu0 0.0
      %9208 = vmatmul.mubr.f32.gmra.mxu0 %v8951
      %v9209 = vpop.f32.mrf.mxu0
      %v9210 = vadd.f32 0.0, %v9209
      %v9211 = vpop.f32.mrf.mxu0
      %9212 = vmatprep.mubr.f32.mxu0 0.0
      %9213 = vmatmul.mubr.f32.gmra.mxu0 %v8954
      %v9214 = vpop.f32.mrf.mxu0
      %v9215 = vadd.f32 0.0, %v9214
      %v9216 = vpop.f32.mrf.mxu0
      %9217 = vmatprep.mubr.f32.mxu0 0.0
      %9218 = vmatmul.mubr.f32.gmra.mxu0 %v8957
      %v9219 = vpop.f32.mrf.mxu0
      %v9220 = vadd.f32 0.0, %v9219
      %v9221 = vpop.f32.mrf.mxu0
      %9222 = vmatprep.mubr.f32.mxu0 0.0
      %9223 = vmatmul.mubr.f32.gmra.mxu0 %v8960
      %v9224 = vpop.f32.mrf.mxu0
      %v9225 = vadd.f32 0.0, %v9224
      %v9226 = vpop.f32.mrf.mxu0
      %9227 = vmatprep.mubr.f32.mxu0 0.0
      %9228 = vmatmul.mubr.f32.gmra.mxu0 %v8963
      %v9229 = vpop.f32.mrf.mxu0
      %v9230 = vadd.f32 0.0, %v9229
      %v9231 = vpop.f32.mrf.mxu0
      %9232 = vmatprep.mubr.f32.mxu0 0.0
      %9233 = vmatmul.mubr.f32.gmra.mxu0 %v8966
      %v9234 = vpop.f32.mrf.mxu0
      %v9235 = vadd.f32 0.0, %v9234
      %v9236 = vpop.f32.mrf.mxu0
      %9237 = vdwg.mxu0
      %v9238 = vadd.f32 %v8761, %v9035
      %v9239 = vadd.f32 %v8762, %v9040
      %v9240 = vadd.f32 %v8763, %v9045
      %v9241 = vadd.f32 %v8764, %v9050
      %v9242 = vadd.f32 %v8765, %v9055
      %v9243 = vadd.f32 %v8766, %v9060
      %v9244 = vadd.f32 %v8767, %v9065
      %v9245 = vadd.f32 %v8768, %v9070
      %v9246 = vadd.f32 %v8769, %v9075
      %v9247 = vadd.f32 %v8770, %v9080
      %v9248 = vadd.f32 %v8771, %v9085
      %v9249 = vadd.f32 %v8772, %v9090
      %v9250 = vadd.f32 %v8773, %v9095
      %v9251 = vadd.f32 %v8774, %v9100
      %v9252 = vadd.f32 %v8775, %v9105
      %v9253 = vadd.f32 %v8776, %v9110
      %v9254 = vadd.f32 %v8777, %v9115
      %v9255 = vadd.f32 %v8778, %v9120
      %v9256 = vadd.f32 %v8779, %v9125
      %v9257 = vadd.f32 %v8780, %v9130
      %v9258 = vadd.f32 %v8781, %v9135
      %v9259 = vadd.f32 %v8782, %v9140
      %v9260 = vadd.f32 %v8783, %v9145
      %v9261 = vadd.f32 %v8784, %v9150
      %v9262 = vadd.f32 %v8785, %v9155
      %v9263 = vadd.f32 %v8786, %v9160
      %v9264 = vadd.f32 %v8787, %v9165
      %v9265 = vadd.f32 %v8788, %v9170
      %v9266 = vadd.f32 %v8789, %v9175
      %v9267 = vadd.f32 %v8790, %v9180
      %v9268 = vadd.f32 %v8791, %v9185
      %v9269 = vadd.f32 %v8792, %v9190
      %v9270 = vadd.f32 %v8793, %v9195
      %v9271 = vadd.f32 %v8794, %v9200
      %v9272 = vadd.f32 %v8795, %v9205
      %v9273 = vadd.f32 %v8796, %v9210
      %v9274 = vadd.f32 %v8797, %v9215
      %v9275 = vadd.f32 %v8798, %v9220
      %v9276 = vadd.f32 %v8799, %v9225
      %v9277 = vadd.f32 %v8800, %v9230
      %v9278 = vadd.f32 %v8801, %v9235
      %v9279 = vld [vmem:[%s4] sm:$0x1]
      %v9281 = vlaneseq
      %v9282 = vshrl.u32 %v9281, 7
      %v9283 = vsub.s32 0, %v9282
      %v9284 = vrot.slane %v9279, %v9283
      %v9286 = vadd.f32 %v9238, %v9284
      %v9287 = vadd.f32 %v9239, %v9284
      %v9288 = vadd.f32 %v9240, %v9284
      %v9289 = vadd.f32 %v9241, %v9284
      %v9290 = vadd.f32 %v9242, %v9284
      %v9291 = vadd.f32 %v9243, %v9284
      %v9292 = vadd.f32 %v9244, %v9284
      %v9293 = vadd.f32 %v9245, %v9284
      %v9294 = vadd.f32 %v9246, %v9284
      %v9295 = vadd.f32 %v9247, %v9284
      %v9296 = vadd.f32 %v9248, %v9284
      %v9297 = vadd.f32 %v9249, %v9284
      %v9298 = vadd.f32 %v9250, %v9284
      %v9299 = vadd.f32 %v9251, %v9284
      %v9300 = vadd.f32 %v9252, %v9284
      %v9301 = vadd.f32 %v9253, %v9284
      %v9302 = vadd.f32 %v9254, %v9284
      %v9303 = vadd.f32 %v9255, %v9284
      %v9304 = vadd.f32 %v9256, %v9284
      %v9305 = vadd.f32 %v9257, %v9284
      %v9306 = vadd.f32 %v9258, %v9284
      %v9307 = vadd.f32 %v9259, %v9284
      %v9308 = vadd.f32 %v9260, %v9284
      %v9309 = vadd.f32 %v9261, %v9284
      %v9310 = vadd.f32 %v9262, %v9284
      %v9311 = vadd.f32 %v9263, %v9284
      %v9312 = vadd.f32 %v9264, %v9284
      %v9313 = vadd.f32 %v9265, %v9284
      %v9314 = vadd.f32 %v9266, %v9284
      %v9315 = vadd.f32 %v9267, %v9284
      %v9316 = vadd.f32 %v9268, %v9284
      %v9317 = vadd.f32 %v9269, %v9284
      %v9318 = vadd.f32 %v9270, %v9284
      %v9319 = vadd.f32 %v9271, %v9284
      %v9320 = vadd.f32 %v9272, %v9284
      %v9321 = vadd.f32 %v9273, %v9284
      %v9322 = vadd.f32 %v9274, %v9284
      %v9323 = vadd.f32 %v9275, %v9284
      %v9324 = vadd.f32 %v9276, %v9284
      %v9325 = vadd.f32 %v9277, %v9284
      %v9326 = vadd.f32 %v9278, %v9284
      %v9327 = vmax.f32 %v9286, 0.0
      %v9328 = vmax.f32 %v9287, 0.0
      %v9329 = vmax.f32 %v9288, 0.0
      %v9330 = vmax.f32 %v9289, 0.0
      %v9331 = vmax.f32 %v9290, 0.0
      %v9332 = vmax.f32 %v9291, 0.0
      %v9333 = vmax.f32 %v9292, 0.0
      %v9334 = vmax.f32 %v9293, 0.0
      %v9335 = vmax.f32 %v9294, 0.0
      %v9336 = vmax.f32 %v9295, 0.0
      %v9337 = vmax.f32 %v9296, 0.0
      %v9338 = vmax.f32 %v9297, 0.0
      %v9339 = vmax.f32 %v9298, 0.0
      %v9340 = vmax.f32 %v9299, 0.0
      %v9341 = vmax.f32 %v9300, 0.0
      %v9342 = vmax.f32 %v9301, 0.0
      %v9343 = vmax.f32 %v9302, 0.0
      %v9344 = vmax.f32 %v9303, 0.0
      %v9345 = vmax.f32 %v9304, 0.0
      %v9346 = vmax.f32 %v9305, 0.0
      %v9347 = vmax.f32 %v9306, 0.0
      %v9348 = vmax.f32 %v9307, 0.0
      %v9349 = vmax.f32 %v9308, 0.0
      %v9350 = vmax.f32 %v9309, 0.0
      %v9351 = vmax.f32 %v9310, 0.0
      %v9352 = vmax.f32 %v9311, 0.0
      %v9353 = vmax.f32 %v9312, 0.0
      %v9354 = vmax.f32 %v9313, 0.0
      %v9355 = vmax.f32 %v9314, 0.0
      %v9356 = vmax.f32 %v9315, 0.0
      %v9357 = vmax.f32 %v9316, 0.0
      %v9358 = vmax.f32 %v9317, 0.0
      %v9359 = vmax.f32 %v9318, 0.0
      %v9360 = vmax.f32 %v9319, 0.0
      %v9361 = vmax.f32 %v9320, 0.0
      %v9362 = vmax.f32 %v9321, 0.0
      %v9363 = vmax.f32 %v9322, 0.0
      %v9364 = vmax.f32 %v9323, 0.0
      %v9365 = vmax.f32 %v9324, 0.0
      %v9366 = vmax.f32 %v9325, 0.0
      %v9367 = vmax.f32 %v9326, 0.0
      %v9368 = vld [vmem:[%s11] sm:$0xff]
      %v9369 = vld [vmem:[%s11 + $0x8] sm:$0xff]
      %v9370 = vld [vmem:[%s11 + $0x10] sm:$0xff]
      %v9371 = vld [vmem:[%s11 + $0x18] sm:$0xff]
      %v9372 = vld [vmem:[%s11 + $0x20] sm:$0xff]
      %v9373 = vld [vmem:[%s11 + $0x28] sm:$0xff]
      %v9374 = vld [vmem:[%s11 + $0x30] sm:$0xff]
      %v9375 = vld [vmem:[%s11 + $0x38] sm:$0xff]
      %v9376 = vld [vmem:[%s11 + $0x40] sm:$0xff]
      %v9377 = vld [vmem:[%s11 + $0x48] sm:$0xff]
      %v9378 = vld [vmem:[%s11 + $0x50] sm:$0xff]
      %v9379 = vld [vmem:[%s11 + $0x58] sm:$0xff]
      %v9380 = vld [vmem:[%s11 + $0x60] sm:$0xff]
      %v9381 = vld [vmem:[%s11 + $0x68] sm:$0xff]
      %v9382 = vld [vmem:[%s11 + $0x70] sm:$0xff]
      %v9383 = vld [vmem:[%s11 + $0x78] sm:$0xff]
      %v9384 = vld [vmem:[%s11 + $0x80] sm:$0xff]
      %v9385 = vld [vmem:[%s11 + $0x88] sm:$0xff]
      %v9386 = vld [vmem:[%s11 + $0x90] sm:$0xff]
      %v9387 = vld [vmem:[%s11 + $0x98] sm:$0xff]
      %v9388 = vld [vmem:[%s11 + $0xa0] sm:$0xff]
      %v9389 = vld [vmem:[%s11 + $0xa8] sm:$0xff]
      %v9390 = vld [vmem:[%s11 + $0xb0] sm:$0xff]
      %v9391 = vld [vmem:[%s11 + $0xb8] sm:$0xff]
      %v9392 = vld [vmem:[%s11 + $0xc0] sm:$0xff]
      %v9393 = vld [vmem:[%s11 + $0xc8] sm:$0xff]
      %v9394 = vld [vmem:[%s11 + $0xd0] sm:$0xff]
      %v9395 = vld [vmem:[%s11 + $0xd8] sm:$0xff]
      %v9396 = vld [vmem:[%s11 + $0xe0] sm:$0xff]
      %v9397 = vld [vmem:[%s11 + $0xe8] sm:$0xff]
      %v9398 = vld [vmem:[%s11 + $0xf0] sm:$0xff]
      %v9399 = vld [vmem:[%s11 + $0xf8] sm:$0xff]
      %v9400 = vld [vmem:[%s11 + $0x100] sm:$0xff]
      %v9401 = vld [vmem:[%s11 + $0x108] sm:$0xff]
      %v9402 = vld [vmem:[%s11 + $0x110] sm:$0xff]
      %v9403 = vld [vmem:[%s11 + $0x118] sm:$0xff]
      %v9404 = vld [vmem:[%s11 + $0x120] sm:$0xf]
      %v9405 = vld [vmem:[%s11 + $0x128] sm:$0xf]
      %v9406 = vld [vmem:[%s11 + $0x130] sm:$0xf]
      %vm9407 = vcmask 556032
      %v9409 = vsel %vm9407, %v9370, 0
      %v9412 = vsel %vm9407, %v9373, 0
      %v9415 = vsel %vm9407, %v9376, 0
      %v9418 = vsel %vm9407, %v9379, 0
      %v9421 = vsel %vm9407, %v9382, 0
      %v9424 = vsel %vm9407, %v9385, 0
      %v9427 = vsel %vm9407, %v9388, 0
      %v9430 = vsel %vm9407, %v9391, 0
      %v9433 = vsel %vm9407, %v9394, 0
      %v9436 = vsel %vm9407, %v9397, 0
      %v9439 = vsel %vm9407, %v9400, 0
      %v9442 = vsel %vm9407, %v9403, 0
      %v9445 = vsel %vm9407, %v9406, 0
      %vm9447 = vcmask 1043456
      %v9449 = vsel %vm9447, %v9367, 0
      %9451 = vmatprep.subr.mxu0 0.0
      %9452 = vmatpush1.msra.mxu0 %v9342
      %9453 = vmatprep.subr.mxu0 0.0
      %9454 = vmatpush1.msra.mxu0 %v9341
      %9455 = vmatprep.subr.mxu0 0.0
      %9456 = vmatpush1.msra.mxu0 %v9340
      %9457 = vmatprep.subr.mxu0 0.0
      %9458 = vmatpush1.msra.mxu0 %v9339
      %9459 = vmatprep.subr.mxu0 0.0
      %9460 = vmatpush1.msra.mxu0 %v9338
      %9461 = vmatprep.subr.mxu0 0.0
      %9462 = vmatpush1.msra.mxu0 %v9337
      %9463 = vmatprep.subr.mxu0 0.0
      %9464 = vmatpush1.msra.mxu0 %v9336
      %9465 = vmatprep.subr.mxu0 0.0
      %9466 = vmatpush1.msra.mxu0 %v9335
      %9467 = vmatprep.subr.mxu0 0.0
      %9468 = vmatpush1.msra.mxu0 %v9334
      %9469 = vmatprep.subr.mxu0 0.0
      %9470 = vmatpush1.msra.mxu0 %v9333
      %9471 = vmatprep.subr.mxu0 0.0
      %9472 = vmatpush1.msra.mxu0 %v9332
      %9473 = vmatprep.subr.mxu0 0.0
      %9474 = vmatpush1.msra.mxu0 %v9331
      %9475 = vmatprep.subr.mxu0 0.0
      %9476 = vmatpush1.msra.mxu0 %v9330
      %9477 = vmatprep.subr.mxu0 0.0
      %9478 = vmatpush1.msra.mxu0 %v9329
      %9479 = vmatprep.subr.mxu0 0.0
      %9480 = vmatpush1.msra.mxu0 %v9328
      %9481 = vmatprep.subr.mxu0 0.0
      %9482 = vmatpush1.msra.mxu0 %v9327
      %9483 = vmatprep.subr.mxu0 0.0
      %9484 = vmatpush2.msra.mxu0 %v9358
      %9485 = vmatprep.subr.mxu0 0.0
      %9486 = vmatpush2.msra.mxu0 %v9357
      %9487 = vmatprep.subr.mxu0 0.0
      %9488 = vmatpush2.msra.mxu0 %v9356
      %9489 = vmatprep.subr.mxu0 0.0
      %9490 = vmatpush2.msra.mxu0 %v9355
      %9491 = vmatprep.subr.mxu0 0.0
      %9492 = vmatpush2.msra.mxu0 %v9354
      %9493 = vmatprep.subr.mxu0 0.0
      %9494 = vmatpush2.msra.mxu0 %v9353
      %9495 = vmatprep.subr.mxu0 0.0
      %9496 = vmatpush2.msra.mxu0 %v9352
      %9497 = vmatprep.subr.mxu0 0.0
      %9498 = vmatpush2.msra.mxu0 %v9351
      %9499 = vmatprep.subr.mxu0 0.0
      %9500 = vmatpush2.msra.mxu0 %v9350
      %9501 = vmatprep.subr.mxu0 0.0
      %9502 = vmatpush2.msra.mxu0 %v9349
      %9503 = vmatprep.subr.mxu0 0.0
      %9504 = vmatpush2.msra.mxu0 %v9348
      %9505 = vmatprep.subr.mxu0 0.0
      %9506 = vmatpush2.msra.mxu0 %v9347
      %9507 = vmatprep.subr.mxu0 0.0
      %9508 = vmatpush2.msra.mxu0 %v9346
      %9509 = vmatprep.subr.mxu0 0.0
      %9510 = vmatpush2.msra.mxu0 %v9345
      %9511 = vmatprep.subr.mxu0 0.0
      %9512 = vmatpush2.msra.mxu0 %v9344
      %9513 = vmatprep.subr.mxu0 0.0
      %9514 = vmatpush2.msra.mxu0 %v9343
      %9515 = vmatprep.mubr.f32.mxu0 %v9369
      %9516 = vmatmul.mubr.f32.gmra.mxu0 %v9368
      %v9517 = vpop.f32.mrf.mxu0
      %v9518 = vadd.f32 0.0, %v9517
      %v9519 = vpop.f32.mrf.mxu0
      %9520 = vmatprep.mubr.f32.mxu0 %v9372
      %9521 = vmatmul.mubr.f32.gmra.mxu0 %v9371
      %v9522 = vpop.f32.mrf.mxu0
      %v9523 = vadd.f32 0.0, %v9522
      %v9524 = vpop.f32.mrf.mxu0
      %9525 = vmatprep.mubr.f32.mxu0 %v9375
      %9526 = vmatmul.mubr.f32.gmra.mxu0 %v9374
      %v9527 = vpop.f32.mrf.mxu0
      %v9528 = vadd.f32 0.0, %v9527
      %v9529 = vpop.f32.mrf.mxu0
      %9530 = vmatprep.mubr.f32.mxu0 %v9378
      %9531 = vmatmul.mubr.f32.gmra.mxu0 %v9377
      %v9532 = vpop.f32.mrf.mxu0
      %v9533 = vadd.f32 0.0, %v9532
      %v9534 = vpop.f32.mrf.mxu0
      %9535 = vmatprep.mubr.f32.mxu0 %v9381
      %9536 = vmatmul.mubr.f32.gmra.mxu0 %v9380
      %v9537 = vpop.f32.mrf.mxu0
      %v9538 = vadd.f32 0.0, %v9537
      %v9539 = vpop.f32.mrf.mxu0
      %9540 = vmatprep.mubr.f32.mxu0 %v9384
      %9541 = vmatmul.mubr.f32.gmra.mxu0 %v9383
      %v9542 = vpop.f32.mrf.mxu0
      %v9543 = vadd.f32 0.0, %v9542
      %v9544 = vpop.f32.mrf.mxu0
      %9545 = vmatprep.mubr.f32.mxu0 %v9387
      %9546 = vmatmul.mubr.f32.gmra.mxu0 %v9386
      %v9547 = vpop.f32.mrf.mxu0
      %v9548 = vadd.f32 0.0, %v9547
      %v9549 = vpop.f32.mrf.mxu0
      %9550 = vmatprep.mubr.f32.mxu0 %v9390
      %9551 = vmatmul.mubr.f32.gmra.mxu0 %v9389
      %v9552 = vpop.f32.mrf.mxu0
      %v9553 = vadd.f32 0.0, %v9552
      %v9554 = vpop.f32.mrf.mxu0
      %9555 = vmatprep.mubr.f32.mxu0 %v9393
      %9556 = vmatmul.mubr.f32.gmra.mxu0 %v9392
      %v9557 = vpop.f32.mrf.mxu0
      %v9558 = vadd.f32 0.0, %v9557
      %v9559 = vpop.f32.mrf.mxu0
      %9560 = vmatprep.mubr.f32.mxu0 %v9396
      %9561 = vmatmul.mubr.f32.gmra.mxu0 %v9395
      %v9562 = vpop.f32.mrf.mxu0
      %v9563 = vadd.f32 0.0, %v9562
      %v9564 = vpop.f32.mrf.mxu0
      %9565 = vmatprep.mubr.f32.mxu0 %v9399
      %9566 = vmatmul.mubr.f32.gmra.mxu0 %v9398
      %v9567 = vpop.f32.mrf.mxu0
      %v9568 = vadd.f32 0.0, %v9567
      %v9569 = vpop.f32.mrf.mxu0
      %9570 = vmatprep.mubr.f32.mxu0 %v9402
      %9571 = vmatmul.mubr.f32.gmra.mxu0 %v9401
      %v9572 = vpop.f32.mrf.mxu0
      %v9573 = vadd.f32 0.0, %v9572
      %v9574 = vpop.f32.mrf.mxu0
      %9575 = vmatprep.mubr.f32.mxu0 %v9405
      %9576 = vmatmul.mubr.f32.gmra.mxu0 %v9404
      %v9577 = vpop.f32.mrf.mxu0
      %v9578 = vadd.f32 0.0, %v9577
      %v9579 = vpop.f32.mrf.mxu0
      %9580 = vdwg.mxu0
      %9581 = vmatprep.subr.mxu0 0.0
      %9582 = vmatpush1.msra.mxu0 0.0
      %9583 = vmatprep.subr.mxu0 0.0
      %9584 = vmatpush1.msra.mxu0 0.0
      %9585 = vmatprep.subr.mxu0 0.0
      %9586 = vmatpush1.msra.mxu0 0.0
      %9587 = vmatprep.subr.mxu0 0.0
      %9588 = vmatpush1.msra.mxu0 0.0
      %9589 = vmatprep.subr.mxu0 0.0
      %9590 = vmatpush1.msra.mxu0 0.0
      %9591 = vmatprep.subr.mxu0 0.0
      %9592 = vmatpush1.msra.mxu0 0.0
      %9593 = vmatprep.subr.mxu0 0.0
      %9594 = vmatpush1.msra.mxu0 0.0
      %9595 = vmatprep.subr.mxu0 0.0
      %9596 = vmatpush1.msra.mxu0 %v9449
      %9597 = vmatprep.subr.mxu0 0.0
      %9598 = vmatpush1.msra.mxu0 %v9366
      %9599 = vmatprep.subr.mxu0 0.0
      %9600 = vmatpush1.msra.mxu0 %v9365
      %9601 = vmatprep.subr.mxu0 0.0
      %9602 = vmatpush1.msra.mxu0 %v9364
      %9603 = vmatprep.subr.mxu0 0.0
      %9604 = vmatpush1.msra.mxu0 %v9363
      %9605 = vmatprep.subr.mxu0 0.0
      %9606 = vmatpush1.msra.mxu0 %v9362
      %9607 = vmatprep.subr.mxu0 0.0
      %9608 = vmatpush1.msra.mxu0 %v9361
      %9609 = vmatprep.subr.mxu0 0.0
      %9610 = vmatpush1.msra.mxu0 %v9360
      %9611 = vmatprep.subr.mxu0 0.0
      %9612 = vmatpush1.msra.mxu0 %v9359
      %9613 = vmatprep.subr.mxu0 0.0
      %9614 = vmatpush2.msra.mxu0 0.0
      %9615 = vmatprep.subr.mxu0 0.0
      %9616 = vmatpush2.msra.mxu0 0.0
      %9617 = vmatprep.subr.mxu0 0.0
      %9618 = vmatpush2.msra.mxu0 0.0
      %9619 = vmatprep.subr.mxu0 0.0
      %9620 = vmatpush2.msra.mxu0 0.0
      %9621 = vmatprep.subr.mxu0 0.0
      %9622 = vmatpush2.msra.mxu0 0.0
      %9623 = vmatprep.subr.mxu0 0.0
      %9624 = vmatpush2.msra.mxu0 0.0
      %9625 = vmatprep.subr.mxu0 0.0
      %9626 = vmatpush2.msra.mxu0 0.0
      %9627 = vmatprep.subr.mxu0 0.0
      %9628 = vmatpush2.msra.mxu0 0.0
      %9629 = vmatprep.subr.mxu0 0.0
      %9630 = vmatpush2.msra.mxu0 0.0
      %9631 = vmatprep.subr.mxu0 0.0
      %9632 = vmatpush2.msra.mxu0 0.0
      %9633 = vmatprep.subr.mxu0 0.0
      %9634 = vmatpush2.msra.mxu0 0.0
      %9635 = vmatprep.subr.mxu0 0.0
      %9636 = vmatpush2.msra.mxu0 0.0
      %9637 = vmatprep.subr.mxu0 0.0
      %9638 = vmatpush2.msra.mxu0 0.0
      %9639 = vmatprep.subr.mxu0 0.0
      %9640 = vmatpush2.msra.mxu0 0.0
      %9641 = vmatprep.subr.mxu0 0.0
      %9642 = vmatpush2.msra.mxu0 0.0
      %9643 = vmatprep.subr.mxu0 0.0
      %9644 = vmatpush2.msra.mxu0 0.0
      %9645 = vmatprep.mubr.f32.mxu0 0.0
      %9646 = vmatmul.mubr.f32.gmra.mxu0 %v9409
      %v9647 = vpop.f32.mrf.mxu0
      %v9648 = vadd.f32 %v9518, %v9647
      %v9649 = vpop.f32.mrf.mxu0
      %9650 = vmatprep.mubr.f32.mxu0 0.0
      %9651 = vmatmul.mubr.f32.gmra.mxu0 %v9412
      %v9652 = vpop.f32.mrf.mxu0
      %v9653 = vadd.f32 %v9523, %v9652
      %v9654 = vpop.f32.mrf.mxu0
      %9655 = vmatprep.mubr.f32.mxu0 0.0
      %9656 = vmatmul.mubr.f32.gmra.mxu0 %v9415
      %v9657 = vpop.f32.mrf.mxu0
      %v9658 = vadd.f32 %v9528, %v9657
      %v9659 = vpop.f32.mrf.mxu0
      %9660 = vmatprep.mubr.f32.mxu0 0.0
      %9661 = vmatmul.mubr.f32.gmra.mxu0 %v9418
      %v9662 = vpop.f32.mrf.mxu0
      %v9663 = vadd.f32 %v9533, %v9662
      %v9664 = vpop.f32.mrf.mxu0
      %9665 = vmatprep.mubr.f32.mxu0 0.0
      %9666 = vmatmul.mubr.f32.gmra.mxu0 %v9421
      %v9667 = vpop.f32.mrf.mxu0
      %v9668 = vadd.f32 %v9538, %v9667
      %v9669 = vpop.f32.mrf.mxu0
      %9670 = vmatprep.mubr.f32.mxu0 0.0
      %9671 = vmatmul.mubr.f32.gmra.mxu0 %v9424
      %v9672 = vpop.f32.mrf.mxu0
      %v9673 = vadd.f32 %v9543, %v9672
      %v9674 = vpop.f32.mrf.mxu0
      %9675 = vmatprep.mubr.f32.mxu0 0.0
      %9676 = vmatmul.mubr.f32.gmra.mxu0 %v9427
      %v9677 = vpop.f32.mrf.mxu0
      %v9678 = vadd.f32 %v9548, %v9677
      %v9679 = vpop.f32.mrf.mxu0
      %9680 = vmatprep.mubr.f32.mxu0 0.0
      %9681 = vmatmul.mubr.f32.gmra.mxu0 %v9430
      %v9682 = vpop.f32.mrf.mxu0
      %v9683 = vadd.f32 %v9553, %v9682
      %v9684 = vpop.f32.mrf.mxu0
      %9685 = vmatprep.mubr.f32.mxu0 0.0
      %9686 = vmatmul.mubr.f32.gmra.mxu0 %v9433
      %v9687 = vpop.f32.mrf.mxu0
      %v9688 = vadd.f32 %v9558, %v9687
      %v9689 = vpop.f32.mrf.mxu0
      %9690 = vmatprep.mubr.f32.mxu0 0.0
      %9691 = vmatmul.mubr.f32.gmra.mxu0 %v9436
      %v9692 = vpop.f32.mrf.mxu0
      %v9693 = vadd.f32 %v9563, %v9692
      %v9694 = vpop.f32.mrf.mxu0
      %9695 = vmatprep.mubr.f32.mxu0 0.0
      %9696 = vmatmul.mubr.f32.gmra.mxu0 %v9439
      %v9697 = vpop.f32.mrf.mxu0
      %v9698 = vadd.f32 %v9568, %v9697
      %v9699 = vpop.f32.mrf.mxu0
      %9700 = vmatprep.mubr.f32.mxu0 0.0
      %9701 = vmatmul.mubr.f32.gmra.mxu0 %v9442
      %v9702 = vpop.f32.mrf.mxu0
      %v9703 = vadd.f32 %v9573, %v9702
      %v9704 = vpop.f32.mrf.mxu0
      %9705 = vmatprep.mubr.f32.mxu0 0.0
      %9706 = vmatmul.mubr.f32.gmra.mxu0 %v9445
      %v9707 = vpop.f32.mrf.mxu0
      %v9708 = vadd.f32 %v9578, %v9707
      %v9709 = vpop.f32.mrf.mxu0
      %9710 = vdwg.mxu0
      %v9712 = vsel %vm9447, %v5017, 0
      %9714 = vmatprep.subr.mxu0 0.0
      %9715 = vmatpush1.msra.mxu0 %v4992
      %9716 = vmatprep.subr.mxu0 0.0
      %9717 = vmatpush1.msra.mxu0 %v4991
      %9718 = vmatprep.subr.mxu0 0.0
      %9719 = vmatpush1.msra.mxu0 %v4990
      %9720 = vmatprep.subr.mxu0 0.0
      %9721 = vmatpush1.msra.mxu0 %v4989
      %9722 = vmatprep.subr.mxu0 0.0
      %9723 = vmatpush1.msra.mxu0 %v4988
      %9724 = vmatprep.subr.mxu0 0.0
      %9725 = vmatpush1.msra.mxu0 %v4987
      %9726 = vmatprep.subr.mxu0 0.0
      %9727 = vmatpush1.msra.mxu0 %v4986
      %9728 = vmatprep.subr.mxu0 0.0
      %9729 = vmatpush1.msra.mxu0 %v4985
      %9730 = vmatprep.subr.mxu0 0.0
      %9731 = vmatpush1.msra.mxu0 %v4984
      %9732 = vmatprep.subr.mxu0 0.0
      %9733 = vmatpush1.msra.mxu0 %v4983
      %9734 = vmatprep.subr.mxu0 0.0
      %9735 = vmatpush1.msra.mxu0 %v4982
      %9736 = vmatprep.subr.mxu0 0.0
      %9737 = vmatpush1.msra.mxu0 %v4981
      %9738 = vmatprep.subr.mxu0 0.0
      %9739 = vmatpush1.msra.mxu0 %v4980
      %9740 = vmatprep.subr.mxu0 0.0
      %9741 = vmatpush1.msra.mxu0 %v4979
      %9742 = vmatprep.subr.mxu0 0.0
      %9743 = vmatpush1.msra.mxu0 %v4978
      %9744 = vmatprep.subr.mxu0 0.0
      %9745 = vmatpush1.msra.mxu0 %v4977
      %9746 = vmatprep.subr.mxu0 0.0
      %9747 = vmatpush2.msra.mxu0 %v5008
      %9748 = vmatprep.subr.mxu0 0.0
      %9749 = vmatpush2.msra.mxu0 %v5007
      %9750 = vmatprep.subr.mxu0 0.0
      %9751 = vmatpush2.msra.mxu0 %v5006
      %9752 = vmatprep.subr.mxu0 0.0
      %9753 = vmatpush2.msra.mxu0 %v5005
      %9754 = vmatprep.subr.mxu0 0.0
      %9755 = vmatpush2.msra.mxu0 %v5004
      %9756 = vmatprep.subr.mxu0 0.0
      %9757 = vmatpush2.msra.mxu0 %v5003
      %9758 = vmatprep.subr.mxu0 0.0
      %9759 = vmatpush2.msra.mxu0 %v5002
      %9760 = vmatprep.subr.mxu0 0.0
      %9761 = vmatpush2.msra.mxu0 %v5001
      %9762 = vmatprep.subr.mxu0 0.0
      %9763 = vmatpush2.msra.mxu0 %v5000
      %9764 = vmatprep.subr.mxu0 0.0
      %9765 = vmatpush2.msra.mxu0 %v4999
      %9766 = vmatprep.subr.mxu0 0.0
      %9767 = vmatpush2.msra.mxu0 %v4998
      %9768 = vmatprep.subr.mxu0 0.0
      %9769 = vmatpush2.msra.mxu0 %v4997
      %9770 = vmatprep.subr.mxu0 0.0
      %9771 = vmatpush2.msra.mxu0 %v4996
      %9772 = vmatprep.subr.mxu0 0.0
      %9773 = vmatpush2.msra.mxu0 %v4995
      %9774 = vmatprep.subr.mxu0 0.0
      %9775 = vmatpush2.msra.mxu0 %v4994
      %9776 = vmatprep.subr.mxu0 0.0
      %9777 = vmatpush2.msra.mxu0 %v4993
      %9778 = vmatprep.mubr.f32.mxu0 %v9369
      %9779 = vmatmul.mubr.f32.gmra.mxu0 %v9368
      %v9780 = vpop.f32.mrf.mxu0
      %v9781 = vadd.f32 0.0, %v9780
      %v9782 = vpop.f32.mrf.mxu0
      %9783 = vmatprep.mubr.f32.mxu0 %v9372
      %9784 = vmatmul.mubr.f32.gmra.mxu0 %v9371
      %v9785 = vpop.f32.mrf.mxu0
      %v9786 = vadd.f32 0.0, %v9785
      %v9787 = vpop.f32.mrf.mxu0
      %9788 = vmatprep.mubr.f32.mxu0 %v9375
      %9789 = vmatmul.mubr.f32.gmra.mxu0 %v9374
      %v9790 = vpop.f32.mrf.mxu0
      %v9791 = vadd.f32 0.0, %v9790
      %v9792 = vpop.f32.mrf.mxu0
      %9793 = vmatprep.mubr.f32.mxu0 %v9378
      %9794 = vmatmul.mubr.f32.gmra.mxu0 %v9377
      %v9795 = vpop.f32.mrf.mxu0
      %v9796 = vadd.f32 0.0, %v9795
      %v9797 = vpop.f32.mrf.mxu0
      %9798 = vmatprep.mubr.f32.mxu0 %v9381
      %9799 = vmatmul.mubr.f32.gmra.mxu0 %v9380
      %v9800 = vpop.f32.mrf.mxu0
      %v9801 = vadd.f32 0.0, %v9800
      %v9802 = vpop.f32.mrf.mxu0
      %9803 = vmatprep.mubr.f32.mxu0 %v9384
      %9804 = vmatmul.mubr.f32.gmra.mxu0 %v9383
      %v9805 = vpop.f32.mrf.mxu0
      %v9806 = vadd.f32 0.0, %v9805
      %v9807 = vpop.f32.mrf.mxu0
      %9808 = vmatprep.mubr.f32.mxu0 %v9387
      %9809 = vmatmul.mubr.f32.gmra.mxu0 %v9386
      %v9810 = vpop.f32.mrf.mxu0
      %v9811 = vadd.f32 0.0, %v9810
      %v9812 = vpop.f32.mrf.mxu0
      %9813 = vmatprep.mubr.f32.mxu0 %v9390
      %9814 = vmatmul.mubr.f32.gmra.mxu0 %v9389
      %v9815 = vpop.f32.mrf.mxu0
      %v9816 = vadd.f32 0.0, %v9815
      %v9817 = vpop.f32.mrf.mxu0
      %9818 = vmatprep.mubr.f32.mxu0 %v9393
      %9819 = vmatmul.mubr.f32.gmra.mxu0 %v9392
      %v9820 = vpop.f32.mrf.mxu0
      %v9821 = vadd.f32 0.0, %v9820
      %v9822 = vpop.f32.mrf.mxu0
      %9823 = vmatprep.mubr.f32.mxu0 %v9396
      %9824 = vmatmul.mubr.f32.gmra.mxu0 %v9395
      %v9825 = vpop.f32.mrf.mxu0
      %v9826 = vadd.f32 0.0, %v9825
      %v9827 = vpop.f32.mrf.mxu0
      %9828 = vmatprep.mubr.f32.mxu0 %v9399
      %9829 = vmatmul.mubr.f32.gmra.mxu0 %v9398
      %v9830 = vpop.f32.mrf.mxu0
      %v9831 = vadd.f32 0.0, %v9830
      %v9832 = vpop.f32.mrf.mxu0
      %9833 = vmatprep.mubr.f32.mxu0 %v9402
      %9834 = vmatmul.mubr.f32.gmra.mxu0 %v9401
      %v9835 = vpop.f32.mrf.mxu0
      %v9836 = vadd.f32 0.0, %v9835
      %v9837 = vpop.f32.mrf.mxu0
      %9838 = vmatprep.mubr.f32.mxu0 %v9405
      %9839 = vmatmul.mubr.f32.gmra.mxu0 %v9404
      %v9840 = vpop.f32.mrf.mxu0
      %v9841 = vadd.f32 0.0, %v9840
      %v9842 = vpop.f32.mrf.mxu0
      %9843 = vdwg.mxu0
      %9844 = vmatprep.subr.mxu0 0.0
      %9845 = vmatpush1.msra.mxu0 0.0
      %9846 = vmatprep.subr.mxu0 0.0
      %9847 = vmatpush1.msra.mxu0 0.0
      %9848 = vmatprep.subr.mxu0 0.0
      %9849 = vmatpush1.msra.mxu0 0.0
      %9850 = vmatprep.subr.mxu0 0.0
      %9851 = vmatpush1.msra.mxu0 0.0
      %9852 = vmatprep.subr.mxu0 0.0
      %9853 = vmatpush1.msra.mxu0 0.0
      %9854 = vmatprep.subr.mxu0 0.0
      %9855 = vmatpush1.msra.mxu0 0.0
      %9856 = vmatprep.subr.mxu0 0.0
      %9857 = vmatpush1.msra.mxu0 0.0
      %9858 = vmatprep.subr.mxu0 0.0
      %9859 = vmatpush1.msra.mxu0 %v9712
      %9860 = vmatprep.subr.mxu0 0.0
      %9861 = vmatpush1.msra.mxu0 %v5016
      %9862 = vmatprep.subr.mxu0 0.0
      %9863 = vmatpush1.msra.mxu0 %v5015
      %9864 = vmatprep.subr.mxu0 0.0
      %9865 = vmatpush1.msra.mxu0 %v5014
      %9866 = vmatprep.subr.mxu0 0.0
      %9867 = vmatpush1.msra.mxu0 %v5013
      %9868 = vmatprep.subr.mxu0 0.0
      %9869 = vmatpush1.msra.mxu0 %v5012
      %9870 = vmatprep.subr.mxu0 0.0
      %9871 = vmatpush1.msra.mxu0 %v5011
      %9872 = vmatprep.subr.mxu0 0.0
      %9873 = vmatpush1.msra.mxu0 %v5010
      %9874 = vmatprep.subr.mxu0 0.0
      %9875 = vmatpush1.msra.mxu0 %v5009
      %9876 = vmatprep.subr.mxu0 0.0
      %9877 = vmatpush2.msra.mxu0 0.0
      %9878 = vmatprep.subr.mxu0 0.0
      %9879 = vmatpush2.msra.mxu0 0.0
      %9880 = vmatprep.subr.mxu0 0.0
      %9881 = vmatpush2.msra.mxu0 0.0
      %9882 = vmatprep.subr.mxu0 0.0
      %9883 = vmatpush2.msra.mxu0 0.0
      %9884 = vmatprep.subr.mxu0 0.0
      %9885 = vmatpush2.msra.mxu0 0.0
      %9886 = vmatprep.subr.mxu0 0.0
      %9887 = vmatpush2.msra.mxu0 0.0
      %9888 = vmatprep.subr.mxu0 0.0
      %9889 = vmatpush2.msra.mxu0 0.0
      %9890 = vmatprep.subr.mxu0 0.0
      %9891 = vmatpush2.msra.mxu0 0.0
      %9892 = vmatprep.subr.mxu0 0.0
      %9893 = vmatpush2.msra.mxu0 0.0
      %9894 = vmatprep.subr.mxu0 0.0
      %9895 = vmatpush2.msra.mxu0 0.0
      %9896 = vmatprep.subr.mxu0 0.0
      %9897 = vmatpush2.msra.mxu0 0.0
      %9898 = vmatprep.subr.mxu0 0.0
      %9899 = vmatpush2.msra.mxu0 0.0
      %9900 = vmatprep.subr.mxu0 0.0
      %9901 = vmatpush2.msra.mxu0 0.0
      %9902 = vmatprep.subr.mxu0 0.0
      %9903 = vmatpush2.msra.mxu0 0.0
      %9904 = vmatprep.subr.mxu0 0.0
      %9905 = vmatpush2.msra.mxu0 0.0
      %9906 = vmatprep.subr.mxu0 0.0
      %9907 = vmatpush2.msra.mxu0 0.0
      %9908 = vmatprep.mubr.f32.mxu0 0.0
      %9909 = vmatmul.mubr.f32.gmra.mxu0 %v9409
      %v9910 = vpop.f32.mrf.mxu0
      %v9911 = vadd.f32 %v9781, %v9910
      %v9912 = vpop.f32.mrf.mxu0
      %9913 = vmatprep.mubr.f32.mxu0 0.0
      %9914 = vmatmul.mubr.f32.gmra.mxu0 %v9412
      %v9915 = vpop.f32.mrf.mxu0
      %v9916 = vadd.f32 %v9786, %v9915
      %v9917 = vpop.f32.mrf.mxu0
      %9918 = vmatprep.mubr.f32.mxu0 0.0
      %9919 = vmatmul.mubr.f32.gmra.mxu0 %v9415
      %v9920 = vpop.f32.mrf.mxu0
      %v9921 = vadd.f32 %v9791, %v9920
      %v9922 = vpop.f32.mrf.mxu0
      %9923 = vmatprep.mubr.f32.mxu0 0.0
      %9924 = vmatmul.mubr.f32.gmra.mxu0 %v9418
      %v9925 = vpop.f32.mrf.mxu0
      %v9926 = vadd.f32 %v9796, %v9925
      %v9927 = vpop.f32.mrf.mxu0
      %9928 = vmatprep.mubr.f32.mxu0 0.0
      %9929 = vmatmul.mubr.f32.gmra.mxu0 %v9421
      %v9930 = vpop.f32.mrf.mxu0
      %v9931 = vadd.f32 %v9801, %v9930
      %v9932 = vpop.f32.mrf.mxu0
      %9933 = vmatprep.mubr.f32.mxu0 0.0
      %9934 = vmatmul.mubr.f32.gmra.mxu0 %v9424
      %v9935 = vpop.f32.mrf.mxu0
      %v9936 = vadd.f32 %v9806, %v9935
      %v9937 = vpop.f32.mrf.mxu0
      %9938 = vmatprep.mubr.f32.mxu0 0.0
      %9939 = vmatmul.mubr.f32.gmra.mxu0 %v9427
      %v9940 = vpop.f32.mrf.mxu0
      %v9941 = vadd.f32 %v9811, %v9940
      %v9942 = vpop.f32.mrf.mxu0
      %9943 = vmatprep.mubr.f32.mxu0 0.0
      %9944 = vmatmul.mubr.f32.gmra.mxu0 %v9430
      %v9945 = vpop.f32.mrf.mxu0
      %v9946 = vadd.f32 %v9816, %v9945
      %v9947 = vpop.f32.mrf.mxu0
      %9948 = vmatprep.mubr.f32.mxu0 0.0
      %9949 = vmatmul.mubr.f32.gmra.mxu0 %v9433
      %v9950 = vpop.f32.mrf.mxu0
      %v9951 = vadd.f32 %v9821, %v9950
      %v9952 = vpop.f32.mrf.mxu0
      %9953 = vmatprep.mubr.f32.mxu0 0.0
      %9954 = vmatmul.mubr.f32.gmra.mxu0 %v9436
      %v9955 = vpop.f32.mrf.mxu0
      %v9956 = vadd.f32 %v9826, %v9955
      %v9957 = vpop.f32.mrf.mxu0
      %9958 = vmatprep.mubr.f32.mxu0 0.0
      %9959 = vmatmul.mubr.f32.gmra.mxu0 %v9439
      %v9960 = vpop.f32.mrf.mxu0
      %v9961 = vadd.f32 %v9831, %v9960
      %v9962 = vpop.f32.mrf.mxu0
      %9963 = vmatprep.mubr.f32.mxu0 0.0
      %9964 = vmatmul.mubr.f32.gmra.mxu0 %v9442
      %v9965 = vpop.f32.mrf.mxu0
      %v9966 = vadd.f32 %v9836, %v9965
      %v9967 = vpop.f32.mrf.mxu0
      %9968 = vmatprep.mubr.f32.mxu0 0.0
      %9969 = vmatmul.mubr.f32.gmra.mxu0 %v9445
      %v9970 = vpop.f32.mrf.mxu0
      %v9971 = vadd.f32 %v9841, %v9970
      %v9972 = vpop.f32.mrf.mxu0
      %9973 = vdwg.mxu0
      %v9974 = vld [vmem:[%s6] sm:$0xff]
      %v9975 = vld [vmem:[%s6 + $0x8] sm:$0xff]
      %v9977 = vsel %vm5018, %v9911, 0
      %v9980 = vsel %vm5018, %v9916, 0
      %v9983 = vsel %vm5018, %v9921, 0
      %v9986 = vsel %vm5018, %v9926, 0
      %v9989 = vsel %vm5018, %v9931, 0
      %v9992 = vsel %vm5018, %v9936, 0
      %v9995 = vsel %vm5018, %v9941, 0
      %v9998 = vsel %vm5018, %v9946, 0
      %v10001 = vsel %vm5018, %v9951, 0
      %v10004 = vsel %vm5018, %v9956, 0
      %v10007 = vsel %vm5018, %v9961, 0
      %v10010 = vsel %vm5018, %v9966, 0
      %v10013 = vsel %vm5018, %v9971, 0
      %10015 = vmatprep.subr.mxu0 0.0
      %10016 = vmatpush1.msra.mxu0 0.0
      %10017 = vmatprep.subr.mxu0 0.0
      %10018 = vmatpush1.msra.mxu0 0.0
      %10019 = vmatprep.subr.mxu0 0.0
      %10020 = vmatpush1.msra.mxu0 0.0
      %10021 = vmatprep.subr.mxu0 0.0
      %10022 = vmatpush1.msra.mxu0 0.0
      %10023 = vmatprep.subr.mxu0 0.0
      %10024 = vmatpush1.msra.mxu0 0.0
      %10025 = vmatprep.subr.mxu0 0.0
      %10026 = vmatpush1.msra.mxu0 0.0
      %10027 = vmatprep.subr.mxu0 0.0
      %10028 = vmatpush1.msra.mxu0 0.0
      %10029 = vmatprep.subr.mxu0 0.0
      %10030 = vmatpush1.msra.mxu0 0.0
      %10031 = vmatprep.subr.mxu0 0.0
      %10032 = vmatpush1.msra.mxu0 0.0
      %10033 = vmatprep.subr.mxu0 0.0
      %10034 = vmatpush1.msra.mxu0 0.0
      %10035 = vmatprep.subr.mxu0 0.0
      %10036 = vmatpush1.msra.mxu0 0.0
      %10037 = vmatprep.subr.mxu0 0.0
      %10038 = vmatpush1.msra.mxu0 0.0
      %10039 = vmatprep.subr.mxu0 0.0
      %10040 = vmatpush1.msra.mxu0 0.0
      %10041 = vmatprep.subr.mxu0 0.0
      %10042 = vmatpush1.msra.mxu0 0.0
      %10043 = vmatprep.subr.mxu0 0.0
      %10044 = vmatpush1.msra.mxu0 %v9975
      %10045 = vmatprep.subr.mxu0 0.0
      %10046 = vmatpush1.msra.mxu0 %v9974
      %10047 = vmatprep.subr.mxu0 0.0
      %10048 = vmatpush2.msra.mxu0 0.0
      %10049 = vmatprep.subr.mxu0 0.0
      %10050 = vmatpush2.msra.mxu0 0.0
      %10051 = vmatprep.subr.mxu0 0.0
      %10052 = vmatpush2.msra.mxu0 0.0
      %10053 = vmatprep.subr.mxu0 0.0
      %10054 = vmatpush2.msra.mxu0 0.0
      %10055 = vmatprep.subr.mxu0 0.0
      %10056 = vmatpush2.msra.mxu0 0.0
      %10057 = vmatprep.subr.mxu0 0.0
      %10058 = vmatpush2.msra.mxu0 0.0
      %10059 = vmatprep.subr.mxu0 0.0
      %10060 = vmatpush2.msra.mxu0 0.0
      %10061 = vmatprep.subr.mxu0 0.0
      %10062 = vmatpush2.msra.mxu0 0.0
      %10063 = vmatprep.subr.mxu0 0.0
      %10064 = vmatpush2.msra.mxu0 0.0
      %10065 = vmatprep.subr.mxu0 0.0
      %10066 = vmatpush2.msra.mxu0 0.0
      %10067 = vmatprep.subr.mxu0 0.0
      %10068 = vmatpush2.msra.mxu0 0.0
      %10069 = vmatprep.subr.mxu0 0.0
      %10070 = vmatpush2.msra.mxu0 0.0
      %10071 = vmatprep.subr.mxu0 0.0
      %10072 = vmatpush2.msra.mxu0 0.0
      %10073 = vmatprep.subr.mxu0 0.0
      %10074 = vmatpush2.msra.mxu0 0.0
      %10075 = vmatprep.subr.mxu0 0.0
      %10076 = vmatpush2.msra.mxu0 0.0
      %10077 = vmatprep.subr.mxu0 0.0
      %10078 = vmatpush2.msra.mxu0 0.0
      %10079 = vmatprep.mubr.f32.mxu0 0.0
      %10080 = vmatmul.mubr.f32.gmra.mxu0 %v9977
      %v10081 = vpop.f32.mrf.mxu0
      %v10082 = vadd.f32 0.0, %v10081
      %v10083 = vpop.f32.mrf.mxu0
      %10084 = vmatprep.mubr.f32.mxu0 0.0
      %10085 = vmatmul.mubr.f32.gmra.mxu0 %v9980
      %v10086 = vpop.f32.mrf.mxu0
      %v10087 = vadd.f32 0.0, %v10086
      %v10088 = vpop.f32.mrf.mxu0
      %10089 = vmatprep.mubr.f32.mxu0 0.0
      %10090 = vmatmul.mubr.f32.gmra.mxu0 %v9983
      %v10091 = vpop.f32.mrf.mxu0
      %v10092 = vadd.f32 0.0, %v10091
      %v10093 = vpop.f32.mrf.mxu0
      %10094 = vmatprep.mubr.f32.mxu0 0.0
      %10095 = vmatmul.mubr.f32.gmra.mxu0 %v9986
      %v10096 = vpop.f32.mrf.mxu0
      %v10097 = vadd.f32 0.0, %v10096
      %v10098 = vpop.f32.mrf.mxu0
      %10099 = vmatprep.mubr.f32.mxu0 0.0
      %10100 = vmatmul.mubr.f32.gmra.mxu0 %v9989
      %v10101 = vpop.f32.mrf.mxu0
      %v10102 = vadd.f32 0.0, %v10101
      %v10103 = vpop.f32.mrf.mxu0
      %10104 = vmatprep.mubr.f32.mxu0 0.0
      %10105 = vmatmul.mubr.f32.gmra.mxu0 %v9992
      %v10106 = vpop.f32.mrf.mxu0
      %v10107 = vadd.f32 0.0, %v10106
      %v10108 = vpop.f32.mrf.mxu0
      %10109 = vmatprep.mubr.f32.mxu0 0.0
      %10110 = vmatmul.mubr.f32.gmra.mxu0 %v9995
      %v10111 = vpop.f32.mrf.mxu0
      %v10112 = vadd.f32 0.0, %v10111
      %v10113 = vpop.f32.mrf.mxu0
      %10114 = vmatprep.mubr.f32.mxu0 0.0
      %10115 = vmatmul.mubr.f32.gmra.mxu0 %v9998
      %v10116 = vpop.f32.mrf.mxu0
      %v10117 = vadd.f32 0.0, %v10116
      %v10118 = vpop.f32.mrf.mxu0
      %10119 = vmatprep.mubr.f32.mxu0 0.0
      %10120 = vmatmul.mubr.f32.gmra.mxu0 %v10001
      %v10121 = vpop.f32.mrf.mxu0
      %v10122 = vadd.f32 0.0, %v10121
      %v10123 = vpop.f32.mrf.mxu0
      %10124 = vmatprep.mubr.f32.mxu0 0.0
      %10125 = vmatmul.mubr.f32.gmra.mxu0 %v10004
      %v10126 = vpop.f32.mrf.mxu0
      %v10127 = vadd.f32 0.0, %v10126
      %v10128 = vpop.f32.mrf.mxu0
      %10129 = vmatprep.mubr.f32.mxu0 0.0
      %10130 = vmatmul.mubr.f32.gmra.mxu0 %v10007
      %v10131 = vpop.f32.mrf.mxu0
      %v10132 = vadd.f32 0.0, %v10131
      %v10133 = vpop.f32.mrf.mxu0
      %10134 = vmatprep.mubr.f32.mxu0 0.0
      %10135 = vmatmul.mubr.f32.gmra.mxu0 %v10010
      %v10136 = vpop.f32.mrf.mxu0
      %v10137 = vadd.f32 0.0, %v10136
      %v10138 = vpop.f32.mrf.mxu0
      %10139 = vmatprep.mubr.f32.mxu0 0.0
      %10140 = vmatmul.mubr.f32.gmra.mxu0 %v10013
      %v10141 = vpop.f32.mrf.mxu0
      %v10142 = vadd.f32 0.0, %v10141
      %v10143 = vpop.f32.mrf.mxu0
      %10144 = vdwg.mxu0
      %vm10145 = vcmask 261120
      %10146 = vst.msk [vmem:[#allocation3] sm:$0xff] %vm10145, 0.0
      %10147 = vst.msk [vmem:[#allocation3 + $0x8] sm:$0xff] %vm10145, 0.0
      %10148 = vst.msk [vmem:[#allocation3 + $0x74] sm:$0xff] %vm10145, 0.0
      %10149 = vst.msk [vmem:[#allocation3 + $0x7c] sm:$0xff] %vm10145, 0.0
      %vm10150 = vcmask 257024
      %10151 = vst.msk [vmem:[#allocation3 + $0x84] sm:$0xf] %vm10150, 0.0
      %10152 = vst.msk [vmem:[#allocation3 + $0x10] sm:$0xff] %vm10145, %v9648
      %10153 = vst.msk [vmem:[#allocation3 + $0x18] sm:$0xff] %vm10145, %v9653
      %10154 = vst.msk [vmem:[#allocation3 + $0x20] sm:$0xff] %vm10145, %v9658
      %10155 = vst.msk [vmem:[#allocation3 + $0x28] sm:$0xff] %vm10145, %v9663
      %10156 = vst.msk [vmem:[#allocation3 + $0x30] sm:$0xff] %vm10145, %v9668
      %10157 = vst.msk [vmem:[#allocation3 + $0x38] sm:$0xff] %vm10145, %v9673
      %10158 = vst.msk [vmem:[#allocation3 + $0x40] sm:$0xff] %vm10145, %v9678
      %10159 = vst.msk [vmem:[#allocation3 + $0x48] sm:$0xff] %vm10145, %v9683
      %10160 = vst.msk [vmem:[#allocation3 + $0x50] sm:$0xff] %vm10145, %v9688
      %10161 = vst.msk [vmem:[#allocation3 + $0x58] sm:$0xff] %vm10145, %v9693
      %10162 = vst.msk [vmem:[#allocation3 + $0x60] sm:$0xff] %vm10145, %v9698
      %10163 = vst.msk [vmem:[#allocation3 + $0x68] sm:$0xff] %vm10145, %v9703
      %10164 = vst.msk [vmem:[#allocation3 + $0x70] sm:$0xf] %vm10150, %v9708
      %v10165 = vld [vmem:[#allocation3 + $0x5] sm:$0xff]
      %v10166 = vld [vmem:[#allocation3 + $0xd] sm:$0xff]
      %v10167 = vld [vmem:[#allocation3 + $0x15] sm:$0xff]
      %v10168 = vld [vmem:[#allocation3 + $0x1d] sm:$0xff]
      %v10169 = vld [vmem:[#allocation3 + $0x25] sm:$0xff]
      %v10170 = vld [vmem:[#allocation3 + $0x2d] sm:$0xff]
      %v10171 = vld [vmem:[#allocation3 + $0x35] sm:$0xff]
      %v10172 = vld [vmem:[#allocation3 + $0x3d] sm:$0xff]
      %v10173 = vld [vmem:[#allocation3 + $0x45] sm:$0xff]
      %v10174 = vld [vmem:[#allocation3 + $0x4d] sm:$0xff]
      %v10175 = vld [vmem:[#allocation3 + $0x55] sm:$0xff]
      %v10176 = vld [vmem:[#allocation3 + $0x5d] sm:$0xff]
      %v10177 = vld [vmem:[#allocation3 + $0x65] sm:$0xf]
      %v10178 = vld [vmem:[%s5] sm:$0xff]
      %v10179 = vld [vmem:[%s5 + $0x8] sm:$0xff]
      %v10180 = vld [vmem:[%s5 + $0x10] sm:$0xff]
      %v10181 = vld [vmem:[%s5 + $0x18] sm:$0xff]
      %v10182 = vld [vmem:[#allocation3 + $0x6] sm:$0xff]
      %v10183 = vld [vmem:[#allocation3 + $0xe] sm:$0xff]
      %v10184 = vld [vmem:[#allocation3 + $0x16] sm:$0xff]
      %v10185 = vld [vmem:[#allocation3 + $0x1e] sm:$0xff]
      %v10186 = vld [vmem:[#allocation3 + $0x26] sm:$0xff]
      %v10187 = vld [vmem:[#allocation3 + $0x2e] sm:$0xff]
      %v10188 = vld [vmem:[#allocation3 + $0x36] sm:$0xff]
      %v10189 = vld [vmem:[#allocation3 + $0x3e] sm:$0xff]
      %v10190 = vld [vmem:[#allocation3 + $0x46] sm:$0xff]
      %v10191 = vld [vmem:[#allocation3 + $0x4e] sm:$0xff]
      %v10192 = vld [vmem:[#allocation3 + $0x56] sm:$0xff]
      %v10193 = vld [vmem:[#allocation3 + $0x5e] sm:$0xff]
      %v10194 = vld [vmem:[#allocation3 + $0x66] sm:$0xf]
      %v10195 = vld [vmem:[%s5 + $0x20] sm:$0xff]
      %v10196 = vld [vmem:[%s5 + $0x28] sm:$0xff]
      %v10197 = vld [vmem:[%s5 + $0x30] sm:$0xff]
      %v10198 = vld [vmem:[%s5 + $0x38] sm:$0xff]
      %v10200 = vsel %vm10145, %v10182, 0
      %v10203 = vsel %vm10145, %v10183, 0
      %v10206 = vsel %vm10145, %v10184, 0
      %v10209 = vsel %vm10145, %v10185, 0
      %v10212 = vsel %vm10145, %v10186, 0
      %v10215 = vsel %vm10145, %v10187, 0
      %v10218 = vsel %vm10145, %v10188, 0
      %v10221 = vsel %vm10145, %v10189, 0
      %v10224 = vsel %vm10145, %v10190, 0
      %v10227 = vsel %vm10145, %v10191, 0
      %v10230 = vsel %vm10145, %v10192, 0
      %v10233 = vsel %vm10145, %v10193, 0
      %v10236 = vsel %vm10145, %v10194, 0
      %10238 = vmatprep.subr.mxu0 0.0
      %10239 = vmatpush1.msra.mxu0 0.0
      %10240 = vmatprep.subr.mxu0 0.0
      %10241 = vmatpush1.msra.mxu0 0.0
      %10242 = vmatprep.subr.mxu0 0.0
      %10243 = vmatpush1.msra.mxu0 0.0
      %10244 = vmatprep.subr.mxu0 0.0
      %10245 = vmatpush1.msra.mxu0 0.0
      %10246 = vmatprep.subr.mxu0 0.0
      %10247 = vmatpush1.msra.mxu0 0.0
      %10248 = vmatprep.subr.mxu0 0.0
      %10249 = vmatpush1.msra.mxu0 0.0
      %10250 = vmatprep.subr.mxu0 0.0
      %10251 = vmatpush1.msra.mxu0 0.0
      %10252 = vmatprep.subr.mxu0 0.0
      %10253 = vmatpush1.msra.mxu0 0.0
      %10254 = vmatprep.subr.mxu0 0.0
      %10255 = vmatpush1.msra.mxu0 0.0
      %10256 = vmatprep.subr.mxu0 0.0
      %10257 = vmatpush1.msra.mxu0 0.0
      %10258 = vmatprep.subr.mxu0 0.0
      %10259 = vmatpush1.msra.mxu0 0.0
      %10260 = vmatprep.subr.mxu0 0.0
      %10261 = vmatpush1.msra.mxu0 0.0
      %10262 = vmatprep.subr.mxu0 0.0
      %10263 = vmatpush1.msra.mxu0 %v10198
      %10264 = vmatprep.subr.mxu0 0.0
      %10265 = vmatpush1.msra.mxu0 %v10197
      %10266 = vmatprep.subr.mxu0 0.0
      %10267 = vmatpush1.msra.mxu0 %v10196
      %10268 = vmatprep.subr.mxu0 0.0
      %10269 = vmatpush1.msra.mxu0 %v10195
      %10270 = vmatprep.subr.mxu0 0.0
      %10271 = vmatpush2.msra.mxu0 0.0
      %10272 = vmatprep.subr.mxu0 0.0
      %10273 = vmatpush2.msra.mxu0 0.0
      %10274 = vmatprep.subr.mxu0 0.0
      %10275 = vmatpush2.msra.mxu0 0.0
      %10276 = vmatprep.subr.mxu0 0.0
      %10277 = vmatpush2.msra.mxu0 0.0
      %10278 = vmatprep.subr.mxu0 0.0
      %10279 = vmatpush2.msra.mxu0 0.0
      %10280 = vmatprep.subr.mxu0 0.0
      %10281 = vmatpush2.msra.mxu0 0.0
      %10282 = vmatprep.subr.mxu0 0.0
      %10283 = vmatpush2.msra.mxu0 0.0
      %10284 = vmatprep.subr.mxu0 0.0
      %10285 = vmatpush2.msra.mxu0 0.0
      %10286 = vmatprep.subr.mxu0 0.0
      %10287 = vmatpush2.msra.mxu0 0.0
      %10288 = vmatprep.subr.mxu0 0.0
      %10289 = vmatpush2.msra.mxu0 0.0
      %10290 = vmatprep.subr.mxu0 0.0
      %10291 = vmatpush2.msra.mxu0 0.0
      %10292 = vmatprep.subr.mxu0 0.0
      %10293 = vmatpush2.msra.mxu0 0.0
      %10294 = vmatprep.subr.mxu0 0.0
      %10295 = vmatpush2.msra.mxu0 0.0
      %10296 = vmatprep.subr.mxu0 0.0
      %10297 = vmatpush2.msra.mxu0 0.0
      %10298 = vmatprep.subr.mxu0 0.0
      %10299 = vmatpush2.msra.mxu0 0.0
      %10300 = vmatprep.subr.mxu0 0.0
      %10301 = vmatpush2.msra.mxu0 0.0
      %10302 = vmatprep.mubr.f32.mxu0 0.0
      %10303 = vmatmul.mubr.f32.gmra.mxu0 %v10200
      %v10304 = vpop.f32.mrf.mxu0
      %v10305 = vadd.f32 0.0, %v10304
      %v10306 = vpop.f32.mrf.mxu0
      %10307 = vmatprep.mubr.f32.mxu0 0.0
      %10308 = vmatmul.mubr.f32.gmra.mxu0 %v10203
      %v10309 = vpop.f32.mrf.mxu0
      %v10310 = vadd.f32 0.0, %v10309
      %v10311 = vpop.f32.mrf.mxu0
      %10312 = vmatprep.mubr.f32.mxu0 0.0
      %10313 = vmatmul.mubr.f32.gmra.mxu0 %v10206
      %v10314 = vpop.f32.mrf.mxu0
      %v10315 = vadd.f32 0.0, %v10314
      %v10316 = vpop.f32.mrf.mxu0
      %10317 = vmatprep.mubr.f32.mxu0 0.0
      %10318 = vmatmul.mubr.f32.gmra.mxu0 %v10209
      %v10319 = vpop.f32.mrf.mxu0
      %v10320 = vadd.f32 0.0, %v10319
      %v10321 = vpop.f32.mrf.mxu0
      %10322 = vmatprep.mubr.f32.mxu0 0.0
      %10323 = vmatmul.mubr.f32.gmra.mxu0 %v10212
      %v10324 = vpop.f32.mrf.mxu0
      %v10325 = vadd.f32 0.0, %v10324
      %v10326 = vpop.f32.mrf.mxu0
      %10327 = vmatprep.mubr.f32.mxu0 0.0
      %10328 = vmatmul.mubr.f32.gmra.mxu0 %v10215
      %v10329 = vpop.f32.mrf.mxu0
      %v10330 = vadd.f32 0.0, %v10329
      %v10331 = vpop.f32.mrf.mxu0
      %10332 = vmatprep.mubr.f32.mxu0 0.0
      %10333 = vmatmul.mubr.f32.gmra.mxu0 %v10218
      %v10334 = vpop.f32.mrf.mxu0
      %v10335 = vadd.f32 0.0, %v10334
      %v10336 = vpop.f32.mrf.mxu0
      %10337 = vmatprep.mubr.f32.mxu0 0.0
      %10338 = vmatmul.mubr.f32.gmra.mxu0 %v10221
      %v10339 = vpop.f32.mrf.mxu0
      %v10340 = vadd.f32 0.0, %v10339
      %v10341 = vpop.f32.mrf.mxu0
      %10342 = vmatprep.mubr.f32.mxu0 0.0
      %10343 = vmatmul.mubr.f32.gmra.mxu0 %v10224
      %v10344 = vpop.f32.mrf.mxu0
      %v10345 = vadd.f32 0.0, %v10344
      %v10346 = vpop.f32.mrf.mxu0
      %10347 = vmatprep.mubr.f32.mxu0 0.0
      %10348 = vmatmul.mubr.f32.gmra.mxu0 %v10227
      %v10349 = vpop.f32.mrf.mxu0
      %v10350 = vadd.f32 0.0, %v10349
      %v10351 = vpop.f32.mrf.mxu0
      %10352 = vmatprep.mubr.f32.mxu0 0.0
      %10353 = vmatmul.mubr.f32.gmra.mxu0 %v10230
      %v10354 = vpop.f32.mrf.mxu0
      %v10355 = vadd.f32 0.0, %v10354
      %v10356 = vpop.f32.mrf.mxu0
      %10357 = vmatprep.mubr.f32.mxu0 0.0
      %10358 = vmatmul.mubr.f32.gmra.mxu0 %v10233
      %v10359 = vpop.f32.mrf.mxu0
      %v10360 = vadd.f32 0.0, %v10359
      %v10361 = vpop.f32.mrf.mxu0
      %10362 = vmatprep.mubr.f32.mxu0 0.0
      %10363 = vmatmul.mubr.f32.gmra.mxu0 %v10236
      %v10364 = vpop.f32.mrf.mxu0
      %v10365 = vadd.f32 0.0, %v10364
      %v10366 = vpop.f32.mrf.mxu0
      %10367 = vdwg.mxu0
      %v10369 = vsel %vm10145, %v10165, 0
      %v10372 = vsel %vm10145, %v10166, 0
      %v10375 = vsel %vm10145, %v10167, 0
      %v10378 = vsel %vm10145, %v10168, 0
      %v10381 = vsel %vm10145, %v10169, 0
      %v10384 = vsel %vm10145, %v10170, 0
      %v10387 = vsel %vm10145, %v10171, 0
      %v10390 = vsel %vm10145, %v10172, 0
      %v10393 = vsel %vm10145, %v10173, 0
      %v10396 = vsel %vm10145, %v10174, 0
      %v10399 = vsel %vm10145, %v10175, 0
      %v10402 = vsel %vm10145, %v10176, 0
      %v10405 = vsel %vm10145, %v10177, 0
      %10407 = vmatprep.subr.mxu0 0.0
      %10408 = vmatpush1.msra.mxu0 0.0
      %10409 = vmatprep.subr.mxu0 0.0
      %10410 = vmatpush1.msra.mxu0 0.0
      %10411 = vmatprep.subr.mxu0 0.0
      %10412 = vmatpush1.msra.mxu0 0.0
      %10413 = vmatprep.subr.mxu0 0.0
      %10414 = vmatpush1.msra.mxu0 0.0
      %10415 = vmatprep.subr.mxu0 0.0
      %10416 = vmatpush1.msra.mxu0 0.0
      %10417 = vmatprep.subr.mxu0 0.0
      %10418 = vmatpush1.msra.mxu0 0.0
      %10419 = vmatprep.subr.mxu0 0.0
      %10420 = vmatpush1.msra.mxu0 0.0
      %10421 = vmatprep.subr.mxu0 0.0
      %10422 = vmatpush1.msra.mxu0 0.0
      %10423 = vmatprep.subr.mxu0 0.0
      %10424 = vmatpush1.msra.mxu0 0.0
      %10425 = vmatprep.subr.mxu0 0.0
      %10426 = vmatpush1.msra.mxu0 0.0
      %10427 = vmatprep.subr.mxu0 0.0
      %10428 = vmatpush1.msra.mxu0 0.0
      %10429 = vmatprep.subr.mxu0 0.0
      %10430 = vmatpush1.msra.mxu0 0.0
      %10431 = vmatprep.subr.mxu0 0.0
      %10432 = vmatpush1.msra.mxu0 %v10181
      %10433 = vmatprep.subr.mxu0 0.0
      %10434 = vmatpush1.msra.mxu0 %v10180
      %10435 = vmatprep.subr.mxu0 0.0
      %10436 = vmatpush1.msra.mxu0 %v10179
      %10437 = vmatprep.subr.mxu0 0.0
      %10438 = vmatpush1.msra.mxu0 %v10178
      %10439 = vmatprep.subr.mxu0 0.0
      %10440 = vmatpush2.msra.mxu0 0.0
      %10441 = vmatprep.subr.mxu0 0.0
      %10442 = vmatpush2.msra.mxu0 0.0
      %10443 = vmatprep.subr.mxu0 0.0
      %10444 = vmatpush2.msra.mxu0 0.0
      %10445 = vmatprep.subr.mxu0 0.0
      %10446 = vmatpush2.msra.mxu0 0.0
      %10447 = vmatprep.subr.mxu0 0.0
      %10448 = vmatpush2.msra.mxu0 0.0
      %10449 = vmatprep.subr.mxu0 0.0
      %10450 = vmatpush2.msra.mxu0 0.0
      %10451 = vmatprep.subr.mxu0 0.0
      %10452 = vmatpush2.msra.mxu0 0.0
      %10453 = vmatprep.subr.mxu0 0.0
      %10454 = vmatpush2.msra.mxu0 0.0
      %10455 = vmatprep.subr.mxu0 0.0
      %10456 = vmatpush2.msra.mxu0 0.0
      %10457 = vmatprep.subr.mxu0 0.0
      %10458 = vmatpush2.msra.mxu0 0.0
      %10459 = vmatprep.subr.mxu0 0.0
      %10460 = vmatpush2.msra.mxu0 0.0
      %10461 = vmatprep.subr.mxu0 0.0
      %10462 = vmatpush2.msra.mxu0 0.0
      %10463 = vmatprep.subr.mxu0 0.0
      %10464 = vmatpush2.msra.mxu0 0.0
      %10465 = vmatprep.subr.mxu0 0.0
      %10466 = vmatpush2.msra.mxu0 0.0
      %10467 = vmatprep.subr.mxu0 0.0
      %10468 = vmatpush2.msra.mxu0 0.0
      %10469 = vmatprep.subr.mxu0 0.0
      %10470 = vmatpush2.msra.mxu0 0.0
      %10471 = vmatprep.mubr.f32.mxu0 0.0
      %10472 = vmatmul.mubr.f32.gmra.mxu0 %v10369
      %v10473 = vpop.f32.mrf.mxu0
      %v10474 = vadd.f32 %v10305, %v10473
      %v10475 = vpop.f32.mrf.mxu0
      %10476 = vmatprep.mubr.f32.mxu0 0.0
      %10477 = vmatmul.mubr.f32.gmra.mxu0 %v10372
      %v10478 = vpop.f32.mrf.mxu0
      %v10479 = vadd.f32 %v10310, %v10478
      %v10480 = vpop.f32.mrf.mxu0
      %10481 = vmatprep.mubr.f32.mxu0 0.0
      %10482 = vmatmul.mubr.f32.gmra.mxu0 %v10375
      %v10483 = vpop.f32.mrf.mxu0
      %v10484 = vadd.f32 %v10315, %v10483
      %v10485 = vpop.f32.mrf.mxu0
      %10486 = vmatprep.mubr.f32.mxu0 0.0
      %10487 = vmatmul.mubr.f32.gmra.mxu0 %v10378
      %v10488 = vpop.f32.mrf.mxu0
      %v10489 = vadd.f32 %v10320, %v10488
      %v10490 = vpop.f32.mrf.mxu0
      %10491 = vmatprep.mubr.f32.mxu0 0.0
      %10492 = vmatmul.mubr.f32.gmra.mxu0 %v10381
      %v10493 = vpop.f32.mrf.mxu0
      %v10494 = vadd.f32 %v10325, %v10493
      %v10495 = vpop.f32.mrf.mxu0
      %10496 = vmatprep.mubr.f32.mxu0 0.0
      %10497 = vmatmul.mubr.f32.gmra.mxu0 %v10384
      %v10498 = vpop.f32.mrf.mxu0
      %v10499 = vadd.f32 %v10330, %v10498
      %v10500 = vpop.f32.mrf.mxu0
      %10501 = vmatprep.mubr.f32.mxu0 0.0
      %10502 = vmatmul.mubr.f32.gmra.mxu0 %v10387
      %v10503 = vpop.f32.mrf.mxu0
      %v10504 = vadd.f32 %v10335, %v10503
      %v10505 = vpop.f32.mrf.mxu0
      %10506 = vmatprep.mubr.f32.mxu0 0.0
      %10507 = vmatmul.mubr.f32.gmra.mxu0 %v10390
      %v10508 = vpop.f32.mrf.mxu0
      %v10509 = vadd.f32 %v10340, %v10508
      %v10510 = vpop.f32.mrf.mxu0
      %10511 = vmatprep.mubr.f32.mxu0 0.0
      %10512 = vmatmul.mubr.f32.gmra.mxu0 %v10393
      %v10513 = vpop.f32.mrf.mxu0
      %v10514 = vadd.f32 %v10345, %v10513
      %v10515 = vpop.f32.mrf.mxu0
      %10516 = vmatprep.mubr.f32.mxu0 0.0
      %10517 = vmatmul.mubr.f32.gmra.mxu0 %v10396
      %v10518 = vpop.f32.mrf.mxu0
      %v10519 = vadd.f32 %v10350, %v10518
      %v10520 = vpop.f32.mrf.mxu0
      %10521 = vmatprep.mubr.f32.mxu0 0.0
      %10522 = vmatmul.mubr.f32.gmra.mxu0 %v10399
      %v10523 = vpop.f32.mrf.mxu0
      %v10524 = vadd.f32 %v10355, %v10523
      %v10525 = vpop.f32.mrf.mxu0
      %10526 = vmatprep.mubr.f32.mxu0 0.0
      %10527 = vmatmul.mubr.f32.gmra.mxu0 %v10402
      %v10528 = vpop.f32.mrf.mxu0
      %v10529 = vadd.f32 %v10360, %v10528
      %v10530 = vpop.f32.mrf.mxu0
      %10531 = vmatprep.mubr.f32.mxu0 0.0
      %10532 = vmatmul.mubr.f32.gmra.mxu0 %v10405
      %v10533 = vpop.f32.mrf.mxu0
      %v10534 = vadd.f32 %v10365, %v10533
      %v10535 = vpop.f32.mrf.mxu0
      %10536 = vdwg.mxu0
      %v10537 = vld [vmem:[#allocation3 + $0x7] sm:$0xff]
      %v10538 = vld [vmem:[#allocation3 + $0xf] sm:$0xff]
      %v10539 = vld [vmem:[#allocation3 + $0x17] sm:$0xff]
      %v10540 = vld [vmem:[#allocation3 + $0x1f] sm:$0xff]
      %v10541 = vld [vmem:[#allocation3 + $0x27] sm:$0xff]
      %v10542 = vld [vmem:[#allocation3 + $0x2f] sm:$0xff]
      %v10543 = vld [vmem:[#allocation3 + $0x37] sm:$0xff]
      %v10544 = vld [vmem:[#allocation3 + $0x3f] sm:$0xff]
      %v10545 = vld [vmem:[#allocation3 + $0x47] sm:$0xff]
      %v10546 = vld [vmem:[#allocation3 + $0x4f] sm:$0xff]
      %v10547 = vld [vmem:[#allocation3 + $0x57] sm:$0xff]
      %v10548 = vld [vmem:[#allocation3 + $0x5f] sm:$0xff]
      %v10549 = vld [vmem:[#allocation3 + $0x67] sm:$0xf]
      %v10550 = vld [vmem:[%s5 + $0x40] sm:$0xff]
      %v10551 = vld [vmem:[%s5 + $0x48] sm:$0xff]
      %v10552 = vld [vmem:[%s5 + $0x50] sm:$0xff]
      %v10553 = vld [vmem:[%s5 + $0x58] sm:$0xff]
      %v10555 = vsel %vm10145, %v10537, 0
      %v10558 = vsel %vm10145, %v10538, 0
      %v10561 = vsel %vm10145, %v10539, 0
      %v10564 = vsel %vm10145, %v10540, 0
      %v10567 = vsel %vm10145, %v10541, 0
      %v10570 = vsel %vm10145, %v10542, 0
      %v10573 = vsel %vm10145, %v10543, 0
      %v10576 = vsel %vm10145, %v10544, 0
      %v10579 = vsel %vm10145, %v10545, 0
      %v10582 = vsel %vm10145, %v10546, 0
      %v10585 = vsel %vm10145, %v10547, 0
      %v10588 = vsel %vm10145, %v10548, 0
      %v10591 = vsel %vm10145, %v10549, 0
      %10593 = vmatprep.subr.mxu0 0.0
      %10594 = vmatpush1.msra.mxu0 0.0
      %10595 = vmatprep.subr.mxu0 0.0
      %10596 = vmatpush1.msra.mxu0 0.0
      %10597 = vmatprep.subr.mxu0 0.0
      %10598 = vmatpush1.msra.mxu0 0.0
      %10599 = vmatprep.subr.mxu0 0.0
      %10600 = vmatpush1.msra.mxu0 0.0
      %10601 = vmatprep.subr.mxu0 0.0
      %10602 = vmatpush1.msra.mxu0 0.0
      %10603 = vmatprep.subr.mxu0 0.0
      %10604 = vmatpush1.msra.mxu0 0.0
      %10605 = vmatprep.subr.mxu0 0.0
      %10606 = vmatpush1.msra.mxu0 0.0
      %10607 = vmatprep.subr.mxu0 0.0
      %10608 = vmatpush1.msra.mxu0 0.0
      %10609 = vmatprep.subr.mxu0 0.0
      %10610 = vmatpush1.msra.mxu0 0.0
      %10611 = vmatprep.subr.mxu0 0.0
      %10612 = vmatpush1.msra.mxu0 0.0
      %10613 = vmatprep.subr.mxu0 0.0
      %10614 = vmatpush1.msra.mxu0 0.0
      %10615 = vmatprep.subr.mxu0 0.0
      %10616 = vmatpush1.msra.mxu0 0.0
      %10617 = vmatprep.subr.mxu0 0.0
      %10618 = vmatpush1.msra.mxu0 %v10553
      %10619 = vmatprep.subr.mxu0 0.0
      %10620 = vmatpush1.msra.mxu0 %v10552
      %10621 = vmatprep.subr.mxu0 0.0
      %10622 = vmatpush1.msra.mxu0 %v10551
      %10623 = vmatprep.subr.mxu0 0.0
      %10624 = vmatpush1.msra.mxu0 %v10550
      %10625 = vmatprep.subr.mxu0 0.0
      %10626 = vmatpush2.msra.mxu0 0.0
      %10627 = vmatprep.subr.mxu0 0.0
      %10628 = vmatpush2.msra.mxu0 0.0
      %10629 = vmatprep.subr.mxu0 0.0
      %10630 = vmatpush2.msra.mxu0 0.0
      %10631 = vmatprep.subr.mxu0 0.0
      %10632 = vmatpush2.msra.mxu0 0.0
      %10633 = vmatprep.subr.mxu0 0.0
      %10634 = vmatpush2.msra.mxu0 0.0
      %10635 = vmatprep.subr.mxu0 0.0
      %10636 = vmatpush2.msra.mxu0 0.0
      %10637 = vmatprep.subr.mxu0 0.0
      %10638 = vmatpush2.msra.mxu0 0.0
      %10639 = vmatprep.subr.mxu0 0.0
      %10640 = vmatpush2.msra.mxu0 0.0
      %10641 = vmatprep.subr.mxu0 0.0
      %10642 = vmatpush2.msra.mxu0 0.0
      %10643 = vmatprep.subr.mxu0 0.0
      %10644 = vmatpush2.msra.mxu0 0.0
      %10645 = vmatprep.subr.mxu0 0.0
      %10646 = vmatpush2.msra.mxu0 0.0
      %10647 = vmatprep.subr.mxu0 0.0
      %10648 = vmatpush2.msra.mxu0 0.0
      %10649 = vmatprep.subr.mxu0 0.0
      %10650 = vmatpush2.msra.mxu0 0.0
      %10651 = vmatprep.subr.mxu0 0.0
      %10652 = vmatpush2.msra.mxu0 0.0
      %10653 = vmatprep.subr.mxu0 0.0
      %10654 = vmatpush2.msra.mxu0 0.0
      %10655 = vmatprep.subr.mxu0 0.0
      %10656 = vmatpush2.msra.mxu0 0.0
      %10657 = vmatprep.mubr.f32.mxu0 0.0
      %10658 = vmatmul.mubr.f32.gmra.mxu0 %v10555
      %v10659 = vpop.f32.mrf.mxu0
      %v10660 = vadd.f32 0.0, %v10659
      %v10661 = vpop.f32.mrf.mxu0
      %10662 = vmatprep.mubr.f32.mxu0 0.0
      %10663 = vmatmul.mubr.f32.gmra.mxu0 %v10558
      %v10664 = vpop.f32.mrf.mxu0
      %v10665 = vadd.f32 0.0, %v10664
      %v10666 = vpop.f32.mrf.mxu0
      %10667 = vmatprep.mubr.f32.mxu0 0.0
      %10668 = vmatmul.mubr.f32.gmra.mxu0 %v10561
      %v10669 = vpop.f32.mrf.mxu0
      %v10670 = vadd.f32 0.0, %v10669
      %v10671 = vpop.f32.mrf.mxu0
      %10672 = vmatprep.mubr.f32.mxu0 0.0
      %10673 = vmatmul.mubr.f32.gmra.mxu0 %v10564
      %v10674 = vpop.f32.mrf.mxu0
      %v10675 = vadd.f32 0.0, %v10674
      %v10676 = vpop.f32.mrf.mxu0
      %10677 = vmatprep.mubr.f32.mxu0 0.0
      %10678 = vmatmul.mubr.f32.gmra.mxu0 %v10567
      %v10679 = vpop.f32.mrf.mxu0
      %v10680 = vadd.f32 0.0, %v10679
      %v10681 = vpop.f32.mrf.mxu0
      %10682 = vmatprep.mubr.f32.mxu0 0.0
      %10683 = vmatmul.mubr.f32.gmra.mxu0 %v10570
      %v10684 = vpop.f32.mrf.mxu0
      %v10685 = vadd.f32 0.0, %v10684
      %v10686 = vpop.f32.mrf.mxu0
      %10687 = vmatprep.mubr.f32.mxu0 0.0
      %10688 = vmatmul.mubr.f32.gmra.mxu0 %v10573
      %v10689 = vpop.f32.mrf.mxu0
      %v10690 = vadd.f32 0.0, %v10689
      %v10691 = vpop.f32.mrf.mxu0
      %10692 = vmatprep.mubr.f32.mxu0 0.0
      %10693 = vmatmul.mubr.f32.gmra.mxu0 %v10576
      %v10694 = vpop.f32.mrf.mxu0
      %v10695 = vadd.f32 0.0, %v10694
      %v10696 = vpop.f32.mrf.mxu0
      %10697 = vmatprep.mubr.f32.mxu0 0.0
      %10698 = vmatmul.mubr.f32.gmra.mxu0 %v10579
      %v10699 = vpop.f32.mrf.mxu0
      %v10700 = vadd.f32 0.0, %v10699
      %v10701 = vpop.f32.mrf.mxu0
      %10702 = vmatprep.mubr.f32.mxu0 0.0
      %10703 = vmatmul.mubr.f32.gmra.mxu0 %v10582
      %v10704 = vpop.f32.mrf.mxu0
      %v10705 = vadd.f32 0.0, %v10704
      %v10706 = vpop.f32.mrf.mxu0
      %10707 = vmatprep.mubr.f32.mxu0 0.0
      %10708 = vmatmul.mubr.f32.gmra.mxu0 %v10585
      %v10709 = vpop.f32.mrf.mxu0
      %v10710 = vadd.f32 0.0, %v10709
      %v10711 = vpop.f32.mrf.mxu0
      %10712 = vmatprep.mubr.f32.mxu0 0.0
      %10713 = vmatmul.mubr.f32.gmra.mxu0 %v10588
      %v10714 = vpop.f32.mrf.mxu0
      %v10715 = vadd.f32 0.0, %v10714
      %v10716 = vpop.f32.mrf.mxu0
      %10717 = vmatprep.mubr.f32.mxu0 0.0
      %10718 = vmatmul.mubr.f32.gmra.mxu0 %v10591
      %v10719 = vpop.f32.mrf.mxu0
      %v10720 = vadd.f32 0.0, %v10719
      %v10721 = vpop.f32.mrf.mxu0
      %10722 = vdwg.mxu0
      %v10723 = vadd.f32 %v10474, %v10660
      %v10724 = vadd.f32 %v10479, %v10665
      %v10725 = vadd.f32 %v10484, %v10670
      %v10726 = vadd.f32 %v10489, %v10675
      %v10727 = vadd.f32 %v10494, %v10680
      %v10728 = vadd.f32 %v10499, %v10685
      %v10729 = vadd.f32 %v10504, %v10690
      %v10730 = vadd.f32 %v10509, %v10695
      %v10731 = vadd.f32 %v10514, %v10700
      %v10732 = vadd.f32 %v10519, %v10705
      %v10733 = vadd.f32 %v10524, %v10710
      %v10734 = vadd.f32 %v10529, %v10715
      %v10735 = vadd.f32 %v10534, %v10720
      %v10736 = vld [vmem:[#allocation3 + $0xf] sm:$0xff]
      %v10737 = vld [vmem:[#allocation3 + $0x17] sm:$0xff]
      %v10738 = vld [vmem:[#allocation3 + $0x1f] sm:$0xff]
      %v10739 = vld [vmem:[#allocation3 + $0x27] sm:$0xff]
      %v10740 = vld [vmem:[#allocation3 + $0x2f] sm:$0xff]
      %v10741 = vld [vmem:[#allocation3 + $0x37] sm:$0xff]
      %v10742 = vld [vmem:[#allocation3 + $0x3f] sm:$0xff]
      %v10743 = vld [vmem:[#allocation3 + $0x47] sm:$0xff]
      %v10744 = vld [vmem:[#allocation3 + $0x4f] sm:$0xff]
      %v10745 = vld [vmem:[#allocation3 + $0x57] sm:$0xff]
      %v10746 = vld [vmem:[#allocation3 + $0x5f] sm:$0xff]
      %v10747 = vld [vmem:[#allocation3 + $0x67] sm:$0xff]
      %v10748 = vld [vmem:[#allocation3 + $0x6f] sm:$0xf]
      %v10749 = vld [vmem:[%s5 + $0x60] sm:$0xff]
      %v10750 = vld [vmem:[%s5 + $0x68] sm:$0xff]
      %v10751 = vld [vmem:[%s5 + $0x70] sm:$0xff]
      %v10752 = vld [vmem:[%s5 + $0x78] sm:$0xff]
      %v10754 = vsel %vm10145, %v10736, 0
      %v10757 = vsel %vm10145, %v10737, 0
      %v10760 = vsel %vm10145, %v10738, 0
      %v10763 = vsel %vm10145, %v10739, 0
      %v10766 = vsel %vm10145, %v10740, 0
      %v10769 = vsel %vm10145, %v10741, 0
      %v10772 = vsel %vm10145, %v10742, 0
      %v10775 = vsel %vm10145, %v10743, 0
      %v10778 = vsel %vm10145, %v10744, 0
      %v10781 = vsel %vm10145, %v10745, 0
      %v10784 = vsel %vm10145, %v10746, 0
      %v10787 = vsel %vm10145, %v10747, 0
      %v10790 = vsel %vm10145, %v10748, 0
      %10792 = vmatprep.subr.mxu0 0.0
      %10793 = vmatpush1.msra.mxu0 0.0
      %10794 = vmatprep.subr.mxu0 0.0
      %10795 = vmatpush1.msra.mxu0 0.0
      %10796 = vmatprep.subr.mxu0 0.0
      %10797 = vmatpush1.msra.mxu0 0.0
      %10798 = vmatprep.subr.mxu0 0.0
      %10799 = vmatpush1.msra.mxu0 0.0
      %10800 = vmatprep.subr.mxu0 0.0
      %10801 = vmatpush1.msra.mxu0 0.0
      %10802 = vmatprep.subr.mxu0 0.0
      %10803 = vmatpush1.msra.mxu0 0.0
      %10804 = vmatprep.subr.mxu0 0.0
      %10805 = vmatpush1.msra.mxu0 0.0
      %10806 = vmatprep.subr.mxu0 0.0
      %10807 = vmatpush1.msra.mxu0 0.0
      %10808 = vmatprep.subr.mxu0 0.0
      %10809 = vmatpush1.msra.mxu0 0.0
      %10810 = vmatprep.subr.mxu0 0.0
      %10811 = vmatpush1.msra.mxu0 0.0
      %10812 = vmatprep.subr.mxu0 0.0
      %10813 = vmatpush1.msra.mxu0 0.0
      %10814 = vmatprep.subr.mxu0 0.0
      %10815 = vmatpush1.msra.mxu0 0.0
      %10816 = vmatprep.subr.mxu0 0.0
      %10817 = vmatpush1.msra.mxu0 %v10752
      %10818 = vmatprep.subr.mxu0 0.0
      %10819 = vmatpush1.msra.mxu0 %v10751
      %10820 = vmatprep.subr.mxu0 0.0
      %10821 = vmatpush1.msra.mxu0 %v10750
      %10822 = vmatprep.subr.mxu0 0.0
      %10823 = vmatpush1.msra.mxu0 %v10749
      %10824 = vmatprep.subr.mxu0 0.0
      %10825 = vmatpush2.msra.mxu0 0.0
      %10826 = vmatprep.subr.mxu0 0.0
      %10827 = vmatpush2.msra.mxu0 0.0
      %10828 = vmatprep.subr.mxu0 0.0
      %10829 = vmatpush2.msra.mxu0 0.0
      %10830 = vmatprep.subr.mxu0 0.0
      %10831 = vmatpush2.msra.mxu0 0.0
      %10832 = vmatprep.subr.mxu0 0.0
      %10833 = vmatpush2.msra.mxu0 0.0
      %10834 = vmatprep.subr.mxu0 0.0
      %10835 = vmatpush2.msra.mxu0 0.0
      %10836 = vmatprep.subr.mxu0 0.0
      %10837 = vmatpush2.msra.mxu0 0.0
      %10838 = vmatprep.subr.mxu0 0.0
      %10839 = vmatpush2.msra.mxu0 0.0
      %10840 = vmatprep.subr.mxu0 0.0
      %10841 = vmatpush2.msra.mxu0 0.0
      %10842 = vmatprep.subr.mxu0 0.0
      %10843 = vmatpush2.msra.mxu0 0.0
      %10844 = vmatprep.subr.mxu0 0.0
      %10845 = vmatpush2.msra.mxu0 0.0
      %10846 = vmatprep.subr.mxu0 0.0
      %10847 = vmatpush2.msra.mxu0 0.0
      %10848 = vmatprep.subr.mxu0 0.0
      %10849 = vmatpush2.msra.mxu0 0.0
      %10850 = vmatprep.subr.mxu0 0.0
      %10851 = vmatpush2.msra.mxu0 0.0
      %10852 = vmatprep.subr.mxu0 0.0
      %10853 = vmatpush2.msra.mxu0 0.0
      %10854 = vmatprep.subr.mxu0 0.0
      %10855 = vmatpush2.msra.mxu0 0.0
      %10856 = vmatprep.mubr.f32.mxu0 0.0
      %10857 = vmatmul.mubr.f32.gmra.mxu0 %v10754
      %v10858 = vpop.f32.mrf.mxu0
      %v10859 = vadd.f32 0.0, %v10858
      %v10860 = vpop.f32.mrf.mxu0
      %10861 = vmatprep.mubr.f32.mxu0 0.0
      %10862 = vmatmul.mubr.f32.gmra.mxu0 %v10757
      %v10863 = vpop.f32.mrf.mxu0
      %v10864 = vadd.f32 0.0, %v10863
      %v10865 = vpop.f32.mrf.mxu0
      %10866 = vmatprep.mubr.f32.mxu0 0.0
      %10867 = vmatmul.mubr.f32.gmra.mxu0 %v10760
      %v10868 = vpop.f32.mrf.mxu0
      %v10869 = vadd.f32 0.0, %v10868
      %v10870 = vpop.f32.mrf.mxu0
      %10871 = vmatprep.mubr.f32.mxu0 0.0
      %10872 = vmatmul.mubr.f32.gmra.mxu0 %v10763
      %v10873 = vpop.f32.mrf.mxu0
      %v10874 = vadd.f32 0.0, %v10873
      %v10875 = vpop.f32.mrf.mxu0
      %10876 = vmatprep.mubr.f32.mxu0 0.0
      %10877 = vmatmul.mubr.f32.gmra.mxu0 %v10766
      %v10878 = vpop.f32.mrf.mxu0
      %v10879 = vadd.f32 0.0, %v10878
      %v10880 = vpop.f32.mrf.mxu0
      %10881 = vmatprep.mubr.f32.mxu0 0.0
      %10882 = vmatmul.mubr.f32.gmra.mxu0 %v10769
      %v10883 = vpop.f32.mrf.mxu0
      %v10884 = vadd.f32 0.0, %v10883
      %v10885 = vpop.f32.mrf.mxu0
      %10886 = vmatprep.mubr.f32.mxu0 0.0
      %10887 = vmatmul.mubr.f32.gmra.mxu0 %v10772
      %v10888 = vpop.f32.mrf.mxu0
      %v10889 = vadd.f32 0.0, %v10888
      %v10890 = vpop.f32.mrf.mxu0
      %10891 = vmatprep.mubr.f32.mxu0 0.0
      %10892 = vmatmul.mubr.f32.gmra.mxu0 %v10775
      %v10893 = vpop.f32.mrf.mxu0
      %v10894 = vadd.f32 0.0, %v10893
      %v10895 = vpop.f32.mrf.mxu0
      %10896 = vmatprep.mubr.f32.mxu0 0.0
      %10897 = vmatmul.mubr.f32.gmra.mxu0 %v10778
      %v10898 = vpop.f32.mrf.mxu0
      %v10899 = vadd.f32 0.0, %v10898
      %v10900 = vpop.f32.mrf.mxu0
      %10901 = vmatprep.mubr.f32.mxu0 0.0
      %10902 = vmatmul.mubr.f32.gmra.mxu0 %v10781
      %v10903 = vpop.f32.mrf.mxu0
      %v10904 = vadd.f32 0.0, %v10903
      %v10905 = vpop.f32.mrf.mxu0
      %10906 = vmatprep.mubr.f32.mxu0 0.0
      %10907 = vmatmul.mubr.f32.gmra.mxu0 %v10784
      %v10908 = vpop.f32.mrf.mxu0
      %v10909 = vadd.f32 0.0, %v10908
      %v10910 = vpop.f32.mrf.mxu0
      %10911 = vmatprep.mubr.f32.mxu0 0.0
      %10912 = vmatmul.mubr.f32.gmra.mxu0 %v10787
      %v10913 = vpop.f32.mrf.mxu0
      %v10914 = vadd.f32 0.0, %v10913
      %v10915 = vpop.f32.mrf.mxu0
      %10916 = vmatprep.mubr.f32.mxu0 0.0
      %10917 = vmatmul.mubr.f32.gmra.mxu0 %v10790
      %v10918 = vpop.f32.mrf.mxu0
      %v10919 = vadd.f32 0.0, %v10918
      %v10920 = vpop.f32.mrf.mxu0
      %10921 = vdwg.mxu0
      %v10922 = vadd.f32 %v10723, %v10859
      %v10923 = vadd.f32 %v10724, %v10864
      %v10924 = vadd.f32 %v10725, %v10869
      %v10925 = vadd.f32 %v10726, %v10874
      %v10926 = vadd.f32 %v10727, %v10879
      %v10927 = vadd.f32 %v10728, %v10884
      %v10928 = vadd.f32 %v10729, %v10889
      %v10929 = vadd.f32 %v10730, %v10894
      %v10930 = vadd.f32 %v10731, %v10899
      %v10931 = vadd.f32 %v10732, %v10904
      %v10932 = vadd.f32 %v10733, %v10909
      %v10933 = vadd.f32 %v10734, %v10914
      %v10934 = vadd.f32 %v10735, %v10919
      %v10935 = vld [vmem:[#allocation3 + $0x10] sm:$0xff]
      %v10936 = vld [vmem:[#allocation3 + $0x18] sm:$0xff]
      %v10937 = vld [vmem:[#allocation3 + $0x20] sm:$0xff]
      %v10938 = vld [vmem:[#allocation3 + $0x28] sm:$0xff]
      %v10939 = vld [vmem:[#allocation3 + $0x30] sm:$0xff]
      %v10940 = vld [vmem:[#allocation3 + $0x38] sm:$0xff]
      %v10941 = vld [vmem:[#allocation3 + $0x40] sm:$0xff]
      %v10942 = vld [vmem:[#allocation3 + $0x48] sm:$0xff]
      %v10943 = vld [vmem:[#allocation3 + $0x50] sm:$0xff]
      %v10944 = vld [vmem:[#allocation3 + $0x58] sm:$0xff]
      %v10945 = vld [vmem:[#allocation3 + $0x60] sm:$0xff]
      %v10946 = vld [vmem:[#allocation3 + $0x68] sm:$0xff]
      %v10947 = vld [vmem:[#allocation3 + $0x70] sm:$0xf]
      %v10948 = vld [vmem:[%s5 + $0x80] sm:$0xff]
      %v10949 = vld [vmem:[%s5 + $0x88] sm:$0xff]
      %v10950 = vld [vmem:[%s5 + $0x90] sm:$0xff]
      %v10951 = vld [vmem:[%s5 + $0x98] sm:$0xff]
      %v10953 = vsel %vm10145, %v10935, 0
      %v10956 = vsel %vm10145, %v10936, 0
      %v10959 = vsel %vm10145, %v10937, 0
      %v10962 = vsel %vm10145, %v10938, 0
      %v10965 = vsel %vm10145, %v10939, 0
      %v10968 = vsel %vm10145, %v10940, 0
      %v10971 = vsel %vm10145, %v10941, 0
      %v10974 = vsel %vm10145, %v10942, 0
      %v10977 = vsel %vm10145, %v10943, 0
      %v10980 = vsel %vm10145, %v10944, 0
      %v10983 = vsel %vm10145, %v10945, 0
      %v10986 = vsel %vm10145, %v10946, 0
      %v10989 = vsel %vm10145, %v10947, 0
      %10991 = vmatprep.subr.mxu0 0.0
      %10992 = vmatpush1.msra.mxu0 0.0
      %10993 = vmatprep.subr.mxu0 0.0
      %10994 = vmatpush1.msra.mxu0 0.0
      %10995 = vmatprep.subr.mxu0 0.0
      %10996 = vmatpush1.msra.mxu0 0.0
      %10997 = vmatprep.subr.mxu0 0.0
      %10998 = vmatpush1.msra.mxu0 0.0
      %10999 = vmatprep.subr.mxu0 0.0
      %11000 = vmatpush1.msra.mxu0 0.0
      %11001 = vmatprep.subr.mxu0 0.0
      %11002 = vmatpush1.msra.mxu0 0.0
      %11003 = vmatprep.subr.mxu0 0.0
      %11004 = vmatpush1.msra.mxu0 0.0
      %11005 = vmatprep.subr.mxu0 0.0
      %11006 = vmatpush1.msra.mxu0 0.0
      %11007 = vmatprep.subr.mxu0 0.0
      %11008 = vmatpush1.msra.mxu0 0.0
      %11009 = vmatprep.subr.mxu0 0.0
      %11010 = vmatpush1.msra.mxu0 0.0
      %11011 = vmatprep.subr.mxu0 0.0
      %11012 = vmatpush1.msra.mxu0 0.0
      %11013 = vmatprep.subr.mxu0 0.0
      %11014 = vmatpush1.msra.mxu0 0.0
      %11015 = vmatprep.subr.mxu0 0.0
      %11016 = vmatpush1.msra.mxu0 %v10951
      %11017 = vmatprep.subr.mxu0 0.0
      %11018 = vmatpush1.msra.mxu0 %v10950
      %11019 = vmatprep.subr.mxu0 0.0
      %11020 = vmatpush1.msra.mxu0 %v10949
      %11021 = vmatprep.subr.mxu0 0.0
      %11022 = vmatpush1.msra.mxu0 %v10948
      %11023 = vmatprep.subr.mxu0 0.0
      %11024 = vmatpush2.msra.mxu0 0.0
      %11025 = vmatprep.subr.mxu0 0.0
      %11026 = vmatpush2.msra.mxu0 0.0
      %11027 = vmatprep.subr.mxu0 0.0
      %11028 = vmatpush2.msra.mxu0 0.0
      %11029 = vmatprep.subr.mxu0 0.0
      %11030 = vmatpush2.msra.mxu0 0.0
      %11031 = vmatprep.subr.mxu0 0.0
      %11032 = vmatpush2.msra.mxu0 0.0
      %11033 = vmatprep.subr.mxu0 0.0
      %11034 = vmatpush2.msra.mxu0 0.0
      %11035 = vmatprep.subr.mxu0 0.0
      %11036 = vmatpush2.msra.mxu0 0.0
      %11037 = vmatprep.subr.mxu0 0.0
      %11038 = vmatpush2.msra.mxu0 0.0
      %11039 = vmatprep.subr.mxu0 0.0
      %11040 = vmatpush2.msra.mxu0 0.0
      %11041 = vmatprep.subr.mxu0 0.0
      %11042 = vmatpush2.msra.mxu0 0.0
      %11043 = vmatprep.subr.mxu0 0.0
      %11044 = vmatpush2.msra.mxu0 0.0
      %11045 = vmatprep.subr.mxu0 0.0
      %11046 = vmatpush2.msra.mxu0 0.0
      %11047 = vmatprep.subr.mxu0 0.0
      %11048 = vmatpush2.msra.mxu0 0.0
      %11049 = vmatprep.subr.mxu0 0.0
      %11050 = vmatpush2.msra.mxu0 0.0
      %11051 = vmatprep.subr.mxu0 0.0
      %11052 = vmatpush2.msra.mxu0 0.0
      %11053 = vmatprep.subr.mxu0 0.0
      %11054 = vmatpush2.msra.mxu0 0.0
      %11055 = vmatprep.mubr.f32.mxu0 0.0
      %11056 = vmatmul.mubr.f32.gmra.mxu0 %v10953
      %v11057 = vpop.f32.mrf.mxu0
      %v11058 = vadd.f32 0.0, %v11057
      %v11059 = vpop.f32.mrf.mxu0
      %11060 = vmatprep.mubr.f32.mxu0 0.0
      %11061 = vmatmul.mubr.f32.gmra.mxu0 %v10956
      %v11062 = vpop.f32.mrf.mxu0
      %v11063 = vadd.f32 0.0, %v11062
      %v11064 = vpop.f32.mrf.mxu0
      %11065 = vmatprep.mubr.f32.mxu0 0.0
      %11066 = vmatmul.mubr.f32.gmra.mxu0 %v10959
      %v11067 = vpop.f32.mrf.mxu0
      %v11068 = vadd.f32 0.0, %v11067
      %v11069 = vpop.f32.mrf.mxu0
      %11070 = vmatprep.mubr.f32.mxu0 0.0
      %11071 = vmatmul.mubr.f32.gmra.mxu0 %v10962
      %v11072 = vpop.f32.mrf.mxu0
      %v11073 = vadd.f32 0.0, %v11072
      %v11074 = vpop.f32.mrf.mxu0
      %11075 = vmatprep.mubr.f32.mxu0 0.0
      %11076 = vmatmul.mubr.f32.gmra.mxu0 %v10965
      %v11077 = vpop.f32.mrf.mxu0
      %v11078 = vadd.f32 0.0, %v11077
      %v11079 = vpop.f32.mrf.mxu0
      %11080 = vmatprep.mubr.f32.mxu0 0.0
      %11081 = vmatmul.mubr.f32.gmra.mxu0 %v10968
      %v11082 = vpop.f32.mrf.mxu0
      %v11083 = vadd.f32 0.0, %v11082
      %v11084 = vpop.f32.mrf.mxu0
      %11085 = vmatprep.mubr.f32.mxu0 0.0
      %11086 = vmatmul.mubr.f32.gmra.mxu0 %v10971
      %v11087 = vpop.f32.mrf.mxu0
      %v11088 = vadd.f32 0.0, %v11087
      %v11089 = vpop.f32.mrf.mxu0
      %11090 = vmatprep.mubr.f32.mxu0 0.0
      %11091 = vmatmul.mubr.f32.gmra.mxu0 %v10974
      %v11092 = vpop.f32.mrf.mxu0
      %v11093 = vadd.f32 0.0, %v11092
      %v11094 = vpop.f32.mrf.mxu0
      %11095 = vmatprep.mubr.f32.mxu0 0.0
      %11096 = vmatmul.mubr.f32.gmra.mxu0 %v10977
      %v11097 = vpop.f32.mrf.mxu0
      %v11098 = vadd.f32 0.0, %v11097
      %v11099 = vpop.f32.mrf.mxu0
      %11100 = vmatprep.mubr.f32.mxu0 0.0
      %11101 = vmatmul.mubr.f32.gmra.mxu0 %v10980
      %v11102 = vpop.f32.mrf.mxu0
      %v11103 = vadd.f32 0.0, %v11102
      %v11104 = vpop.f32.mrf.mxu0
      %11105 = vmatprep.mubr.f32.mxu0 0.0
      %11106 = vmatmul.mubr.f32.gmra.mxu0 %v10983
      %v11107 = vpop.f32.mrf.mxu0
      %v11108 = vadd.f32 0.0, %v11107
      %v11109 = vpop.f32.mrf.mxu0
      %11110 = vmatprep.mubr.f32.mxu0 0.0
      %11111 = vmatmul.mubr.f32.gmra.mxu0 %v10986
      %v11112 = vpop.f32.mrf.mxu0
      %v11113 = vadd.f32 0.0, %v11112
      %v11114 = vpop.f32.mrf.mxu0
      %11115 = vmatprep.mubr.f32.mxu0 0.0
      %11116 = vmatmul.mubr.f32.gmra.mxu0 %v10989
      %v11117 = vpop.f32.mrf.mxu0
      %v11118 = vadd.f32 0.0, %v11117
      %v11119 = vpop.f32.mrf.mxu0
      %11120 = vdwg.mxu0
      %v11121 = vadd.f32 %v10922, %v11058
      %v11122 = vadd.f32 %v10923, %v11063
      %v11123 = vadd.f32 %v10924, %v11068
      %v11124 = vadd.f32 %v10925, %v11073
      %v11125 = vadd.f32 %v10926, %v11078
      %v11126 = vadd.f32 %v10927, %v11083
      %v11127 = vadd.f32 %v10928, %v11088
      %v11128 = vadd.f32 %v10929, %v11093
      %v11129 = vadd.f32 %v10930, %v11098
      %v11130 = vadd.f32 %v10931, %v11103
      %v11131 = vadd.f32 %v10932, %v11108
      %v11132 = vadd.f32 %v10933, %v11113
      %v11133 = vadd.f32 %v10934, %v11118
      %v11134 = vld [vmem:[#allocation3 + $0x11] sm:$0xff]
      %v11135 = vld [vmem:[#allocation3 + $0x19] sm:$0xff]
      %v11136 = vld [vmem:[#allocation3 + $0x21] sm:$0xff]
      %v11137 = vld [vmem:[#allocation3 + $0x29] sm:$0xff]
      %v11138 = vld [vmem:[#allocation3 + $0x31] sm:$0xff]
      %v11139 = vld [vmem:[#allocation3 + $0x39] sm:$0xff]
      %v11140 = vld [vmem:[#allocation3 + $0x41] sm:$0xff]
      %v11141 = vld [vmem:[#allocation3 + $0x49] sm:$0xff]
      %v11142 = vld [vmem:[#allocation3 + $0x51] sm:$0xff]
      %v11143 = vld [vmem:[#allocation3 + $0x59] sm:$0xff]
      %v11144 = vld [vmem:[#allocation3 + $0x61] sm:$0xff]
      %v11145 = vld [vmem:[#allocation3 + $0x69] sm:$0xff]
      %v11146 = vld [vmem:[#allocation3 + $0x71] sm:$0xf]
      %v11147 = vld [vmem:[%s5 + $0xa0] sm:$0xff]
      %v11148 = vld [vmem:[%s5 + $0xa8] sm:$0xff]
      %v11149 = vld [vmem:[%s5 + $0xb0] sm:$0xff]
      %v11150 = vld [vmem:[%s5 + $0xb8] sm:$0xff]
      %v11152 = vsel %vm10145, %v11134, 0
      %v11155 = vsel %vm10145, %v11135, 0
      %v11158 = vsel %vm10145, %v11136, 0
      %v11161 = vsel %vm10145, %v11137, 0
      %v11164 = vsel %vm10145, %v11138, 0
      %v11167 = vsel %vm10145, %v11139, 0
      %v11170 = vsel %vm10145, %v11140, 0
      %v11173 = vsel %vm10145, %v11141, 0
      %v11176 = vsel %vm10145, %v11142, 0
      %v11179 = vsel %vm10145, %v11143, 0
      %v11182 = vsel %vm10145, %v11144, 0
      %v11185 = vsel %vm10145, %v11145, 0
      %v11188 = vsel %vm10145, %v11146, 0
      %11190 = vmatprep.subr.mxu0 0.0
      %11191 = vmatpush1.msra.mxu0 0.0
      %11192 = vmatprep.subr.mxu0 0.0
      %11193 = vmatpush1.msra.mxu0 0.0
      %11194 = vmatprep.subr.mxu0 0.0
      %11195 = vmatpush1.msra.mxu0 0.0
      %11196 = vmatprep.subr.mxu0 0.0
      %11197 = vmatpush1.msra.mxu0 0.0
      %11198 = vmatprep.subr.mxu0 0.0
      %11199 = vmatpush1.msra.mxu0 0.0
      %11200 = vmatprep.subr.mxu0 0.0
      %11201 = vmatpush1.msra.mxu0 0.0
      %11202 = vmatprep.subr.mxu0 0.0
      %11203 = vmatpush1.msra.mxu0 0.0
      %11204 = vmatprep.subr.mxu0 0.0
      %11205 = vmatpush1.msra.mxu0 0.0
      %11206 = vmatprep.subr.mxu0 0.0
      %11207 = vmatpush1.msra.mxu0 0.0
      %11208 = vmatprep.subr.mxu0 0.0
      %11209 = vmatpush1.msra.mxu0 0.0
      %11210 = vmatprep.subr.mxu0 0.0
      %11211 = vmatpush1.msra.mxu0 0.0
      %11212 = vmatprep.subr.mxu0 0.0
      %11213 = vmatpush1.msra.mxu0 0.0
      %11214 = vmatprep.subr.mxu0 0.0
      %11215 = vmatpush1.msra.mxu0 %v11150
      %11216 = vmatprep.subr.mxu0 0.0
      %11217 = vmatpush1.msra.mxu0 %v11149
      %11218 = vmatprep.subr.mxu0 0.0
      %11219 = vmatpush1.msra.mxu0 %v11148
      %11220 = vmatprep.subr.mxu0 0.0
      %11221 = vmatpush1.msra.mxu0 %v11147
      %11222 = vmatprep.subr.mxu0 0.0
      %11223 = vmatpush2.msra.mxu0 0.0
      %11224 = vmatprep.subr.mxu0 0.0
      %11225 = vmatpush2.msra.mxu0 0.0
      %11226 = vmatprep.subr.mxu0 0.0
      %11227 = vmatpush2.msra.mxu0 0.0
      %11228 = vmatprep.subr.mxu0 0.0
      %11229 = vmatpush2.msra.mxu0 0.0
      %11230 = vmatprep.subr.mxu0 0.0
      %11231 = vmatpush2.msra.mxu0 0.0
      %11232 = vmatprep.subr.mxu0 0.0
      %11233 = vmatpush2.msra.mxu0 0.0
      %11234 = vmatprep.subr.mxu0 0.0
      %11235 = vmatpush2.msra.mxu0 0.0
      %11236 = vmatprep.subr.mxu0 0.0
      %11237 = vmatpush2.msra.mxu0 0.0
      %11238 = vmatprep.subr.mxu0 0.0
      %11239 = vmatpush2.msra.mxu0 0.0
      %11240 = vmatprep.subr.mxu0 0.0
      %11241 = vmatpush2.msra.mxu0 0.0
      %11242 = vmatprep.subr.mxu0 0.0
      %11243 = vmatpush2.msra.mxu0 0.0
      %11244 = vmatprep.subr.mxu0 0.0
      %11245 = vmatpush2.msra.mxu0 0.0
      %11246 = vmatprep.subr.mxu0 0.0
      %11247 = vmatpush2.msra.mxu0 0.0
      %11248 = vmatprep.subr.mxu0 0.0
      %11249 = vmatpush2.msra.mxu0 0.0
      %11250 = vmatprep.subr.mxu0 0.0
      %11251 = vmatpush2.msra.mxu0 0.0
      %11252 = vmatprep.subr.mxu0 0.0
      %11253 = vmatpush2.msra.mxu0 0.0
      %11254 = vmatprep.mubr.f32.mxu0 0.0
      %11255 = vmatmul.mubr.f32.gmra.mxu0 %v11152
      %v11256 = vpop.f32.mrf.mxu0
      %v11257 = vadd.f32 0.0, %v11256
      %v11258 = vpop.f32.mrf.mxu0
      %11259 = vmatprep.mubr.f32.mxu0 0.0
      %11260 = vmatmul.mubr.f32.gmra.mxu0 %v11155
      %v11261 = vpop.f32.mrf.mxu0
      %v11262 = vadd.f32 0.0, %v11261
      %v11263 = vpop.f32.mrf.mxu0
      %11264 = vmatprep.mubr.f32.mxu0 0.0
      %11265 = vmatmul.mubr.f32.gmra.mxu0 %v11158
      %v11266 = vpop.f32.mrf.mxu0
      %v11267 = vadd.f32 0.0, %v11266
      %v11268 = vpop.f32.mrf.mxu0
      %11269 = vmatprep.mubr.f32.mxu0 0.0
      %11270 = vmatmul.mubr.f32.gmra.mxu0 %v11161
      %v11271 = vpop.f32.mrf.mxu0
      %v11272 = vadd.f32 0.0, %v11271
      %v11273 = vpop.f32.mrf.mxu0
      %11274 = vmatprep.mubr.f32.mxu0 0.0
      %11275 = vmatmul.mubr.f32.gmra.mxu0 %v11164
      %v11276 = vpop.f32.mrf.mxu0
      %v11277 = vadd.f32 0.0, %v11276
      %v11278 = vpop.f32.mrf.mxu0
      %11279 = vmatprep.mubr.f32.mxu0 0.0
      %11280 = vmatmul.mubr.f32.gmra.mxu0 %v11167
      %v11281 = vpop.f32.mrf.mxu0
      %v11282 = vadd.f32 0.0, %v11281
      %v11283 = vpop.f32.mrf.mxu0
      %11284 = vmatprep.mubr.f32.mxu0 0.0
      %11285 = vmatmul.mubr.f32.gmra.mxu0 %v11170
      %v11286 = vpop.f32.mrf.mxu0
      %v11287 = vadd.f32 0.0, %v11286
      %v11288 = vpop.f32.mrf.mxu0
      %11289 = vmatprep.mubr.f32.mxu0 0.0
      %11290 = vmatmul.mubr.f32.gmra.mxu0 %v11173
      %v11291 = vpop.f32.mrf.mxu0
      %v11292 = vadd.f32 0.0, %v11291
      %v11293 = vpop.f32.mrf.mxu0
      %11294 = vmatprep.mubr.f32.mxu0 0.0
      %11295 = vmatmul.mubr.f32.gmra.mxu0 %v11176
      %v11296 = vpop.f32.mrf.mxu0
      %v11297 = vadd.f32 0.0, %v11296
      %v11298 = vpop.f32.mrf.mxu0
      %11299 = vmatprep.mubr.f32.mxu0 0.0
      %11300 = vmatmul.mubr.f32.gmra.mxu0 %v11179
      %v11301 = vpop.f32.mrf.mxu0
      %v11302 = vadd.f32 0.0, %v11301
      %v11303 = vpop.f32.mrf.mxu0
      %11304 = vmatprep.mubr.f32.mxu0 0.0
      %11305 = vmatmul.mubr.f32.gmra.mxu0 %v11182
      %v11306 = vpop.f32.mrf.mxu0
      %v11307 = vadd.f32 0.0, %v11306
      %v11308 = vpop.f32.mrf.mxu0
      %11309 = vmatprep.mubr.f32.mxu0 0.0
      %11310 = vmatmul.mubr.f32.gmra.mxu0 %v11185
      %v11311 = vpop.f32.mrf.mxu0
      %v11312 = vadd.f32 0.0, %v11311
      %v11313 = vpop.f32.mrf.mxu0
      %11314 = vmatprep.mubr.f32.mxu0 0.0
      %11315 = vmatmul.mubr.f32.gmra.mxu0 %v11188
      %v11316 = vpop.f32.mrf.mxu0
      %v11317 = vadd.f32 0.0, %v11316
      %v11318 = vpop.f32.mrf.mxu0
      %11319 = vdwg.mxu0
      %v11320 = vadd.f32 %v11121, %v11257
      %v11321 = vadd.f32 %v11122, %v11262
      %v11322 = vadd.f32 %v11123, %v11267
      %v11323 = vadd.f32 %v11124, %v11272
      %v11324 = vadd.f32 %v11125, %v11277
      %v11325 = vadd.f32 %v11126, %v11282
      %v11326 = vadd.f32 %v11127, %v11287
      %v11327 = vadd.f32 %v11128, %v11292
      %v11328 = vadd.f32 %v11129, %v11297
      %v11329 = vadd.f32 %v11130, %v11302
      %v11330 = vadd.f32 %v11131, %v11307
      %v11331 = vadd.f32 %v11132, %v11312
      %v11332 = vadd.f32 %v11133, %v11317
      %v11333 = vld [vmem:[#allocation3 + $0x19] sm:$0xff]
      %v11334 = vld [vmem:[#allocation3 + $0x21] sm:$0xff]
      %v11335 = vld [vmem:[#allocation3 + $0x29] sm:$0xff]
      %v11336 = vld [vmem:[#allocation3 + $0x31] sm:$0xff]
      %v11337 = vld [vmem:[#allocation3 + $0x39] sm:$0xff]
      %v11338 = vld [vmem:[#allocation3 + $0x41] sm:$0xff]
      %v11339 = vld [vmem:[#allocation3 + $0x49] sm:$0xff]
      %v11340 = vld [vmem:[#allocation3 + $0x51] sm:$0xff]
      %v11341 = vld [vmem:[#allocation3 + $0x59] sm:$0xff]
      %v11342 = vld [vmem:[#allocation3 + $0x61] sm:$0xff]
      %v11343 = vld [vmem:[#allocation3 + $0x69] sm:$0xff]
      %v11344 = vld [vmem:[#allocation3 + $0x71] sm:$0xff]
      %v11345 = vld [vmem:[#allocation3 + $0x79] sm:$0xf]
      %v11346 = vld [vmem:[%s5 + $0xc0] sm:$0xff]
      %v11347 = vld [vmem:[%s5 + $0xc8] sm:$0xff]
      %v11348 = vld [vmem:[%s5 + $0xd0] sm:$0xff]
      %v11349 = vld [vmem:[%s5 + $0xd8] sm:$0xff]
      %v11351 = vsel %vm10145, %v11333, 0
      %v11354 = vsel %vm10145, %v11334, 0
      %v11357 = vsel %vm10145, %v11335, 0
      %v11360 = vsel %vm10145, %v11336, 0
      %v11363 = vsel %vm10145, %v11337, 0
      %v11366 = vsel %vm10145, %v11338, 0
      %v11369 = vsel %vm10145, %v11339, 0
      %v11372 = vsel %vm10145, %v11340, 0
      %v11375 = vsel %vm10145, %v11341, 0
      %v11378 = vsel %vm10145, %v11342, 0
      %v11381 = vsel %vm10145, %v11343, 0
      %v11384 = vsel %vm10145, %v11344, 0
      %v11387 = vsel %vm10145, %v11345, 0
      %11389 = vmatprep.subr.mxu0 0.0
      %11390 = vmatpush1.msra.mxu0 0.0
      %11391 = vmatprep.subr.mxu0 0.0
      %11392 = vmatpush1.msra.mxu0 0.0
      %11393 = vmatprep.subr.mxu0 0.0
      %11394 = vmatpush1.msra.mxu0 0.0
      %11395 = vmatprep.subr.mxu0 0.0
      %11396 = vmatpush1.msra.mxu0 0.0
      %11397 = vmatprep.subr.mxu0 0.0
      %11398 = vmatpush1.msra.mxu0 0.0
      %11399 = vmatprep.subr.mxu0 0.0
      %11400 = vmatpush1.msra.mxu0 0.0
      %11401 = vmatprep.subr.mxu0 0.0
      %11402 = vmatpush1.msra.mxu0 0.0
      %11403 = vmatprep.subr.mxu0 0.0
      %11404 = vmatpush1.msra.mxu0 0.0
      %11405 = vmatprep.subr.mxu0 0.0
      %11406 = vmatpush1.msra.mxu0 0.0
      %11407 = vmatprep.subr.mxu0 0.0
      %11408 = vmatpush1.msra.mxu0 0.0
      %11409 = vmatprep.subr.mxu0 0.0
      %11410 = vmatpush1.msra.mxu0 0.0
      %11411 = vmatprep.subr.mxu0 0.0
      %11412 = vmatpush1.msra.mxu0 0.0
      %11413 = vmatprep.subr.mxu0 0.0
      %11414 = vmatpush1.msra.mxu0 %v11349
      %11415 = vmatprep.subr.mxu0 0.0
      %11416 = vmatpush1.msra.mxu0 %v11348
      %11417 = vmatprep.subr.mxu0 0.0
      %11418 = vmatpush1.msra.mxu0 %v11347
      %11419 = vmatprep.subr.mxu0 0.0
      %11420 = vmatpush1.msra.mxu0 %v11346
      %11421 = vmatprep.subr.mxu0 0.0
      %11422 = vmatpush2.msra.mxu0 0.0
      %11423 = vmatprep.subr.mxu0 0.0
      %11424 = vmatpush2.msra.mxu0 0.0
      %11425 = vmatprep.subr.mxu0 0.0
      %11426 = vmatpush2.msra.mxu0 0.0
      %11427 = vmatprep.subr.mxu0 0.0
      %11428 = vmatpush2.msra.mxu0 0.0
      %11429 = vmatprep.subr.mxu0 0.0
      %11430 = vmatpush2.msra.mxu0 0.0
      %11431 = vmatprep.subr.mxu0 0.0
      %11432 = vmatpush2.msra.mxu0 0.0
      %11433 = vmatprep.subr.mxu0 0.0
      %11434 = vmatpush2.msra.mxu0 0.0
      %11435 = vmatprep.subr.mxu0 0.0
      %11436 = vmatpush2.msra.mxu0 0.0
      %11437 = vmatprep.subr.mxu0 0.0
      %11438 = vmatpush2.msra.mxu0 0.0
      %11439 = vmatprep.subr.mxu0 0.0
      %11440 = vmatpush2.msra.mxu0 0.0
      %11441 = vmatprep.subr.mxu0 0.0
      %11442 = vmatpush2.msra.mxu0 0.0
      %11443 = vmatprep.subr.mxu0 0.0
      %11444 = vmatpush2.msra.mxu0 0.0
      %11445 = vmatprep.subr.mxu0 0.0
      %11446 = vmatpush2.msra.mxu0 0.0
      %11447 = vmatprep.subr.mxu0 0.0
      %11448 = vmatpush2.msra.mxu0 0.0
      %11449 = vmatprep.subr.mxu0 0.0
      %11450 = vmatpush2.msra.mxu0 0.0
      %11451 = vmatprep.subr.mxu0 0.0
      %11452 = vmatpush2.msra.mxu0 0.0
      %11453 = vmatprep.mubr.f32.mxu0 0.0
      %11454 = vmatmul.mubr.f32.gmra.mxu0 %v11351
      %v11455 = vpop.f32.mrf.mxu0
      %v11456 = vadd.f32 0.0, %v11455
      %v11457 = vpop.f32.mrf.mxu0
      %11458 = vmatprep.mubr.f32.mxu0 0.0
      %11459 = vmatmul.mubr.f32.gmra.mxu0 %v11354
      %v11460 = vpop.f32.mrf.mxu0
      %v11461 = vadd.f32 0.0, %v11460
      %v11462 = vpop.f32.mrf.mxu0
      %11463 = vmatprep.mubr.f32.mxu0 0.0
      %11464 = vmatmul.mubr.f32.gmra.mxu0 %v11357
      %v11465 = vpop.f32.mrf.mxu0
      %v11466 = vadd.f32 0.0, %v11465
      %v11467 = vpop.f32.mrf.mxu0
      %11468 = vmatprep.mubr.f32.mxu0 0.0
      %11469 = vmatmul.mubr.f32.gmra.mxu0 %v11360
      %v11470 = vpop.f32.mrf.mxu0
      %v11471 = vadd.f32 0.0, %v11470
      %v11472 = vpop.f32.mrf.mxu0
      %11473 = vmatprep.mubr.f32.mxu0 0.0
      %11474 = vmatmul.mubr.f32.gmra.mxu0 %v11363
      %v11475 = vpop.f32.mrf.mxu0
      %v11476 = vadd.f32 0.0, %v11475
      %v11477 = vpop.f32.mrf.mxu0
      %11478 = vmatprep.mubr.f32.mxu0 0.0
      %11479 = vmatmul.mubr.f32.gmra.mxu0 %v11366
      %v11480 = vpop.f32.mrf.mxu0
      %v11481 = vadd.f32 0.0, %v11480
      %v11482 = vpop.f32.mrf.mxu0
      %11483 = vmatprep.mubr.f32.mxu0 0.0
      %11484 = vmatmul.mubr.f32.gmra.mxu0 %v11369
      %v11485 = vpop.f32.mrf.mxu0
      %v11486 = vadd.f32 0.0, %v11485
      %v11487 = vpop.f32.mrf.mxu0
      %11488 = vmatprep.mubr.f32.mxu0 0.0
      %11489 = vmatmul.mubr.f32.gmra.mxu0 %v11372
      %v11490 = vpop.f32.mrf.mxu0
      %v11491 = vadd.f32 0.0, %v11490
      %v11492 = vpop.f32.mrf.mxu0
      %11493 = vmatprep.mubr.f32.mxu0 0.0
      %11494 = vmatmul.mubr.f32.gmra.mxu0 %v11375
      %v11495 = vpop.f32.mrf.mxu0
      %v11496 = vadd.f32 0.0, %v11495
      %v11497 = vpop.f32.mrf.mxu0
      %11498 = vmatprep.mubr.f32.mxu0 0.0
      %11499 = vmatmul.mubr.f32.gmra.mxu0 %v11378
      %v11500 = vpop.f32.mrf.mxu0
      %v11501 = vadd.f32 0.0, %v11500
      %v11502 = vpop.f32.mrf.mxu0
      %11503 = vmatprep.mubr.f32.mxu0 0.0
      %11504 = vmatmul.mubr.f32.gmra.mxu0 %v11381
      %v11505 = vpop.f32.mrf.mxu0
      %v11506 = vadd.f32 0.0, %v11505
      %v11507 = vpop.f32.mrf.mxu0
      %11508 = vmatprep.mubr.f32.mxu0 0.0
      %11509 = vmatmul.mubr.f32.gmra.mxu0 %v11384
      %v11510 = vpop.f32.mrf.mxu0
      %v11511 = vadd.f32 0.0, %v11510
      %v11512 = vpop.f32.mrf.mxu0
      %11513 = vmatprep.mubr.f32.mxu0 0.0
      %11514 = vmatmul.mubr.f32.gmra.mxu0 %v11387
      %v11515 = vpop.f32.mrf.mxu0
      %v11516 = vadd.f32 0.0, %v11515
      %v11517 = vpop.f32.mrf.mxu0
      %11518 = vdwg.mxu0
      %v11519 = vadd.f32 %v11320, %v11456
      %v11520 = vadd.f32 %v11321, %v11461
      %v11521 = vadd.f32 %v11322, %v11466
      %v11522 = vadd.f32 %v11323, %v11471
      %v11523 = vadd.f32 %v11324, %v11476
      %v11524 = vadd.f32 %v11325, %v11481
      %v11525 = vadd.f32 %v11326, %v11486
      %v11526 = vadd.f32 %v11327, %v11491
      %v11527 = vadd.f32 %v11328, %v11496
      %v11528 = vadd.f32 %v11329, %v11501
      %v11529 = vadd.f32 %v11330, %v11506
      %v11530 = vadd.f32 %v11331, %v11511
      %v11531 = vadd.f32 %v11332, %v11516
      %v11532 = vld [vmem:[#allocation3 + $0x1a] sm:$0xff]
      %v11533 = vld [vmem:[#allocation3 + $0x22] sm:$0xff]
      %v11534 = vld [vmem:[#allocation3 + $0x2a] sm:$0xff]
      %v11535 = vld [vmem:[#allocation3 + $0x32] sm:$0xff]
      %v11536 = vld [vmem:[#allocation3 + $0x3a] sm:$0xff]
      %v11537 = vld [vmem:[#allocation3 + $0x42] sm:$0xff]
      %v11538 = vld [vmem:[#allocation3 + $0x4a] sm:$0xff]
      %v11539 = vld [vmem:[#allocation3 + $0x52] sm:$0xff]
      %v11540 = vld [vmem:[#allocation3 + $0x5a] sm:$0xff]
      %v11541 = vld [vmem:[#allocation3 + $0x62] sm:$0xff]
      %v11542 = vld [vmem:[#allocation3 + $0x6a] sm:$0xff]
      %v11543 = vld [vmem:[#allocation3 + $0x72] sm:$0xff]
      %v11544 = vld [vmem:[#allocation3 + $0x7a] sm:$0xf]
      %v11545 = vld [vmem:[%s5 + $0xe0] sm:$0xff]
      %v11546 = vld [vmem:[%s5 + $0xe8] sm:$0xff]
      %v11547 = vld [vmem:[%s5 + $0xf0] sm:$0xff]
      %v11548 = vld [vmem:[%s5 + $0xf8] sm:$0xff]
      %v11550 = vsel %vm10145, %v11532, 0
      %v11553 = vsel %vm10145, %v11533, 0
      %v11556 = vsel %vm10145, %v11534, 0
      %v11559 = vsel %vm10145, %v11535, 0
      %v11562 = vsel %vm10145, %v11536, 0
      %v11565 = vsel %vm10145, %v11537, 0
      %v11568 = vsel %vm10145, %v11538, 0
      %v11571 = vsel %vm10145, %v11539, 0
      %v11574 = vsel %vm10145, %v11540, 0
      %v11577 = vsel %vm10145, %v11541, 0
      %v11580 = vsel %vm10145, %v11542, 0
      %v11583 = vsel %vm10145, %v11543, 0
      %v11586 = vsel %vm10145, %v11544, 0
      %11588 = vmatprep.subr.mxu0 0.0
      %11589 = vmatpush1.msra.mxu0 0.0
      %11590 = vmatprep.subr.mxu0 0.0
      %11591 = vmatpush1.msra.mxu0 0.0
      %11592 = vmatprep.subr.mxu0 0.0
      %11593 = vmatpush1.msra.mxu0 0.0
      %11594 = vmatprep.subr.mxu0 0.0
      %11595 = vmatpush1.msra.mxu0 0.0
      %11596 = vmatprep.subr.mxu0 0.0
      %11597 = vmatpush1.msra.mxu0 0.0
      %11598 = vmatprep.subr.mxu0 0.0
      %11599 = vmatpush1.msra.mxu0 0.0
      %11600 = vmatprep.subr.mxu0 0.0
      %11601 = vmatpush1.msra.mxu0 0.0
      %11602 = vmatprep.subr.mxu0 0.0
      %11603 = vmatpush1.msra.mxu0 0.0
      %11604 = vmatprep.subr.mxu0 0.0
      %11605 = vmatpush1.msra.mxu0 0.0
      %11606 = vmatprep.subr.mxu0 0.0
      %11607 = vmatpush1.msra.mxu0 0.0
      %11608 = vmatprep.subr.mxu0 0.0
      %11609 = vmatpush1.msra.mxu0 0.0
      %11610 = vmatprep.subr.mxu0 0.0
      %11611 = vmatpush1.msra.mxu0 0.0
      %11612 = vmatprep.subr.mxu0 0.0
      %11613 = vmatpush1.msra.mxu0 %v11548
      %11614 = vmatprep.subr.mxu0 0.0
      %11615 = vmatpush1.msra.mxu0 %v11547
      %11616 = vmatprep.subr.mxu0 0.0
      %11617 = vmatpush1.msra.mxu0 %v11546
      %11618 = vmatprep.subr.mxu0 0.0
      %11619 = vmatpush1.msra.mxu0 %v11545
      %11620 = vmatprep.subr.mxu0 0.0
      %11621 = vmatpush2.msra.mxu0 0.0
      %11622 = vmatprep.subr.mxu0 0.0
      %11623 = vmatpush2.msra.mxu0 0.0
      %11624 = vmatprep.subr.mxu0 0.0
      %11625 = vmatpush2.msra.mxu0 0.0
      %11626 = vmatprep.subr.mxu0 0.0
      %11627 = vmatpush2.msra.mxu0 0.0
      %11628 = vmatprep.subr.mxu0 0.0
      %11629 = vmatpush2.msra.mxu0 0.0
      %11630 = vmatprep.subr.mxu0 0.0
      %11631 = vmatpush2.msra.mxu0 0.0
      %11632 = vmatprep.subr.mxu0 0.0
      %11633 = vmatpush2.msra.mxu0 0.0
      %11634 = vmatprep.subr.mxu0 0.0
      %11635 = vmatpush2.msra.mxu0 0.0
      %11636 = vmatprep.subr.mxu0 0.0
      %11637 = vmatpush2.msra.mxu0 0.0
      %11638 = vmatprep.subr.mxu0 0.0
      %11639 = vmatpush2.msra.mxu0 0.0
      %11640 = vmatprep.subr.mxu0 0.0
      %11641 = vmatpush2.msra.mxu0 0.0
      %11642 = vmatprep.subr.mxu0 0.0
      %11643 = vmatpush2.msra.mxu0 0.0
      %11644 = vmatprep.subr.mxu0 0.0
      %11645 = vmatpush2.msra.mxu0 0.0
      %11646 = vmatprep.subr.mxu0 0.0
      %11647 = vmatpush2.msra.mxu0 0.0
      %11648 = vmatprep.subr.mxu0 0.0
      %11649 = vmatpush2.msra.mxu0 0.0
      %11650 = vmatprep.subr.mxu0 0.0
      %11651 = vmatpush2.msra.mxu0 0.0
      %11652 = vmatprep.mubr.f32.mxu0 0.0
      %11653 = vmatmul.mubr.f32.gmra.mxu0 %v11550
      %v11654 = vpop.f32.mrf.mxu0
      %v11655 = vadd.f32 0.0, %v11654
      %v11656 = vpop.f32.mrf.mxu0
      %11657 = vmatprep.mubr.f32.mxu0 0.0
      %11658 = vmatmul.mubr.f32.gmra.mxu0 %v11553
      %v11659 = vpop.f32.mrf.mxu0
      %v11660 = vadd.f32 0.0, %v11659
      %v11661 = vpop.f32.mrf.mxu0
      %11662 = vmatprep.mubr.f32.mxu0 0.0
      %11663 = vmatmul.mubr.f32.gmra.mxu0 %v11556
      %v11664 = vpop.f32.mrf.mxu0
      %v11665 = vadd.f32 0.0, %v11664
      %v11666 = vpop.f32.mrf.mxu0
      %11667 = vmatprep.mubr.f32.mxu0 0.0
      %11668 = vmatmul.mubr.f32.gmra.mxu0 %v11559
      %v11669 = vpop.f32.mrf.mxu0
      %v11670 = vadd.f32 0.0, %v11669
      %v11671 = vpop.f32.mrf.mxu0
      %11672 = vmatprep.mubr.f32.mxu0 0.0
      %11673 = vmatmul.mubr.f32.gmra.mxu0 %v11562
      %v11674 = vpop.f32.mrf.mxu0
      %v11675 = vadd.f32 0.0, %v11674
      %v11676 = vpop.f32.mrf.mxu0
      %11677 = vmatprep.mubr.f32.mxu0 0.0
      %11678 = vmatmul.mubr.f32.gmra.mxu0 %v11565
      %v11679 = vpop.f32.mrf.mxu0
      %v11680 = vadd.f32 0.0, %v11679
      %v11681 = vpop.f32.mrf.mxu0
      %11682 = vmatprep.mubr.f32.mxu0 0.0
      %11683 = vmatmul.mubr.f32.gmra.mxu0 %v11568
      %v11684 = vpop.f32.mrf.mxu0
      %v11685 = vadd.f32 0.0, %v11684
      %v11686 = vpop.f32.mrf.mxu0
      %11687 = vmatprep.mubr.f32.mxu0 0.0
      %11688 = vmatmul.mubr.f32.gmra.mxu0 %v11571
      %v11689 = vpop.f32.mrf.mxu0
      %v11690 = vadd.f32 0.0, %v11689
      %v11691 = vpop.f32.mrf.mxu0
      %11692 = vmatprep.mubr.f32.mxu0 0.0
      %11693 = vmatmul.mubr.f32.gmra.mxu0 %v11574
      %v11694 = vpop.f32.mrf.mxu0
      %v11695 = vadd.f32 0.0, %v11694
      %v11696 = vpop.f32.mrf.mxu0
      %11697 = vmatprep.mubr.f32.mxu0 0.0
      %11698 = vmatmul.mubr.f32.gmra.mxu0 %v11577
      %v11699 = vpop.f32.mrf.mxu0
      %v11700 = vadd.f32 0.0, %v11699
      %v11701 = vpop.f32.mrf.mxu0
      %11702 = vmatprep.mubr.f32.mxu0 0.0
      %11703 = vmatmul.mubr.f32.gmra.mxu0 %v11580
      %v11704 = vpop.f32.mrf.mxu0
      %v11705 = vadd.f32 0.0, %v11704
      %v11706 = vpop.f32.mrf.mxu0
      %11707 = vmatprep.mubr.f32.mxu0 0.0
      %11708 = vmatmul.mubr.f32.gmra.mxu0 %v11583
      %v11709 = vpop.f32.mrf.mxu0
      %v11710 = vadd.f32 0.0, %v11709
      %v11711 = vpop.f32.mrf.mxu0
      %11712 = vmatprep.mubr.f32.mxu0 0.0
      %11713 = vmatmul.mubr.f32.gmra.mxu0 %v11586
      %v11714 = vpop.f32.mrf.mxu0
      %v11715 = vadd.f32 0.0, %v11714
      %v11716 = vpop.f32.mrf.mxu0
      %11717 = vdwg.mxu0
      %v11718 = vadd.f32 %v11519, %v11655
      %v11719 = vadd.f32 %v11520, %v11660
      %v11720 = vadd.f32 %v11521, %v11665
      %v11721 = vadd.f32 %v11522, %v11670
      %v11722 = vadd.f32 %v11523, %v11675
      %v11723 = vadd.f32 %v11524, %v11680
      %v11724 = vadd.f32 %v11525, %v11685
      %v11725 = vadd.f32 %v11526, %v11690
      %v11726 = vadd.f32 %v11527, %v11695
      %v11727 = vadd.f32 %v11528, %v11700
      %v11728 = vadd.f32 %v11529, %v11705
      %v11729 = vadd.f32 %v11530, %v11710
      %v11730 = vadd.f32 %v11531, %v11715
      %v11731 = vld [vmem:[#allocation3 + $0x1b] sm:$0xff]
      %v11732 = vld [vmem:[#allocation3 + $0x23] sm:$0xff]
      %v11733 = vld [vmem:[#allocation3 + $0x2b] sm:$0xff]
      %v11734 = vld [vmem:[#allocation3 + $0x33] sm:$0xff]
      %v11735 = vld [vmem:[#allocation3 + $0x3b] sm:$0xff]
      %v11736 = vld [vmem:[#allocation3 + $0x43] sm:$0xff]
      %v11737 = vld [vmem:[#allocation3 + $0x4b] sm:$0xff]
      %v11738 = vld [vmem:[#allocation3 + $0x53] sm:$0xff]
      %v11739 = vld [vmem:[#allocation3 + $0x5b] sm:$0xff]
      %v11740 = vld [vmem:[#allocation3 + $0x63] sm:$0xff]
      %v11741 = vld [vmem:[#allocation3 + $0x6b] sm:$0xff]
      %v11742 = vld [vmem:[#allocation3 + $0x73] sm:$0xff]
      %v11743 = vld [vmem:[#allocation3 + $0x7b] sm:$0xf]
      %v11744 = vld [vmem:[%s5 + $0x100] sm:$0xff]
      %v11745 = vld [vmem:[%s5 + $0x108] sm:$0xff]
      %v11746 = vld [vmem:[%s5 + $0x110] sm:$0xff]
      %v11747 = vld [vmem:[%s5 + $0x118] sm:$0xff]
      %v11749 = vsel %vm10145, %v11731, 0
      %v11752 = vsel %vm10145, %v11732, 0
      %v11755 = vsel %vm10145, %v11733, 0
      %v11758 = vsel %vm10145, %v11734, 0
      %v11761 = vsel %vm10145, %v11735, 0
      %v11764 = vsel %vm10145, %v11736, 0
      %v11767 = vsel %vm10145, %v11737, 0
      %v11770 = vsel %vm10145, %v11738, 0
      %v11773 = vsel %vm10145, %v11739, 0
      %v11776 = vsel %vm10145, %v11740, 0
      %v11779 = vsel %vm10145, %v11741, 0
      %v11782 = vsel %vm10145, %v11742, 0
      %v11785 = vsel %vm10145, %v11743, 0
      %11787 = vmatprep.subr.mxu0 0.0
      %11788 = vmatpush1.msra.mxu0 0.0
      %11789 = vmatprep.subr.mxu0 0.0
      %11790 = vmatpush1.msra.mxu0 0.0
      %11791 = vmatprep.subr.mxu0 0.0
      %11792 = vmatpush1.msra.mxu0 0.0
      %11793 = vmatprep.subr.mxu0 0.0
      %11794 = vmatpush1.msra.mxu0 0.0
      %11795 = vmatprep.subr.mxu0 0.0
      %11796 = vmatpush1.msra.mxu0 0.0
      %11797 = vmatprep.subr.mxu0 0.0
      %11798 = vmatpush1.msra.mxu0 0.0
      %11799 = vmatprep.subr.mxu0 0.0
      %11800 = vmatpush1.msra.mxu0 0.0
      %11801 = vmatprep.subr.mxu0 0.0
      %11802 = vmatpush1.msra.mxu0 0.0
      %11803 = vmatprep.subr.mxu0 0.0
      %11804 = vmatpush1.msra.mxu0 0.0
      %11805 = vmatprep.subr.mxu0 0.0
      %11806 = vmatpush1.msra.mxu0 0.0
      %11807 = vmatprep.subr.mxu0 0.0
      %11808 = vmatpush1.msra.mxu0 0.0
      %11809 = vmatprep.subr.mxu0 0.0
      %11810 = vmatpush1.msra.mxu0 0.0
      %11811 = vmatprep.subr.mxu0 0.0
      %11812 = vmatpush1.msra.mxu0 %v11747
      %11813 = vmatprep.subr.mxu0 0.0
      %11814 = vmatpush1.msra.mxu0 %v11746
      %11815 = vmatprep.subr.mxu0 0.0
      %11816 = vmatpush1.msra.mxu0 %v11745
      %11817 = vmatprep.subr.mxu0 0.0
      %11818 = vmatpush1.msra.mxu0 %v11744
      %11819 = vmatprep.subr.mxu0 0.0
      %11820 = vmatpush2.msra.mxu0 0.0
      %11821 = vmatprep.subr.mxu0 0.0
      %11822 = vmatpush2.msra.mxu0 0.0
      %11823 = vmatprep.subr.mxu0 0.0
      %11824 = vmatpush2.msra.mxu0 0.0
      %11825 = vmatprep.subr.mxu0 0.0
      %11826 = vmatpush2.msra.mxu0 0.0
      %11827 = vmatprep.subr.mxu0 0.0
      %11828 = vmatpush2.msra.mxu0 0.0
      %11829 = vmatprep.subr.mxu0 0.0
      %11830 = vmatpush2.msra.mxu0 0.0
      %11831 = vmatprep.subr.mxu0 0.0
      %11832 = vmatpush2.msra.mxu0 0.0
      %11833 = vmatprep.subr.mxu0 0.0
      %11834 = vmatpush2.msra.mxu0 0.0
      %11835 = vmatprep.subr.mxu0 0.0
      %11836 = vmatpush2.msra.mxu0 0.0
      %11837 = vmatprep.subr.mxu0 0.0
      %11838 = vmatpush2.msra.mxu0 0.0
      %11839 = vmatprep.subr.mxu0 0.0
      %11840 = vmatpush2.msra.mxu0 0.0
      %11841 = vmatprep.subr.mxu0 0.0
      %11842 = vmatpush2.msra.mxu0 0.0
      %11843 = vmatprep.subr.mxu0 0.0
      %11844 = vmatpush2.msra.mxu0 0.0
      %11845 = vmatprep.subr.mxu0 0.0
      %11846 = vmatpush2.msra.mxu0 0.0
      %11847 = vmatprep.subr.mxu0 0.0
      %11848 = vmatpush2.msra.mxu0 0.0
      %11849 = vmatprep.subr.mxu0 0.0
      %11850 = vmatpush2.msra.mxu0 0.0
      %11851 = vmatprep.mubr.f32.mxu0 0.0
      %11852 = vmatmul.mubr.f32.gmra.mxu0 %v11749
      %v11853 = vpop.f32.mrf.mxu0
      %v11854 = vadd.f32 0.0, %v11853
      %v11855 = vpop.f32.mrf.mxu0
      %11856 = vmatprep.mubr.f32.mxu0 0.0
      %11857 = vmatmul.mubr.f32.gmra.mxu0 %v11752
      %v11858 = vpop.f32.mrf.mxu0
      %v11859 = vadd.f32 0.0, %v11858
      %v11860 = vpop.f32.mrf.mxu0
      %11861 = vmatprep.mubr.f32.mxu0 0.0
      %11862 = vmatmul.mubr.f32.gmra.mxu0 %v11755
      %v11863 = vpop.f32.mrf.mxu0
      %v11864 = vadd.f32 0.0, %v11863
      %v11865 = vpop.f32.mrf.mxu0
      %11866 = vmatprep.mubr.f32.mxu0 0.0
      %11867 = vmatmul.mubr.f32.gmra.mxu0 %v11758
      %v11868 = vpop.f32.mrf.mxu0
      %v11869 = vadd.f32 0.0, %v11868
      %v11870 = vpop.f32.mrf.mxu0
      %11871 = vmatprep.mubr.f32.mxu0 0.0
      %11872 = vmatmul.mubr.f32.gmra.mxu0 %v11761
      %v11873 = vpop.f32.mrf.mxu0
      %v11874 = vadd.f32 0.0, %v11873
      %v11875 = vpop.f32.mrf.mxu0
      %11876 = vmatprep.mubr.f32.mxu0 0.0
      %11877 = vmatmul.mubr.f32.gmra.mxu0 %v11764
      %v11878 = vpop.f32.mrf.mxu0
      %v11879 = vadd.f32 0.0, %v11878
      %v11880 = vpop.f32.mrf.mxu0
      %11881 = vmatprep.mubr.f32.mxu0 0.0
      %11882 = vmatmul.mubr.f32.gmra.mxu0 %v11767
      %v11883 = vpop.f32.mrf.mxu0
      %v11884 = vadd.f32 0.0, %v11883
      %v11885 = vpop.f32.mrf.mxu0
      %11886 = vmatprep.mubr.f32.mxu0 0.0
      %11887 = vmatmul.mubr.f32.gmra.mxu0 %v11770
      %v11888 = vpop.f32.mrf.mxu0
      %v11889 = vadd.f32 0.0, %v11888
      %v11890 = vpop.f32.mrf.mxu0
      %11891 = vmatprep.mubr.f32.mxu0 0.0
      %11892 = vmatmul.mubr.f32.gmra.mxu0 %v11773
      %v11893 = vpop.f32.mrf.mxu0
      %v11894 = vadd.f32 0.0, %v11893
      %v11895 = vpop.f32.mrf.mxu0
      %11896 = vmatprep.mubr.f32.mxu0 0.0
      %11897 = vmatmul.mubr.f32.gmra.mxu0 %v11776
      %v11898 = vpop.f32.mrf.mxu0
      %v11899 = vadd.f32 0.0, %v11898
      %v11900 = vpop.f32.mrf.mxu0
      %11901 = vmatprep.mubr.f32.mxu0 0.0
      %11902 = vmatmul.mubr.f32.gmra.mxu0 %v11779
      %v11903 = vpop.f32.mrf.mxu0
      %v11904 = vadd.f32 0.0, %v11903
      %v11905 = vpop.f32.mrf.mxu0
      %11906 = vmatprep.mubr.f32.mxu0 0.0
      %11907 = vmatmul.mubr.f32.gmra.mxu0 %v11782
      %v11908 = vpop.f32.mrf.mxu0
      %v11909 = vadd.f32 0.0, %v11908
      %v11910 = vpop.f32.mrf.mxu0
      %11911 = vmatprep.mubr.f32.mxu0 0.0
      %11912 = vmatmul.mubr.f32.gmra.mxu0 %v11785
      %v11913 = vpop.f32.mrf.mxu0
      %v11914 = vadd.f32 0.0, %v11913
      %v11915 = vpop.f32.mrf.mxu0
      %11916 = vdwg.mxu0
      %v11917 = vadd.f32 %v11718, %v11854
      %v11918 = vadd.f32 %v11719, %v11859
      %v11919 = vadd.f32 %v11720, %v11864
      %v11920 = vadd.f32 %v11721, %v11869
      %v11921 = vadd.f32 %v11722, %v11874
      %v11922 = vadd.f32 %v11723, %v11879
      %v11923 = vadd.f32 %v11724, %v11884
      %v11924 = vadd.f32 %v11725, %v11889
      %v11925 = vadd.f32 %v11726, %v11894
      %v11926 = vadd.f32 %v11727, %v11899
      %v11927 = vadd.f32 %v11728, %v11904
      %v11928 = vadd.f32 %v11729, %v11909
      %v11929 = vadd.f32 %v11730, %v11914
      %v11930 = vadd.f32 %v11917, %v10082
      %v11931 = vadd.f32 %v11918, %v10087
      %v11932 = vadd.f32 %v11919, %v10092
      %v11933 = vadd.f32 %v11920, %v10097
      %v11934 = vadd.f32 %v11921, %v10102
      %v11935 = vadd.f32 %v11922, %v10107
      %v11936 = vadd.f32 %v11923, %v10112
      %v11937 = vadd.f32 %v11924, %v10117
      %v11938 = vadd.f32 %v11925, %v10122
      %v11939 = vadd.f32 %v11926, %v10127
      %v11940 = vadd.f32 %v11927, %v10132
      %v11941 = vadd.f32 %v11928, %v10137
      %v11942 = vadd.f32 %v11929, %v10142
      %v11943 = vld [vmem:[%s7] sm:$0x1]
      %v11945 = vlaneseq
      %v11946 = vshrl.u32 %v11945, 7
      %v11947 = vsub.s32 0, %v11946
      %v11948 = vrot.slane %v11943, %v11947
      %v11950 = vadd.f32 %v11930, %v11948
      %v11951 = vadd.f32 %v11931, %v11948
      %v11952 = vadd.f32 %v11932, %v11948
      %v11953 = vadd.f32 %v11933, %v11948
      %v11954 = vadd.f32 %v11934, %v11948
      %v11955 = vadd.f32 %v11935, %v11948
      %v11956 = vadd.f32 %v11936, %v11948
      %v11957 = vadd.f32 %v11937, %v11948
      %v11958 = vadd.f32 %v11938, %v11948
      %v11959 = vadd.f32 %v11939, %v11948
      %v11960 = vadd.f32 %v11940, %v11948
      %v11961 = vadd.f32 %v11941, %v11948
      %v11962 = vadd.f32 %v11942, %v11948
      %v11963 = vmax.f32 %v11950, 0.0
      %v11964 = vmax.f32 %v11951, 0.0
      %v11965 = vmax.f32 %v11952, 0.0
      %v11966 = vmax.f32 %v11953, 0.0
      %v11967 = vmax.f32 %v11954, 0.0
      %v11968 = vmax.f32 %v11955, 0.0
      %v11969 = vmax.f32 %v11956, 0.0
      %v11970 = vmax.f32 %v11957, 0.0
      %v11971 = vmax.f32 %v11958, 0.0
      %v11972 = vmax.f32 %v11959, 0.0
      %v11973 = vmax.f32 %v11960, 0.0
      %v11974 = vmax.f32 %v11961, 0.0
      %v11975 = vmax.f32 %v11962, 0.0
      %v11976 = vld [vmem:[%s12] sm:$0x1]
      %vm11977 = vcmask 818176
      %v11979 = vsel %vm11977, %v11976, 0
      %v11982 = vsel %vm9447, %v11975, 0
      %11984 = vmatprep.subr.mxu0 0.0
      %11985 = vmatpush1.msra.mxu0 0.0
      %11986 = vmatprep.subr.mxu0 0.0
      %11987 = vmatpush1.msra.mxu0 0.0
      %11988 = vmatprep.subr.mxu0 0.0
      %11989 = vmatpush1.msra.mxu0 0.0
      %11990 = vmatprep.subr.mxu0 0.0
      %11991 = vmatpush1.msra.mxu0 %v11982
      %11992 = vmatprep.subr.mxu0 0.0
      %11993 = vmatpush1.msra.mxu0 %v11974
      %11994 = vmatprep.subr.mxu0 0.0
      %11995 = vmatpush1.msra.mxu0 %v11973
      %11996 = vmatprep.subr.mxu0 0.0
      %11997 = vmatpush1.msra.mxu0 %v11972
      %11998 = vmatprep.subr.mxu0 0.0
      %11999 = vmatpush1.msra.mxu0 %v11971
      %12000 = vmatprep.subr.mxu0 0.0
      %12001 = vmatpush1.msra.mxu0 %v11970
      %12002 = vmatprep.subr.mxu0 0.0
      %12003 = vmatpush1.msra.mxu0 %v11969
      %12004 = vmatprep.subr.mxu0 0.0
      %12005 = vmatpush1.msra.mxu0 %v11968
      %12006 = vmatprep.subr.mxu0 0.0
      %12007 = vmatpush1.msra.mxu0 %v11967
      %12008 = vmatprep.subr.mxu0 0.0
      %12009 = vmatpush1.msra.mxu0 %v11966
      %12010 = vmatprep.subr.mxu0 0.0
      %12011 = vmatpush1.msra.mxu0 %v11965
      %12012 = vmatprep.subr.mxu0 0.0
      %12013 = vmatpush1.msra.mxu0 %v11964
      %12014 = vmatprep.subr.mxu0 0.0
      %12015 = vmatpush1.msra.mxu0 %v11963
      %12016 = vmatprep.subr.mxu0 0.0
      %12017 = vmatpush2.msra.mxu0 0.0
      %12018 = vmatprep.subr.mxu0 0.0
      %12019 = vmatpush2.msra.mxu0 0.0
      %12020 = vmatprep.subr.mxu0 0.0
      %12021 = vmatpush2.msra.mxu0 0.0
      %12022 = vmatprep.subr.mxu0 0.0
      %12023 = vmatpush2.msra.mxu0 0.0
      %12024 = vmatprep.subr.mxu0 0.0
      %12025 = vmatpush2.msra.mxu0 0.0
      %12026 = vmatprep.subr.mxu0 0.0
      %12027 = vmatpush2.msra.mxu0 0.0
      %12028 = vmatprep.subr.mxu0 0.0
      %12029 = vmatpush2.msra.mxu0 0.0
      %12030 = vmatprep.subr.mxu0 0.0
      %12031 = vmatpush2.msra.mxu0 0.0
      %12032 = vmatprep.subr.mxu0 0.0
      %12033 = vmatpush2.msra.mxu0 0.0
      %12034 = vmatprep.subr.mxu0 0.0
      %12035 = vmatpush2.msra.mxu0 0.0
      %12036 = vmatprep.subr.mxu0 0.0
      %12037 = vmatpush2.msra.mxu0 0.0
      %12038 = vmatprep.subr.mxu0 0.0
      %12039 = vmatpush2.msra.mxu0 0.0
      %12040 = vmatprep.subr.mxu0 0.0
      %12041 = vmatpush2.msra.mxu0 0.0
      %12042 = vmatprep.subr.mxu0 0.0
      %12043 = vmatpush2.msra.mxu0 0.0
      %12044 = vmatprep.subr.mxu0 0.0
      %12045 = vmatpush2.msra.mxu0 0.0
      %12046 = vmatprep.subr.mxu0 0.0
      %12047 = vmatpush2.msra.mxu0 0.0
      %12048 = vmatprep.mubr.f32.mxu0 0.0
      %12049 = vmatmul.mubr.f32.gmra.mxu0 %v11979
      %v12050 = vpop.f32.mrf.mxu0
      %v12051 = vadd.f32 0.0, %v12050
      %v12052 = vpop.f32.mrf.mxu0
      %12053 = vdwg.mxu0
      %v12054 = vld [vmem:[%s8] sm:$0xff]
      %v12055 = vld [vmem:[%s8 + $0x8] sm:$0xff]
      %v12056 = vld [vmem:[%s8 + $0x10] sm:$0xff]
      %v12057 = vld [vmem:[%s8 + $0x18] sm:$0xff]
      %v12058 = vld [vmem:[%s9] sm:$0x1]
      %v12060 = vsel %vm10145, %v12051, 0
      %12062 = vmatprep.subr.mxu0 0.0
      %12063 = vmatpush1.msra.mxu0 0.0
      %12064 = vmatprep.subr.mxu0 0.0
      %12065 = vmatpush1.msra.mxu0 0.0
      %12066 = vmatprep.subr.mxu0 0.0
      %12067 = vmatpush1.msra.mxu0 0.0
      %12068 = vmatprep.subr.mxu0 0.0
      %12069 = vmatpush1.msra.mxu0 0.0
      %12070 = vmatprep.subr.mxu0 0.0
      %12071 = vmatpush1.msra.mxu0 0.0
      %12072 = vmatprep.subr.mxu0 0.0
      %12073 = vmatpush1.msra.mxu0 0.0
      %12074 = vmatprep.subr.mxu0 0.0
      %12075 = vmatpush1.msra.mxu0 0.0
      %12076 = vmatprep.subr.mxu0 0.0
      %12077 = vmatpush1.msra.mxu0 0.0
      %12078 = vmatprep.subr.mxu0 0.0
      %12079 = vmatpush1.msra.mxu0 0.0
      %12080 = vmatprep.subr.mxu0 0.0
      %12081 = vmatpush1.msra.mxu0 0.0
      %12082 = vmatprep.subr.mxu0 0.0
      %12083 = vmatpush1.msra.mxu0 0.0
      %12084 = vmatprep.subr.mxu0 0.0
      %12085 = vmatpush1.msra.mxu0 0.0
      %12086 = vmatprep.subr.mxu0 0.0
      %12087 = vmatpush1.msra.mxu0 %v12057
      %12088 = vmatprep.subr.mxu0 0.0
      %12089 = vmatpush1.msra.mxu0 %v12056
      %12090 = vmatprep.subr.mxu0 0.0
      %12091 = vmatpush1.msra.mxu0 %v12055
      %12092 = vmatprep.subr.mxu0 0.0
      %12093 = vmatpush1.msra.mxu0 %v12054
      %12094 = vmatprep.subr.mxu0 0.0
      %12095 = vmatpush2.msra.mxu0 0.0
      %12096 = vmatprep.subr.mxu0 0.0
      %12097 = vmatpush2.msra.mxu0 0.0
      %12098 = vmatprep.subr.mxu0 0.0
      %12099 = vmatpush2.msra.mxu0 0.0
      %12100 = vmatprep.subr.mxu0 0.0
      %12101 = vmatpush2.msra.mxu0 0.0
      %12102 = vmatprep.subr.mxu0 0.0
      %12103 = vmatpush2.msra.mxu0 0.0
      %12104 = vmatprep.subr.mxu0 0.0
      %12105 = vmatpush2.msra.mxu0 0.0
      %12106 = vmatprep.subr.mxu0 0.0
      %12107 = vmatpush2.msra.mxu0 0.0
      %12108 = vmatprep.subr.mxu0 0.0
      %12109 = vmatpush2.msra.mxu0 0.0
      %12110 = vmatprep.subr.mxu0 0.0
      %12111 = vmatpush2.msra.mxu0 0.0
      %12112 = vmatprep.subr.mxu0 0.0
      %12113 = vmatpush2.msra.mxu0 0.0
      %12114 = vmatprep.subr.mxu0 0.0
      %12115 = vmatpush2.msra.mxu0 0.0
      %12116 = vmatprep.subr.mxu0 0.0
      %12117 = vmatpush2.msra.mxu0 0.0
      %12118 = vmatprep.subr.mxu0 0.0
      %12119 = vmatpush2.msra.mxu0 0.0
      %12120 = vmatprep.subr.mxu0 0.0
      %12121 = vmatpush2.msra.mxu0 0.0
      %12122 = vmatprep.subr.mxu0 0.0
      %12123 = vmatpush2.msra.mxu0 0.0
      %12124 = vmatprep.subr.mxu0 0.0
      %12125 = vmatpush2.msra.mxu0 0.0
      %12126 = vmatprep.mubr.f32.mxu0 0.0
      %12127 = vmatmul.mubr.f32.gmra.mxu0 %v12060
      %v12128 = vpop.f32.mrf.mxu0
      %v12129 = vadd.f32 %v12058, %v12128
      %v12130 = vpop.f32.mrf.mxu0
      %12131 = vdwg.mxu0
      %v12132 = vlaneseq
      %v12133 = vshrl.u32 %v12132, 7
      %v12134 = vsub.s32 0, %v12133
      %v12135 = vrot.slane %v12129, %v12134
      %12136 = vst [vmem:[%s438] sm:$0xff] %v12135
      %p12137 = scmp.lt.s32.totalorder %s24, 1
      %s12138 = scalar_select %p12137, %s24, 1
      %s12139 = smul.addr %s12138, 8
      %s12140 = scalar_lea.vmem %s13, %s12139
      // Predicated region
      $region73: #{forward.1} parent=71 // pred_check
        %p12141 = pneg %p320
      $region74: #{forward.1} parent=71 // pred_check_branch
        %12143 = sbr.rel (%p12141) target = $region76
      $region75: #{forward.1} parent=71 // pred_region
        _
      $region76: #{forward.1} parent=71 // pred_fallthru
        _
    $region72: #{forward.1} parent=5 // pred_fallthru
      _
    %p12144 = scmp.le.s32.totalorder 2, %s19
    // Predicated region
    $region77: #{forward.1} parent=5 // pred_check
      %p12145 = pneg %p12144
    $region78: #{forward.1} parent=5 // pred_check_branch
      %12147 = sbr.rel (%p12145) target = $region80
    $region79: #{forward.1} parent=5 // pred_region
      %s12148 = ssub.s32 %s19, 2
      // Predicated region
      $region81: #{forward.1} parent=79 // pred_check
        %p12149 = pneg %p326
      $region82: #{forward.1} parent=79 // pred_check_branch
        %12151 = sbr.rel (%p12149) target = $region84
      $region83: #{forward.1} parent=79 // pred_region
        %p12152 = scmp.lt.s32.totalorder %s25, 1
        %s12153 = scalar_select %p12152, %s25, 1
        %s12154 = smul.addr %s12153, 8
        %s12155 = scalar_lea.vmem %s13, %s12154
      $region84: #{forward.1} parent=79 // pred_fallthru
        _
    $region80: #{forward.1} parent=5 // pred_fallthru
      _
  $region6: #{forward.1} parent=0 // loop_footer
    %s23 = sadd.s32 1, %s19
  $region7: #{forward.1} parent=0 // loop_footer_branch
    %18 = sbr.rel target = $region3
  $region8: #{forward.1} parent=0 // loop_exit
    _

</llo_original>
